<compile_context>
chip_gen: v6e
topology: v6e:2x2x1
jax: 0.10.0
libtpu: 0.0.40
codegen_flags: <defaults>
</compile_context>

<pallas_src>
import functools

import jax
import jax.numpy as jnp
from jax.experimental import pallas as pl
from jax.experimental.pallas import tpu as pltpu

EPS = 1e-5
VMEM_LIMIT = 32 * 1024 * 1024  # explicit scoped-VMEM budget, safe on v5e/v6e/v7x


# --------------------------------------------------------------------------
# In-kernel helpers
# --------------------------------------------------------------------------
def _zero_border(pad_ref, H, W, C):
    """Zero only the 1-element spatial border of the (H+2, W+2, C) scratch.

    The interior is fully overwritten every grid step, so border-only stores
    are all that is needed (and they are megacore-safe under "parallel").
    """
    pad_ref[0:1, :, :] = jnp.zeros((1, W + 2, C), jnp.float32)
    pad_ref[H + 1:H + 2, :, :] = jnp.zeros((1, W + 2, C), jnp.float32)
    pad_ref[1:H + 1, 0:1, :] = jnp.zeros((H, 1, C), jnp.float32)
    pad_ref[1:H + 1, W + 1:W + 2, :] = jnp.zeros((H, 1, C), jnp.float32)


def _conv3x3(pad_ref, w_ref, acc_ref, H, W, C_in):
    """3x3 / stride-1 conv of the zero-bordered scratch, accumulated on the MXU.

    pad_ref: (H+2, W+2, C_in) VMEM scratch (border already zero, interior = x)
    w_ref  : (9, C_in, C_out) weights, tap-major (t = kh*3 + kw)
    acc_ref: (H*W, C_out) f32 VMEM accumulator (tap 0 initializes it).
    """
    # TODO(synk): with realistic channel counts, fold the 9 taps into the matmul
    # contraction (im2col, K = 9*C_in) and/or pad channels to a lane-dense width;
    # kept as 9 accumulated matmuls here for lowering robustness at tiny C.
    for t in range(9):
        kh, kw = divmod(t, 3)
        patch = pad_ref[kh:kh + H, kw:kw + W, :]                 # (H, W, C_in)
        contrib = jnp.dot(patch.reshape(H * W, C_in), w_ref[t],
                          preferred_element_type=jnp.float32)
        if t == 0:
            acc_ref[...] = contrib          # first tap initializes (no zero-fill)
        else:
            acc_ref[...] += contrib


# --------------------------------------------------------------------------
# Kernels (one batch element per grid step)
# --------------------------------------------------------------------------
def conv1_stats_kernel(x_ref, w_ref, y_ref, s_ref, ss_ref, pad_ref, acc_ref,
                       *, H, W, C_in, C_out):
    """conv1 of one batch element + per-channel sum / sum-of-squares partials."""
    _zero_border(pad_ref, H, W, C_in)
    pad_ref[1:H + 1, 1:W + 1, :] = x_ref[0]                      # interior <- x
    _conv3x3(pad_ref, w_ref, acc_ref, H, W, C_in)
    acc = acc_ref[...]                                           # (H*W, C_out)
    y_ref[...] = acc.reshape(1, H, W, C_out)
    s_ref[...] = jnp.sum(acc, axis=0, keepdims=True).reshape(1, 1, C_out)
    ss_ref[...] = jnp.sum(acc * acc, axis=0, keepdims=True).reshape(1, 1, C_out)


def bn_conv2_stats_kernel(y1_ref, scale_ref, shift_ref, w_ref,
                          y2_ref, s_ref, ss_ref, pad_ref, acc_ref,
                          *, H, W, C_out):
    """BN1+ReLU (folded per-channel affine) -> conv2 -> BN2 partial stats."""
    h = y1_ref[...].reshape(H * W, C_out)
    h = jnp.maximum(h * scale_ref[...] + shift_ref[...], 0.0)    # BN1 + ReLU
    _zero_border(pad_ref, H, W, C_out)
    pad_ref[1:H + 1, 1:W + 1, :] = h.reshape(H, W, C_out)
    _conv3x3(pad_ref, w_ref, acc_ref, H, W, C_out)
    acc = acc_ref[...]
    y2_ref[...] = acc.reshape(1, H, W, C_out)
    s_ref[...] = jnp.sum(acc, axis=0, keepdims=True).reshape(1, 1, C_out)
    ss_ref[...] = jnp.sum(acc * acc, axis=0, keepdims=True).reshape(1, 1, C_out)


def bn_relu_kernel(y_ref, scale_ref, shift_ref, o_ref, *, H, W, C_out):
    """Final BN2+ReLU with folded per-channel affine; emits (C, H*W) slab.

    Output is written channel-major with the full H*W spatial extent on the
    lane axis (256 lanes here), so stores are unmasked and the wrapper only
    needs a free reshape back to (N, C, H, W) -- no post-kernel transpose.
    """
    y = y_ref[...].reshape(H * W, C_out)
    o = jnp.maximum(y * scale_ref[...] + shift_ref[...], 0.0)    # (H*W, C_out)
    o_ref[...] = o.T.reshape(1, C_out, H * W)                    # lane-dense NCHW


# --------------------------------------------------------------------------
# Wrapper
# --------------------------------------------------------------------------
def _fold_bn(sum_n1c, sumsq_n1c, gamma, beta, count):
    """Fold training-mode BatchNorm (biased batch var) into scale/shift."""
    c = sum_n1c.shape[-1]
    total = jnp.sum(sum_n1c, axis=0)          # (1, C)
    total_sq = jnp.sum(sumsq_n1c, axis=0)     # (1, C)
    mean = total / count
    var = jnp.maximum(total_sq / count - mean * mean, 0.0)
    scale = gamma.reshape(1, c).astype(jnp.float32) * jax.lax.rsqrt(var + EPS)
    shift = beta.reshape(1, c).astype(jnp.float32) - mean * scale
    return scale, shift


@jax.jit
def double_conv(x_nchw, w1_oihw, g1, b1, w2_oihw, g2, b2):
    """DoubleConv forward. x_nchw: (N, C_in, H, W) -> (N, C_out, H, W)."""
    N, C_in, H, W = x_nchw.shape
    C_out = w1_oihw.shape[0]
    f32 = jnp.float32

    # Layout glue only (no padding copy): NCHW -> NHWC, OIHW -> (tap, Cin, Cout).
    x = jnp.transpose(x_nchw, (0, 2, 3, 1)).astype(f32)
    w1 = jnp.transpose(w1_oihw, (2, 3, 1, 0)).reshape(9, C_in, C_out).astype(f32)
    w2 = jnp.transpose(w2_oihw, (2, 3, 1, 0)).reshape(9, C_out, C_out).astype(f32)

    cp = pltpu.CompilerParams(dimension_semantics=("parallel",),
                              vmem_limit_bytes=VMEM_LIMIT)
    count = jnp.asarray(N * H * W, f32)

    img_in = pl.BlockSpec((1, H, W, C_in), lambda n: (n, 0, 0, 0))
    img_mid = pl.BlockSpec((1, H, W, C_out), lambda n: (n, 0, 0, 0))
    img_out = pl.BlockSpec((1, C_out, H * W), lambda n: (n, 0, 0))
    stat = pl.BlockSpec((1, 1, C_out), lambda n: (n, 0, 0))
    chan = pl.BlockSpec((1, C_out), lambda n: (0, 0))
    w1_spec = pl.BlockSpec((9, C_in, C_out), lambda n: (0, 0, 0))
    w2_spec = pl.BlockSpec((9, C_out, C_out), lambda n: (0, 0, 0))

    # ---- pass 1: conv1 + BN1 partial stats --------------------------------
    y1, s1, ss1 = pl.pallas_call(
        functools.partial(conv1_stats_kernel, H=H, W=W, C_in=C_in, C_out=C_out),
        grid=(N,),
        in_specs=[img_in, w1_spec],
        out_specs=(img_mid, stat, stat),
        out_shape=(jax.ShapeDtypeStruct((N, H, W, C_out), f32),
                   jax.ShapeDtypeStruct((N, 1, C_out), f32),
                   jax.ShapeDtypeStruct((N, 1, C_out), f32)),
        scratch_shapes=[pltpu.VMEM((H + 2, W + 2, C_in), f32),
                        pltpu.VMEM((H * W, C_out), f32)],
        compiler_params=cp,
    )(x, w1)
    scale1, shift1 = _fold_bn(s1, ss1, g1, b1, count)

    # ---- pass 2: BN1+ReLU -> conv2 + BN2 partial stats ---------------------
    y2, s2, ss2 = pl.pallas_call(
        functools.partial(bn_conv2_stats_kernel, H=H, W=W, C_out=C_out),
        grid=(N,),
        in_specs=[img_mid, chan, chan, w2_spec],
        out_specs=(img_mid, stat, stat),
        out_shape=(jax.ShapeDtypeStruct((N, H, W, C_out), f32),
                   jax.ShapeDtypeStruct((N, 1, C_out), f32),
                   jax.ShapeDtypeStruct((N, 1, C_out), f32)),
        scratch_shapes=[pltpu.VMEM((H + 2, W + 2, C_out), f32),
                        pltpu.VMEM((H * W, C_out), f32)],
        compiler_params=cp,
    )(y1, scale1, shift1, w2)
    scale2, shift2 = _fold_bn(s2, ss2, g2, b2, count)

    # ---- pass 3: BN2 + ReLU, lane-dense NCHW output -------------------------
    out_flat = pl.pallas_call(
        functools.partial(bn_relu_kernel, H=H, W=W, C_out=C_out),
        grid=(N,),
        in_specs=[img_mid, chan, chan],
        out_specs=img_out,
        out_shape=jax.ShapeDtypeStruct((N, C_out, H * W), f32),
        compiler_params=cp,
    )(y2, scale2, shift2)

    # Free reshape back to PyTorch's NCHW (no transpose needed).
    return out_flat.reshape(N, C_out, H, W)


# --------------------------------------------------------------------------
# Pure-JAX reference (matches PyTorch training-mode forward) + test
# --------------------------------------------------------------------------
def _reference(x_nchw, w1_oihw, g1, b1, w2_oihw, g2, b2):
    def conv(x, w):
        return jax.lax.conv_general_dilated(
            x, w, window_strides=(1, 1), padding=((1, 1), (1, 1)),
            dimension_numbers=("NCHW", "OIHW", "NCHW"))

    def bn_relu(x, g, b):
        mean = jnp.mean(x, axis=(0, 2, 3), keepdims=True)
        var = jnp.mean((x - mean) ** 2, axis=(0, 2, 3), keepdims=True)
        y = (x - mean) * jax.lax.rsqrt(var + EPS)
        y = y * g.reshape(1, -1, 1, 1) + b.reshape(1, -1, 1, 1)
        return jnp.maximum(y, 0.0)

    h = bn_relu(conv(x_nchw, w1_oihw), g1, b1)
    return bn_relu(conv(h, w2_oihw), g2, b2)


if __name__ == "__main__":
    N, C_in, C_out, H, W = 2, 4, 8, 16, 16

    key = jax.random.PRNGKey(0)
    kx, kw1, kw2, kg1, kb1, kg2, kb2 = jax.random.split(key, 7)

    x = jax.random.normal(kx, (N, C_in, H, W), jnp.float32)
    # Conv2d weights (PyTorch OIHW), bias=False
    w1 = jax.random.normal(kw1, (C_out, C_in, 3, 3), jnp.float32) * 0.2
    w2 = jax.random.normal(kw2, (C_out, C_out, 3, 3), jnp.float32) * 0.2
    # BatchNorm affine params (deterministic, non-trivial)
    g1 = 1.0 + 0.1 * jax.random.normal(kg1, (C_out,), jnp.float32)
    b1 = 0.1 * jax.random.normal(kb1, (C_out,), jnp.float32)
    g2 = 1.0 + 0.1 * jax.random.normal(kg2, (C_out,), jnp.float32)
    b2 = 0.1 * jax.random.normal(kb2, (C_out,), jnp.float32)

    out = jax.block_until_ready(double_conv(x, w1, g1, b1, w2, g2, b2))

    ref = _reference(x, w1, g1, b1, w2, g2, b2)
    assert out.shape == (N, C_out, H, W)
    max_err = float(jnp.max(jnp.abs(out - ref)))
    assert jnp.allclose(out, ref, atol=1e-4, rtol=1e-4), max_err

    print("KERNEL_OK")
</pallas_src>

<mosaic_0001>
module attributes {stable_mosaic.version = 11 : i64} {
  func.func @conv1_stats_kernel(%arg0: i32, %arg1: memref<1x16x16x4xf32, #tpu.memory_space<vmem>>, %arg2: memref<9x4x8xf32, #tpu.memory_space<vmem>>, %arg3: memref<1x16x16x8xf32, #tpu.memory_space<vmem>>, %arg4: memref<1x1x8xf32, #tpu.memory_space<vmem>>, %arg5: memref<1x1x8xf32, #tpu.memory_space<vmem>>, %arg6: memref<18x18x4xf32, #tpu.memory_space<vmem>>, %arg7: memref<256x8xf32, #tpu.memory_space<vmem>>) attributes {dimension_semantics = [#tpu.dimension_semantics<parallel>], iteration_bounds = array<i64: 2>, scalar_prefetch = 0 : i64, scratch_operands = 2 : i64, tpu.core_type = #tpu.core_type<tc>, window_params = [{transform_indices = @transform_0, window_bounds = array<i64: 1, 16, 16, 4>}, {pipeline_mode = #tpu.pipeline_mode<synchronous>, transform_indices = @transform_1, window_bounds = array<i64: 9, 4, 8>}, {transform_indices = @transform_2, window_bounds = array<i64: 1, 16, 16, 8>}, {transform_indices = @transform_3, window_bounds = array<i64: 1, 1, 8>}, {transform_indices = @transform_4, window_bounds = array<i64: 1, 1, 8>}]} {
    %cst = arith.constant 0.000000e+00 : f32
    %0 = vector.broadcast %cst : f32 to vector<1x18x4xf32>
    %c0 = arith.constant 0 : index
    %c0_0 = arith.constant 0 : index
    %c0_1 = arith.constant 0 : index
    %1 = vector.load %arg6[%c0, %c0_0, %c0_1] : memref<18x18x4xf32, #tpu.memory_space<vmem>>, vector<1x18x4xf32>
    tpu.vector_store %arg6[%c0, %c0_0, %c0_1], %0 {strides = array<i32>} : memref<18x18x4xf32, #tpu.memory_space<vmem>>, vector<1x18x4xf32>,
    %cst_2 = arith.constant 0.000000e+00 : f32
    %2 = vector.broadcast %cst_2 : f32 to vector<1x18x4xf32>
    %c17 = arith.constant 17 : index
    %c0_3 = arith.constant 0 : index
    %c0_4 = arith.constant 0 : index
    %3 = vector.load %arg6[%c17, %c0_3, %c0_4] : memref<18x18x4xf32, #tpu.memory_space<vmem>>, vector<1x18x4xf32>
    tpu.vector_store %arg6[%c17, %c0_3, %c0_4], %2 {strides = array<i32>} : memref<18x18x4xf32, #tpu.memory_space<vmem>>, vector<1x18x4xf32>,
    %cst_5 = arith.constant 0.000000e+00 : f32
    %4 = vector.broadcast %cst_5 : f32 to vector<16x1x4xf32>
    %c1 = arith.constant 1 : index
    %c0_6 = arith.constant 0 : index
    %c0_7 = arith.constant 0 : index
    %5 = vector.load %arg6[%c1, %c0_6, %c0_7] : memref<18x18x4xf32, #tpu.memory_space<vmem>>, vector<16x1x4xf32>
    tpu.vector_store %arg6[%c1, %c0_6, %c0_7], %4 {strides = array<i32>} : memref<18x18x4xf32, #tpu.memory_space<vmem>>, vector<16x1x4xf32>,
    %cst_8 = arith.constant 0.000000e+00 : f32
    %6 = vector.broadcast %cst_8 : f32 to vector<16x1x4xf32>
    %c1_9 = arith.constant 1 : index
    %c17_10 = arith.constant 17 : index
    %c0_11 = arith.constant 0 : index
    %7 = vector.load %arg6[%c1_9, %c17_10, %c0_11] : memref<18x18x4xf32, #tpu.memory_space<vmem>>, vector<16x1x4xf32>
    tpu.vector_store %arg6[%c1_9, %c17_10, %c0_11], %6 {strides = array<i32>} : memref<18x18x4xf32, #tpu.memory_space<vmem>>, vector<16x1x4xf32>,
    %c0_12 = arith.constant 0 : index
    %c0_13 = arith.constant 0 : index
    %c0_14 = arith.constant 0 : index
    %c0_15 = arith.constant 0 : index
    %8 = vector.load %arg1[%c0_12, %c0_13, %c0_14, %c0_15] : memref<1x16x16x4xf32, #tpu.memory_space<vmem>>, vector<1x16x16x4xf32>
    %9 = vector.shape_cast %8 : vector<1x16x16x4xf32> to vector<16x16x4xf32>
    %c1_16 = arith.constant 1 : index
    %c1_17 = arith.constant 1 : index
    %c0_18 = arith.constant 0 : index
    %10 = vector.load %arg6[%c1_16, %c1_17, %c0_18] : memref<18x18x4xf32, #tpu.memory_space<vmem>>, vector<16x16x4xf32>
    tpu.vector_store %arg6[%c1_16, %c1_17, %c0_18], %9 {strides = array<i32>} : memref<18x18x4xf32, #tpu.memory_space<vmem>>, vector<16x16x4xf32>,
    %c0_19 = arith.constant 0 : index
    %c0_20 = arith.constant 0 : index
    %c0_21 = arith.constant 0 : index
    %11 = vector.load %arg6[%c0_19, %c0_20, %c0_21] : memref<18x18x4xf32, #tpu.memory_space<vmem>>, vector<16x16x4xf32>
    %12 = vector.shape_cast %11 : vector<16x16x4xf32> to vector<256x4xf32>
    %c0_22 = arith.constant 0 : index
    %c0_23 = arith.constant 0 : index
    %c0_24 = arith.constant 0 : index
    %13 = vector.load %arg2[%c0_22, %c0_23, %c0_24] : memref<9x4x8xf32, #tpu.memory_space<vmem>>, vector<1x4x8xf32>
    %14 = vector.shape_cast %13 : vector<1x4x8xf32> to vector<4x8xf32>
    %cst_25 = arith.constant dense<0.000000e+00> : vector<256x8xf32>
    %15 = tpu.matmul %12, %14, %cst_25 {dimension_numbers = #tpu.dot_dimension_numbers<[1], [0], [0], [1], [0, 0, 1, 1], [], []>} : vector<256x4xf32>, vector<4x8xf32>, vector<256x8xf32> -> vector<256x8xf32>
    %c0_26 = arith.constant 0 : index
    %c0_27 = arith.constant 0 : index
    %16 = vector.load %arg7[%c0_26, %c0_27] : memref<256x8xf32, #tpu.memory_space<vmem>>, vector<256x8xf32>
    tpu.vector_store %arg7[%c0_26, %c0_27], %15 {strides = array<i32>} : memref<256x8xf32, #tpu.memory_space<vmem>>, vector<256x8xf32>,
    %c0_28 = arith.constant 0 : index
    %c1_29 = arith.constant 1 : index
    %c0_30 = arith.constant 0 : index
    %17 = vector.load %arg6[%c0_28, %c1_29, %c0_30] : memref<18x18x4xf32, #tpu.memory_space<vmem>>, vector<16x16x4xf32>
    %18 = vector.shape_cast %17 : vector<16x16x4xf32> to vector<256x4xf32>
    %c1_31 = arith.constant 1 : index
    %c0_32 = arith.constant 0 : index
    %c0_33 = arith.constant 0 : index
    %19 = vector.load %arg2[%c1_31, %c0_32, %c0_33] : memref<9x4x8xf32, #tpu.memory_space<vmem>>, vector<1x4x8xf32>
    %20 = vector.shape_cast %19 : vector<1x4x8xf32> to vector<4x8xf32>
    %cst_34 = arith.constant dense<0.000000e+00> : vector<256x8xf32>
    %21 = tpu.matmul %18, %20, %cst_34 {dimension_numbers = #tpu.dot_dimension_numbers<[1], [0], [0], [1], [0, 0, 1, 1], [], []>} : vector<256x4xf32>, vector<4x8xf32>, vector<256x8xf32> -> vector<256x8xf32>
    %c0_35 = arith.constant 0 : index
    %c0_36 = arith.constant 0 : index
    %22 = vector.load %arg7[%c0_35, %c0_36] : memref<256x8xf32, #tpu.memory_space<vmem>>, vector<256x8xf32>
    %23 = arith.addf %22, %21 : vector<256x8xf32>
    %c0_37 = arith.constant 0 : index
    %c0_38 = arith.constant 0 : index
    %24 = vector.load %arg7[%c0_37, %c0_38] : memref<256x8xf32, #tpu.memory_space<vmem>>, vector<256x8xf32>
    tpu.vector_store %arg7[%c0_37, %c0_38], %23 {strides = array<i32>} : memref<256x8xf32, #tpu.memory_space<vmem>>, vector<256x8xf32>,
    %c0_39 = arith.constant 0 : index
    %c2 = arith.constant 2 : index
    %c0_40 = arith.constant 0 : index
    %25 = vector.load %arg6[%c0_39, %c2, %c0_40] : memref<18x18x4xf32, #tpu.memory_space<vmem>>, vector<16x16x4xf32>
    %26 = vector.shape_cast %25 : vector<16x16x4xf32> to vector<256x4xf32>
    %c2_41 = arith.constant 2 : index
    %c0_42 = arith.constant 0 : index
    %c0_43 = arith.constant 0 : index
    %27 = vector.load %arg2[%c2_41, %c0_42, %c0_43] : memref<9x4x8xf32, #tpu.memory_space<vmem>>, vector<1x4x8xf32>
    %28 = vector.shape_cast %27 : vector<1x4x8xf32> to vector<4x8xf32>
    %cst_44 = arith.constant dense<0.000000e+00> : vector<256x8xf32>
    %29 = tpu.matmul %26, %28, %cst_44 {dimension_numbers = #tpu.dot_dimension_numbers<[1], [0], [0], [1], [0, 0, 1, 1], [], []>} : vector<256x4xf32>, vector<4x8xf32>, vector<256x8xf32> -> vector<256x8xf32>
    %c0_45 = arith.constant 0 : index
    %c0_46 = arith.constant 0 : index
    %30 = vector.load %arg7[%c0_45, %c0_46] : memref<256x8xf32, #tpu.memory_space<vmem>>, vector<256x8xf32>
    %31 = arith.addf %30, %29 : vector<256x8xf32>
    %c0_47 = arith.constant 0 : index
    %c0_48 = arith.constant 0 : index
    %32 = vector.load %arg7[%c0_47, %c0_48] : memref<256x8xf32, #tpu.memory_space<vmem>>, vector<256x8xf32>
    tpu.vector_store %arg7[%c0_47, %c0_48], %31 {strides = array<i32>} : memref<256x8xf32, #tpu.memory_space<vmem>>, vector<256x8xf32>,
    %c1_49 = arith.constant 1 : index
    %c0_50 = arith.constant 0 : index
    %c0_51 = arith.constant 0 : index
    %33 = vector.load %arg6[%c1_49, %c0_50, %c0_51] : memref<18x18x4xf32, #tpu.memory_space<vmem>>, vector<16x16x4xf32>
    %34 = vector.shape_cast %33 : vector<16x16x4xf32> to vector<256x4xf32>
    %c3 = arith.constant 3 : index
    %c0_52 = arith.constant 0 : index
    %c0_53 = arith.constant 0 : index
    %35 = vector.load %arg2[%c3, %c0_52, %c0_53] : memref<9x4x8xf32, #tpu.memory_space<vmem>>, vector<1x4x8xf32>
    %36 = vector.shape_cast %35 : vector<1x4x8xf32> to vector<4x8xf32>
    %cst_54 = arith.constant dense<0.000000e+00> : vector<256x8xf32>
    %37 = tpu.matmul %34, %36, %cst_54 {dimension_numbers = #tpu.dot_dimension_numbers<[1], [0], [0], [1], [0, 0, 1, 1], [], []>} : vector<256x4xf32>, vector<4x8xf32>, vector<256x8xf32> -> vector<256x8xf32>
    %c0_55 = arith.constant 0 : index
    %c0_56 = arith.constant 0 : index
    %38 = vector.load %arg7[%c0_55, %c0_56] : memref<256x8xf32, #tpu.memory_space<vmem>>, vector<256x8xf32>
    %39 = arith.addf %38, %37 : vector<256x8xf32>
    %c0_57 = arith.constant 0 : index
    %c0_58 = arith.constant 0 : index
    %40 = vector.load %arg7[%c0_57, %c0_58] : memref<256x8xf32, #tpu.memory_space<vmem>>, vector<256x8xf32>
    tpu.vector_store %arg7[%c0_57, %c0_58], %39 {strides = array<i32>} : memref<256x8xf32, #tpu.memory_space<vmem>>, vector<256x8xf32>,
    %c1_59 = arith.constant 1 : index
    %c1_60 = arith.constant 1 : index
    %c0_61 = arith.constant 0 : index
    %41 = vector.load %arg6[%c1_59, %c1_60, %c0_61] : memref<18x18x4xf32, #tpu.memory_space<vmem>>, vector<16x16x4xf32>
    %42 = vector.shape_cast %41 : vector<16x16x4xf32> to vector<256x4xf32>
    %c4 = arith.constant 4 : index
    %c0_62 = arith.constant 0 : index
    %c0_63 = arith.constant 0 : index
    %43 = vector.load %arg2[%c4, %c0_62, %c0_63] : memref<9x4x8xf32, #tpu.memory_space<vmem>>, vector<1x4x8xf32>
    %44 = vector.shape_cast %43 : vector<1x4x8xf32> to vector<4x8xf32>
    %cst_64 = arith.constant dense<0.000000e+00> : vector<256x8xf32>
    %45 = tpu.matmul %42, %44, %cst_64 {dimension_numbers = #tpu.dot_dimension_numbers<[1], [0], [0], [1], [0, 0, 1, 1], [], []>} : vector<256x4xf32>, vector<4x8xf32>, vector<256x8xf32> -> vector<256x8xf32>
    %c0_65 = arith.constant 0 : index
    %c0_66 = arith.constant 0 : index
    %46 = vector.load %arg7[%c0_65, %c0_66] : memref<256x8xf32, #tpu.memory_space<vmem>>, vector<256x8xf32>
    %47 = arith.addf %46, %45 : vector<256x8xf32>
    %c0_67 = arith.constant 0 : index
    %c0_68 = arith.constant 0 : index
    %48 = vector.load %arg7[%c0_67, %c0_68] : memref<256x8xf32, #tpu.memory_space<vmem>>, vector<256x8xf32>
    tpu.vector_store %arg7[%c0_67, %c0_68], %47 {strides = array<i32>} : memref<256x8xf32, #tpu.memory_space<vmem>>, vector<256x8xf32>,
    %c1_69 = arith.constant 1 : index
    %c2_70 = arith.constant 2 : index
    %c0_71 = arith.constant 0 : index
    %49 = vector.load %arg6[%c1_69, %c2_70, %c0_71] : memref<18x18x4xf32, #tpu.memory_space<vmem>>, vector<16x16x4xf32>
    %50 = vector.shape_cast %49 : vector<16x16x4xf32> to vector<256x4xf32>
    %c5 = arith.constant 5 : index
    %c0_72 = arith.constant 0 : index
    %c0_73 = arith.constant 0 : index
    %51 = vector.load %arg2[%c5, %c0_72, %c0_73] : memref<9x4x8xf32, #tpu.memory_space<vmem>>, vector<1x4x8xf32>
    %52 = vector.shape_cast %51 : vector<1x4x8xf32> to vector<4x8xf32>
    %cst_74 = arith.constant dense<0.000000e+00> : vector<256x8xf32>
    %53 = tpu.matmul %50, %52, %cst_74 {dimension_numbers = #tpu.dot_dimension_numbers<[1], [0], [0], [1], [0, 0, 1, 1], [], []>} : vector<256x4xf32>, vector<4x8xf32>, vector<256x8xf32> -> vector<256x8xf32>
    %c0_75 = arith.constant 0 : index
    %c0_76 = arith.constant 0 : index
    %54 = vector.load %arg7[%c0_75, %c0_76] : memref<256x8xf32, #tpu.memory_space<vmem>>, vector<256x8xf32>
    %55 = arith.addf %54, %53 : vector<256x8xf32>
    %c0_77 = arith.constant 0 : index
    %c0_78 = arith.constant 0 : index
    %56 = vector.load %arg7[%c0_77, %c0_78] : memref<256x8xf32, #tpu.memory_space<vmem>>, vector<256x8xf32>
    tpu.vector_store %arg7[%c0_77, %c0_78], %55 {strides = array<i32>} : memref<256x8xf32, #tpu.memory_space<vmem>>, vector<256x8xf32>,
    %c2_79 = arith.constant 2 : index
    %c0_80 = arith.constant 0 : index
    %c0_81 = arith.constant 0 : index
    %57 = vector.load %arg6[%c2_79, %c0_80, %c0_81] : memref<18x18x4xf32, #tpu.memory_space<vmem>>, vector<16x16x4xf32>
    %58 = vector.shape_cast %57 : vector<16x16x4xf32> to vector<256x4xf32>
    %c6 = arith.constant 6 : index
    %c0_82 = arith.constant 0 : index
    %c0_83 = arith.constant 0 : index
    %59 = vector.load %arg2[%c6, %c0_82, %c0_83] : memref<9x4x8xf32, #tpu.memory_space<vmem>>, vector<1x4x8xf32>
    %60 = vector.shape_cast %59 : vector<1x4x8xf32> to vector<4x8xf32>
    %cst_84 = arith.constant dense<0.000000e+00> : vector<256x8xf32>
    %61 = tpu.matmul %58, %60, %cst_84 {dimension_numbers = #tpu.dot_dimension_numbers<[1], [0], [0], [1], [0, 0, 1, 1], [], []>} : vector<256x4xf32>, vector<4x8xf32>, vector<256x8xf32> -> vector<256x8xf32>
    %c0_85 = arith.constant 0 : index
    %c0_86 = arith.constant 0 : index
    %62 = vector.load %arg7[%c0_85, %c0_86] : memref<256x8xf32, #tpu.memory_space<vmem>>, vector<256x8xf32>
    %63 = arith.addf %62, %61 : vector<256x8xf32>
    %c0_87 = arith.constant 0 : index
    %c0_88 = arith.constant 0 : index
    %64 = vector.load %arg7[%c0_87, %c0_88] : memref<256x8xf32, #tpu.memory_space<vmem>>, vector<256x8xf32>
    tpu.vector_store %arg7[%c0_87, %c0_88], %63 {strides = array<i32>} : memref<256x8xf32, #tpu.memory_space<vmem>>, vector<256x8xf32>,
    %c2_89 = arith.constant 2 : index
    %c1_90 = arith.constant 1 : index
    %c0_91 = arith.constant 0 : index
    %65 = vector.load %arg6[%c2_89, %c1_90, %c0_91] : memref<18x18x4xf32, #tpu.memory_space<vmem>>, vector<16x16x4xf32>
    %66 = vector.shape_cast %65 : vector<16x16x4xf32> to vector<256x4xf32>
    %c7 = arith.constant 7 : index
    %c0_92 = arith.constant 0 : index
    %c0_93 = arith.constant 0 : index
    %67 = vector.load %arg2[%c7, %c0_92, %c0_93] : memref<9x4x8xf32, #tpu.memory_space<vmem>>, vector<1x4x8xf32>
    %68 = vector.shape_cast %67 : vector<1x4x8xf32> to vector<4x8xf32>
    %cst_94 = arith.constant dense<0.000000e+00> : vector<256x8xf32>
    %69 = tpu.matmul %66, %68, %cst_94 {dimension_numbers = #tpu.dot_dimension_numbers<[1], [0], [0], [1], [0, 0, 1, 1], [], []>} : vector<256x4xf32>, vector<4x8xf32>, vector<256x8xf32> -> vector<256x8xf32>
    %c0_95 = arith.constant 0 : index
    %c0_96 = arith.constant 0 : index
    %70 = vector.load %arg7[%c0_95, %c0_96] : memref<256x8xf32, #tpu.memory_space<vmem>>, vector<256x8xf32>
    %71 = arith.addf %70, %69 : vector<256x8xf32>
    %c0_97 = arith.constant 0 : index
    %c0_98 = arith.constant 0 : index
    %72 = vector.load %arg7[%c0_97, %c0_98] : memref<256x8xf32, #tpu.memory_space<vmem>>, vector<256x8xf32>
    tpu.vector_store %arg7[%c0_97, %c0_98], %71 {strides = array<i32>} : memref<256x8xf32, #tpu.memory_space<vmem>>, vector<256x8xf32>,
    %c2_99 = arith.constant 2 : index
    %c2_100 = arith.constant 2 : index
    %c0_101 = arith.constant 0 : index
    %73 = vector.load %arg6[%c2_99, %c2_100, %c0_101] : memref<18x18x4xf32, #tpu.memory_space<vmem>>, vector<16x16x4xf32>
    %74 = vector.shape_cast %73 : vector<16x16x4xf32> to vector<256x4xf32>
    %c8 = arith.constant 8 : index
    %c0_102 = arith.constant 0 : index
    %c0_103 = arith.constant 0 : index
    %75 = vector.load %arg2[%c8, %c0_102, %c0_103] : memref<9x4x8xf32, #tpu.memory_space<vmem>>, vector<1x4x8xf32>
    %76 = vector.shape_cast %75 : vector<1x4x8xf32> to vector<4x8xf32>
    %cst_104 = arith.constant dense<0.000000e+00> : vector<256x8xf32>
    %77 = tpu.matmul %74, %76, %cst_104 {dimension_numbers = #tpu.dot_dimension_numbers<[1], [0], [0], [1], [0, 0, 1, 1], [], []>} : vector<256x4xf32>, vector<4x8xf32>, vector<256x8xf32> -> vector<256x8xf32>
    %c0_105 = arith.constant 0 : index
    %c0_106 = arith.constant 0 : index
    %78 = vector.load %arg7[%c0_105, %c0_106] : memref<256x8xf32, #tpu.memory_space<vmem>>, vector<256x8xf32>
    %79 = arith.addf %78, %77 : vector<256x8xf32>
    %c0_107 = arith.constant 0 : index
    %c0_108 = arith.constant 0 : index
    %80 = vector.load %arg7[%c0_107, %c0_108] : memref<256x8xf32, #tpu.memory_space<vmem>>, vector<256x8xf32>
    tpu.vector_store %arg7[%c0_107, %c0_108], %79 {strides = array<i32>} : memref<256x8xf32, #tpu.memory_space<vmem>>, vector<256x8xf32>,
    %c0_109 = arith.constant 0 : index
    %c0_110 = arith.constant 0 : index
    %81 = vector.load %arg7[%c0_109, %c0_110] : memref<256x8xf32, #tpu.memory_space<vmem>>, vector<256x8xf32>
    %82 = vector.shape_cast %81 : vector<256x8xf32> to vector<1x16x16x8xf32>
    %c0_111 = arith.constant 0 : index
    %c0_112 = arith.constant 0 : index
    %c0_113 = arith.constant 0 : index
    %c0_114 = arith.constant 0 : index
    %83 = vector.load %arg3[%c0_111, %c0_112, %c0_113, %c0_114] : memref<1x16x16x8xf32, #tpu.memory_space<vmem>>, vector<1x16x16x8xf32>
    tpu.vector_store %arg3[%c0_111, %c0_112, %c0_113, %c0_114], %82 {strides = array<i32>} : memref<1x16x16x8xf32, #tpu.memory_space<vmem>>, vector<1x16x16x8xf32>,
    %cst_115 = arith.constant dense<0.000000e+00> : vector<8xf32>
    %84 = vector.multi_reduction <add>, %81, %cst_115 [0] : vector<256x8xf32> to vector<8xf32>
    %85 = vector.shape_cast %84 : vector<8xf32> to vector<1x8xf32>
    %86 = vector.shape_cast %85 : vector<1x8xf32> to vector<1x1x8xf32>
    %c0_116 = arith.constant 0 : index
    %c0_117 = arith.constant 0 : index
    %c0_118 = arith.constant 0 : index
    %87 = vector.load %arg4[%c0_116, %c0_117, %c0_118] : memref<1x1x8xf32, #tpu.memory_space<vmem>>, vector<1x1x8xf32>
    tpu.vector_store %arg4[%c0_116, %c0_117, %c0_118], %86 {strides = array<i32>} : memref<1x1x8xf32, #tpu.memory_space<vmem>>, vector<1x1x8xf32>,
    %88 = arith.mulf %81, %81 : vector<256x8xf32>
    %cst_119 = arith.constant dense<0.000000e+00> : vector<8xf32>
    %89 = vector.multi_reduction <add>, %88, %cst_119 [0] : vector<256x8xf32> to vector<8xf32>
    %90 = vector.shape_cast %89 : vector<8xf32> to vector<1x8xf32>
    %91 = vector.shape_cast %90 : vector<1x8xf32> to vector<1x1x8xf32>
    %c0_120 = arith.constant 0 : index
    %c0_121 = arith.constant 0 : index
    %c0_122 = arith.constant 0 : index
    %92 = vector.load %arg5[%c0_120, %c0_121, %c0_122] : memref<1x1x8xf32, #tpu.memory_space<vmem>>, vector<1x1x8xf32>
    tpu.vector_store %arg5[%c0_120, %c0_121, %c0_122], %91 {strides = array<i32>} : memref<1x1x8xf32, #tpu.memory_space<vmem>>, vector<1x1x8xf32>,
    return
  }
  func.func @transform_0(%arg0: i32) -> (i32, i32, i32, i32) {
    %c0_i32 = arith.constant 0 : i32
    %c0_i32_0 = arith.constant 0 : i32
    %c0_i32_1 = arith.constant 0 : i32
    %c0_i32_2 = arith.constant 0 : i32
    return %arg0, %c0_i32, %c0_i32_0, %c0_i32_1 : i32, i32, i32, i32
  }
  func.func @transform_1(%arg0: i32) -> (i32, i32, i32) {
    %c0_i32 = arith.constant 0 : i32
    %c0_i32_0 = arith.constant 0 : i32
    %c0_i32_1 = arith.constant 0 : i32
    %c0_i32_2 = arith.constant 0 : i32
    return %c0_i32, %c0_i32_0, %c0_i32_1 : i32, i32, i32
  }
  func.func @transform_2(%arg0: i32) -> (i32, i32, i32, i32) {
    %c0_i32 = arith.constant 0 : i32
    %c0_i32_0 = arith.constant 0 : i32
    %c0_i32_1 = arith.constant 0 : i32
    %c0_i32_2 = arith.constant 0 : i32
    return %arg0, %c0_i32, %c0_i32_0, %c0_i32_1 : i32, i32, i32, i32
  }
  func.func @transform_3(%arg0: i32) -> (i32, i32, i32) {
    %c0_i32 = arith.constant 0 : i32
    %c0_i32_0 = arith.constant 0 : i32
    %c0_i32_1 = arith.constant 0 : i32
    return %arg0, %c0_i32, %c0_i32_0 : i32, i32, i32
  }
  func.func @transform_4(%arg0: i32) -> (i32, i32, i32) {
    %c0_i32 = arith.constant 0 : i32
    %c0_i32_0 = arith.constant 0 : i32
    %c0_i32_1 = arith.constant 0 : i32
    return %arg0, %c0_i32, %c0_i32_0 : i32, i32, i32
  }
}

module attributes {stable_mosaic.version = 11 : i64} {
  func.func @bn_relu_kernel(%arg0: i32, %arg1: memref<1x16x16x8xf32, #tpu.memory_space<vmem>>, %arg2: memref<1x8xf32, #tpu.memory_space<vmem>>, %arg3: memref<1x8xf32, #tpu.memory_space<vmem>>, %arg4: memref<1x8x256xf32, #tpu.memory_space<vmem>>) attributes {dimension_semantics = [#tpu.dimension_semantics<parallel>], iteration_bounds = array<i64: 2>, scalar_prefetch = 0 : i64, scratch_operands = 0 : i64, tpu.core_type = #tpu.core_type<tc>, window_params = [{transform_indices = @transform_0, window_bounds = array<i64: 1, 16, 16, 8>}, {pipeline_mode = #tpu.pipeline_mode<synchronous>, transform_indices = @transform_1, window_bounds = array<i64: 1, 8>}, {pipeline_mode = #tpu.pipeline_mode<synchronous>, transform_indices = @transform_2, window_bounds = array<i64: 1, 8>}, {transform_indices = @transform_3, window_bounds = array<i64: 1, 8, 256>}]} {
    %c0 = arith.constant 0 : index
    %c0_0 = arith.constant 0 : index
    %c0_1 = arith.constant 0 : index
    %c0_2 = arith.constant 0 : index
    %0 = vector.load %arg1[%c0, %c0_0, %c0_1, %c0_2] : memref<1x16x16x8xf32, #tpu.memory_space<vmem>>, vector<1x16x16x8xf32>
    %1 = vector.shape_cast %0 : vector<1x16x16x8xf32> to vector<256x8xf32>
    %c0_3 = arith.constant 0 : index
    %c0_4 = arith.constant 0 : index
    %2 = vector.load %arg2[%c0_3, %c0_4] : memref<1x8xf32, #tpu.memory_space<vmem>>, vector<1x8xf32>
    %3 = vector.broadcast %2 : vector<1x8xf32> to vector<256x8xf32>
    %4 = arith.mulf %1, %3 : vector<256x8xf32>
    %c0_5 = arith.constant 0 : index
    %c0_6 = arith.constant 0 : index
    %5 = vector.load %arg3[%c0_5, %c0_6] : memref<1x8xf32, #tpu.memory_space<vmem>>, vector<1x8xf32>
    %6 = vector.broadcast %5 : vector<1x8xf32> to vector<256x8xf32>
    %7 = arith.addf %4, %6 : vector<256x8xf32>
    %cst = arith.constant 0.000000e+00 : f32
    %8 = vector.broadcast %cst : f32 to vector<256x8xf32>
    %9 = arith.maximumf %7, %8 : vector<256x8xf32>
    %10 = tpu.transpose %9, [1, 0] : vector<256x8xf32> -> vector<8x256xf32>
    %11 = vector.shape_cast %10 : vector<8x256xf32> to vector<1x8x256xf32>
    %c0_7 = arith.constant 0 : index
    %c0_8 = arith.constant 0 : index
    %c0_9 = arith.constant 0 : index
    %12 = vector.load %arg4[%c0_7, %c0_8, %c0_9] : memref<1x8x256xf32, #tpu.memory_space<vmem>>, vector<1x8x256xf32>
    tpu.vector_store %arg4[%c0_7, %c0_8, %c0_9], %11 {strides = array<i32>} : memref<1x8x256xf32, #tpu.memory_space<vmem>>, vector<1x8x256xf32>,
    return
  }
  func.func @transform_0(%arg0: i32) -> (i32, i32, i32, i32) {
    %c0_i32 = arith.constant 0 : i32
    %c0_i32_0 = arith.constant 0 : i32
    %c0_i32_1 = arith.constant 0 : i32
    %c0_i32_2 = arith.constant 0 : i32
    return %arg0, %c0_i32, %c0_i32_0, %c0_i32_1 : i32, i32, i32, i32
  }
  func.func @transform_1(%arg0: i32) -> (i32, i32) {
    %c0_i32 = arith.constant 0 : i32
    %c0_i32_0 = arith.constant 0 : i32
    %c0_i32_1 = arith.constant 0 : i32
    return %c0_i32, %c0_i32_0 : i32, i32
  }
  func.func @transform_2(%arg0: i32) -> (i32, i32) {
    %c0_i32 = arith.constant 0 : i32
    %c0_i32_0 = arith.constant 0 : i32
    %c0_i32_1 = arith.constant 0 : i32
    return %c0_i32, %c0_i32_0 : i32, i32
  }
  func.func @transform_3(%arg0: i32) -> (i32, i32, i32) {
    %c0_i32 = arith.constant 0 : i32
    %c0_i32_0 = arith.constant 0 : i32
    %c0_i32_1 = arith.constant 0 : i32
    return %arg0, %c0_i32, %c0_i32_0 : i32, i32, i32
  }
}

module attributes {stable_mosaic.version = 11 : i64} {
  func.func @bn_conv2_stats_kernel(%arg0: i32, %arg1: memref<1x16x16x8xf32, #tpu.memory_space<vmem>>, %arg2: memref<1x8xf32, #tpu.memory_space<vmem>>, %arg3: memref<1x8xf32, #tpu.memory_space<vmem>>, %arg4: memref<9x8x8xf32, #tpu.memory_space<vmem>>, %arg5: memref<1x16x16x8xf32, #tpu.memory_space<vmem>>, %arg6: memref<1x1x8xf32, #tpu.memory_space<vmem>>, %arg7: memref<1x1x8xf32, #tpu.memory_space<vmem>>, %arg8: memref<18x18x8xf32, #tpu.memory_space<vmem>>, %arg9: memref<256x8xf32, #tpu.memory_space<vmem>>) attributes {dimension_semantics = [#tpu.dimension_semantics<parallel>], iteration_bounds = array<i64: 2>, scalar_prefetch = 0 : i64, scratch_operands = 2 : i64, tpu.core_type = #tpu.core_type<tc>, window_params = [{transform_indices = @transform_0, window_bounds = array<i64: 1, 16, 16, 8>}, {pipeline_mode = #tpu.pipeline_mode<synchronous>, transform_indices = @transform_1, window_bounds = array<i64: 1, 8>}, {pipeline_mode = #tpu.pipeline_mode<synchronous>, transform_indices = @transform_2, window_bounds = array<i64: 1, 8>}, {pipeline_mode = #tpu.pipeline_mode<synchronous>, transform_indices = @transform_3, window_bounds = array<i64: 9, 8, 8>}, {transform_indices = @transform_4, window_bounds = array<i64: 1, 16, 16, 8>}, {transform_indices = @transform_5, window_bounds = array<i64: 1, 1, 8>}, {transform_indices = @transform_6, window_bounds = array<i64: 1, 1, 8>}]} {
    %c0 = arith.constant 0 : index
    %c0_0 = arith.constant 0 : index
    %c0_1 = arith.constant 0 : index
    %c0_2 = arith.constant 0 : index
    %0 = vector.load %arg1[%c0, %c0_0, %c0_1, %c0_2] : memref<1x16x16x8xf32, #tpu.memory_space<vmem>>, vector<1x16x16x8xf32>
    %1 = vector.shape_cast %0 : vector<1x16x16x8xf32> to vector<256x8xf32>
    %c0_3 = arith.constant 0 : index
    %c0_4 = arith.constant 0 : index
    %2 = vector.load %arg2[%c0_3, %c0_4] : memref<1x8xf32, #tpu.memory_space<vmem>>, vector<1x8xf32>
    %3 = vector.broadcast %2 : vector<1x8xf32> to vector<256x8xf32>
    %4 = arith.mulf %1, %3 : vector<256x8xf32>
    %c0_5 = arith.constant 0 : index
    %c0_6 = arith.constant 0 : index
    %5 = vector.load %arg3[%c0_5, %c0_6] : memref<1x8xf32, #tpu.memory_space<vmem>>, vector<1x8xf32>
    %6 = vector.broadcast %5 : vector<1x8xf32> to vector<256x8xf32>
    %7 = arith.addf %4, %6 : vector<256x8xf32>
    %cst = arith.constant 0.000000e+00 : f32
    %8 = vector.broadcast %cst : f32 to vector<256x8xf32>
    %9 = arith.maximumf %7, %8 : vector<256x8xf32>
    %cst_7 = arith.constant 0.000000e+00 : f32
    %10 = vector.broadcast %cst_7 : f32 to vector<1x18x8xf32>
    %c0_8 = arith.constant 0 : index
    %c0_9 = arith.constant 0 : index
    %c0_10 = arith.constant 0 : index
    %11 = vector.load %arg8[%c0_8, %c0_9, %c0_10] : memref<18x18x8xf32, #tpu.memory_space<vmem>>, vector<1x18x8xf32>
    tpu.vector_store %arg8[%c0_8, %c0_9, %c0_10], %10 {strides = array<i32>} : memref<18x18x8xf32, #tpu.memory_space<vmem>>, vector<1x18x8xf32>,
    %cst_11 = arith.constant 0.000000e+00 : f32
    %12 = vector.broadcast %cst_11 : f32 to vector<1x18x8xf32>
    %c17 = arith.constant 17 : index
    %c0_12 = arith.constant 0 : index
    %c0_13 = arith.constant 0 : index
    %13 = vector.load %arg8[%c17, %c0_12, %c0_13] : memref<18x18x8xf32, #tpu.memory_space<vmem>>, vector<1x18x8xf32>
    tpu.vector_store %arg8[%c17, %c0_12, %c0_13], %12 {strides = array<i32>} : memref<18x18x8xf32, #tpu.memory_space<vmem>>, vector<1x18x8xf32>,
    %cst_14 = arith.constant 0.000000e+00 : f32
    %14 = vector.broadcast %cst_14 : f32 to vector<16x1x8xf32>
    %c1 = arith.constant 1 : index
    %c0_15 = arith.constant 0 : index
    %c0_16 = arith.constant 0 : index
    %15 = vector.load %arg8[%c1, %c0_15, %c0_16] : memref<18x18x8xf32, #tpu.memory_space<vmem>>, vector<16x1x8xf32>
    tpu.vector_store %arg8[%c1, %c0_15, %c0_16], %14 {strides = array<i32>} : memref<18x18x8xf32, #tpu.memory_space<vmem>>, vector<16x1x8xf32>,
    %cst_17 = arith.constant 0.000000e+00 : f32
    %16 = vector.broadcast %cst_17 : f32 to vector<16x1x8xf32>
    %c1_18 = arith.constant 1 : index
    %c17_19 = arith.constant 17 : index
    %c0_20 = arith.constant 0 : index
    %17 = vector.load %arg8[%c1_18, %c17_19, %c0_20] : memref<18x18x8xf32, #tpu.memory_space<vmem>>, vector<16x1x8xf32>
    tpu.vector_store %arg8[%c1_18, %c17_19, %c0_20], %16 {strides = array<i32>} : memref<18x18x8xf32, #tpu.memory_space<vmem>>, vector<16x1x8xf32>,
    %18 = vector.shape_cast %9 : vector<256x8xf32> to vector<16x16x8xf32>
    %c1_21 = arith.constant 1 : index
    %c1_22 = arith.constant 1 : index
    %c0_23 = arith.constant 0 : index
    %19 = vector.load %arg8[%c1_21, %c1_22, %c0_23] : memref<18x18x8xf32, #tpu.memory_space<vmem>>, vector<16x16x8xf32>
    tpu.vector_store %arg8[%c1_21, %c1_22, %c0_23], %18 {strides = array<i32>} : memref<18x18x8xf32, #tpu.memory_space<vmem>>, vector<16x16x8xf32>,
    %c0_24 = arith.constant 0 : index
    %c0_25 = arith.constant 0 : index
    %c0_26 = arith.constant 0 : index
    %20 = vector.load %arg8[%c0_24, %c0_25, %c0_26] : memref<18x18x8xf32, #tpu.memory_space<vmem>>, vector<16x16x8xf32>
    %21 = vector.shape_cast %20 : vector<16x16x8xf32> to vector<256x8xf32>
    %c0_27 = arith.constant 0 : index
    %c0_28 = arith.constant 0 : index
    %c0_29 = arith.constant 0 : index
    %22 = vector.load %arg4[%c0_27, %c0_28, %c0_29] : memref<9x8x8xf32, #tpu.memory_space<vmem>>, vector<1x8x8xf32>
    %23 = vector.shape_cast %22 : vector<1x8x8xf32> to vector<8x8xf32>
    %cst_30 = arith.constant dense<0.000000e+00> : vector<256x8xf32>
    %24 = tpu.matmul %21, %23, %cst_30 {dimension_numbers = #tpu.dot_dimension_numbers<[1], [0], [0], [1], [0, 0, 1, 1], [], []>} : vector<256x8xf32>, vector<8x8xf32>, vector<256x8xf32> -> vector<256x8xf32>
    %c0_31 = arith.constant 0 : index
    %c0_32 = arith.constant 0 : index
    %25 = vector.load %arg9[%c0_31, %c0_32] : memref<256x8xf32, #tpu.memory_space<vmem>>, vector<256x8xf32>
    tpu.vector_store %arg9[%c0_31, %c0_32], %24 {strides = array<i32>} : memref<256x8xf32, #tpu.memory_space<vmem>>, vector<256x8xf32>,
    %c0_33 = arith.constant 0 : index
    %c1_34 = arith.constant 1 : index
    %c0_35 = arith.constant 0 : index
    %26 = vector.load %arg8[%c0_33, %c1_34, %c0_35] : memref<18x18x8xf32, #tpu.memory_space<vmem>>, vector<16x16x8xf32>
    %27 = vector.shape_cast %26 : vector<16x16x8xf32> to vector<256x8xf32>
    %c1_36 = arith.constant 1 : index
    %c0_37 = arith.constant 0 : index
    %c0_38 = arith.constant 0 : index
    %28 = vector.load %arg4[%c1_36, %c0_37, %c0_38] : memref<9x8x8xf32, #tpu.memory_space<vmem>>, vector<1x8x8xf32>
    %29 = vector.shape_cast %28 : vector<1x8x8xf32> to vector<8x8xf32>
    %cst_39 = arith.constant dense<0.000000e+00> : vector<256x8xf32>
    %30 = tpu.matmul %27, %29, %cst_39 {dimension_numbers = #tpu.dot_dimension_numbers<[1], [0], [0], [1], [0, 0, 1, 1], [], []>} : vector<256x8xf32>, vector<8x8xf32>, vector<256x8xf32> -> vector<256x8xf32>
    %c0_40 = arith.constant 0 : index
    %c0_41 = arith.constant 0 : index
    %31 = vector.load %arg9[%c0_40, %c0_41] : memref<256x8xf32, #tpu.memory_space<vmem>>, vector<256x8xf32>
    %32 = arith.addf %31, %30 : vector<256x8xf32>
    %c0_42 = arith.constant 0 : index
    %c0_43 = arith.constant 0 : index
    %33 = vector.load %arg9[%c0_42, %c0_43] : memref<256x8xf32, #tpu.memory_space<vmem>>, vector<256x8xf32>
    tpu.vector_store %arg9[%c0_42, %c0_43], %32 {strides = array<i32>} : memref<256x8xf32, #tpu.memory_space<vmem>>, vector<256x8xf32>,
    %c0_44 = arith.constant 0 : index
    %c2 = arith.constant 2 : index
    %c0_45 = arith.constant 0 : index
    %34 = vector.load %arg8[%c0_44, %c2, %c0_45] : memref<18x18x8xf32, #tpu.memory_space<vmem>>, vector<16x16x8xf32>
    %35 = vector.shape_cast %34 : vector<16x16x8xf32> to vector<256x8xf32>
    %c2_46 = arith.constant 2 : index
    %c0_47 = arith.constant 0 : index
    %c0_48 = arith.constant 0 : index
    %36 = vector.load %arg4[%c2_46, %c0_47, %c0_48] : memref<9x8x8xf32, #tpu.memory_space<vmem>>, vector<1x8x8xf32>
    %37 = vector.shape_cast %36 : vector<1x8x8xf32> to vector<8x8xf32>
    %cst_49 = arith.constant dense<0.000000e+00> : vector<256x8xf32>
    %38 = tpu.matmul %35, %37, %cst_49 {dimension_numbers = #tpu.dot_dimension_numbers<[1], [0], [0], [1], [0, 0, 1, 1], [], []>} : vector<256x8xf32>, vector<8x8xf32>, vector<256x8xf32> -> vector<256x8xf32>
    %c0_50 = arith.constant 0 : index
    %c0_51 = arith.constant 0 : index
    %39 = vector.load %arg9[%c0_50, %c0_51] : memref<256x8xf32, #tpu.memory_space<vmem>>, vector<256x8xf32>
    %40 = arith.addf %39, %38 : vector<256x8xf32>
    %c0_52 = arith.constant 0 : index
    %c0_53 = arith.constant 0 : index
    %41 = vector.load %arg9[%c0_52, %c0_53] : memref<256x8xf32, #tpu.memory_space<vmem>>, vector<256x8xf32>
    tpu.vector_store %arg9[%c0_52, %c0_53], %40 {strides = array<i32>} : memref<256x8xf32, #tpu.memory_space<vmem>>, vector<256x8xf32>,
    %c1_54 = arith.constant 1 : index
    %c0_55 = arith.constant 0 : index
    %c0_56 = arith.constant 0 : index
    %42 = vector.load %arg8[%c1_54, %c0_55, %c0_56] : memref<18x18x8xf32, #tpu.memory_space<vmem>>, vector<16x16x8xf32>
    %43 = vector.shape_cast %42 : vector<16x16x8xf32> to vector<256x8xf32>
    %c3 = arith.constant 3 : index
    %c0_57 = arith.constant 0 : index
    %c0_58 = arith.constant 0 : index
    %44 = vector.load %arg4[%c3, %c0_57, %c0_58] : memref<9x8x8xf32, #tpu.memory_space<vmem>>, vector<1x8x8xf32>
    %45 = vector.shape_cast %44 : vector<1x8x8xf32> to vector<8x8xf32>
    %cst_59 = arith.constant dense<0.000000e+00> : vector<256x8xf32>
    %46 = tpu.matmul %43, %45, %cst_59 {dimension_numbers = #tpu.dot_dimension_numbers<[1], [0], [0], [1], [0, 0, 1, 1], [], []>} : vector<256x8xf32>, vector<8x8xf32>, vector<256x8xf32> -> vector<256x8xf32>
    %c0_60 = arith.constant 0 : index
    %c0_61 = arith.constant 0 : index
    %47 = vector.load %arg9[%c0_60, %c0_61] : memref<256x8xf32, #tpu.memory_space<vmem>>, vector<256x8xf32>
    %48 = arith.addf %47, %46 : vector<256x8xf32>
    %c0_62 = arith.constant 0 : index
    %c0_63 = arith.constant 0 : index
    %49 = vector.load %arg9[%c0_62, %c0_63] : memref<256x8xf32, #tpu.memory_space<vmem>>, vector<256x8xf32>
    tpu.vector_store %arg9[%c0_62, %c0_63], %48 {strides = array<i32>} : memref<256x8xf32, #tpu.memory_space<vmem>>, vector<256x8xf32>,
    %c1_64 = arith.constant 1 : index
    %c1_65 = arith.constant 1 : index
    %c0_66 = arith.constant 0 : index
    %50 = vector.load %arg8[%c1_64, %c1_65, %c0_66] : memref<18x18x8xf32, #tpu.memory_space<vmem>>, vector<16x16x8xf32>
    %51 = vector.shape_cast %50 : vector<16x16x8xf32> to vector<256x8xf32>
    %c4 = arith.constant 4 : index
    %c0_67 = arith.constant 0 : index
    %c0_68 = arith.constant 0 : index
    %52 = vector.load %arg4[%c4, %c0_67, %c0_68] : memref<9x8x8xf32, #tpu.memory_space<vmem>>, vector<1x8x8xf32>
    %53 = vector.shape_cast %52 : vector<1x8x8xf32> to vector<8x8xf32>
    %cst_69 = arith.constant dense<0.000000e+00> : vector<256x8xf32>
    %54 = tpu.matmul %51, %53, %cst_69 {dimension_numbers = #tpu.dot_dimension_numbers<[1], [0], [0], [1], [0, 0, 1, 1], [], []>} : vector<256x8xf32>, vector<8x8xf32>, vector<256x8xf32> -> vector<256x8xf32>
    %c0_70 = arith.constant 0 : index
    %c0_71 = arith.constant 0 : index
    %55 = vector.load %arg9[%c0_70, %c0_71] : memref<256x8xf32, #tpu.memory_space<vmem>>, vector<256x8xf32>
    %56 = arith.addf %55, %54 : vector<256x8xf32>
    %c0_72 = arith.constant 0 : index
    %c0_73 = arith.constant 0 : index
    %57 = vector.load %arg9[%c0_72, %c0_73] : memref<256x8xf32, #tpu.memory_space<vmem>>, vector<256x8xf32>
    tpu.vector_store %arg9[%c0_72, %c0_73], %56 {strides = array<i32>} : memref<256x8xf32, #tpu.memory_space<vmem>>, vector<256x8xf32>,
    %c1_74 = arith.constant 1 : index
    %c2_75 = arith.constant 2 : index
    %c0_76 = arith.constant 0 : index
    %58 = vector.load %arg8[%c1_74, %c2_75, %c0_76] : memref<18x18x8xf32, #tpu.memory_space<vmem>>, vector<16x16x8xf32>
    %59 = vector.shape_cast %58 : vector<16x16x8xf32> to vector<256x8xf32>
    %c5 = arith.constant 5 : index
    %c0_77 = arith.constant 0 : index
    %c0_78 = arith.constant 0 : index
    %60 = vector.load %arg4[%c5, %c0_77, %c0_78] : memref<9x8x8xf32, #tpu.memory_space<vmem>>, vector<1x8x8xf32>
    %61 = vector.shape_cast %60 : vector<1x8x8xf32> to vector<8x8xf32>
    %cst_79 = arith.constant dense<0.000000e+00> : vector<256x8xf32>
    %62 = tpu.matmul %59, %61, %cst_79 {dimension_numbers = #tpu.dot_dimension_numbers<[1], [0], [0], [1], [0, 0, 1, 1], [], []>} : vector<256x8xf32>, vector<8x8xf32>, vector<256x8xf32> -> vector<256x8xf32>
    %c0_80 = arith.constant 0 : index
    %c0_81 = arith.constant 0 : index
    %63 = vector.load %arg9[%c0_80, %c0_81] : memref<256x8xf32, #tpu.memory_space<vmem>>, vector<256x8xf32>
    %64 = arith.addf %63, %62 : vector<256x8xf32>
    %c0_82 = arith.constant 0 : index
    %c0_83 = arith.constant 0 : index
    %65 = vector.load %arg9[%c0_82, %c0_83] : memref<256x8xf32, #tpu.memory_space<vmem>>, vector<256x8xf32>
    tpu.vector_store %arg9[%c0_82, %c0_83], %64 {strides = array<i32>} : memref<256x8xf32, #tpu.memory_space<vmem>>, vector<256x8xf32>,
    %c2_84 = arith.constant 2 : index
    %c0_85 = arith.constant 0 : index
    %c0_86 = arith.constant 0 : index
    %66 = vector.load %arg8[%c2_84, %c0_85, %c0_86] : memref<18x18x8xf32, #tpu.memory_space<vmem>>, vector<16x16x8xf32>
    %67 = vector.shape_cast %66 : vector<16x16x8xf32> to vector<256x8xf32>
    %c6 = arith.constant 6 : index
    %c0_87 = arith.constant 0 : index
    %c0_88 = arith.constant 0 : index
    %68 = vector.load %arg4[%c6, %c0_87, %c0_88] : memref<9x8x8xf32, #tpu.memory_space<vmem>>, vector<1x8x8xf32>
    %69 = vector.shape_cast %68 : vector<1x8x8xf32> to vector<8x8xf32>
    %cst_89 = arith.constant dense<0.000000e+00> : vector<256x8xf32>
    %70 = tpu.matmul %67, %69, %cst_89 {dimension_numbers = #tpu.dot_dimension_numbers<[1], [0], [0], [1], [0, 0, 1, 1], [], []>} : vector<256x8xf32>, vector<8x8xf32>, vector<256x8xf32> -> vector<256x8xf32>
    %c0_90 = arith.constant 0 : index
    %c0_91 = arith.constant 0 : index
    %71 = vector.load %arg9[%c0_90, %c0_91] : memref<256x8xf32, #tpu.memory_space<vmem>>, vector<256x8xf32>
    %72 = arith.addf %71, %70 : vector<256x8xf32>
    %c0_92 = arith.constant 0 : index
    %c0_93 = arith.constant 0 : index
    %73 = vector.load %arg9[%c0_92, %c0_93] : memref<256x8xf32, #tpu.memory_space<vmem>>, vector<256x8xf32>
    tpu.vector_store %arg9[%c0_92, %c0_93], %72 {strides = array<i32>} : memref<256x8xf32, #tpu.memory_space<vmem>>, vector<256x8xf32>,
    %c2_94 = arith.constant 2 : index
    %c1_95 = arith.constant 1 : index
    %c0_96 = arith.constant 0 : index
    %74 = vector.load %arg8[%c2_94, %c1_95, %c0_96] : memref<18x18x8xf32, #tpu.memory_space<vmem>>, vector<16x16x8xf32>
    %75 = vector.shape_cast %74 : vector<16x16x8xf32> to vector<256x8xf32>
    %c7 = arith.constant 7 : index
    %c0_97 = arith.constant 0 : index
    %c0_98 = arith.constant 0 : index
    %76 = vector.load %arg4[%c7, %c0_97, %c0_98] : memref<9x8x8xf32, #tpu.memory_space<vmem>>, vector<1x8x8xf32>
    %77 = vector.shape_cast %76 : vector<1x8x8xf32> to vector<8x8xf32>
    %cst_99 = arith.constant dense<0.000000e+00> : vector<256x8xf32>
    %78 = tpu.matmul %75, %77, %cst_99 {dimension_numbers = #tpu.dot_dimension_numbers<[1], [0], [0], [1], [0, 0, 1, 1], [], []>} : vector<256x8xf32>, vector<8x8xf32>, vector<256x8xf32> -> vector<256x8xf32>
    %c0_100 = arith.constant 0 : index
    %c0_101 = arith.constant 0 : index
    %79 = vector.load %arg9[%c0_100, %c0_101] : memref<256x8xf32, #tpu.memory_space<vmem>>, vector<256x8xf32>
    %80 = arith.addf %79, %78 : vector<256x8xf32>
    %c0_102 = arith.constant 0 : index
    %c0_103 = arith.constant 0 : index
    %81 = vector.load %arg9[%c0_102, %c0_103] : memref<256x8xf32, #tpu.memory_space<vmem>>, vector<256x8xf32>
    tpu.vector_store %arg9[%c0_102, %c0_103], %80 {strides = array<i32>} : memref<256x8xf32, #tpu.memory_space<vmem>>, vector<256x8xf32>,
    %c2_104 = arith.constant 2 : index
    %c2_105 = arith.constant 2 : index
    %c0_106 = arith.constant 0 : index
    %82 = vector.load %arg8[%c2_104, %c2_105, %c0_106] : memref<18x18x8xf32, #tpu.memory_space<vmem>>, vector<16x16x8xf32>
    %83 = vector.shape_cast %82 : vector<16x16x8xf32> to vector<256x8xf32>
    %c8 = arith.constant 8 : index
    %c0_107 = arith.constant 0 : index
    %c0_108 = arith.constant 0 : index
    %84 = vector.load %arg4[%c8, %c0_107, %c0_108] : memref<9x8x8xf32, #tpu.memory_space<vmem>>, vector<1x8x8xf32>
    %85 = vector.shape_cast %84 : vector<1x8x8xf32> to vector<8x8xf32>
    %cst_109 = arith.constant dense<0.000000e+00> : vector<256x8xf32>
    %86 = tpu.matmul %83, %85, %cst_109 {dimension_numbers = #tpu.dot_dimension_numbers<[1], [0], [0], [1], [0, 0, 1, 1], [], []>} : vector<256x8xf32>, vector<8x8xf32>, vector<256x8xf32> -> vector<256x8xf32>
    %c0_110 = arith.constant 0 : index
    %c0_111 = arith.constant 0 : index
    %87 = vector.load %arg9[%c0_110, %c0_111] : memref<256x8xf32, #tpu.memory_space<vmem>>, vector<256x8xf32>
    %88 = arith.addf %87, %86 : vector<256x8xf32>
    %c0_112 = arith.constant 0 : index
    %c0_113 = arith.constant 0 : index
    %89 = vector.load %arg9[%c0_112, %c0_113] : memref<256x8xf32, #tpu.memory_space<vmem>>, vector<256x8xf32>
    tpu.vector_store %arg9[%c0_112, %c0_113], %88 {strides = array<i32>} : memref<256x8xf32, #tpu.memory_space<vmem>>, vector<256x8xf32>,
    %c0_114 = arith.constant 0 : index
    %c0_115 = arith.constant 0 : index
    %90 = vector.load %arg9[%c0_114, %c0_115] : memref<256x8xf32, #tpu.memory_space<vmem>>, vector<256x8xf32>
    %91 = vector.shape_cast %90 : vector<256x8xf32> to vector<1x16x16x8xf32>
    %c0_116 = arith.constant 0 : index
    %c0_117 = arith.constant 0 : index
    %c0_118 = arith.constant 0 : index
    %c0_119 = arith.constant 0 : index
    %92 = vector.load %arg5[%c0_116, %c0_117, %c0_118, %c0_119] : memref<1x16x16x8xf32, #tpu.memory_space<vmem>>, vector<1x16x16x8xf32>
    tpu.vector_store %arg5[%c0_116, %c0_117, %c0_118, %c0_119], %91 {strides = array<i32>} : memref<1x16x16x8xf32, #tpu.memory_space<vmem>>, vector<1x16x16x8xf32>,
    %cst_120 = arith.constant dense<0.000000e+00> : vector<8xf32>
    %93 = vector.multi_reduction <add>, %90, %cst_120 [0] : vector<256x8xf32> to vector<8xf32>
    %94 = vector.shape_cast %93 : vector<8xf32> to vector<1x8xf32>
    %95 = vector.shape_cast %94 : vector<1x8xf32> to vector<1x1x8xf32>
    %c0_121 = arith.constant 0 : index
    %c0_122 = arith.constant 0 : index
    %c0_123 = arith.constant 0 : index
    %96 = vector.load %arg6[%c0_121, %c0_122, %c0_123] : memref<1x1x8xf32, #tpu.memory_space<vmem>>, vector<1x1x8xf32>
    tpu.vector_store %arg6[%c0_121, %c0_122, %c0_123], %95 {strides = array<i32>} : memref<1x1x8xf32, #tpu.memory_space<vmem>>, vector<1x1x8xf32>,
    %97 = arith.mulf %90, %90 : vector<256x8xf32>
    %cst_124 = arith.constant dense<0.000000e+00> : vector<8xf32>
    %98 = vector.multi_reduction <add>, %97, %cst_124 [0] : vector<256x8xf32> to vector<8xf32>
    %99 = vector.shape_cast %98 : vector<8xf32> to vector<1x8xf32>
    %100 = vector.shape_cast %99 : vector<1x8xf32> to vector<1x1x8xf32>
    %c0_125 = arith.constant 0 : index
    %c0_126 = arith.constant 0 : index
    %c0_127 = arith.constant 0 : index
    %101 = vector.load %arg7[%c0_125, %c0_126, %c0_127] : memref<1x1x8xf32, #tpu.memory_space<vmem>>, vector<1x1x8xf32>
    tpu.vector_store %arg7[%c0_125, %c0_126, %c0_127], %100 {strides = array<i32>} : memref<1x1x8xf32, #tpu.memory_space<vmem>>, vector<1x1x8xf32>,
    return
  }
  func.func @transform_0(%arg0: i32) -> (i32, i32, i32, i32) {
    %c0_i32 = arith.constant 0 : i32
    %c0_i32_0 = arith.constant 0 : i32
    %c0_i32_1 = arith.constant 0 : i32
    %c0_i32_2 = arith.constant 0 : i32
    return %arg0, %c0_i32, %c0_i32_0, %c0_i32_1 : i32, i32, i32, i32
  }
  func.func @transform_1(%arg0: i32) -> (i32, i32) {
    %c0_i32 = arith.constant 0 : i32
    %c0_i32_0 = arith.constant 0 : i32
    %c0_i32_1 = arith.constant 0 : i32
    return %c0_i32, %c0_i32_0 : i32, i32
  }
  func.func @transform_2(%arg0: i32) -> (i32, i32) {
    %c0_i32 = arith.constant 0 : i32
    %c0_i32_0 = arith.constant 0 : i32
    %c0_i32_1 = arith.constant 0 : i32
    return %c0_i32, %c0_i32_0 : i32, i32
  }
  func.func @transform_3(%arg0: i32) -> (i32, i32, i32) {
    %c0_i32 = arith.constant 0 : i32
    %c0_i32_0 = arith.constant 0 : i32
    %c0_i32_1 = arith.constant 0 : i32
    %c0_i32_2 = arith.constant 0 : i32
    return %c0_i32, %c0_i32_0, %c0_i32_1 : i32, i32, i32
  }
  func.func @transform_4(%arg0: i32) -> (i32, i32, i32, i32) {
    %c0_i32 = arith.constant 0 : i32
    %c0_i32_0 = arith.constant 0 : i32
    %c0_i32_1 = arith.constant 0 : i32
    %c0_i32_2 = arith.constant 0 : i32
    return %arg0, %c0_i32, %c0_i32_0, %c0_i32_1 : i32, i32, i32, i32
  }
  func.func @transform_5(%arg0: i32) -> (i32, i32, i32) {
    %c0_i32 = arith.constant 0 : i32
    %c0_i32_0 = arith.constant 0 : i32
    %c0_i32_1 = arith.constant 0 : i32
    return %arg0, %c0_i32, %c0_i32_0 : i32, i32, i32
  }
  func.func @transform_6(%arg0: i32) -> (i32, i32, i32) {
    %c0_i32 = arith.constant 0 : i32
    %c0_i32_0 = arith.constant 0 : i32
    %c0_i32_1 = arith.constant 0 : i32
    return %arg0, %c0_i32, %c0_i32_0 : i32, i32, i32
  }
}

</mosaic_0001>

<llo_original>
// kernel: double_conv.5
$region0: #{double_conv.5}
  #allocation0 [shape = 'u32[]', space=smem, size = 0x4, offset = 0x4, fixed_abs, tag = 'smem constant byte address 0x4 - core index']
  #allocation1 [shape = 'u32[144,128]{1,0:T(1,128)}', space=vmem, size = 0x12000, scoped, tag = 'internal scratch']
  %s0 = inlined_call_operand.vmem [shape: f32[2,16,16,8], index: 0, kind: input, shape index: {}]
  %s1 = inlined_call_operand.vmem [shape: f32[1,8], index: 1, kind: input, shape index: {}]
  %s2 = inlined_call_operand.vmem [shape: f32[1,8], index: 2, kind: input, shape index: {}]
  %s3 = inlined_call_operand.vmem [shape: f32[2,8,256], index: 3, kind: output, shape index: {}]
  %s4 = sld [smem:[#allocation0]]
  $region45: #{double_conv.5} parent=0
    _
  %s6 = ssub.s32 1, %s4
  %s7 = scalar_select 0, %s6, %s4
  loop: start=0, step=1, limit=4
  $region2: #{double_conv.5} parent=0 // loop_pre_header
    _
  $region3: #{double_conv.5} parent=0 // loop_header
    %s9 = sphi 0, %s13
    %p10 = scmp.ge.s32.totalorder %s9, 4
    %s19 = sphi 0, %s21
    %s22 = sphi 0, %s19
    %s23 = sphi 0, %s22
    %s39 = sphi 0, %s23
    %s43 = sphi 0, %s43
    %s45 = sphi 0, %s43
    %s46 = sphi 0, %s45
    %s60 = sphi 0, %s46
    %s64 = sphi 0, %s64
    %s66 = sphi 0, %s64
    %s67 = sphi 0, %s66
    %s81 = sphi 0, %s67
    %s87 = sphi 0, %s89
    %s90 = sphi 0, %s87
    %s91 = sphi 0, %s90
    %s107 = sphi 0, %s91
  $region4: #{double_conv.5} parent=0 // loop_header_branch
    %12 = sbr.rel (%p10) target = $region8
  $region5: #{double_conv.5} parent=0 // loop_body
    %s14 = ssub.s32 %s9, 1
    %s15 = ssub.s32 %s9, 2
    %s16 = sadd.s32 %s9, 1
    %s17 = ssub.s32 %s9, %s16
    %p18 = scmp.eq.s32.totalorder %s17, 0
    %s20 = sadd.s32 %s19, 1
    %s21 = scalar_select %p18, %s19, %s20
    %p24 = pneg %p18
    %p25 = scmp.eq.s32.totalorder %s9, 1
    %p26 = por %p24, %p25
    %p27 = scmp.ne.s32.totalorder %s19, %s22
    %p28 = scmp.eq.s32.totalorder %s9, 0
    %p29 = por %p27, %p28
    %p30 = scmp.ne.s32.totalorder %s19, %s22
    %p31 = scmp.eq.s32.totalorder %s14, 1
    %p32 = por %p30, %p31
    %p33 = scmp.ne.s32.totalorder %s22, %s23
    %p34 = scmp.eq.s32.totalorder %s14, 0
    %p35 = por %p33, %p34
    %p36 = scmp.ne.s32.totalorder %s22, %s23
    %p37 = scmp.eq.s32.totalorder %s15, 1
    %p38 = por %p36, %p37
    %p40 = scmp.ne.s32.totalorder %s23, %s39
    %p41 = scmp.eq.s32.totalorder %s15, 0
    %p42 = por %p40, %p41
    %s44 = sadd.s32 %s43, 1
    %p47 = scmp.eq.s32.totalorder %s9, 1
    %p48 = scmp.ne.s32.totalorder %s43, %s45
    %p49 = scmp.eq.s32.totalorder %s9, 0
    %p50 = por %p48, %p49
    %p51 = scmp.ne.s32.totalorder %s43, %s45
    %p52 = scmp.eq.s32.totalorder %s14, 1
    %p53 = por %p51, %p52
    %p54 = scmp.ne.s32.totalorder %s45, %s46
    %p55 = scmp.eq.s32.totalorder %s14, 0
    %p56 = por %p54, %p55
    %p57 = scmp.ne.s32.totalorder %s45, %s46
    %p58 = scmp.eq.s32.totalorder %s15, 1
    %p59 = por %p57, %p58
    %p61 = scmp.ne.s32.totalorder %s46, %s60
    %p62 = scmp.eq.s32.totalorder %s15, 0
    %p63 = por %p61, %p62
    %s65 = sadd.s32 %s64, 1
    %p68 = scmp.eq.s32.totalorder %s9, 1
    %p69 = scmp.ne.s32.totalorder %s64, %s66
    %p70 = scmp.eq.s32.totalorder %s9, 0
    %p71 = por %p69, %p70
    %p72 = scmp.ne.s32.totalorder %s64, %s66
    %p73 = scmp.eq.s32.totalorder %s14, 1
    %p74 = por %p72, %p73
    %p75 = scmp.ne.s32.totalorder %s66, %s67
    %p76 = scmp.eq.s32.totalorder %s14, 0
    %p77 = por %p75, %p76
    %p78 = scmp.ne.s32.totalorder %s66, %s67
    %p79 = scmp.eq.s32.totalorder %s15, 1
    %p80 = por %p78, %p79
    %p82 = scmp.ne.s32.totalorder %s67, %s81
    %p83 = scmp.eq.s32.totalorder %s15, 0
    %p84 = por %p82, %p83
    %s85 = ssub.s32 %s9, %s16
    %p86 = scmp.eq.s32.totalorder %s85, 0
    %s88 = sadd.s32 %s87, 1
    %s89 = scalar_select %p86, %s87, %s88
    %p92 = pneg %p86
    %p93 = scmp.eq.s32.totalorder %s9, 1
    %p94 = por %p92, %p93
    %p95 = scmp.ne.s32.totalorder %s87, %s90
    %p96 = scmp.eq.s32.totalorder %s9, 0
    %p97 = por %p95, %p96
    %p98 = scmp.ne.s32.totalorder %s87, %s90
    %p99 = scmp.eq.s32.totalorder %s14, 1
    %p100 = por %p98, %p99
    %p101 = scmp.ne.s32.totalorder %s90, %s91
    %p102 = scmp.eq.s32.totalorder %s14, 0
    %p103 = por %p101, %p102
    %p104 = scmp.ne.s32.totalorder %s90, %s91
    %p105 = scmp.eq.s32.totalorder %s15, 1
    %p106 = por %p104, %p105
    %p108 = scmp.ne.s32.totalorder %s91, %s107
    %p109 = scmp.eq.s32.totalorder %s15, 0
    %p110 = por %p108, %p109
    %p111 = scmp.le.s32.totalorder 1, %s9
    %p112 = scmp.lt.s32.totalorder %s9, 3
    %p113 = pnand %p111, %p112
    %p114 = pneg %p113
    // Predicated region
    $region9: #{double_conv.5} parent=5 // pred_check
      _
    $region10: #{double_conv.5} parent=5 // pred_check_branch
      %116 = sbr.rel (%p113) target = $region12
    $region11: #{double_conv.5} parent=5 // pred_region
      %s117 = ssub.s32 %s9, 1
      // Predicated region
      $region13: #{double_conv.5} parent=11 // pred_check
        %p118 = pneg %p56
      $region14: #{double_conv.5} parent=11 // pred_check_branch
        %120 = sbr.rel (%p118) target = $region16
      $region15: #{double_conv.5} parent=11 // pred_region
        _
      $region16: #{double_conv.5} parent=11 // pred_fallthru
        _
      // Predicated region
      $region17: #{double_conv.5} parent=11 // pred_check
        %p121 = pneg %p77
      $region18: #{double_conv.5} parent=11 // pred_check_branch
        %123 = sbr.rel (%p121) target = $region20
      $region19: #{double_conv.5} parent=11 // pred_region
        _
      $region20: #{double_conv.5} parent=11 // pred_fallthru
        _
    $region12: #{double_conv.5} parent=5 // pred_fallthru
      _
    %p124 = scmp.lt.s32.totalorder %s9, 2
    // Predicated region
    $region21: #{double_conv.5} parent=5 // pred_check
      %p125 = pneg %p124
    $region22: #{double_conv.5} parent=5 // pred_check_branch
      %127 = sbr.rel (%p125) target = $region24
    $region23: #{double_conv.5} parent=5 // pred_region
      // Predicated region
      $region25: #{double_conv.5} parent=23 // pred_check
        %p128 = pneg %p29
      $region26: #{double_conv.5} parent=23 // pred_check_branch
        %130 = sbr.rel (%p128) target = $region28
      $region27: #{double_conv.5} parent=23 // pred_region
        %p131 = scmp.lt.s32.totalorder %s9, 1
        %s132 = scalar_select %p131, %s9, 1
        %s133 = smul.addr %s132, 32
        %s134 = smul.addr %s133, 8
        %s135 = scalar_lea.vmem %s0, %s134
      $region28: #{double_conv.5} parent=23 // pred_fallthru
        _
    $region24: #{double_conv.5} parent=5 // pred_fallthru
      _
    %p136 = scmp.le.s32.totalorder 1, %s9
    %p137 = scmp.lt.s32.totalorder %s9, 3
    %p138 = pnand %p136, %p137
    %p139 = pneg %p138
    // Predicated region
    $region29: #{double_conv.5} parent=5 // pred_check
      _
    $region30: #{double_conv.5} parent=5 // pred_check_branch
      %141 = sbr.rel (%p138) target = $region32
    $region31: #{double_conv.5} parent=5 // pred_region
      %s142 = ssub.s32 %s9, 1
      %p143 = scmp.lt.s32.totalorder %s14, 1
      %s144 = scalar_select %p143, %s14, 1
      %s145 = smul.addr %s144, 32
      %s146 = smul.addr %s145, 8
      %s147 = scalar_lea.vmem %s0, %s146
      %p148 = pneg %p35
      %p149 = pneg %p32
      %p150 = pneg %p56
      %p151 = pneg %p53
      %p152 = pneg %p77
      %p153 = pneg %p74
      %p154 = pneg %p103
      %p155 = pneg %p100
      %p156 = scmp.lt.s32.totalorder %s14, 1
      %s157 = scalar_select %p156, %s14, 1
      %s158 = smul.addr %s157, 2
      %s159 = smul.addr %s158, 8
      %s160 = scalar_lea.vmem %s3, %s159
      %p161 = scmp.lt.s32.totalorder %s14, 1
      %s162 = scalar_select %p161, %s14, 1
      %s163 = smul.addr %s162, 32
      %s164 = smul.addr %s163, 8
      %s165 = scalar_lea.vmem %s0, %s164
      %p166 = scmp.lt.s32.totalorder %s14, 1
      %s167 = scalar_select %p166, %s14, 1
      %s168 = smul.addr %s167, 2
      %s169 = smul.addr %s168, 8
      %s170 = scalar_lea.vmem %s3, %s169
      %v171 = vld [vmem:[%s165] sm:$0xff]
      %v172 = vld [vmem:[%s165 + $0x8] sm:$0xff]
      %v173 = vld [vmem:[%s165 + $0x10] sm:$0xff]
      %v174 = vld [vmem:[%s165 + $0x18] sm:$0xff]
      %v175 = vld [vmem:[%s165 + $0x20] sm:$0xff]
      %v176 = vld [vmem:[%s165 + $0x28] sm:$0xff]
      %v177 = vld [vmem:[%s165 + $0x30] sm:$0xff]
      %v178 = vld [vmem:[%s165 + $0x38] sm:$0xff]
      %v179 = vld [vmem:[%s165 + $0x40] sm:$0xff]
      %v180 = vld [vmem:[%s165 + $0x48] sm:$0xff]
      %v181 = vld [vmem:[%s165 + $0x50] sm:$0xff]
      %v182 = vld [vmem:[%s165 + $0x58] sm:$0xff]
      %v183 = vld [vmem:[%s165 + $0x60] sm:$0xff]
      %v184 = vld [vmem:[%s165 + $0x68] sm:$0xff]
      %v185 = vld [vmem:[%s165 + $0x70] sm:$0xff]
      %v186 = vld [vmem:[%s165 + $0x78] sm:$0xff]
      %v187 = vld [vmem:[%s165 + $0x80] sm:$0xff]
      %v188 = vld [vmem:[%s165 + $0x88] sm:$0xff]
      %v189 = vld [vmem:[%s165 + $0x90] sm:$0xff]
      %v190 = vld [vmem:[%s165 + $0x98] sm:$0xff]
      %v191 = vld [vmem:[%s165 + $0xa0] sm:$0xff]
      %v192 = vld [vmem:[%s165 + $0xa8] sm:$0xff]
      %v193 = vld [vmem:[%s165 + $0xb0] sm:$0xff]
      %v194 = vld [vmem:[%s165 + $0xb8] sm:$0xff]
      %v195 = vld [vmem:[%s165 + $0xc0] sm:$0xff]
      %v196 = vld [vmem:[%s165 + $0xc8] sm:$0xff]
      %v197 = vld [vmem:[%s165 + $0xd0] sm:$0xff]
      %v198 = vld [vmem:[%s165 + $0xd8] sm:$0xff]
      %v199 = vld [vmem:[%s165 + $0xe0] sm:$0xff]
      %v200 = vld [vmem:[%s165 + $0xe8] sm:$0xff]
      %v201 = vld [vmem:[%s165 + $0xf0] sm:$0xff]
      %v202 = vld [vmem:[%s165 + $0xf8] sm:$0xff]
      %v203 = vld [vmem:[%s1] sm:$0x1]
      %v205 = vlaneseq
      %v206 = vshrl.u32 %v205, 7
      %v207 = vsub.s32 0, %v206
      %v208 = vrot.slane %v203, %v207
      %v210 = vmul.f32 %v171, %v208
      %v211 = vmul.f32 %v172, %v208
      %v212 = vmul.f32 %v173, %v208
      %v213 = vmul.f32 %v174, %v208
      %v214 = vmul.f32 %v175, %v208
      %v215 = vmul.f32 %v176, %v208
      %v216 = vmul.f32 %v177, %v208
      %v217 = vmul.f32 %v178, %v208
      %v218 = vmul.f32 %v179, %v208
      %v219 = vmul.f32 %v180, %v208
      %v220 = vmul.f32 %v181, %v208
      %v221 = vmul.f32 %v182, %v208
      %v222 = vmul.f32 %v183, %v208
      %v223 = vmul.f32 %v184, %v208
      %v224 = vmul.f32 %v185, %v208
      %v225 = vmul.f32 %v186, %v208
      %v226 = vmul.f32 %v187, %v208
      %v227 = vmul.f32 %v188, %v208
      %v228 = vmul.f32 %v189, %v208
      %v229 = vmul.f32 %v190, %v208
      %v230 = vmul.f32 %v191, %v208
      %v231 = vmul.f32 %v192, %v208
      %v232 = vmul.f32 %v193, %v208
      %v233 = vmul.f32 %v194, %v208
      %v234 = vmul.f32 %v195, %v208
      %v235 = vmul.f32 %v196, %v208
      %v236 = vmul.f32 %v197, %v208
      %v237 = vmul.f32 %v198, %v208
      %v238 = vmul.f32 %v199, %v208
      %v239 = vmul.f32 %v200, %v208
      %v240 = vmul.f32 %v201, %v208
      %v241 = vmul.f32 %v202, %v208
      %v242 = vld [vmem:[%s2] sm:$0x1]
      %v244 = vlaneseq
      %v245 = vshrl.u32 %v244, 7
      %v246 = vsub.s32 0, %v245
      %v247 = vrot.slane %v242, %v246
      %v249 = vadd.f32 %v210, %v247
      %v250 = vadd.f32 %v211, %v247
      %v251 = vadd.f32 %v212, %v247
      %v252 = vadd.f32 %v213, %v247
      %v253 = vadd.f32 %v214, %v247
      %v254 = vadd.f32 %v215, %v247
      %v255 = vadd.f32 %v216, %v247
      %v256 = vadd.f32 %v217, %v247
      %v257 = vadd.f32 %v218, %v247
      %v258 = vadd.f32 %v219, %v247
      %v259 = vadd.f32 %v220, %v247
      %v260 = vadd.f32 %v221, %v247
      %v261 = vadd.f32 %v222, %v247
      %v262 = vadd.f32 %v223, %v247
      %v263 = vadd.f32 %v224, %v247
      %v264 = vadd.f32 %v225, %v247
      %v265 = vadd.f32 %v226, %v247
      %v266 = vadd.f32 %v227, %v247
      %v267 = vadd.f32 %v228, %v247
      %v268 = vadd.f32 %v229, %v247
      %v269 = vadd.f32 %v230, %v247
      %v270 = vadd.f32 %v231, %v247
      %v271 = vadd.f32 %v232, %v247
      %v272 = vadd.f32 %v233, %v247
      %v273 = vadd.f32 %v234, %v247
      %v274 = vadd.f32 %v235, %v247
      %v275 = vadd.f32 %v236, %v247
      %v276 = vadd.f32 %v237, %v247
      %v277 = vadd.f32 %v238, %v247
      %v278 = vadd.f32 %v239, %v247
      %v279 = vadd.f32 %v240, %v247
      %v280 = vadd.f32 %v241, %v247
      %v281 = vmax.f32 %v249, 0.0
      %v282 = vmax.f32 %v250, 0.0
      %v283 = vmax.f32 %v251, 0.0
      %v284 = vmax.f32 %v252, 0.0
      %v285 = vmax.f32 %v253, 0.0
      %v286 = vmax.f32 %v254, 0.0
      %v287 = vmax.f32 %v255, 0.0
      %v288 = vmax.f32 %v256, 0.0
      %v289 = vmax.f32 %v257, 0.0
      %v290 = vmax.f32 %v258, 0.0
      %v291 = vmax.f32 %v259, 0.0
      %v292 = vmax.f32 %v260, 0.0
      %v293 = vmax.f32 %v261, 0.0
      %v294 = vmax.f32 %v262, 0.0
      %v295 = vmax.f32 %v263, 0.0
      %v296 = vmax.f32 %v264, 0.0
      %v297 = vmax.f32 %v265, 0.0
      %v298 = vmax.f32 %v266, 0.0
      %v299 = vmax.f32 %v267, 0.0
      %v300 = vmax.f32 %v268, 0.0
      %v301 = vmax.f32 %v269, 0.0
      %v302 = vmax.f32 %v270, 0.0
      %v303 = vmax.f32 %v271, 0.0
      %v304 = vmax.f32 %v272, 0.0
      %v305 = vmax.f32 %v273, 0.0
      %v306 = vmax.f32 %v274, 0.0
      %v307 = vmax.f32 %v275, 0.0
      %v308 = vmax.f32 %v276, 0.0
      %v309 = vmax.f32 %v277, 0.0
      %v310 = vmax.f32 %v278, 0.0
      %v311 = vmax.f32 %v279, 0.0
      %v312 = vmax.f32 %v280, 0.0
      %313 = vxpose.xlu0.b32.start [1/16] %v281, 128
      %314 = vxpose.xlu0.b32.cont [2/16] %v282, 128
      %315 = vxpose.xlu0.b32.cont [3/16] %v283, 128
      %316 = vxpose.xlu0.b32.cont [4/16] %v284, 128
      %317 = vxpose.xlu0.b32.cont [5/16] %v285, 128
      %318 = vxpose.xlu0.b32.cont [6/16] %v286, 128
      %319 = vxpose.xlu0.b32.cont [7/16] %v287, 128
      %320 = vxpose.xlu0.b32.cont [8/16] %v288, 128
      %321 = vxpose.xlu0.b32.cont [9/16] %v289, 128
      %322 = vxpose.xlu0.b32.cont [10/16] %v290, 128
      %323 = vxpose.xlu0.b32.cont [11/16] %v291, 128
      %324 = vxpose.xlu0.b32.cont [12/16] %v292, 128
      %325 = vxpose.xlu0.b32.cont [13/16] %v293, 128
      %326 = vxpose.xlu0.b32.cont [14/16] %v294, 128
      %327 = vxpose.xlu0.b32.cont [15/16] %v295, 128
      %328 = vxpose.xlu0.b32.end [16/16] %v296, 128
      %v329 = vpop.trf.xlu0
      %v330 = vpop.trf.xlu0
      %v331 = vpop.trf.xlu0
      %v332 = vpop.trf.xlu0
      %v333 = vpop.trf.xlu0
      %v334 = vpop.trf.xlu0
      %v335 = vpop.trf.xlu0
      %v336 = vpop.trf.xlu0
      %v337 = vpop.trf.xlu0
      %v338 = vpop.trf.xlu0
      %v339 = vpop.trf.xlu0
      %v340 = vpop.trf.xlu0
      %v341 = vpop.trf.xlu0
      %v342 = vpop.trf.xlu0
      %v343 = vpop.trf.xlu0
      %v344 = vpop.trf.xlu0
      %345 = vxpose.xlu0.b32.start [1/16] %v297, 128
      %346 = vxpose.xlu0.b32.cont [2/16] %v298, 128
      %347 = vxpose.xlu0.b32.cont [3/16] %v299, 128
      %348 = vxpose.xlu0.b32.cont [4/16] %v300, 128
      %349 = vxpose.xlu0.b32.cont [5/16] %v301, 128
      %350 = vxpose.xlu0.b32.cont [6/16] %v302, 128
      %351 = vxpose.xlu0.b32.cont [7/16] %v303, 128
      %352 = vxpose.xlu0.b32.cont [8/16] %v304, 128
      %353 = vxpose.xlu0.b32.cont [9/16] %v305, 128
      %354 = vxpose.xlu0.b32.cont [10/16] %v306, 128
      %355 = vxpose.xlu0.b32.cont [11/16] %v307, 128
      %356 = vxpose.xlu0.b32.cont [12/16] %v308, 128
      %357 = vxpose.xlu0.b32.cont [13/16] %v309, 128
      %358 = vxpose.xlu0.b32.cont [14/16] %v310, 128
      %359 = vxpose.xlu0.b32.cont [15/16] %v311, 128
      %360 = vxpose.xlu0.b32.end [16/16] %v312, 128
      %v361 = vpop.trf.xlu0
      %v362 = vpop.trf.xlu0
      %v363 = vpop.trf.xlu0
      %v364 = vpop.trf.xlu0
      %v365 = vpop.trf.xlu0
      %v366 = vpop.trf.xlu0
      %v367 = vpop.trf.xlu0
      %v368 = vpop.trf.xlu0
      %v369 = vpop.trf.xlu0
      %v370 = vpop.trf.xlu0
      %v371 = vpop.trf.xlu0
      %v372 = vpop.trf.xlu0
      %v373 = vpop.trf.xlu0
      %v374 = vpop.trf.xlu0
      %v375 = vpop.trf.xlu0
      %v376 = vpop.trf.xlu0
      %377 = vst [vmem:[%s170] sm:$0xff] %v329
      %378 = vst [vmem:[%s170 + $0x8] sm:$0xff] %v361
      %p379 = scmp.lt.s32.totalorder %s14, 1
      %s380 = scalar_select %p379, %s14, 1
      %s381 = smul.addr %s380, 2
      %s382 = smul.addr %s381, 8
      %s383 = scalar_lea.vmem %s3, %s382
      // Predicated region
      $region33: #{double_conv.5} parent=31 // pred_check
        %p384 = pneg %p100
      $region34: #{double_conv.5} parent=31 // pred_check_branch
        %386 = sbr.rel (%p384) target = $region36
      $region35: #{double_conv.5} parent=31 // pred_region
        _
      $region36: #{double_conv.5} parent=31 // pred_fallthru
        _
    $region32: #{double_conv.5} parent=5 // pred_fallthru
      _
    %p387 = scmp.le.s32.totalorder 2, %s9
    // Predicated region
    $region37: #{double_conv.5} parent=5 // pred_check
      %p388 = pneg %p387
    $region38: #{double_conv.5} parent=5 // pred_check_branch
      %390 = sbr.rel (%p388) target = $region40
    $region39: #{double_conv.5} parent=5 // pred_region
      %s391 = ssub.s32 %s9, 2
      // Predicated region
      $region41: #{double_conv.5} parent=39 // pred_check
        %p392 = pneg %p106
      $region42: #{double_conv.5} parent=39 // pred_check_branch
        %394 = sbr.rel (%p392) target = $region44
      $region43: #{double_conv.5} parent=39 // pred_region
        %p395 = scmp.lt.s32.totalorder %s15, 1
        %s396 = scalar_select %p395, %s15, 1
        %s397 = smul.addr %s396, 2
        %s398 = smul.addr %s397, 8
        %s399 = scalar_lea.vmem %s3, %s398
      $region44: #{double_conv.5} parent=39 // pred_fallthru
        _
    $region40: #{double_conv.5} parent=5 // pred_fallthru
      _
  $region6: #{double_conv.5} parent=0 // loop_footer
    %s13 = sadd.s32 1, %s9
  $region7: #{double_conv.5} parent=0 // loop_footer_branch
    %8 = sbr.rel target = $region3
  $region8: #{double_conv.5} parent=0 // loop_exit
    _

// kernel: double_conv.3
$region0: #{double_conv.3}
  #allocation0 [shape = 'u32[]', space=smem, size = 0x4, offset = 0x4, fixed_abs, tag = 'smem constant byte address 0x4 - core index']
  #allocation1 [shape = 'u32[144,128]{1,0:T(1,128)}', space=vmem, size = 0x12000, scoped, tag = 'internal scratch']
  #allocation2 [shape = 'f32[18,18,4]{2,1,0:T(8,128)}', space=vmem, size = 0x36000, scoped, tag = 'scratch operand']
  #allocation3 [shape = 'f32[256,8]{1,0:T(8,128)}', space=vmem, size = 0x20000, scoped, tag = 'scratch operand']
  %s0 = inlined_call_operand.vmem [shape: f32[2,16,16,4], index: 0, kind: input, shape index: {}]
  %s1 = inlined_call_operand.vmem [shape: f32[9,4,8], index: 1, kind: input, shape index: {}]
  %s2 = inlined_call_operand.vmem [shape: f32[2,16,16,8], index: 2, kind: output, shape index: {0}]
  %s3 = inlined_call_operand.vmem [shape: f32[2,1,8], index: 3, kind: output, shape index: {1}]
  %s4 = inlined_call_operand.vmem [shape: f32[2,1,8], index: 4, kind: output, shape index: {2}]
  %5 = xla_tuple %s2, %s3, %s4
  %s6 = sld [smem:[#allocation0]]
  $region57: #{double_conv.3} parent=0
    _
  %s8 = ssub.s32 1, %s6
  %s9 = scalar_select 0, %s8, %s6
  loop: start=0, step=1, limit=4
  $region2: #{double_conv.3} parent=0 // loop_pre_header
    _
  $region3: #{double_conv.3} parent=0 // loop_header
    %s11 = sphi 0, %s15
    %p12 = scmp.ge.s32.totalorder %s11, 4
    %s21 = sphi 0, %s23
    %s24 = sphi 0, %s21
    %s25 = sphi 0, %s24
    %s41 = sphi 0, %s25
    %s45 = sphi 0, %s45
    %s47 = sphi 0, %s45
    %s48 = sphi 0, %s47
    %s62 = sphi 0, %s48
    %s68 = sphi 0, %s70
    %s71 = sphi 0, %s68
    %s72 = sphi 0, %s71
    %s88 = sphi 0, %s72
    %s94 = sphi 0, %s96
    %s97 = sphi 0, %s94
    %s98 = sphi 0, %s97
    %s114 = sphi 0, %s98
    %s120 = sphi 0, %s122
    %s123 = sphi 0, %s120
    %s124 = sphi 0, %s123
    %s140 = sphi 0, %s124
  $region4: #{double_conv.3} parent=0 // loop_header_branch
    %14 = sbr.rel (%p12) target = $region8
  $region5: #{double_conv.3} parent=0 // loop_body
    %s16 = ssub.s32 %s11, 1
    %s17 = ssub.s32 %s11, 2
    %s18 = sadd.s32 %s11, 1
    %s19 = ssub.s32 %s11, %s18
    %p20 = scmp.eq.s32.totalorder %s19, 0
    %s22 = sadd.s32 %s21, 1
    %s23 = scalar_select %p20, %s21, %s22
    %p26 = pneg %p20
    %p27 = scmp.eq.s32.totalorder %s11, 1
    %p28 = por %p26, %p27
    %p29 = scmp.ne.s32.totalorder %s21, %s24
    %p30 = scmp.eq.s32.totalorder %s11, 0
    %p31 = por %p29, %p30
    %p32 = scmp.ne.s32.totalorder %s21, %s24
    %p33 = scmp.eq.s32.totalorder %s16, 1
    %p34 = por %p32, %p33
    %p35 = scmp.ne.s32.totalorder %s24, %s25
    %p36 = scmp.eq.s32.totalorder %s16, 0
    %p37 = por %p35, %p36
    %p38 = scmp.ne.s32.totalorder %s24, %s25
    %p39 = scmp.eq.s32.totalorder %s17, 1
    %p40 = por %p38, %p39
    %p42 = scmp.ne.s32.totalorder %s25, %s41
    %p43 = scmp.eq.s32.totalorder %s17, 0
    %p44 = por %p42, %p43
    %s46 = sadd.s32 %s45, 1
    %p49 = scmp.eq.s32.totalorder %s11, 1
    %p50 = scmp.ne.s32.totalorder %s45, %s47
    %p51 = scmp.eq.s32.totalorder %s11, 0
    %p52 = por %p50, %p51
    %p53 = scmp.ne.s32.totalorder %s45, %s47
    %p54 = scmp.eq.s32.totalorder %s16, 1
    %p55 = por %p53, %p54
    %p56 = scmp.ne.s32.totalorder %s47, %s48
    %p57 = scmp.eq.s32.totalorder %s16, 0
    %p58 = por %p56, %p57
    %p59 = scmp.ne.s32.totalorder %s47, %s48
    %p60 = scmp.eq.s32.totalorder %s17, 1
    %p61 = por %p59, %p60
    %p63 = scmp.ne.s32.totalorder %s48, %s62
    %p64 = scmp.eq.s32.totalorder %s17, 0
    %p65 = por %p63, %p64
    %s66 = ssub.s32 %s11, %s18
    %p67 = scmp.eq.s32.totalorder %s66, 0
    %s69 = sadd.s32 %s68, 1
    %s70 = scalar_select %p67, %s68, %s69
    %p73 = pneg %p67
    %p74 = scmp.eq.s32.totalorder %s11, 1
    %p75 = por %p73, %p74
    %p76 = scmp.ne.s32.totalorder %s68, %s71
    %p77 = scmp.eq.s32.totalorder %s11, 0
    %p78 = por %p76, %p77
    %p79 = scmp.ne.s32.totalorder %s68, %s71
    %p80 = scmp.eq.s32.totalorder %s16, 1
    %p81 = por %p79, %p80
    %p82 = scmp.ne.s32.totalorder %s71, %s72
    %p83 = scmp.eq.s32.totalorder %s16, 0
    %p84 = por %p82, %p83
    %p85 = scmp.ne.s32.totalorder %s71, %s72
    %p86 = scmp.eq.s32.totalorder %s17, 1
    %p87 = por %p85, %p86
    %p89 = scmp.ne.s32.totalorder %s72, %s88
    %p90 = scmp.eq.s32.totalorder %s17, 0
    %p91 = por %p89, %p90
    %s92 = ssub.s32 %s11, %s18
    %p93 = scmp.eq.s32.totalorder %s92, 0
    %s95 = sadd.s32 %s94, 1
    %s96 = scalar_select %p93, %s94, %s95
    %p99 = pneg %p93
    %p100 = scmp.eq.s32.totalorder %s11, 1
    %p101 = por %p99, %p100
    %p102 = scmp.ne.s32.totalorder %s94, %s97
    %p103 = scmp.eq.s32.totalorder %s11, 0
    %p104 = por %p102, %p103
    %p105 = scmp.ne.s32.totalorder %s94, %s97
    %p106 = scmp.eq.s32.totalorder %s16, 1
    %p107 = por %p105, %p106
    %p108 = scmp.ne.s32.totalorder %s97, %s98
    %p109 = scmp.eq.s32.totalorder %s16, 0
    %p110 = por %p108, %p109
    %p111 = scmp.ne.s32.totalorder %s97, %s98
    %p112 = scmp.eq.s32.totalorder %s17, 1
    %p113 = por %p111, %p112
    %p115 = scmp.ne.s32.totalorder %s98, %s114
    %p116 = scmp.eq.s32.totalorder %s17, 0
    %p117 = por %p115, %p116
    %s118 = ssub.s32 %s11, %s18
    %p119 = scmp.eq.s32.totalorder %s118, 0
    %s121 = sadd.s32 %s120, 1
    %s122 = scalar_select %p119, %s120, %s121
    %p125 = pneg %p119
    %p126 = scmp.eq.s32.totalorder %s11, 1
    %p127 = por %p125, %p126
    %p128 = scmp.ne.s32.totalorder %s120, %s123
    %p129 = scmp.eq.s32.totalorder %s11, 0
    %p130 = por %p128, %p129
    %p131 = scmp.ne.s32.totalorder %s120, %s123
    %p132 = scmp.eq.s32.totalorder %s16, 1
    %p133 = por %p131, %p132
    %p134 = scmp.ne.s32.totalorder %s123, %s124
    %p135 = scmp.eq.s32.totalorder %s16, 0
    %p136 = por %p134, %p135
    %p137 = scmp.ne.s32.totalorder %s123, %s124
    %p138 = scmp.eq.s32.totalorder %s17, 1
    %p139 = por %p137, %p138
    %p141 = scmp.ne.s32.totalorder %s124, %s140
    %p142 = scmp.eq.s32.totalorder %s17, 0
    %p143 = por %p141, %p142
    %p144 = scmp.le.s32.totalorder 1, %s11
    %p145 = scmp.lt.s32.totalorder %s11, 3
    %p146 = pnand %p144, %p145
    %p147 = pneg %p146
    // Predicated region
    $region9: #{double_conv.3} parent=5 // pred_check
      _
    $region10: #{double_conv.3} parent=5 // pred_check_branch
      %149 = sbr.rel (%p146) target = $region12
    $region11: #{double_conv.3} parent=5 // pred_region
      %s150 = ssub.s32 %s11, 1
      // Predicated region
      $region13: #{double_conv.3} parent=11 // pred_check
        %p151 = pneg %p58
      $region14: #{double_conv.3} parent=11 // pred_check_branch
        %153 = sbr.rel (%p151) target = $region16
      $region15: #{double_conv.3} parent=11 // pred_region
        _
      $region16: #{double_conv.3} parent=11 // pred_fallthru
        _
    $region12: #{double_conv.3} parent=5 // pred_fallthru
      _
    %p154 = scmp.lt.s32.totalorder %s11, 2
    // Predicated region
    $region17: #{double_conv.3} parent=5 // pred_check
      %p155 = pneg %p154
    $region18: #{double_conv.3} parent=5 // pred_check_branch
      %157 = sbr.rel (%p155) target = $region20
    $region19: #{double_conv.3} parent=5 // pred_region
      // Predicated region
      $region21: #{double_conv.3} parent=19 // pred_check
        %p158 = pneg %p31
      $region22: #{double_conv.3} parent=19 // pred_check_branch
        %160 = sbr.rel (%p158) target = $region24
      $region23: #{double_conv.3} parent=19 // pred_region
        %p161 = scmp.lt.s32.totalorder %s11, 1
        %s162 = scalar_select %p161, %s11, 1
        %s163 = smul.addr %s162, 32
        %s164 = smul.addr %s163, 8
        %s165 = scalar_lea.vmem %s0, %s164
      $region24: #{double_conv.3} parent=19 // pred_fallthru
        _
    $region20: #{double_conv.3} parent=5 // pred_fallthru
      _
    %p166 = scmp.le.s32.totalorder 1, %s11
    %p167 = scmp.lt.s32.totalorder %s11, 3
    %p168 = pnand %p166, %p167
    %p169 = pneg %p168
    // Predicated region
    $region25: #{double_conv.3} parent=5 // pred_check
      _
    $region26: #{double_conv.3} parent=5 // pred_check_branch
      %171 = sbr.rel (%p168) target = $region28
    $region27: #{double_conv.3} parent=5 // pred_region
      %s172 = ssub.s32 %s11, 1
      %p173 = scmp.lt.s32.totalorder %s16, 1
      %s174 = scalar_select %p173, %s16, 1
      %s175 = smul.addr %s174, 32
      %s176 = smul.addr %s175, 8
      %s177 = scalar_lea.vmem %s0, %s176
      %p178 = pneg %p37
      %p179 = pneg %p34
      %p180 = pneg %p58
      %p181 = pneg %p55
      %p182 = pneg %p84
      %p183 = pneg %p81
      %p184 = scmp.lt.s32.totalorder %s16, 1
      %s185 = scalar_select %p184, %s16, 1
      %s186 = smul.addr %s185, 32
      %s187 = smul.addr %s186, 8
      %s188 = scalar_lea.vmem %s2, %s187
      %p189 = pneg %p110
      %p190 = pneg %p107
      %p191 = scmp.lt.s32.totalorder %s16, 1
      %s192 = scalar_select %p191, %s16, 1
      %s193 = scalar_lea.vmem %s3, %s192
      %p194 = pneg %p136
      %p195 = pneg %p133
      %p196 = scmp.lt.s32.totalorder %s16, 1
      %s197 = scalar_select %p196, %s16, 1
      %s198 = scalar_lea.vmem %s4, %s197
      %p199 = scmp.lt.s32.totalorder %s16, 1
      %s200 = scalar_select %p199, %s16, 1
      %s201 = smul.addr %s200, 32
      %s202 = smul.addr %s201, 8
      %s203 = scalar_lea.vmem %s0, %s202
      %p204 = scmp.lt.s32.totalorder %s16, 1
      %s205 = scalar_select %p204, %s16, 1
      %s206 = smul.addr %s205, 32
      %s207 = smul.addr %s206, 8
      %s208 = scalar_lea.vmem %s2, %s207
      %p209 = scmp.lt.s32.totalorder %s16, 1
      %s210 = scalar_select %p209, %s16, 1
      %s211 = scalar_lea.vmem %s3, %s210
      %p212 = scmp.lt.s32.totalorder %s16, 1
      %s213 = scalar_select %p212, %s16, 1
      %s214 = scalar_lea.vmem %s4, %s213
      %vm215 = vcmask 31744
      %216 = vst.msk [vmem:[#allocation2] sm:$0xff] %vm215, 0.0
      %217 = vst.msk [vmem:[#allocation2 + $0x8] sm:$0xff] %vm215, 0.0
      %vm218 = vcmask 25600
      %219 = vst.msk [vmem:[#allocation2 + $0x10] sm:$0x3] %vm218, 0.0
      %s220 = scalar_lea.vmem [#allocation2], 408
      %221 = vst.msk [vmem:[%s220] sm:$0xff] %vm215, 0.0
      %222 = vst.msk [vmem:[%s220 + $0x8] sm:$0xff] %vm215, 0.0
      %223 = vst.msk [vmem:[%s220 + $0x10] sm:$0x3] %vm218, 0.0
      %s224 = scalar_lea.vmem [#allocation2], 24
      %vm225 = vcmask 24576
      %226 = vst.msk [vmem:[%s224] sm:$0x1] %vm225, 0.0
      %227 = vst.msk [vmem:[%s224 + $0x18] sm:$0x1] %vm225, 0.0
      %228 = vst.msk [vmem:[%s224 + $0x30] sm:$0x1] %vm225, 0.0
      %229 = vst.msk [vmem:[%s224 + $0x48] sm:$0x1] %vm225, 0.0
      %230 = vst.msk [vmem:[%s224 + $0x60] sm:$0x1] %vm225, 0.0
      %231 = vst.msk [vmem:[%s224 + $0x78] sm:$0x1] %vm225, 0.0
      %232 = vst.msk [vmem:[%s224 + $0x90] sm:$0x1] %vm225, 0.0
      %233 = vst.msk [vmem:[%s224 + $0xa8] sm:$0x1] %vm225, 0.0
      %234 = vst.msk [vmem:[%s224 + $0xc0] sm:$0x1] %vm225, 0.0
      %235 = vst.msk [vmem:[%s224 + $0xd8] sm:$0x1] %vm225, 0.0
      %236 = vst.msk [vmem:[%s224 + $0xf0] sm:$0x1] %vm225, 0.0
      %237 = vst.msk [vmem:[%s224 + $0x108] sm:$0x1] %vm225, 0.0
      %238 = vst.msk [vmem:[%s224 + $0x120] sm:$0x1] %vm225, 0.0
      %239 = vst.msk [vmem:[%s224 + $0x138] sm:$0x1] %vm225, 0.0
      %240 = vst.msk [vmem:[%s224 + $0x150] sm:$0x1] %vm225, 0.0
      %241 = vst.msk [vmem:[%s224 + $0x168] sm:$0x1] %vm225, 0.0
      %242 = vst.msk [vmem:[%s224 + $0x11] sm:$0x1] %vm225, 0.0
      %243 = vst.msk [vmem:[%s224 + $0x29] sm:$0x1] %vm225, 0.0
      %244 = vst.msk [vmem:[%s224 + $0x41] sm:$0x1] %vm225, 0.0
      %245 = vst.msk [vmem:[%s224 + $0x59] sm:$0x1] %vm225, 0.0
      %246 = vst.msk [vmem:[%s224 + $0x71] sm:$0x1] %vm225, 0.0
      %247 = vst.msk [vmem:[%s224 + $0x89] sm:$0x1] %vm225, 0.0
      %248 = vst.msk [vmem:[%s224 + $0xa1] sm:$0x1] %vm225, 0.0
      %249 = vst.msk [vmem:[%s224 + $0xb9] sm:$0x1] %vm225, 0.0
      %250 = vst.msk [vmem:[%s224 + $0xd1] sm:$0x1] %vm225, 0.0
      %251 = vst.msk [vmem:[%s224 + $0xe9] sm:$0x1] %vm225, 0.0
      %252 = vst.msk [vmem:[%s224 + $0x101] sm:$0x1] %vm225, 0.0
      %253 = vst.msk [vmem:[%s224 + $0x119] sm:$0x1] %vm225, 0.0
      %254 = vst.msk [vmem:[%s224 + $0x131] sm:$0x1] %vm225, 0.0
      %255 = vst.msk [vmem:[%s224 + $0x149] sm:$0x1] %vm225, 0.0
      %256 = vst.msk [vmem:[%s224 + $0x161] sm:$0x1] %vm225, 0.0
      %257 = vst.msk [vmem:[%s224 + $0x179] sm:$0x1] %vm225, 0.0
      %v258 = vld [vmem:[%s203] sm:$0xff]
      %v259 = vld [vmem:[%s203 + $0x8] sm:$0xff]
      %v260 = vld [vmem:[%s203 + $0x10] sm:$0xff]
      %v261 = vld [vmem:[%s203 + $0x18] sm:$0xff]
      %v262 = vld [vmem:[%s203 + $0x20] sm:$0xff]
      %v263 = vld [vmem:[%s203 + $0x28] sm:$0xff]
      %v264 = vld [vmem:[%s203 + $0x30] sm:$0xff]
      %v265 = vld [vmem:[%s203 + $0x38] sm:$0xff]
      %v266 = vld [vmem:[%s203 + $0x40] sm:$0xff]
      %v267 = vld [vmem:[%s203 + $0x48] sm:$0xff]
      %v268 = vld [vmem:[%s203 + $0x50] sm:$0xff]
      %v269 = vld [vmem:[%s203 + $0x58] sm:$0xff]
      %v270 = vld [vmem:[%s203 + $0x60] sm:$0xff]
      %v271 = vld [vmem:[%s203 + $0x68] sm:$0xff]
      %v272 = vld [vmem:[%s203 + $0x70] sm:$0xff]
      %v273 = vld [vmem:[%s203 + $0x78] sm:$0xff]
      %v274 = vld [vmem:[%s203 + $0x80] sm:$0xff]
      %v275 = vld [vmem:[%s203 + $0x88] sm:$0xff]
      %v276 = vld [vmem:[%s203 + $0x90] sm:$0xff]
      %v277 = vld [vmem:[%s203 + $0x98] sm:$0xff]
      %v278 = vld [vmem:[%s203 + $0xa0] sm:$0xff]
      %v279 = vld [vmem:[%s203 + $0xa8] sm:$0xff]
      %v280 = vld [vmem:[%s203 + $0xb0] sm:$0xff]
      %v281 = vld [vmem:[%s203 + $0xb8] sm:$0xff]
      %v282 = vld [vmem:[%s203 + $0xc0] sm:$0xff]
      %v283 = vld [vmem:[%s203 + $0xc8] sm:$0xff]
      %v284 = vld [vmem:[%s203 + $0xd0] sm:$0xff]
      %v285 = vld [vmem:[%s203 + $0xd8] sm:$0xff]
      %v286 = vld [vmem:[%s203 + $0xe0] sm:$0xff]
      %v287 = vld [vmem:[%s203 + $0xe8] sm:$0xff]
      %v288 = vld [vmem:[%s203 + $0xf0] sm:$0xff]
      %v289 = vld [vmem:[%s203 + $0xf8] sm:$0xff]
      %290 = vst.msk [vmem:[%s224 + $0x1] sm:$0xff] %vm215, %v258
      %291 = vst.msk [vmem:[%s224 + $0x9] sm:$0xff] %vm215, %v259
      %292 = vst.msk [vmem:[%s224 + $0x19] sm:$0xff] %vm215, %v260
      %293 = vst.msk [vmem:[%s224 + $0x21] sm:$0xff] %vm215, %v261
      %294 = vst.msk [vmem:[%s224 + $0x31] sm:$0xff] %vm215, %v262
      %295 = vst.msk [vmem:[%s224 + $0x39] sm:$0xff] %vm215, %v263
      %296 = vst.msk [vmem:[%s224 + $0x49] sm:$0xff] %vm215, %v264
      %297 = vst.msk [vmem:[%s224 + $0x51] sm:$0xff] %vm215, %v265
      %298 = vst.msk [vmem:[%s224 + $0x61] sm:$0xff] %vm215, %v266
      %299 = vst.msk [vmem:[%s224 + $0x69] sm:$0xff] %vm215, %v267
      %300 = vst.msk [vmem:[%s224 + $0x79] sm:$0xff] %vm215, %v268
      %301 = vst.msk [vmem:[%s224 + $0x81] sm:$0xff] %vm215, %v269
      %302 = vst.msk [vmem:[%s224 + $0x91] sm:$0xff] %vm215, %v270
      %303 = vst.msk [vmem:[%s224 + $0x99] sm:$0xff] %vm215, %v271
      %304 = vst.msk [vmem:[%s224 + $0xa9] sm:$0xff] %vm215, %v272
      %305 = vst.msk [vmem:[%s224 + $0xb1] sm:$0xff] %vm215, %v273
      %306 = vst.msk [vmem:[%s224 + $0xc1] sm:$0xff] %vm215, %v274
      %307 = vst.msk [vmem:[%s224 + $0xc9] sm:$0xff] %vm215, %v275
      %308 = vst.msk [vmem:[%s224 + $0xd9] sm:$0xff] %vm215, %v276
      %309 = vst.msk [vmem:[%s224 + $0xe1] sm:$0xff] %vm215, %v277
      %310 = vst.msk [vmem:[%s224 + $0xf1] sm:$0xff] %vm215, %v278
      %311 = vst.msk [vmem:[%s224 + $0xf9] sm:$0xff] %vm215, %v279
      %312 = vst.msk [vmem:[%s224 + $0x109] sm:$0xff] %vm215, %v280
      %313 = vst.msk [vmem:[%s224 + $0x111] sm:$0xff] %vm215, %v281
      %314 = vst.msk [vmem:[%s224 + $0x121] sm:$0xff] %vm215, %v282
      %315 = vst.msk [vmem:[%s224 + $0x129] sm:$0xff] %vm215, %v283
      %316 = vst.msk [vmem:[%s224 + $0x139] sm:$0xff] %vm215, %v284
      %317 = vst.msk [vmem:[%s224 + $0x141] sm:$0xff] %vm215, %v285
      %318 = vst.msk [vmem:[%s224 + $0x151] sm:$0xff] %vm215, %v286
      %319 = vst.msk [vmem:[%s224 + $0x159] sm:$0xff] %vm215, %v287
      %320 = vst.msk [vmem:[%s224 + $0x169] sm:$0xff] %vm215, %v288
      %321 = vst.msk [vmem:[%s224 + $0x171] sm:$0xff] %vm215, %v289
      %v322 = vld [vmem:[#allocation2] sm:$0xff]
      %v323 = vld [vmem:[#allocation2 + $0x8] sm:$0xff]
      %v324 = vld [vmem:[#allocation2 + $0x18] sm:$0xff]
      %v325 = vld [vmem:[#allocation2 + $0x20] sm:$0xff]
      %v326 = vld [vmem:[#allocation2 + $0x30] sm:$0xff]
      %v327 = vld [vmem:[#allocation2 + $0x38] sm:$0xff]
      %v328 = vld [vmem:[#allocation2 + $0x48] sm:$0xff]
      %v329 = vld [vmem:[#allocation2 + $0x50] sm:$0xff]
      %v330 = vld [vmem:[#allocation2 + $0x60] sm:$0xff]
      %v331 = vld [vmem:[#allocation2 + $0x68] sm:$0xff]
      %v332 = vld [vmem:[#allocation2 + $0x78] sm:$0xff]
      %v333 = vld [vmem:[#allocation2 + $0x80] sm:$0xff]
      %v334 = vld [vmem:[#allocation2 + $0x90] sm:$0xff]
      %v335 = vld [vmem:[#allocation2 + $0x98] sm:$0xff]
      %v336 = vld [vmem:[#allocation2 + $0xa8] sm:$0xff]
      %v337 = vld [vmem:[#allocation2 + $0xb0] sm:$0xff]
      %v338 = vld [vmem:[#allocation2 + $0xc0] sm:$0xff]
      %v339 = vld [vmem:[#allocation2 + $0xc8] sm:$0xff]
      %v340 = vld [vmem:[#allocation2 + $0xd8] sm:$0xff]
      %v341 = vld [vmem:[#allocation2 + $0xe0] sm:$0xff]
      %v342 = vld [vmem:[#allocation2 + $0xf0] sm:$0xff]
      %v343 = vld [vmem:[#allocation2 + $0xf8] sm:$0xff]
      %v344 = vld [vmem:[#allocation2 + $0x108] sm:$0xff]
      %v345 = vld [vmem:[#allocation2 + $0x110] sm:$0xff]
      %v346 = vld [vmem:[#allocation2 + $0x120] sm:$0xff]
      %v347 = vld [vmem:[#allocation2 + $0x128] sm:$0xff]
      %v348 = vld [vmem:[#allocation2 + $0x138] sm:$0xff]
      %v349 = vld [vmem:[#allocation2 + $0x140] sm:$0xff]
      %v350 = vld [vmem:[#allocation2 + $0x150] sm:$0xff]
      %v351 = vld [vmem:[#allocation2 + $0x158] sm:$0xff]
      %v352 = vld [vmem:[#allocation2 + $0x168] sm:$0xff]
      %v353 = vld [vmem:[#allocation2 + $0x170] sm:$0xff]
      %v354 = vld [vmem:[%s1] sm:$0xf]
      %v356 = vsel %vm215, %v322, 0
      %v359 = vsel %vm215, %v323, 0
      %v362 = vsel %vm215, %v324, 0
      %v365 = vsel %vm215, %v325, 0
      %v368 = vsel %vm215, %v326, 0
      %v371 = vsel %vm215, %v327, 0
      %v374 = vsel %vm215, %v328, 0
      %v377 = vsel %vm215, %v329, 0
      %v380 = vsel %vm215, %v330, 0
      %v383 = vsel %vm215, %v331, 0
      %v386 = vsel %vm215, %v332, 0
      %v389 = vsel %vm215, %v333, 0
      %v392 = vsel %vm215, %v334, 0
      %v395 = vsel %vm215, %v335, 0
      %v398 = vsel %vm215, %v336, 0
      %v401 = vsel %vm215, %v337, 0
      %v404 = vsel %vm215, %v338, 0
      %v407 = vsel %vm215, %v339, 0
      %v410 = vsel %vm215, %v340, 0
      %v413 = vsel %vm215, %v341, 0
      %v416 = vsel %vm215, %v342, 0
      %v419 = vsel %vm215, %v343, 0
      %v422 = vsel %vm215, %v344, 0
      %v425 = vsel %vm215, %v345, 0
      %v428 = vsel %vm215, %v346, 0
      %v431 = vsel %vm215, %v347, 0
      %v434 = vsel %vm215, %v348, 0
      %v437 = vsel %vm215, %v349, 0
      %v440 = vsel %vm215, %v350, 0
      %v443 = vsel %vm215, %v351, 0
      %v446 = vsel %vm215, %v352, 0
      %v449 = vsel %vm215, %v353, 0
      %vm451 = vcmask 1043456
      %v453 = vsel %vm451, %v354, 0
      %455 = vmatprep.subr.mxu0 0.0
      %456 = vmatpush1.msra.mxu0 0.0
      %457 = vmatprep.subr.mxu0 0.0
      %458 = vmatpush1.msra.mxu0 0.0
      %459 = vmatprep.subr.mxu0 0.0
      %460 = vmatpush1.msra.mxu0 0.0
      %461 = vmatprep.subr.mxu0 0.0
      %462 = vmatpush1.msra.mxu0 0.0
      %463 = vmatprep.subr.mxu0 0.0
      %464 = vmatpush1.msra.mxu0 0.0
      %465 = vmatprep.subr.mxu0 0.0
      %466 = vmatpush1.msra.mxu0 0.0
      %467 = vmatprep.subr.mxu0 0.0
      %468 = vmatpush1.msra.mxu0 0.0
      %469 = vmatprep.subr.mxu0 0.0
      %470 = vmatpush1.msra.mxu0 0.0
      %471 = vmatprep.subr.mxu0 0.0
      %472 = vmatpush1.msra.mxu0 0.0
      %473 = vmatprep.subr.mxu0 0.0
      %474 = vmatpush1.msra.mxu0 0.0
      %475 = vmatprep.subr.mxu0 0.0
      %476 = vmatpush1.msra.mxu0 0.0
      %477 = vmatprep.subr.mxu0 0.0
      %478 = vmatpush1.msra.mxu0 0.0
      %479 = vmatprep.subr.mxu0 0.0
      %480 = vmatpush1.msra.mxu0 0.0
      %481 = vmatprep.subr.mxu0 0.0
      %482 = vmatpush1.msra.mxu0 0.0
      %483 = vmatprep.subr.mxu0 0.0
      %484 = vmatpush1.msra.mxu0 0.0
      %485 = vmatprep.subr.mxu0 0.0
      %486 = vmatpush1.msra.mxu0 %v453
      %487 = vmatprep.subr.mxu0 0.0
      %488 = vmatpush2.msra.mxu0 0.0
      %489 = vmatprep.subr.mxu0 0.0
      %490 = vmatpush2.msra.mxu0 0.0
      %491 = vmatprep.subr.mxu0 0.0
      %492 = vmatpush2.msra.mxu0 0.0
      %493 = vmatprep.subr.mxu0 0.0
      %494 = vmatpush2.msra.mxu0 0.0
      %495 = vmatprep.subr.mxu0 0.0
      %496 = vmatpush2.msra.mxu0 0.0
      %497 = vmatprep.subr.mxu0 0.0
      %498 = vmatpush2.msra.mxu0 0.0
      %499 = vmatprep.subr.mxu0 0.0
      %500 = vmatpush2.msra.mxu0 0.0
      %501 = vmatprep.subr.mxu0 0.0
      %502 = vmatpush2.msra.mxu0 0.0
      %503 = vmatprep.subr.mxu0 0.0
      %504 = vmatpush2.msra.mxu0 0.0
      %505 = vmatprep.subr.mxu0 0.0
      %506 = vmatpush2.msra.mxu0 0.0
      %507 = vmatprep.subr.mxu0 0.0
      %508 = vmatpush2.msra.mxu0 0.0
      %509 = vmatprep.subr.mxu0 0.0
      %510 = vmatpush2.msra.mxu0 0.0
      %511 = vmatprep.subr.mxu0 0.0
      %512 = vmatpush2.msra.mxu0 0.0
      %513 = vmatprep.subr.mxu0 0.0
      %514 = vmatpush2.msra.mxu0 0.0
      %515 = vmatprep.subr.mxu0 0.0
      %516 = vmatpush2.msra.mxu0 0.0
      %517 = vmatprep.subr.mxu0 0.0
      %518 = vmatpush2.msra.mxu0 0.0
      %519 = vmatprep.mubr.f32.mxu0 0.0
      %520 = vmatmul.mubr.f32.gmra.mxu0 %v356
      %v521 = vpop.f32.mrf.mxu0
      %v522 = vadd.f32 0.0, %v521
      %v523 = vpop.f32.mrf.mxu0
      %524 = vmatprep.mubr.f32.mxu0 0.0
      %525 = vmatmul.mubr.f32.gmra.mxu0 %v359
      %v526 = vpop.f32.mrf.mxu0
      %v527 = vadd.f32 0.0, %v526
      %v528 = vpop.f32.mrf.mxu0
      %529 = vmatprep.mubr.f32.mxu0 0.0
      %530 = vmatmul.mubr.f32.gmra.mxu0 %v362
      %v531 = vpop.f32.mrf.mxu0
      %v532 = vadd.f32 0.0, %v531
      %v533 = vpop.f32.mrf.mxu0
      %534 = vmatprep.mubr.f32.mxu0 0.0
      %535 = vmatmul.mubr.f32.gmra.mxu0 %v365
      %v536 = vpop.f32.mrf.mxu0
      %v537 = vadd.f32 0.0, %v536
      %v538 = vpop.f32.mrf.mxu0
      %539 = vmatprep.mubr.f32.mxu0 0.0
      %540 = vmatmul.mubr.f32.gmra.mxu0 %v368
      %v541 = vpop.f32.mrf.mxu0
      %v542 = vadd.f32 0.0, %v541
      %v543 = vpop.f32.mrf.mxu0
      %544 = vmatprep.mubr.f32.mxu0 0.0
      %545 = vmatmul.mubr.f32.gmra.mxu0 %v371
      %v546 = vpop.f32.mrf.mxu0
      %v547 = vadd.f32 0.0, %v546
      %v548 = vpop.f32.mrf.mxu0
      %549 = vmatprep.mubr.f32.mxu0 0.0
      %550 = vmatmul.mubr.f32.gmra.mxu0 %v374
      %v551 = vpop.f32.mrf.mxu0
      %v552 = vadd.f32 0.0, %v551
      %v553 = vpop.f32.mrf.mxu0
      %554 = vmatprep.mubr.f32.mxu0 0.0
      %555 = vmatmul.mubr.f32.gmra.mxu0 %v377
      %v556 = vpop.f32.mrf.mxu0
      %v557 = vadd.f32 0.0, %v556
      %v558 = vpop.f32.mrf.mxu0
      %559 = vmatprep.mubr.f32.mxu0 0.0
      %560 = vmatmul.mubr.f32.gmra.mxu0 %v380
      %v561 = vpop.f32.mrf.mxu0
      %v562 = vadd.f32 0.0, %v561
      %v563 = vpop.f32.mrf.mxu0
      %564 = vmatprep.mubr.f32.mxu0 0.0
      %565 = vmatmul.mubr.f32.gmra.mxu0 %v383
      %v566 = vpop.f32.mrf.mxu0
      %v567 = vadd.f32 0.0, %v566
      %v568 = vpop.f32.mrf.mxu0
      %569 = vmatprep.mubr.f32.mxu0 0.0
      %570 = vmatmul.mubr.f32.gmra.mxu0 %v386
      %v571 = vpop.f32.mrf.mxu0
      %v572 = vadd.f32 0.0, %v571
      %v573 = vpop.f32.mrf.mxu0
      %574 = vmatprep.mubr.f32.mxu0 0.0
      %575 = vmatmul.mubr.f32.gmra.mxu0 %v389
      %v576 = vpop.f32.mrf.mxu0
      %v577 = vadd.f32 0.0, %v576
      %v578 = vpop.f32.mrf.mxu0
      %579 = vmatprep.mubr.f32.mxu0 0.0
      %580 = vmatmul.mubr.f32.gmra.mxu0 %v392
      %v581 = vpop.f32.mrf.mxu0
      %v582 = vadd.f32 0.0, %v581
      %v583 = vpop.f32.mrf.mxu0
      %584 = vmatprep.mubr.f32.mxu0 0.0
      %585 = vmatmul.mubr.f32.gmra.mxu0 %v395
      %v586 = vpop.f32.mrf.mxu0
      %v587 = vadd.f32 0.0, %v586
      %v588 = vpop.f32.mrf.mxu0
      %589 = vmatprep.mubr.f32.mxu0 0.0
      %590 = vmatmul.mubr.f32.gmra.mxu0 %v398
      %v591 = vpop.f32.mrf.mxu0
      %v592 = vadd.f32 0.0, %v591
      %v593 = vpop.f32.mrf.mxu0
      %594 = vmatprep.mubr.f32.mxu0 0.0
      %595 = vmatmul.mubr.f32.gmra.mxu0 %v401
      %v596 = vpop.f32.mrf.mxu0
      %v597 = vadd.f32 0.0, %v596
      %v598 = vpop.f32.mrf.mxu0
      %599 = vmatprep.mubr.f32.mxu0 0.0
      %600 = vmatmul.mubr.f32.gmra.mxu0 %v404
      %v601 = vpop.f32.mrf.mxu0
      %v602 = vadd.f32 0.0, %v601
      %v603 = vpop.f32.mrf.mxu0
      %604 = vmatprep.mubr.f32.mxu0 0.0
      %605 = vmatmul.mubr.f32.gmra.mxu0 %v407
      %v606 = vpop.f32.mrf.mxu0
      %v607 = vadd.f32 0.0, %v606
      %v608 = vpop.f32.mrf.mxu0
      %609 = vmatprep.mubr.f32.mxu0 0.0
      %610 = vmatmul.mubr.f32.gmra.mxu0 %v410
      %v611 = vpop.f32.mrf.mxu0
      %v612 = vadd.f32 0.0, %v611
      %v613 = vpop.f32.mrf.mxu0
      %614 = vmatprep.mubr.f32.mxu0 0.0
      %615 = vmatmul.mubr.f32.gmra.mxu0 %v413
      %v616 = vpop.f32.mrf.mxu0
      %v617 = vadd.f32 0.0, %v616
      %v618 = vpop.f32.mrf.mxu0
      %619 = vmatprep.mubr.f32.mxu0 0.0
      %620 = vmatmul.mubr.f32.gmra.mxu0 %v416
      %v621 = vpop.f32.mrf.mxu0
      %v622 = vadd.f32 0.0, %v621
      %v623 = vpop.f32.mrf.mxu0
      %624 = vmatprep.mubr.f32.mxu0 0.0
      %625 = vmatmul.mubr.f32.gmra.mxu0 %v419
      %v626 = vpop.f32.mrf.mxu0
      %v627 = vadd.f32 0.0, %v626
      %v628 = vpop.f32.mrf.mxu0
      %629 = vmatprep.mubr.f32.mxu0 0.0
      %630 = vmatmul.mubr.f32.gmra.mxu0 %v422
      %v631 = vpop.f32.mrf.mxu0
      %v632 = vadd.f32 0.0, %v631
      %v633 = vpop.f32.mrf.mxu0
      %634 = vmatprep.mubr.f32.mxu0 0.0
      %635 = vmatmul.mubr.f32.gmra.mxu0 %v425
      %v636 = vpop.f32.mrf.mxu0
      %v637 = vadd.f32 0.0, %v636
      %v638 = vpop.f32.mrf.mxu0
      %639 = vmatprep.mubr.f32.mxu0 0.0
      %640 = vmatmul.mubr.f32.gmra.mxu0 %v428
      %v641 = vpop.f32.mrf.mxu0
      %v642 = vadd.f32 0.0, %v641
      %v643 = vpop.f32.mrf.mxu0
      %644 = vmatprep.mubr.f32.mxu0 0.0
      %645 = vmatmul.mubr.f32.gmra.mxu0 %v431
      %v646 = vpop.f32.mrf.mxu0
      %v647 = vadd.f32 0.0, %v646
      %v648 = vpop.f32.mrf.mxu0
      %649 = vmatprep.mubr.f32.mxu0 0.0
      %650 = vmatmul.mubr.f32.gmra.mxu0 %v434
      %v651 = vpop.f32.mrf.mxu0
      %v652 = vadd.f32 0.0, %v651
      %v653 = vpop.f32.mrf.mxu0
      %654 = vmatprep.mubr.f32.mxu0 0.0
      %655 = vmatmul.mubr.f32.gmra.mxu0 %v437
      %v656 = vpop.f32.mrf.mxu0
      %v657 = vadd.f32 0.0, %v656
      %v658 = vpop.f32.mrf.mxu0
      %659 = vmatprep.mubr.f32.mxu0 0.0
      %660 = vmatmul.mubr.f32.gmra.mxu0 %v440
      %v661 = vpop.f32.mrf.mxu0
      %v662 = vadd.f32 0.0, %v661
      %v663 = vpop.f32.mrf.mxu0
      %664 = vmatprep.mubr.f32.mxu0 0.0
      %665 = vmatmul.mubr.f32.gmra.mxu0 %v443
      %v666 = vpop.f32.mrf.mxu0
      %v667 = vadd.f32 0.0, %v666
      %v668 = vpop.f32.mrf.mxu0
      %669 = vmatprep.mubr.f32.mxu0 0.0
      %670 = vmatmul.mubr.f32.gmra.mxu0 %v446
      %v671 = vpop.f32.mrf.mxu0
      %v672 = vadd.f32 0.0, %v671
      %v673 = vpop.f32.mrf.mxu0
      %674 = vmatprep.mubr.f32.mxu0 0.0
      %675 = vmatmul.mubr.f32.gmra.mxu0 %v449
      %v676 = vpop.f32.mrf.mxu0
      %v677 = vadd.f32 0.0, %v676
      %v678 = vpop.f32.mrf.mxu0
      %679 = vdwg.mxu0
      %vm680 = vcmask 64512
      %681 = vst.msk [vmem:[#allocation3] sm:$0xff] %vm680, %v522
      %682 = vst.msk [vmem:[#allocation3 + $0x8] sm:$0xff] %vm680, %v527
      %683 = vst.msk [vmem:[#allocation3 + $0x10] sm:$0xff] %vm680, %v532
      %684 = vst.msk [vmem:[#allocation3 + $0x18] sm:$0xff] %vm680, %v537
      %685 = vst.msk [vmem:[#allocation3 + $0x20] sm:$0xff] %vm680, %v542
      %686 = vst.msk [vmem:[#allocation3 + $0x28] sm:$0xff] %vm680, %v547
      %687 = vst.msk [vmem:[#allocation3 + $0x30] sm:$0xff] %vm680, %v552
      %688 = vst.msk [vmem:[#allocation3 + $0x38] sm:$0xff] %vm680, %v557
      %689 = vst.msk [vmem:[#allocation3 + $0x40] sm:$0xff] %vm680, %v562
      %690 = vst.msk [vmem:[#allocation3 + $0x48] sm:$0xff] %vm680, %v567
      %691 = vst.msk [vmem:[#allocation3 + $0x50] sm:$0xff] %vm680, %v572
      %692 = vst.msk [vmem:[#allocation3 + $0x58] sm:$0xff] %vm680, %v577
      %693 = vst.msk [vmem:[#allocation3 + $0x60] sm:$0xff] %vm680, %v582
      %694 = vst.msk [vmem:[#allocation3 + $0x68] sm:$0xff] %vm680, %v587
      %695 = vst.msk [vmem:[#allocation3 + $0x70] sm:$0xff] %vm680, %v592
      %696 = vst.msk [vmem:[#allocation3 + $0x78] sm:$0xff] %vm680, %v597
      %697 = vst.msk [vmem:[#allocation3 + $0x80] sm:$0xff] %vm680, %v602
      %698 = vst.msk [vmem:[#allocation3 + $0x88] sm:$0xff] %vm680, %v607
      %699 = vst.msk [vmem:[#allocation3 + $0x90] sm:$0xff] %vm680, %v612
      %700 = vst.msk [vmem:[#allocation3 + $0x98] sm:$0xff] %vm680, %v617
      %701 = vst.msk [vmem:[#allocation3 + $0xa0] sm:$0xff] %vm680, %v622
      %702 = vst.msk [vmem:[#allocation3 + $0xa8] sm:$0xff] %vm680, %v627
      %703 = vst.msk [vmem:[#allocation3 + $0xb0] sm:$0xff] %vm680, %v632
      %704 = vst.msk [vmem:[#allocation3 + $0xb8] sm:$0xff] %vm680, %v637
      %705 = vst.msk [vmem:[#allocation3 + $0xc0] sm:$0xff] %vm680, %v642
      %706 = vst.msk [vmem:[#allocation3 + $0xc8] sm:$0xff] %vm680, %v647
      %707 = vst.msk [vmem:[#allocation3 + $0xd0] sm:$0xff] %vm680, %v652
      %708 = vst.msk [vmem:[#allocation3 + $0xd8] sm:$0xff] %vm680, %v657
      %709 = vst.msk [vmem:[#allocation3 + $0xe0] sm:$0xff] %vm680, %v662
      %710 = vst.msk [vmem:[#allocation3 + $0xe8] sm:$0xff] %vm680, %v667
      %711 = vst.msk [vmem:[#allocation3 + $0xf0] sm:$0xff] %vm680, %v672
      %712 = vst.msk [vmem:[#allocation3 + $0xf8] sm:$0xff] %vm680, %v677
      %v713 = vld [vmem:[#allocation2 + $0x1] sm:$0xff]
      %v714 = vld [vmem:[#allocation2 + $0x9] sm:$0xff]
      %v715 = vld [vmem:[#allocation2 + $0x19] sm:$0xff]
      %v716 = vld [vmem:[#allocation2 + $0x21] sm:$0xff]
      %v717 = vld [vmem:[#allocation2 + $0x31] sm:$0xff]
      %v718 = vld [vmem:[#allocation2 + $0x39] sm:$0xff]
      %v719 = vld [vmem:[#allocation2 + $0x49] sm:$0xff]
      %v720 = vld [vmem:[#allocation2 + $0x51] sm:$0xff]
      %v721 = vld [vmem:[#allocation2 + $0x61] sm:$0xff]
      %v722 = vld [vmem:[#allocation2 + $0x69] sm:$0xff]
      %v723 = vld [vmem:[#allocation2 + $0x79] sm:$0xff]
      %v724 = vld [vmem:[#allocation2 + $0x81] sm:$0xff]
      %v725 = vld [vmem:[#allocation2 + $0x91] sm:$0xff]
      %v726 = vld [vmem:[#allocation2 + $0x99] sm:$0xff]
      %v727 = vld [vmem:[#allocation2 + $0xa9] sm:$0xff]
      %v728 = vld [vmem:[#allocation2 + $0xb1] sm:$0xff]
      %v729 = vld [vmem:[#allocation2 + $0xc1] sm:$0xff]
      %v730 = vld [vmem:[#allocation2 + $0xc9] sm:$0xff]
      %v731 = vld [vmem:[#allocation2 + $0xd9] sm:$0xff]
      %v732 = vld [vmem:[#allocation2 + $0xe1] sm:$0xff]
      %v733 = vld [vmem:[#allocation2 + $0xf1] sm:$0xff]
      %v734 = vld [vmem:[#allocation2 + $0xf9] sm:$0xff]
      %v735 = vld [vmem:[#allocation2 + $0x109] sm:$0xff]
      %v736 = vld [vmem:[#allocation2 + $0x111] sm:$0xff]
      %v737 = vld [vmem:[#allocation2 + $0x121] sm:$0xff]
      %v738 = vld [vmem:[#allocation2 + $0x129] sm:$0xff]
      %v739 = vld [vmem:[#allocation2 + $0x139] sm:$0xff]
      %v740 = vld [vmem:[#allocation2 + $0x141] sm:$0xff]
      %v741 = vld [vmem:[#allocation2 + $0x151] sm:$0xff]
      %v742 = vld [vmem:[#allocation2 + $0x159] sm:$0xff]
      %v743 = vld [vmem:[#allocation2 + $0x169] sm:$0xff]
      %v744 = vld [vmem:[#allocation2 + $0x171] sm:$0xff]
      %s745 = scalar_lea.vmem %s1, 4
      %v746 = vld [vmem:[%s745] sm:$0xf]
      %v748 = vsel %vm215, %v713, 0
      %v751 = vsel %vm215, %v714, 0
      %v754 = vsel %vm215, %v715, 0
      %v757 = vsel %vm215, %v716, 0
      %v760 = vsel %vm215, %v717, 0
      %v763 = vsel %vm215, %v718, 0
      %v766 = vsel %vm215, %v719, 0
      %v769 = vsel %vm215, %v720, 0
      %v772 = vsel %vm215, %v721, 0
      %v775 = vsel %vm215, %v722, 0
      %v778 = vsel %vm215, %v723, 0
      %v781 = vsel %vm215, %v724, 0
      %v784 = vsel %vm215, %v725, 0
      %v787 = vsel %vm215, %v726, 0
      %v790 = vsel %vm215, %v727, 0
      %v793 = vsel %vm215, %v728, 0
      %v796 = vsel %vm215, %v729, 0
      %v799 = vsel %vm215, %v730, 0
      %v802 = vsel %vm215, %v731, 0
      %v805 = vsel %vm215, %v732, 0
      %v808 = vsel %vm215, %v733, 0
      %v811 = vsel %vm215, %v734, 0
      %v814 = vsel %vm215, %v735, 0
      %v817 = vsel %vm215, %v736, 0
      %v820 = vsel %vm215, %v737, 0
      %v823 = vsel %vm215, %v738, 0
      %v826 = vsel %vm215, %v739, 0
      %v829 = vsel %vm215, %v740, 0
      %v832 = vsel %vm215, %v741, 0
      %v835 = vsel %vm215, %v742, 0
      %v838 = vsel %vm215, %v743, 0
      %v841 = vsel %vm215, %v744, 0
      %v844 = vsel %vm451, %v746, 0
      %846 = vmatprep.subr.mxu0 0.0
      %847 = vmatpush1.msra.mxu0 0.0
      %848 = vmatprep.subr.mxu0 0.0
      %849 = vmatpush1.msra.mxu0 0.0
      %850 = vmatprep.subr.mxu0 0.0
      %851 = vmatpush1.msra.mxu0 0.0
      %852 = vmatprep.subr.mxu0 0.0
      %853 = vmatpush1.msra.mxu0 0.0
      %854 = vmatprep.subr.mxu0 0.0
      %855 = vmatpush1.msra.mxu0 0.0
      %856 = vmatprep.subr.mxu0 0.0
      %857 = vmatpush1.msra.mxu0 0.0
      %858 = vmatprep.subr.mxu0 0.0
      %859 = vmatpush1.msra.mxu0 0.0
      %860 = vmatprep.subr.mxu0 0.0
      %861 = vmatpush1.msra.mxu0 0.0
      %862 = vmatprep.subr.mxu0 0.0
      %863 = vmatpush1.msra.mxu0 0.0
      %864 = vmatprep.subr.mxu0 0.0
      %865 = vmatpush1.msra.mxu0 0.0
      %866 = vmatprep.subr.mxu0 0.0
      %867 = vmatpush1.msra.mxu0 0.0
      %868 = vmatprep.subr.mxu0 0.0
      %869 = vmatpush1.msra.mxu0 0.0
      %870 = vmatprep.subr.mxu0 0.0
      %871 = vmatpush1.msra.mxu0 0.0
      %872 = vmatprep.subr.mxu0 0.0
      %873 = vmatpush1.msra.mxu0 0.0
      %874 = vmatprep.subr.mxu0 0.0
      %875 = vmatpush1.msra.mxu0 0.0
      %876 = vmatprep.subr.mxu0 0.0
      %877 = vmatpush1.msra.mxu0 %v844
      %878 = vmatprep.subr.mxu0 0.0
      %879 = vmatpush2.msra.mxu0 0.0
      %880 = vmatprep.subr.mxu0 0.0
      %881 = vmatpush2.msra.mxu0 0.0
      %882 = vmatprep.subr.mxu0 0.0
      %883 = vmatpush2.msra.mxu0 0.0
      %884 = vmatprep.subr.mxu0 0.0
      %885 = vmatpush2.msra.mxu0 0.0
      %886 = vmatprep.subr.mxu0 0.0
      %887 = vmatpush2.msra.mxu0 0.0
      %888 = vmatprep.subr.mxu0 0.0
      %889 = vmatpush2.msra.mxu0 0.0
      %890 = vmatprep.subr.mxu0 0.0
      %891 = vmatpush2.msra.mxu0 0.0
      %892 = vmatprep.subr.mxu0 0.0
      %893 = vmatpush2.msra.mxu0 0.0
      %894 = vmatprep.subr.mxu0 0.0
      %895 = vmatpush2.msra.mxu0 0.0
      %896 = vmatprep.subr.mxu0 0.0
      %897 = vmatpush2.msra.mxu0 0.0
      %898 = vmatprep.subr.mxu0 0.0
      %899 = vmatpush2.msra.mxu0 0.0
      %900 = vmatprep.subr.mxu0 0.0
      %901 = vmatpush2.msra.mxu0 0.0
      %902 = vmatprep.subr.mxu0 0.0
      %903 = vmatpush2.msra.mxu0 0.0
      %904 = vmatprep.subr.mxu0 0.0
      %905 = vmatpush2.msra.mxu0 0.0
      %906 = vmatprep.subr.mxu0 0.0
      %907 = vmatpush2.msra.mxu0 0.0
      %908 = vmatprep.subr.mxu0 0.0
      %909 = vmatpush2.msra.mxu0 0.0
      %910 = vmatprep.mubr.f32.mxu0 0.0
      %911 = vmatmul.mubr.f32.gmra.mxu0 %v748
      %v912 = vpop.f32.mrf.mxu0
      %v913 = vadd.f32 0.0, %v912
      %v914 = vpop.f32.mrf.mxu0
      %915 = vmatprep.mubr.f32.mxu0 0.0
      %916 = vmatmul.mubr.f32.gmra.mxu0 %v751
      %v917 = vpop.f32.mrf.mxu0
      %v918 = vadd.f32 0.0, %v917
      %v919 = vpop.f32.mrf.mxu0
      %920 = vmatprep.mubr.f32.mxu0 0.0
      %921 = vmatmul.mubr.f32.gmra.mxu0 %v754
      %v922 = vpop.f32.mrf.mxu0
      %v923 = vadd.f32 0.0, %v922
      %v924 = vpop.f32.mrf.mxu0
      %925 = vmatprep.mubr.f32.mxu0 0.0
      %926 = vmatmul.mubr.f32.gmra.mxu0 %v757
      %v927 = vpop.f32.mrf.mxu0
      %v928 = vadd.f32 0.0, %v927
      %v929 = vpop.f32.mrf.mxu0
      %930 = vmatprep.mubr.f32.mxu0 0.0
      %931 = vmatmul.mubr.f32.gmra.mxu0 %v760
      %v932 = vpop.f32.mrf.mxu0
      %v933 = vadd.f32 0.0, %v932
      %v934 = vpop.f32.mrf.mxu0
      %935 = vmatprep.mubr.f32.mxu0 0.0
      %936 = vmatmul.mubr.f32.gmra.mxu0 %v763
      %v937 = vpop.f32.mrf.mxu0
      %v938 = vadd.f32 0.0, %v937
      %v939 = vpop.f32.mrf.mxu0
      %940 = vmatprep.mubr.f32.mxu0 0.0
      %941 = vmatmul.mubr.f32.gmra.mxu0 %v766
      %v942 = vpop.f32.mrf.mxu0
      %v943 = vadd.f32 0.0, %v942
      %v944 = vpop.f32.mrf.mxu0
      %945 = vmatprep.mubr.f32.mxu0 0.0
      %946 = vmatmul.mubr.f32.gmra.mxu0 %v769
      %v947 = vpop.f32.mrf.mxu0
      %v948 = vadd.f32 0.0, %v947
      %v949 = vpop.f32.mrf.mxu0
      %950 = vmatprep.mubr.f32.mxu0 0.0
      %951 = vmatmul.mubr.f32.gmra.mxu0 %v772
      %v952 = vpop.f32.mrf.mxu0
      %v953 = vadd.f32 0.0, %v952
      %v954 = vpop.f32.mrf.mxu0
      %955 = vmatprep.mubr.f32.mxu0 0.0
      %956 = vmatmul.mubr.f32.gmra.mxu0 %v775
      %v957 = vpop.f32.mrf.mxu0
      %v958 = vadd.f32 0.0, %v957
      %v959 = vpop.f32.mrf.mxu0
      %960 = vmatprep.mubr.f32.mxu0 0.0
      %961 = vmatmul.mubr.f32.gmra.mxu0 %v778
      %v962 = vpop.f32.mrf.mxu0
      %v963 = vadd.f32 0.0, %v962
      %v964 = vpop.f32.mrf.mxu0
      %965 = vmatprep.mubr.f32.mxu0 0.0
      %966 = vmatmul.mubr.f32.gmra.mxu0 %v781
      %v967 = vpop.f32.mrf.mxu0
      %v968 = vadd.f32 0.0, %v967
      %v969 = vpop.f32.mrf.mxu0
      %970 = vmatprep.mubr.f32.mxu0 0.0
      %971 = vmatmul.mubr.f32.gmra.mxu0 %v784
      %v972 = vpop.f32.mrf.mxu0
      %v973 = vadd.f32 0.0, %v972
      %v974 = vpop.f32.mrf.mxu0
      %975 = vmatprep.mubr.f32.mxu0 0.0
      %976 = vmatmul.mubr.f32.gmra.mxu0 %v787
      %v977 = vpop.f32.mrf.mxu0
      %v978 = vadd.f32 0.0, %v977
      %v979 = vpop.f32.mrf.mxu0
      %980 = vmatprep.mubr.f32.mxu0 0.0
      %981 = vmatmul.mubr.f32.gmra.mxu0 %v790
      %v982 = vpop.f32.mrf.mxu0
      %v983 = vadd.f32 0.0, %v982
      %v984 = vpop.f32.mrf.mxu0
      %985 = vmatprep.mubr.f32.mxu0 0.0
      %986 = vmatmul.mubr.f32.gmra.mxu0 %v793
      %v987 = vpop.f32.mrf.mxu0
      %v988 = vadd.f32 0.0, %v987
      %v989 = vpop.f32.mrf.mxu0
      %990 = vmatprep.mubr.f32.mxu0 0.0
      %991 = vmatmul.mubr.f32.gmra.mxu0 %v796
      %v992 = vpop.f32.mrf.mxu0
      %v993 = vadd.f32 0.0, %v992
      %v994 = vpop.f32.mrf.mxu0
      %995 = vmatprep.mubr.f32.mxu0 0.0
      %996 = vmatmul.mubr.f32.gmra.mxu0 %v799
      %v997 = vpop.f32.mrf.mxu0
      %v998 = vadd.f32 0.0, %v997
      %v999 = vpop.f32.mrf.mxu0
      %1000 = vmatprep.mubr.f32.mxu0 0.0
      %1001 = vmatmul.mubr.f32.gmra.mxu0 %v802
      %v1002 = vpop.f32.mrf.mxu0
      %v1003 = vadd.f32 0.0, %v1002
      %v1004 = vpop.f32.mrf.mxu0
      %1005 = vmatprep.mubr.f32.mxu0 0.0
      %1006 = vmatmul.mubr.f32.gmra.mxu0 %v805
      %v1007 = vpop.f32.mrf.mxu0
      %v1008 = vadd.f32 0.0, %v1007
      %v1009 = vpop.f32.mrf.mxu0
      %1010 = vmatprep.mubr.f32.mxu0 0.0
      %1011 = vmatmul.mubr.f32.gmra.mxu0 %v808
      %v1012 = vpop.f32.mrf.mxu0
      %v1013 = vadd.f32 0.0, %v1012
      %v1014 = vpop.f32.mrf.mxu0
      %1015 = vmatprep.mubr.f32.mxu0 0.0
      %1016 = vmatmul.mubr.f32.gmra.mxu0 %v811
      %v1017 = vpop.f32.mrf.mxu0
      %v1018 = vadd.f32 0.0, %v1017
      %v1019 = vpop.f32.mrf.mxu0
      %1020 = vmatprep.mubr.f32.mxu0 0.0
      %1021 = vmatmul.mubr.f32.gmra.mxu0 %v814
      %v1022 = vpop.f32.mrf.mxu0
      %v1023 = vadd.f32 0.0, %v1022
      %v1024 = vpop.f32.mrf.mxu0
      %1025 = vmatprep.mubr.f32.mxu0 0.0
      %1026 = vmatmul.mubr.f32.gmra.mxu0 %v817
      %v1027 = vpop.f32.mrf.mxu0
      %v1028 = vadd.f32 0.0, %v1027
      %v1029 = vpop.f32.mrf.mxu0
      %1030 = vmatprep.mubr.f32.mxu0 0.0
      %1031 = vmatmul.mubr.f32.gmra.mxu0 %v820
      %v1032 = vpop.f32.mrf.mxu0
      %v1033 = vadd.f32 0.0, %v1032
      %v1034 = vpop.f32.mrf.mxu0
      %1035 = vmatprep.mubr.f32.mxu0 0.0
      %1036 = vmatmul.mubr.f32.gmra.mxu0 %v823
      %v1037 = vpop.f32.mrf.mxu0
      %v1038 = vadd.f32 0.0, %v1037
      %v1039 = vpop.f32.mrf.mxu0
      %1040 = vmatprep.mubr.f32.mxu0 0.0
      %1041 = vmatmul.mubr.f32.gmra.mxu0 %v826
      %v1042 = vpop.f32.mrf.mxu0
      %v1043 = vadd.f32 0.0, %v1042
      %v1044 = vpop.f32.mrf.mxu0
      %1045 = vmatprep.mubr.f32.mxu0 0.0
      %1046 = vmatmul.mubr.f32.gmra.mxu0 %v829
      %v1047 = vpop.f32.mrf.mxu0
      %v1048 = vadd.f32 0.0, %v1047
      %v1049 = vpop.f32.mrf.mxu0
      %1050 = vmatprep.mubr.f32.mxu0 0.0
      %1051 = vmatmul.mubr.f32.gmra.mxu0 %v832
      %v1052 = vpop.f32.mrf.mxu0
      %v1053 = vadd.f32 0.0, %v1052
      %v1054 = vpop.f32.mrf.mxu0
      %1055 = vmatprep.mubr.f32.mxu0 0.0
      %1056 = vmatmul.mubr.f32.gmra.mxu0 %v835
      %v1057 = vpop.f32.mrf.mxu0
      %v1058 = vadd.f32 0.0, %v1057
      %v1059 = vpop.f32.mrf.mxu0
      %1060 = vmatprep.mubr.f32.mxu0 0.0
      %1061 = vmatmul.mubr.f32.gmra.mxu0 %v838
      %v1062 = vpop.f32.mrf.mxu0
      %v1063 = vadd.f32 0.0, %v1062
      %v1064 = vpop.f32.mrf.mxu0
      %1065 = vmatprep.mubr.f32.mxu0 0.0
      %1066 = vmatmul.mubr.f32.gmra.mxu0 %v841
      %v1067 = vpop.f32.mrf.mxu0
      %v1068 = vadd.f32 0.0, %v1067
      %v1069 = vpop.f32.mrf.mxu0
      %1070 = vdwg.mxu0
      %v1071 = vld [vmem:[#allocation3] sm:$0xff]
      %v1072 = vld [vmem:[#allocation3 + $0x8] sm:$0xff]
      %v1073 = vld [vmem:[#allocation3 + $0x10] sm:$0xff]
      %v1074 = vld [vmem:[#allocation3 + $0x18] sm:$0xff]
      %v1075 = vld [vmem:[#allocation3 + $0x20] sm:$0xff]
      %v1076 = vld [vmem:[#allocation3 + $0x28] sm:$0xff]
      %v1077 = vld [vmem:[#allocation3 + $0x30] sm:$0xff]
      %v1078 = vld [vmem:[#allocation3 + $0x38] sm:$0xff]
      %v1079 = vld [vmem:[#allocation3 + $0x40] sm:$0xff]
      %v1080 = vld [vmem:[#allocation3 + $0x48] sm:$0xff]
      %v1081 = vld [vmem:[#allocation3 + $0x50] sm:$0xff]
      %v1082 = vld [vmem:[#allocation3 + $0x58] sm:$0xff]
      %v1083 = vld [vmem:[#allocation3 + $0x60] sm:$0xff]
      %v1084 = vld [vmem:[#allocation3 + $0x68] sm:$0xff]
      %v1085 = vld [vmem:[#allocation3 + $0x70] sm:$0xff]
      %v1086 = vld [vmem:[#allocation3 + $0x78] sm:$0xff]
      %v1087 = vld [vmem:[#allocation3 + $0x80] sm:$0xff]
      %v1088 = vld [vmem:[#allocation3 + $0x88] sm:$0xff]
      %v1089 = vld [vmem:[#allocation3 + $0x90] sm:$0xff]
      %v1090 = vld [vmem:[#allocation3 + $0x98] sm:$0xff]
      %v1091 = vld [vmem:[#allocation3 + $0xa0] sm:$0xff]
      %v1092 = vld [vmem:[#allocation3 + $0xa8] sm:$0xff]
      %v1093 = vld [vmem:[#allocation3 + $0xb0] sm:$0xff]
      %v1094 = vld [vmem:[#allocation3 + $0xb8] sm:$0xff]
      %v1095 = vld [vmem:[#allocation3 + $0xc0] sm:$0xff]
      %v1096 = vld [vmem:[#allocation3 + $0xc8] sm:$0xff]
      %v1097 = vld [vmem:[#allocation3 + $0xd0] sm:$0xff]
      %v1098 = vld [vmem:[#allocation3 + $0xd8] sm:$0xff]
      %v1099 = vld [vmem:[#allocation3 + $0xe0] sm:$0xff]
      %v1100 = vld [vmem:[#allocation3 + $0xe8] sm:$0xff]
      %v1101 = vld [vmem:[#allocation3 + $0xf0] sm:$0xff]
      %v1102 = vld [vmem:[#allocation3 + $0xf8] sm:$0xff]
      %v1103 = vadd.f32 %v1071, %v913
      %v1104 = vadd.f32 %v1072, %v918
      %v1105 = vadd.f32 %v1073, %v923
      %v1106 = vadd.f32 %v1074, %v928
      %v1107 = vadd.f32 %v1075, %v933
      %v1108 = vadd.f32 %v1076, %v938
      %v1109 = vadd.f32 %v1077, %v943
      %v1110 = vadd.f32 %v1078, %v948
      %v1111 = vadd.f32 %v1079, %v953
      %v1112 = vadd.f32 %v1080, %v958
      %v1113 = vadd.f32 %v1081, %v963
      %v1114 = vadd.f32 %v1082, %v968
      %v1115 = vadd.f32 %v1083, %v973
      %v1116 = vadd.f32 %v1084, %v978
      %v1117 = vadd.f32 %v1085, %v983
      %v1118 = vadd.f32 %v1086, %v988
      %v1119 = vadd.f32 %v1087, %v993
      %v1120 = vadd.f32 %v1088, %v998
      %v1121 = vadd.f32 %v1089, %v1003
      %v1122 = vadd.f32 %v1090, %v1008
      %v1123 = vadd.f32 %v1091, %v1013
      %v1124 = vadd.f32 %v1092, %v1018
      %v1125 = vadd.f32 %v1093, %v1023
      %v1126 = vadd.f32 %v1094, %v1028
      %v1127 = vadd.f32 %v1095, %v1033
      %v1128 = vadd.f32 %v1096, %v1038
      %v1129 = vadd.f32 %v1097, %v1043
      %v1130 = vadd.f32 %v1098, %v1048
      %v1131 = vadd.f32 %v1099, %v1053
      %v1132 = vadd.f32 %v1100, %v1058
      %v1133 = vadd.f32 %v1101, %v1063
      %v1134 = vadd.f32 %v1102, %v1068
      %1135 = vst.msk [vmem:[#allocation3] sm:$0xff] %vm680, %v1103
      %1136 = vst.msk [vmem:[#allocation3 + $0x8] sm:$0xff] %vm680, %v1104
      %1137 = vst.msk [vmem:[#allocation3 + $0x10] sm:$0xff] %vm680, %v1105
      %1138 = vst.msk [vmem:[#allocation3 + $0x18] sm:$0xff] %vm680, %v1106
      %1139 = vst.msk [vmem:[#allocation3 + $0x20] sm:$0xff] %vm680, %v1107
      %1140 = vst.msk [vmem:[#allocation3 + $0x28] sm:$0xff] %vm680, %v1108
      %1141 = vst.msk [vmem:[#allocation3 + $0x30] sm:$0xff] %vm680, %v1109
      %1142 = vst.msk [vmem:[#allocation3 + $0x38] sm:$0xff] %vm680, %v1110
      %1143 = vst.msk [vmem:[#allocation3 + $0x40] sm:$0xff] %vm680, %v1111
      %1144 = vst.msk [vmem:[#allocation3 + $0x48] sm:$0xff] %vm680, %v1112
      %1145 = vst.msk [vmem:[#allocation3 + $0x50] sm:$0xff] %vm680, %v1113
      %1146 = vst.msk [vmem:[#allocation3 + $0x58] sm:$0xff] %vm680, %v1114
      %1147 = vst.msk [vmem:[#allocation3 + $0x60] sm:$0xff] %vm680, %v1115
      %1148 = vst.msk [vmem:[#allocation3 + $0x68] sm:$0xff] %vm680, %v1116
      %1149 = vst.msk [vmem:[#allocation3 + $0x70] sm:$0xff] %vm680, %v1117
      %1150 = vst.msk [vmem:[#allocation3 + $0x78] sm:$0xff] %vm680, %v1118
      %1151 = vst.msk [vmem:[#allocation3 + $0x80] sm:$0xff] %vm680, %v1119
      %1152 = vst.msk [vmem:[#allocation3 + $0x88] sm:$0xff] %vm680, %v1120
      %1153 = vst.msk [vmem:[#allocation3 + $0x90] sm:$0xff] %vm680, %v1121
      %1154 = vst.msk [vmem:[#allocation3 + $0x98] sm:$0xff] %vm680, %v1122
      %1155 = vst.msk [vmem:[#allocation3 + $0xa0] sm:$0xff] %vm680, %v1123
      %1156 = vst.msk [vmem:[#allocation3 + $0xa8] sm:$0xff] %vm680, %v1124
      %1157 = vst.msk [vmem:[#allocation3 + $0xb0] sm:$0xff] %vm680, %v1125
      %1158 = vst.msk [vmem:[#allocation3 + $0xb8] sm:$0xff] %vm680, %v1126
      %1159 = vst.msk [vmem:[#allocation3 + $0xc0] sm:$0xff] %vm680, %v1127
      %1160 = vst.msk [vmem:[#allocation3 + $0xc8] sm:$0xff] %vm680, %v1128
      %1161 = vst.msk [vmem:[#allocation3 + $0xd0] sm:$0xff] %vm680, %v1129
      %1162 = vst.msk [vmem:[#allocation3 + $0xd8] sm:$0xff] %vm680, %v1130
      %1163 = vst.msk [vmem:[#allocation3 + $0xe0] sm:$0xff] %vm680, %v1131
      %1164 = vst.msk [vmem:[#allocation3 + $0xe8] sm:$0xff] %vm680, %v1132
      %1165 = vst.msk [vmem:[#allocation3 + $0xf0] sm:$0xff] %vm680, %v1133
      %1166 = vst.msk [vmem:[#allocation3 + $0xf8] sm:$0xff] %vm680, %v1134
      %v1167 = vld [vmem:[#allocation2 + $0x2] sm:$0xff]
      %v1168 = vld [vmem:[#allocation2 + $0xa] sm:$0xff]
      %v1169 = vld [vmem:[#allocation2 + $0x1a] sm:$0xff]
      %v1170 = vld [vmem:[#allocation2 + $0x22] sm:$0xff]
      %v1171 = vld [vmem:[#allocation2 + $0x32] sm:$0xff]
      %v1172 = vld [vmem:[#allocation2 + $0x3a] sm:$0xff]
      %v1173 = vld [vmem:[#allocation2 + $0x4a] sm:$0xff]
      %v1174 = vld [vmem:[#allocation2 + $0x52] sm:$0xff]
      %v1175 = vld [vmem:[#allocation2 + $0x62] sm:$0xff]
      %v1176 = vld [vmem:[#allocation2 + $0x6a] sm:$0xff]
      %v1177 = vld [vmem:[#allocation2 + $0x7a] sm:$0xff]
      %v1178 = vld [vmem:[#allocation2 + $0x82] sm:$0xff]
      %v1179 = vld [vmem:[#allocation2 + $0x92] sm:$0xff]
      %v1180 = vld [vmem:[#allocation2 + $0x9a] sm:$0xff]
      %v1181 = vld [vmem:[#allocation2 + $0xaa] sm:$0xff]
      %v1182 = vld [vmem:[#allocation2 + $0xb2] sm:$0xff]
      %v1183 = vld [vmem:[#allocation2 + $0xc2] sm:$0xff]
      %v1184 = vld [vmem:[#allocation2 + $0xca] sm:$0xff]
      %v1185 = vld [vmem:[#allocation2 + $0xda] sm:$0xff]
      %v1186 = vld [vmem:[#allocation2 + $0xe2] sm:$0xff]
      %v1187 = vld [vmem:[#allocation2 + $0xf2] sm:$0xff]
      %v1188 = vld [vmem:[#allocation2 + $0xfa] sm:$0xff]
      %v1189 = vld [vmem:[#allocation2 + $0x10a] sm:$0xff]
      %v1190 = vld [vmem:[#allocation2 + $0x112] sm:$0xff]
      %v1191 = vld [vmem:[#allocation2 + $0x122] sm:$0xff]
      %v1192 = vld [vmem:[#allocation2 + $0x12a] sm:$0xff]
      %v1193 = vld [vmem:[#allocation2 + $0x13a] sm:$0xff]
      %v1194 = vld [vmem:[#allocation2 + $0x142] sm:$0xff]
      %v1195 = vld [vmem:[#allocation2 + $0x152] sm:$0xff]
      %v1196 = vld [vmem:[#allocation2 + $0x15a] sm:$0xff]
      %v1197 = vld [vmem:[#allocation2 + $0x16a] sm:$0xff]
      %v1198 = vld [vmem:[#allocation2 + $0x172] sm:$0xff]
      %s1199 = scalar_lea.vmem %s1, 8
      %v1200 = vld [vmem:[%s1199] sm:$0xf]
      %v1202 = vsel %vm215, %v1167, 0
      %v1205 = vsel %vm215, %v1168, 0
      %v1208 = vsel %vm215, %v1169, 0
      %v1211 = vsel %vm215, %v1170, 0
      %v1214 = vsel %vm215, %v1171, 0
      %v1217 = vsel %vm215, %v1172, 0
      %v1220 = vsel %vm215, %v1173, 0
      %v1223 = vsel %vm215, %v1174, 0
      %v1226 = vsel %vm215, %v1175, 0
      %v1229 = vsel %vm215, %v1176, 0
      %v1232 = vsel %vm215, %v1177, 0
      %v1235 = vsel %vm215, %v1178, 0
      %v1238 = vsel %vm215, %v1179, 0
      %v1241 = vsel %vm215, %v1180, 0
      %v1244 = vsel %vm215, %v1181, 0
      %v1247 = vsel %vm215, %v1182, 0
      %v1250 = vsel %vm215, %v1183, 0
      %v1253 = vsel %vm215, %v1184, 0
      %v1256 = vsel %vm215, %v1185, 0
      %v1259 = vsel %vm215, %v1186, 0
      %v1262 = vsel %vm215, %v1187, 0
      %v1265 = vsel %vm215, %v1188, 0
      %v1268 = vsel %vm215, %v1189, 0
      %v1271 = vsel %vm215, %v1190, 0
      %v1274 = vsel %vm215, %v1191, 0
      %v1277 = vsel %vm215, %v1192, 0
      %v1280 = vsel %vm215, %v1193, 0
      %v1283 = vsel %vm215, %v1194, 0
      %v1286 = vsel %vm215, %v1195, 0
      %v1289 = vsel %vm215, %v1196, 0
      %v1292 = vsel %vm215, %v1197, 0
      %v1295 = vsel %vm215, %v1198, 0
      %v1298 = vsel %vm451, %v1200, 0
      %1300 = vmatprep.subr.mxu0 0.0
      %1301 = vmatpush1.msra.mxu0 0.0
      %1302 = vmatprep.subr.mxu0 0.0
      %1303 = vmatpush1.msra.mxu0 0.0
      %1304 = vmatprep.subr.mxu0 0.0
      %1305 = vmatpush1.msra.mxu0 0.0
      %1306 = vmatprep.subr.mxu0 0.0
      %1307 = vmatpush1.msra.mxu0 0.0
      %1308 = vmatprep.subr.mxu0 0.0
      %1309 = vmatpush1.msra.mxu0 0.0
      %1310 = vmatprep.subr.mxu0 0.0
      %1311 = vmatpush1.msra.mxu0 0.0
      %1312 = vmatprep.subr.mxu0 0.0
      %1313 = vmatpush1.msra.mxu0 0.0
      %1314 = vmatprep.subr.mxu0 0.0
      %1315 = vmatpush1.msra.mxu0 0.0
      %1316 = vmatprep.subr.mxu0 0.0
      %1317 = vmatpush1.msra.mxu0 0.0
      %1318 = vmatprep.subr.mxu0 0.0
      %1319 = vmatpush1.msra.mxu0 0.0
      %1320 = vmatprep.subr.mxu0 0.0
      %1321 = vmatpush1.msra.mxu0 0.0
      %1322 = vmatprep.subr.mxu0 0.0
      %1323 = vmatpush1.msra.mxu0 0.0
      %1324 = vmatprep.subr.mxu0 0.0
      %1325 = vmatpush1.msra.mxu0 0.0
      %1326 = vmatprep.subr.mxu0 0.0
      %1327 = vmatpush1.msra.mxu0 0.0
      %1328 = vmatprep.subr.mxu0 0.0
      %1329 = vmatpush1.msra.mxu0 0.0
      %1330 = vmatprep.subr.mxu0 0.0
      %1331 = vmatpush1.msra.mxu0 %v1298
      %1332 = vmatprep.subr.mxu0 0.0
      %1333 = vmatpush2.msra.mxu0 0.0
      %1334 = vmatprep.subr.mxu0 0.0
      %1335 = vmatpush2.msra.mxu0 0.0
      %1336 = vmatprep.subr.mxu0 0.0
      %1337 = vmatpush2.msra.mxu0 0.0
      %1338 = vmatprep.subr.mxu0 0.0
      %1339 = vmatpush2.msra.mxu0 0.0
      %1340 = vmatprep.subr.mxu0 0.0
      %1341 = vmatpush2.msra.mxu0 0.0
      %1342 = vmatprep.subr.mxu0 0.0
      %1343 = vmatpush2.msra.mxu0 0.0
      %1344 = vmatprep.subr.mxu0 0.0
      %1345 = vmatpush2.msra.mxu0 0.0
      %1346 = vmatprep.subr.mxu0 0.0
      %1347 = vmatpush2.msra.mxu0 0.0
      %1348 = vmatprep.subr.mxu0 0.0
      %1349 = vmatpush2.msra.mxu0 0.0
      %1350 = vmatprep.subr.mxu0 0.0
      %1351 = vmatpush2.msra.mxu0 0.0
      %1352 = vmatprep.subr.mxu0 0.0
      %1353 = vmatpush2.msra.mxu0 0.0
      %1354 = vmatprep.subr.mxu0 0.0
      %1355 = vmatpush2.msra.mxu0 0.0
      %1356 = vmatprep.subr.mxu0 0.0
      %1357 = vmatpush2.msra.mxu0 0.0
      %1358 = vmatprep.subr.mxu0 0.0
      %1359 = vmatpush2.msra.mxu0 0.0
      %1360 = vmatprep.subr.mxu0 0.0
      %1361 = vmatpush2.msra.mxu0 0.0
      %1362 = vmatprep.subr.mxu0 0.0
      %1363 = vmatpush2.msra.mxu0 0.0
      %1364 = vmatprep.mubr.f32.mxu0 0.0
      %1365 = vmatmul.mubr.f32.gmra.mxu0 %v1202
      %v1366 = vpop.f32.mrf.mxu0
      %v1367 = vadd.f32 0.0, %v1366
      %v1368 = vpop.f32.mrf.mxu0
      %1369 = vmatprep.mubr.f32.mxu0 0.0
      %1370 = vmatmul.mubr.f32.gmra.mxu0 %v1205
      %v1371 = vpop.f32.mrf.mxu0
      %v1372 = vadd.f32 0.0, %v1371
      %v1373 = vpop.f32.mrf.mxu0
      %1374 = vmatprep.mubr.f32.mxu0 0.0
      %1375 = vmatmul.mubr.f32.gmra.mxu0 %v1208
      %v1376 = vpop.f32.mrf.mxu0
      %v1377 = vadd.f32 0.0, %v1376
      %v1378 = vpop.f32.mrf.mxu0
      %1379 = vmatprep.mubr.f32.mxu0 0.0
      %1380 = vmatmul.mubr.f32.gmra.mxu0 %v1211
      %v1381 = vpop.f32.mrf.mxu0
      %v1382 = vadd.f32 0.0, %v1381
      %v1383 = vpop.f32.mrf.mxu0
      %1384 = vmatprep.mubr.f32.mxu0 0.0
      %1385 = vmatmul.mubr.f32.gmra.mxu0 %v1214
      %v1386 = vpop.f32.mrf.mxu0
      %v1387 = vadd.f32 0.0, %v1386
      %v1388 = vpop.f32.mrf.mxu0
      %1389 = vmatprep.mubr.f32.mxu0 0.0
      %1390 = vmatmul.mubr.f32.gmra.mxu0 %v1217
      %v1391 = vpop.f32.mrf.mxu0
      %v1392 = vadd.f32 0.0, %v1391
      %v1393 = vpop.f32.mrf.mxu0
      %1394 = vmatprep.mubr.f32.mxu0 0.0
      %1395 = vmatmul.mubr.f32.gmra.mxu0 %v1220
      %v1396 = vpop.f32.mrf.mxu0
      %v1397 = vadd.f32 0.0, %v1396
      %v1398 = vpop.f32.mrf.mxu0
      %1399 = vmatprep.mubr.f32.mxu0 0.0
      %1400 = vmatmul.mubr.f32.gmra.mxu0 %v1223
      %v1401 = vpop.f32.mrf.mxu0
      %v1402 = vadd.f32 0.0, %v1401
      %v1403 = vpop.f32.mrf.mxu0
      %1404 = vmatprep.mubr.f32.mxu0 0.0
      %1405 = vmatmul.mubr.f32.gmra.mxu0 %v1226
      %v1406 = vpop.f32.mrf.mxu0
      %v1407 = vadd.f32 0.0, %v1406
      %v1408 = vpop.f32.mrf.mxu0
      %1409 = vmatprep.mubr.f32.mxu0 0.0
      %1410 = vmatmul.mubr.f32.gmra.mxu0 %v1229
      %v1411 = vpop.f32.mrf.mxu0
      %v1412 = vadd.f32 0.0, %v1411
      %v1413 = vpop.f32.mrf.mxu0
      %1414 = vmatprep.mubr.f32.mxu0 0.0
      %1415 = vmatmul.mubr.f32.gmra.mxu0 %v1232
      %v1416 = vpop.f32.mrf.mxu0
      %v1417 = vadd.f32 0.0, %v1416
      %v1418 = vpop.f32.mrf.mxu0
      %1419 = vmatprep.mubr.f32.mxu0 0.0
      %1420 = vmatmul.mubr.f32.gmra.mxu0 %v1235
      %v1421 = vpop.f32.mrf.mxu0
      %v1422 = vadd.f32 0.0, %v1421
      %v1423 = vpop.f32.mrf.mxu0
      %1424 = vmatprep.mubr.f32.mxu0 0.0
      %1425 = vmatmul.mubr.f32.gmra.mxu0 %v1238
      %v1426 = vpop.f32.mrf.mxu0
      %v1427 = vadd.f32 0.0, %v1426
      %v1428 = vpop.f32.mrf.mxu0
      %1429 = vmatprep.mubr.f32.mxu0 0.0
      %1430 = vmatmul.mubr.f32.gmra.mxu0 %v1241
      %v1431 = vpop.f32.mrf.mxu0
      %v1432 = vadd.f32 0.0, %v1431
      %v1433 = vpop.f32.mrf.mxu0
      %1434 = vmatprep.mubr.f32.mxu0 0.0
      %1435 = vmatmul.mubr.f32.gmra.mxu0 %v1244
      %v1436 = vpop.f32.mrf.mxu0
      %v1437 = vadd.f32 0.0, %v1436
      %v1438 = vpop.f32.mrf.mxu0
      %1439 = vmatprep.mubr.f32.mxu0 0.0
      %1440 = vmatmul.mubr.f32.gmra.mxu0 %v1247
      %v1441 = vpop.f32.mrf.mxu0
      %v1442 = vadd.f32 0.0, %v1441
      %v1443 = vpop.f32.mrf.mxu0
      %1444 = vmatprep.mubr.f32.mxu0 0.0
      %1445 = vmatmul.mubr.f32.gmra.mxu0 %v1250
      %v1446 = vpop.f32.mrf.mxu0
      %v1447 = vadd.f32 0.0, %v1446
      %v1448 = vpop.f32.mrf.mxu0
      %1449 = vmatprep.mubr.f32.mxu0 0.0
      %1450 = vmatmul.mubr.f32.gmra.mxu0 %v1253
      %v1451 = vpop.f32.mrf.mxu0
      %v1452 = vadd.f32 0.0, %v1451
      %v1453 = vpop.f32.mrf.mxu0
      %1454 = vmatprep.mubr.f32.mxu0 0.0
      %1455 = vmatmul.mubr.f32.gmra.mxu0 %v1256
      %v1456 = vpop.f32.mrf.mxu0
      %v1457 = vadd.f32 0.0, %v1456
      %v1458 = vpop.f32.mrf.mxu0
      %1459 = vmatprep.mubr.f32.mxu0 0.0
      %1460 = vmatmul.mubr.f32.gmra.mxu0 %v1259
      %v1461 = vpop.f32.mrf.mxu0
      %v1462 = vadd.f32 0.0, %v1461
      %v1463 = vpop.f32.mrf.mxu0
      %1464 = vmatprep.mubr.f32.mxu0 0.0
      %1465 = vmatmul.mubr.f32.gmra.mxu0 %v1262
      %v1466 = vpop.f32.mrf.mxu0
      %v1467 = vadd.f32 0.0, %v1466
      %v1468 = vpop.f32.mrf.mxu0
      %1469 = vmatprep.mubr.f32.mxu0 0.0
      %1470 = vmatmul.mubr.f32.gmra.mxu0 %v1265
      %v1471 = vpop.f32.mrf.mxu0
      %v1472 = vadd.f32 0.0, %v1471
      %v1473 = vpop.f32.mrf.mxu0
      %1474 = vmatprep.mubr.f32.mxu0 0.0
      %1475 = vmatmul.mubr.f32.gmra.mxu0 %v1268
      %v1476 = vpop.f32.mrf.mxu0
      %v1477 = vadd.f32 0.0, %v1476
      %v1478 = vpop.f32.mrf.mxu0
      %1479 = vmatprep.mubr.f32.mxu0 0.0
      %1480 = vmatmul.mubr.f32.gmra.mxu0 %v1271
      %v1481 = vpop.f32.mrf.mxu0
      %v1482 = vadd.f32 0.0, %v1481
      %v1483 = vpop.f32.mrf.mxu0
      %1484 = vmatprep.mubr.f32.mxu0 0.0
      %1485 = vmatmul.mubr.f32.gmra.mxu0 %v1274
      %v1486 = vpop.f32.mrf.mxu0
      %v1487 = vadd.f32 0.0, %v1486
      %v1488 = vpop.f32.mrf.mxu0
      %1489 = vmatprep.mubr.f32.mxu0 0.0
      %1490 = vmatmul.mubr.f32.gmra.mxu0 %v1277
      %v1491 = vpop.f32.mrf.mxu0
      %v1492 = vadd.f32 0.0, %v1491
      %v1493 = vpop.f32.mrf.mxu0
      %1494 = vmatprep.mubr.f32.mxu0 0.0
      %1495 = vmatmul.mubr.f32.gmra.mxu0 %v1280
      %v1496 = vpop.f32.mrf.mxu0
      %v1497 = vadd.f32 0.0, %v1496
      %v1498 = vpop.f32.mrf.mxu0
      %1499 = vmatprep.mubr.f32.mxu0 0.0
      %1500 = vmatmul.mubr.f32.gmra.mxu0 %v1283
      %v1501 = vpop.f32.mrf.mxu0
      %v1502 = vadd.f32 0.0, %v1501
      %v1503 = vpop.f32.mrf.mxu0
      %1504 = vmatprep.mubr.f32.mxu0 0.0
      %1505 = vmatmul.mubr.f32.gmra.mxu0 %v1286
      %v1506 = vpop.f32.mrf.mxu0
      %v1507 = vadd.f32 0.0, %v1506
      %v1508 = vpop.f32.mrf.mxu0
      %1509 = vmatprep.mubr.f32.mxu0 0.0
      %1510 = vmatmul.mubr.f32.gmra.mxu0 %v1289
      %v1511 = vpop.f32.mrf.mxu0
      %v1512 = vadd.f32 0.0, %v1511
      %v1513 = vpop.f32.mrf.mxu0
      %1514 = vmatprep.mubr.f32.mxu0 0.0
      %1515 = vmatmul.mubr.f32.gmra.mxu0 %v1292
      %v1516 = vpop.f32.mrf.mxu0
      %v1517 = vadd.f32 0.0, %v1516
      %v1518 = vpop.f32.mrf.mxu0
      %1519 = vmatprep.mubr.f32.mxu0 0.0
      %1520 = vmatmul.mubr.f32.gmra.mxu0 %v1295
      %v1521 = vpop.f32.mrf.mxu0
      %v1522 = vadd.f32 0.0, %v1521
      %v1523 = vpop.f32.mrf.mxu0
      %1524 = vdwg.mxu0
      %v1525 = vld [vmem:[#allocation3] sm:$0xff]
      %v1526 = vld [vmem:[#allocation3 + $0x8] sm:$0xff]
      %v1527 = vld [vmem:[#allocation3 + $0x10] sm:$0xff]
      %v1528 = vld [vmem:[#allocation3 + $0x18] sm:$0xff]
      %v1529 = vld [vmem:[#allocation3 + $0x20] sm:$0xff]
      %v1530 = vld [vmem:[#allocation3 + $0x28] sm:$0xff]
      %v1531 = vld [vmem:[#allocation3 + $0x30] sm:$0xff]
      %v1532 = vld [vmem:[#allocation3 + $0x38] sm:$0xff]
      %v1533 = vld [vmem:[#allocation3 + $0x40] sm:$0xff]
      %v1534 = vld [vmem:[#allocation3 + $0x48] sm:$0xff]
      %v1535 = vld [vmem:[#allocation3 + $0x50] sm:$0xff]
      %v1536 = vld [vmem:[#allocation3 + $0x58] sm:$0xff]
      %v1537 = vld [vmem:[#allocation3 + $0x60] sm:$0xff]
      %v1538 = vld [vmem:[#allocation3 + $0x68] sm:$0xff]
      %v1539 = vld [vmem:[#allocation3 + $0x70] sm:$0xff]
      %v1540 = vld [vmem:[#allocation3 + $0x78] sm:$0xff]
      %v1541 = vld [vmem:[#allocation3 + $0x80] sm:$0xff]
      %v1542 = vld [vmem:[#allocation3 + $0x88] sm:$0xff]
      %v1543 = vld [vmem:[#allocation3 + $0x90] sm:$0xff]
      %v1544 = vld [vmem:[#allocation3 + $0x98] sm:$0xff]
      %v1545 = vld [vmem:[#allocation3 + $0xa0] sm:$0xff]
      %v1546 = vld [vmem:[#allocation3 + $0xa8] sm:$0xff]
      %v1547 = vld [vmem:[#allocation3 + $0xb0] sm:$0xff]
      %v1548 = vld [vmem:[#allocation3 + $0xb8] sm:$0xff]
      %v1549 = vld [vmem:[#allocation3 + $0xc0] sm:$0xff]
      %v1550 = vld [vmem:[#allocation3 + $0xc8] sm:$0xff]
      %v1551 = vld [vmem:[#allocation3 + $0xd0] sm:$0xff]
      %v1552 = vld [vmem:[#allocation3 + $0xd8] sm:$0xff]
      %v1553 = vld [vmem:[#allocation3 + $0xe0] sm:$0xff]
      %v1554 = vld [vmem:[#allocation3 + $0xe8] sm:$0xff]
      %v1555 = vld [vmem:[#allocation3 + $0xf0] sm:$0xff]
      %v1556 = vld [vmem:[#allocation3 + $0xf8] sm:$0xff]
      %v1557 = vadd.f32 %v1525, %v1367
      %v1558 = vadd.f32 %v1526, %v1372
      %v1559 = vadd.f32 %v1527, %v1377
      %v1560 = vadd.f32 %v1528, %v1382
      %v1561 = vadd.f32 %v1529, %v1387
      %v1562 = vadd.f32 %v1530, %v1392
      %v1563 = vadd.f32 %v1531, %v1397
      %v1564 = vadd.f32 %v1532, %v1402
      %v1565 = vadd.f32 %v1533, %v1407
      %v1566 = vadd.f32 %v1534, %v1412
      %v1567 = vadd.f32 %v1535, %v1417
      %v1568 = vadd.f32 %v1536, %v1422
      %v1569 = vadd.f32 %v1537, %v1427
      %v1570 = vadd.f32 %v1538, %v1432
      %v1571 = vadd.f32 %v1539, %v1437
      %v1572 = vadd.f32 %v1540, %v1442
      %v1573 = vadd.f32 %v1541, %v1447
      %v1574 = vadd.f32 %v1542, %v1452
      %v1575 = vadd.f32 %v1543, %v1457
      %v1576 = vadd.f32 %v1544, %v1462
      %v1577 = vadd.f32 %v1545, %v1467
      %v1578 = vadd.f32 %v1546, %v1472
      %v1579 = vadd.f32 %v1547, %v1477
      %v1580 = vadd.f32 %v1548, %v1482
      %v1581 = vadd.f32 %v1549, %v1487
      %v1582 = vadd.f32 %v1550, %v1492
      %v1583 = vadd.f32 %v1551, %v1497
      %v1584 = vadd.f32 %v1552, %v1502
      %v1585 = vadd.f32 %v1553, %v1507
      %v1586 = vadd.f32 %v1554, %v1512
      %v1587 = vadd.f32 %v1555, %v1517
      %v1588 = vadd.f32 %v1556, %v1522
      %1589 = vst.msk [vmem:[#allocation3] sm:$0xff] %vm680, %v1557
      %1590 = vst.msk [vmem:[#allocation3 + $0x8] sm:$0xff] %vm680, %v1558
      %1591 = vst.msk [vmem:[#allocation3 + $0x10] sm:$0xff] %vm680, %v1559
      %1592 = vst.msk [vmem:[#allocation3 + $0x18] sm:$0xff] %vm680, %v1560
      %1593 = vst.msk [vmem:[#allocation3 + $0x20] sm:$0xff] %vm680, %v1561
      %1594 = vst.msk [vmem:[#allocation3 + $0x28] sm:$0xff] %vm680, %v1562
      %1595 = vst.msk [vmem:[#allocation3 + $0x30] sm:$0xff] %vm680, %v1563
      %1596 = vst.msk [vmem:[#allocation3 + $0x38] sm:$0xff] %vm680, %v1564
      %1597 = vst.msk [vmem:[#allocation3 + $0x40] sm:$0xff] %vm680, %v1565
      %1598 = vst.msk [vmem:[#allocation3 + $0x48] sm:$0xff] %vm680, %v1566
      %1599 = vst.msk [vmem:[#allocation3 + $0x50] sm:$0xff] %vm680, %v1567
      %1600 = vst.msk [vmem:[#allocation3 + $0x58] sm:$0xff] %vm680, %v1568
      %1601 = vst.msk [vmem:[#allocation3 + $0x60] sm:$0xff] %vm680, %v1569
      %1602 = vst.msk [vmem:[#allocation3 + $0x68] sm:$0xff] %vm680, %v1570
      %1603 = vst.msk [vmem:[#allocation3 + $0x70] sm:$0xff] %vm680, %v1571
      %1604 = vst.msk [vmem:[#allocation3 + $0x78] sm:$0xff] %vm680, %v1572
      %1605 = vst.msk [vmem:[#allocation3 + $0x80] sm:$0xff] %vm680, %v1573
      %1606 = vst.msk [vmem:[#allocation3 + $0x88] sm:$0xff] %vm680, %v1574
      %1607 = vst.msk [vmem:[#allocation3 + $0x90] sm:$0xff] %vm680, %v1575
      %1608 = vst.msk [vmem:[#allocation3 + $0x98] sm:$0xff] %vm680, %v1576
      %1609 = vst.msk [vmem:[#allocation3 + $0xa0] sm:$0xff] %vm680, %v1577
      %1610 = vst.msk [vmem:[#allocation3 + $0xa8] sm:$0xff] %vm680, %v1578
      %1611 = vst.msk [vmem:[#allocation3 + $0xb0] sm:$0xff] %vm680, %v1579
      %1612 = vst.msk [vmem:[#allocation3 + $0xb8] sm:$0xff] %vm680, %v1580
      %1613 = vst.msk [vmem:[#allocation3 + $0xc0] sm:$0xff] %vm680, %v1581
      %1614 = vst.msk [vmem:[#allocation3 + $0xc8] sm:$0xff] %vm680, %v1582
      %1615 = vst.msk [vmem:[#allocation3 + $0xd0] sm:$0xff] %vm680, %v1583
      %1616 = vst.msk [vmem:[#allocation3 + $0xd8] sm:$0xff] %vm680, %v1584
      %1617 = vst.msk [vmem:[#allocation3 + $0xe0] sm:$0xff] %vm680, %v1585
      %1618 = vst.msk [vmem:[#allocation3 + $0xe8] sm:$0xff] %vm680, %v1586
      %1619 = vst.msk [vmem:[#allocation3 + $0xf0] sm:$0xff] %vm680, %v1587
      %1620 = vst.msk [vmem:[#allocation3 + $0xf8] sm:$0xff] %vm680, %v1588
      %v1621 = vld [vmem:[%s224] sm:$0xff]
      %v1622 = vld [vmem:[%s224 + $0x8] sm:$0xff]
      %v1623 = vld [vmem:[%s224 + $0x18] sm:$0xff]
      %v1624 = vld [vmem:[%s224 + $0x20] sm:$0xff]
      %v1625 = vld [vmem:[%s224 + $0x30] sm:$0xff]
      %v1626 = vld [vmem:[%s224 + $0x38] sm:$0xff]
      %v1627 = vld [vmem:[%s224 + $0x48] sm:$0xff]
      %v1628 = vld [vmem:[%s224 + $0x50] sm:$0xff]
      %v1629 = vld [vmem:[%s224 + $0x60] sm:$0xff]
      %v1630 = vld [vmem:[%s224 + $0x68] sm:$0xff]
      %v1631 = vld [vmem:[%s224 + $0x78] sm:$0xff]
      %v1632 = vld [vmem:[%s224 + $0x80] sm:$0xff]
      %v1633 = vld [vmem:[%s224 + $0x90] sm:$0xff]
      %v1634 = vld [vmem:[%s224 + $0x98] sm:$0xff]
      %v1635 = vld [vmem:[%s224 + $0xa8] sm:$0xff]
      %v1636 = vld [vmem:[%s224 + $0xb0] sm:$0xff]
      %v1637 = vld [vmem:[%s224 + $0xc0] sm:$0xff]
      %v1638 = vld [vmem:[%s224 + $0xc8] sm:$0xff]
      %v1639 = vld [vmem:[%s224 + $0xd8] sm:$0xff]
      %v1640 = vld [vmem:[%s224 + $0xe0] sm:$0xff]
      %v1641 = vld [vmem:[%s224 + $0xf0] sm:$0xff]
      %v1642 = vld [vmem:[%s224 + $0xf8] sm:$0xff]
      %v1643 = vld [vmem:[%s224 + $0x108] sm:$0xff]
      %v1644 = vld [vmem:[%s224 + $0x110] sm:$0xff]
      %v1645 = vld [vmem:[%s224 + $0x120] sm:$0xff]
      %v1646 = vld [vmem:[%s224 + $0x128] sm:$0xff]
      %v1647 = vld [vmem:[%s224 + $0x138] sm:$0xff]
      %v1648 = vld [vmem:[%s224 + $0x140] sm:$0xff]
      %v1649 = vld [vmem:[%s224 + $0x150] sm:$0xff]
      %v1650 = vld [vmem:[%s224 + $0x158] sm:$0xff]
      %v1651 = vld [vmem:[%s224 + $0x168] sm:$0xff]
      %v1652 = vld [vmem:[%s224 + $0x170] sm:$0xff]
      %s1653 = scalar_lea.vmem %s1, 12
      %v1654 = vld [vmem:[%s1653] sm:$0xf]
      %v1656 = vsel %vm215, %v1621, 0
      %v1659 = vsel %vm215, %v1622, 0
      %v1662 = vsel %vm215, %v1623, 0
      %v1665 = vsel %vm215, %v1624, 0
      %v1668 = vsel %vm215, %v1625, 0
      %v1671 = vsel %vm215, %v1626, 0
      %v1674 = vsel %vm215, %v1627, 0
      %v1677 = vsel %vm215, %v1628, 0
      %v1680 = vsel %vm215, %v1629, 0
      %v1683 = vsel %vm215, %v1630, 0
      %v1686 = vsel %vm215, %v1631, 0
      %v1689 = vsel %vm215, %v1632, 0
      %v1692 = vsel %vm215, %v1633, 0
      %v1695 = vsel %vm215, %v1634, 0
      %v1698 = vsel %vm215, %v1635, 0
      %v1701 = vsel %vm215, %v1636, 0
      %v1704 = vsel %vm215, %v1637, 0
      %v1707 = vsel %vm215, %v1638, 0
      %v1710 = vsel %vm215, %v1639, 0
      %v1713 = vsel %vm215, %v1640, 0
      %v1716 = vsel %vm215, %v1641, 0
      %v1719 = vsel %vm215, %v1642, 0
      %v1722 = vsel %vm215, %v1643, 0
      %v1725 = vsel %vm215, %v1644, 0
      %v1728 = vsel %vm215, %v1645, 0
      %v1731 = vsel %vm215, %v1646, 0
      %v1734 = vsel %vm215, %v1647, 0
      %v1737 = vsel %vm215, %v1648, 0
      %v1740 = vsel %vm215, %v1649, 0
      %v1743 = vsel %vm215, %v1650, 0
      %v1746 = vsel %vm215, %v1651, 0
      %v1749 = vsel %vm215, %v1652, 0
      %v1752 = vsel %vm451, %v1654, 0
      %1754 = vmatprep.subr.mxu0 0.0
      %1755 = vmatpush1.msra.mxu0 0.0
      %1756 = vmatprep.subr.mxu0 0.0
      %1757 = vmatpush1.msra.mxu0 0.0
      %1758 = vmatprep.subr.mxu0 0.0
      %1759 = vmatpush1.msra.mxu0 0.0
      %1760 = vmatprep.subr.mxu0 0.0
      %1761 = vmatpush1.msra.mxu0 0.0
      %1762 = vmatprep.subr.mxu0 0.0
      %1763 = vmatpush1.msra.mxu0 0.0
      %1764 = vmatprep.subr.mxu0 0.0
      %1765 = vmatpush1.msra.mxu0 0.0
      %1766 = vmatprep.subr.mxu0 0.0
      %1767 = vmatpush1.msra.mxu0 0.0
      %1768 = vmatprep.subr.mxu0 0.0
      %1769 = vmatpush1.msra.mxu0 0.0
      %1770 = vmatprep.subr.mxu0 0.0
      %1771 = vmatpush1.msra.mxu0 0.0
      %1772 = vmatprep.subr.mxu0 0.0
      %1773 = vmatpush1.msra.mxu0 0.0
      %1774 = vmatprep.subr.mxu0 0.0
      %1775 = vmatpush1.msra.mxu0 0.0
      %1776 = vmatprep.subr.mxu0 0.0
      %1777 = vmatpush1.msra.mxu0 0.0
      %1778 = vmatprep.subr.mxu0 0.0
      %1779 = vmatpush1.msra.mxu0 0.0
      %1780 = vmatprep.subr.mxu0 0.0
      %1781 = vmatpush1.msra.mxu0 0.0
      %1782 = vmatprep.subr.mxu0 0.0
      %1783 = vmatpush1.msra.mxu0 0.0
      %1784 = vmatprep.subr.mxu0 0.0
      %1785 = vmatpush1.msra.mxu0 %v1752
      %1786 = vmatprep.subr.mxu0 0.0
      %1787 = vmatpush2.msra.mxu0 0.0
      %1788 = vmatprep.subr.mxu0 0.0
      %1789 = vmatpush2.msra.mxu0 0.0
      %1790 = vmatprep.subr.mxu0 0.0
      %1791 = vmatpush2.msra.mxu0 0.0
      %1792 = vmatprep.subr.mxu0 0.0
      %1793 = vmatpush2.msra.mxu0 0.0
      %1794 = vmatprep.subr.mxu0 0.0
      %1795 = vmatpush2.msra.mxu0 0.0
      %1796 = vmatprep.subr.mxu0 0.0
      %1797 = vmatpush2.msra.mxu0 0.0
      %1798 = vmatprep.subr.mxu0 0.0
      %1799 = vmatpush2.msra.mxu0 0.0
      %1800 = vmatprep.subr.mxu0 0.0
      %1801 = vmatpush2.msra.mxu0 0.0
      %1802 = vmatprep.subr.mxu0 0.0
      %1803 = vmatpush2.msra.mxu0 0.0
      %1804 = vmatprep.subr.mxu0 0.0
      %1805 = vmatpush2.msra.mxu0 0.0
      %1806 = vmatprep.subr.mxu0 0.0
      %1807 = vmatpush2.msra.mxu0 0.0
      %1808 = vmatprep.subr.mxu0 0.0
      %1809 = vmatpush2.msra.mxu0 0.0
      %1810 = vmatprep.subr.mxu0 0.0
      %1811 = vmatpush2.msra.mxu0 0.0
      %1812 = vmatprep.subr.mxu0 0.0
      %1813 = vmatpush2.msra.mxu0 0.0
      %1814 = vmatprep.subr.mxu0 0.0
      %1815 = vmatpush2.msra.mxu0 0.0
      %1816 = vmatprep.subr.mxu0 0.0
      %1817 = vmatpush2.msra.mxu0 0.0
      %1818 = vmatprep.mubr.f32.mxu0 0.0
      %1819 = vmatmul.mubr.f32.gmra.mxu0 %v1656
      %v1820 = vpop.f32.mrf.mxu0
      %v1821 = vadd.f32 0.0, %v1820
      %v1822 = vpop.f32.mrf.mxu0
      %1823 = vmatprep.mubr.f32.mxu0 0.0
      %1824 = vmatmul.mubr.f32.gmra.mxu0 %v1659
      %v1825 = vpop.f32.mrf.mxu0
      %v1826 = vadd.f32 0.0, %v1825
      %v1827 = vpop.f32.mrf.mxu0
      %1828 = vmatprep.mubr.f32.mxu0 0.0
      %1829 = vmatmul.mubr.f32.gmra.mxu0 %v1662
      %v1830 = vpop.f32.mrf.mxu0
      %v1831 = vadd.f32 0.0, %v1830
      %v1832 = vpop.f32.mrf.mxu0
      %1833 = vmatprep.mubr.f32.mxu0 0.0
      %1834 = vmatmul.mubr.f32.gmra.mxu0 %v1665
      %v1835 = vpop.f32.mrf.mxu0
      %v1836 = vadd.f32 0.0, %v1835
      %v1837 = vpop.f32.mrf.mxu0
      %1838 = vmatprep.mubr.f32.mxu0 0.0
      %1839 = vmatmul.mubr.f32.gmra.mxu0 %v1668
      %v1840 = vpop.f32.mrf.mxu0
      %v1841 = vadd.f32 0.0, %v1840
      %v1842 = vpop.f32.mrf.mxu0
      %1843 = vmatprep.mubr.f32.mxu0 0.0
      %1844 = vmatmul.mubr.f32.gmra.mxu0 %v1671
      %v1845 = vpop.f32.mrf.mxu0
      %v1846 = vadd.f32 0.0, %v1845
      %v1847 = vpop.f32.mrf.mxu0
      %1848 = vmatprep.mubr.f32.mxu0 0.0
      %1849 = vmatmul.mubr.f32.gmra.mxu0 %v1674
      %v1850 = vpop.f32.mrf.mxu0
      %v1851 = vadd.f32 0.0, %v1850
      %v1852 = vpop.f32.mrf.mxu0
      %1853 = vmatprep.mubr.f32.mxu0 0.0
      %1854 = vmatmul.mubr.f32.gmra.mxu0 %v1677
      %v1855 = vpop.f32.mrf.mxu0
      %v1856 = vadd.f32 0.0, %v1855
      %v1857 = vpop.f32.mrf.mxu0
      %1858 = vmatprep.mubr.f32.mxu0 0.0
      %1859 = vmatmul.mubr.f32.gmra.mxu0 %v1680
      %v1860 = vpop.f32.mrf.mxu0
      %v1861 = vadd.f32 0.0, %v1860
      %v1862 = vpop.f32.mrf.mxu0
      %1863 = vmatprep.mubr.f32.mxu0 0.0
      %1864 = vmatmul.mubr.f32.gmra.mxu0 %v1683
      %v1865 = vpop.f32.mrf.mxu0
      %v1866 = vadd.f32 0.0, %v1865
      %v1867 = vpop.f32.mrf.mxu0
      %1868 = vmatprep.mubr.f32.mxu0 0.0
      %1869 = vmatmul.mubr.f32.gmra.mxu0 %v1686
      %v1870 = vpop.f32.mrf.mxu0
      %v1871 = vadd.f32 0.0, %v1870
      %v1872 = vpop.f32.mrf.mxu0
      %1873 = vmatprep.mubr.f32.mxu0 0.0
      %1874 = vmatmul.mubr.f32.gmra.mxu0 %v1689
      %v1875 = vpop.f32.mrf.mxu0
      %v1876 = vadd.f32 0.0, %v1875
      %v1877 = vpop.f32.mrf.mxu0
      %1878 = vmatprep.mubr.f32.mxu0 0.0
      %1879 = vmatmul.mubr.f32.gmra.mxu0 %v1692
      %v1880 = vpop.f32.mrf.mxu0
      %v1881 = vadd.f32 0.0, %v1880
      %v1882 = vpop.f32.mrf.mxu0
      %1883 = vmatprep.mubr.f32.mxu0 0.0
      %1884 = vmatmul.mubr.f32.gmra.mxu0 %v1695
      %v1885 = vpop.f32.mrf.mxu0
      %v1886 = vadd.f32 0.0, %v1885
      %v1887 = vpop.f32.mrf.mxu0
      %1888 = vmatprep.mubr.f32.mxu0 0.0
      %1889 = vmatmul.mubr.f32.gmra.mxu0 %v1698
      %v1890 = vpop.f32.mrf.mxu0
      %v1891 = vadd.f32 0.0, %v1890
      %v1892 = vpop.f32.mrf.mxu0
      %1893 = vmatprep.mubr.f32.mxu0 0.0
      %1894 = vmatmul.mubr.f32.gmra.mxu0 %v1701
      %v1895 = vpop.f32.mrf.mxu0
      %v1896 = vadd.f32 0.0, %v1895
      %v1897 = vpop.f32.mrf.mxu0
      %1898 = vmatprep.mubr.f32.mxu0 0.0
      %1899 = vmatmul.mubr.f32.gmra.mxu0 %v1704
      %v1900 = vpop.f32.mrf.mxu0
      %v1901 = vadd.f32 0.0, %v1900
      %v1902 = vpop.f32.mrf.mxu0
      %1903 = vmatprep.mubr.f32.mxu0 0.0
      %1904 = vmatmul.mubr.f32.gmra.mxu0 %v1707
      %v1905 = vpop.f32.mrf.mxu0
      %v1906 = vadd.f32 0.0, %v1905
      %v1907 = vpop.f32.mrf.mxu0
      %1908 = vmatprep.mubr.f32.mxu0 0.0
      %1909 = vmatmul.mubr.f32.gmra.mxu0 %v1710
      %v1910 = vpop.f32.mrf.mxu0
      %v1911 = vadd.f32 0.0, %v1910
      %v1912 = vpop.f32.mrf.mxu0
      %1913 = vmatprep.mubr.f32.mxu0 0.0
      %1914 = vmatmul.mubr.f32.gmra.mxu0 %v1713
      %v1915 = vpop.f32.mrf.mxu0
      %v1916 = vadd.f32 0.0, %v1915
      %v1917 = vpop.f32.mrf.mxu0
      %1918 = vmatprep.mubr.f32.mxu0 0.0
      %1919 = vmatmul.mubr.f32.gmra.mxu0 %v1716
      %v1920 = vpop.f32.mrf.mxu0
      %v1921 = vadd.f32 0.0, %v1920
      %v1922 = vpop.f32.mrf.mxu0
      %1923 = vmatprep.mubr.f32.mxu0 0.0
      %1924 = vmatmul.mubr.f32.gmra.mxu0 %v1719
      %v1925 = vpop.f32.mrf.mxu0
      %v1926 = vadd.f32 0.0, %v1925
      %v1927 = vpop.f32.mrf.mxu0
      %1928 = vmatprep.mubr.f32.mxu0 0.0
      %1929 = vmatmul.mubr.f32.gmra.mxu0 %v1722
      %v1930 = vpop.f32.mrf.mxu0
      %v1931 = vadd.f32 0.0, %v1930
      %v1932 = vpop.f32.mrf.mxu0
      %1933 = vmatprep.mubr.f32.mxu0 0.0
      %1934 = vmatmul.mubr.f32.gmra.mxu0 %v1725
      %v1935 = vpop.f32.mrf.mxu0
      %v1936 = vadd.f32 0.0, %v1935
      %v1937 = vpop.f32.mrf.mxu0
      %1938 = vmatprep.mubr.f32.mxu0 0.0
      %1939 = vmatmul.mubr.f32.gmra.mxu0 %v1728
      %v1940 = vpop.f32.mrf.mxu0
      %v1941 = vadd.f32 0.0, %v1940
      %v1942 = vpop.f32.mrf.mxu0
      %1943 = vmatprep.mubr.f32.mxu0 0.0
      %1944 = vmatmul.mubr.f32.gmra.mxu0 %v1731
      %v1945 = vpop.f32.mrf.mxu0
      %v1946 = vadd.f32 0.0, %v1945
      %v1947 = vpop.f32.mrf.mxu0
      %1948 = vmatprep.mubr.f32.mxu0 0.0
      %1949 = vmatmul.mubr.f32.gmra.mxu0 %v1734
      %v1950 = vpop.f32.mrf.mxu0
      %v1951 = vadd.f32 0.0, %v1950
      %v1952 = vpop.f32.mrf.mxu0
      %1953 = vmatprep.mubr.f32.mxu0 0.0
      %1954 = vmatmul.mubr.f32.gmra.mxu0 %v1737
      %v1955 = vpop.f32.mrf.mxu0
      %v1956 = vadd.f32 0.0, %v1955
      %v1957 = vpop.f32.mrf.mxu0
      %1958 = vmatprep.mubr.f32.mxu0 0.0
      %1959 = vmatmul.mubr.f32.gmra.mxu0 %v1740
      %v1960 = vpop.f32.mrf.mxu0
      %v1961 = vadd.f32 0.0, %v1960
      %v1962 = vpop.f32.mrf.mxu0
      %1963 = vmatprep.mubr.f32.mxu0 0.0
      %1964 = vmatmul.mubr.f32.gmra.mxu0 %v1743
      %v1965 = vpop.f32.mrf.mxu0
      %v1966 = vadd.f32 0.0, %v1965
      %v1967 = vpop.f32.mrf.mxu0
      %1968 = vmatprep.mubr.f32.mxu0 0.0
      %1969 = vmatmul.mubr.f32.gmra.mxu0 %v1746
      %v1970 = vpop.f32.mrf.mxu0
      %v1971 = vadd.f32 0.0, %v1970
      %v1972 = vpop.f32.mrf.mxu0
      %1973 = vmatprep.mubr.f32.mxu0 0.0
      %1974 = vmatmul.mubr.f32.gmra.mxu0 %v1749
      %v1975 = vpop.f32.mrf.mxu0
      %v1976 = vadd.f32 0.0, %v1975
      %v1977 = vpop.f32.mrf.mxu0
      %1978 = vdwg.mxu0
      %v1979 = vld [vmem:[#allocation3] sm:$0xff]
      %v1980 = vld [vmem:[#allocation3 + $0x8] sm:$0xff]
      %v1981 = vld [vmem:[#allocation3 + $0x10] sm:$0xff]
      %v1982 = vld [vmem:[#allocation3 + $0x18] sm:$0xff]
      %v1983 = vld [vmem:[#allocation3 + $0x20] sm:$0xff]
      %v1984 = vld [vmem:[#allocation3 + $0x28] sm:$0xff]
      %v1985 = vld [vmem:[#allocation3 + $0x30] sm:$0xff]
      %v1986 = vld [vmem:[#allocation3 + $0x38] sm:$0xff]
      %v1987 = vld [vmem:[#allocation3 + $0x40] sm:$0xff]
      %v1988 = vld [vmem:[#allocation3 + $0x48] sm:$0xff]
      %v1989 = vld [vmem:[#allocation3 + $0x50] sm:$0xff]
      %v1990 = vld [vmem:[#allocation3 + $0x58] sm:$0xff]
      %v1991 = vld [vmem:[#allocation3 + $0x60] sm:$0xff]
      %v1992 = vld [vmem:[#allocation3 + $0x68] sm:$0xff]
      %v1993 = vld [vmem:[#allocation3 + $0x70] sm:$0xff]
      %v1994 = vld [vmem:[#allocation3 + $0x78] sm:$0xff]
      %v1995 = vld [vmem:[#allocation3 + $0x80] sm:$0xff]
      %v1996 = vld [vmem:[#allocation3 + $0x88] sm:$0xff]
      %v1997 = vld [vmem:[#allocation3 + $0x90] sm:$0xff]
      %v1998 = vld [vmem:[#allocation3 + $0x98] sm:$0xff]
      %v1999 = vld [vmem:[#allocation3 + $0xa0] sm:$0xff]
      %v2000 = vld [vmem:[#allocation3 + $0xa8] sm:$0xff]
      %v2001 = vld [vmem:[#allocation3 + $0xb0] sm:$0xff]
      %v2002 = vld [vmem:[#allocation3 + $0xb8] sm:$0xff]
      %v2003 = vld [vmem:[#allocation3 + $0xc0] sm:$0xff]
      %v2004 = vld [vmem:[#allocation3 + $0xc8] sm:$0xff]
      %v2005 = vld [vmem:[#allocation3 + $0xd0] sm:$0xff]
      %v2006 = vld [vmem:[#allocation3 + $0xd8] sm:$0xff]
      %v2007 = vld [vmem:[#allocation3 + $0xe0] sm:$0xff]
      %v2008 = vld [vmem:[#allocation3 + $0xe8] sm:$0xff]
      %v2009 = vld [vmem:[#allocation3 + $0xf0] sm:$0xff]
      %v2010 = vld [vmem:[#allocation3 + $0xf8] sm:$0xff]
      %v2011 = vadd.f32 %v1979, %v1821
      %v2012 = vadd.f32 %v1980, %v1826
      %v2013 = vadd.f32 %v1981, %v1831
      %v2014 = vadd.f32 %v1982, %v1836
      %v2015 = vadd.f32 %v1983, %v1841
      %v2016 = vadd.f32 %v1984, %v1846
      %v2017 = vadd.f32 %v1985, %v1851
      %v2018 = vadd.f32 %v1986, %v1856
      %v2019 = vadd.f32 %v1987, %v1861
      %v2020 = vadd.f32 %v1988, %v1866
      %v2021 = vadd.f32 %v1989, %v1871
      %v2022 = vadd.f32 %v1990, %v1876
      %v2023 = vadd.f32 %v1991, %v1881
      %v2024 = vadd.f32 %v1992, %v1886
      %v2025 = vadd.f32 %v1993, %v1891
      %v2026 = vadd.f32 %v1994, %v1896
      %v2027 = vadd.f32 %v1995, %v1901
      %v2028 = vadd.f32 %v1996, %v1906
      %v2029 = vadd.f32 %v1997, %v1911
      %v2030 = vadd.f32 %v1998, %v1916
      %v2031 = vadd.f32 %v1999, %v1921
      %v2032 = vadd.f32 %v2000, %v1926
      %v2033 = vadd.f32 %v2001, %v1931
      %v2034 = vadd.f32 %v2002, %v1936
      %v2035 = vadd.f32 %v2003, %v1941
      %v2036 = vadd.f32 %v2004, %v1946
      %v2037 = vadd.f32 %v2005, %v1951
      %v2038 = vadd.f32 %v2006, %v1956
      %v2039 = vadd.f32 %v2007, %v1961
      %v2040 = vadd.f32 %v2008, %v1966
      %v2041 = vadd.f32 %v2009, %v1971
      %v2042 = vadd.f32 %v2010, %v1976
      %2043 = vst.msk [vmem:[#allocation3] sm:$0xff] %vm680, %v2011
      %2044 = vst.msk [vmem:[#allocation3 + $0x8] sm:$0xff] %vm680, %v2012
      %2045 = vst.msk [vmem:[#allocation3 + $0x10] sm:$0xff] %vm680, %v2013
      %2046 = vst.msk [vmem:[#allocation3 + $0x18] sm:$0xff] %vm680, %v2014
      %2047 = vst.msk [vmem:[#allocation3 + $0x20] sm:$0xff] %vm680, %v2015
      %2048 = vst.msk [vmem:[#allocation3 + $0x28] sm:$0xff] %vm680, %v2016
      %2049 = vst.msk [vmem:[#allocation3 + $0x30] sm:$0xff] %vm680, %v2017
      %2050 = vst.msk [vmem:[#allocation3 + $0x38] sm:$0xff] %vm680, %v2018
      %2051 = vst.msk [vmem:[#allocation3 + $0x40] sm:$0xff] %vm680, %v2019
      %2052 = vst.msk [vmem:[#allocation3 + $0x48] sm:$0xff] %vm680, %v2020
      %2053 = vst.msk [vmem:[#allocation3 + $0x50] sm:$0xff] %vm680, %v2021
      %2054 = vst.msk [vmem:[#allocation3 + $0x58] sm:$0xff] %vm680, %v2022
      %2055 = vst.msk [vmem:[#allocation3 + $0x60] sm:$0xff] %vm680, %v2023
      %2056 = vst.msk [vmem:[#allocation3 + $0x68] sm:$0xff] %vm680, %v2024
      %2057 = vst.msk [vmem:[#allocation3 + $0x70] sm:$0xff] %vm680, %v2025
      %2058 = vst.msk [vmem:[#allocation3 + $0x78] sm:$0xff] %vm680, %v2026
      %2059 = vst.msk [vmem:[#allocation3 + $0x80] sm:$0xff] %vm680, %v2027
      %2060 = vst.msk [vmem:[#allocation3 + $0x88] sm:$0xff] %vm680, %v2028
      %2061 = vst.msk [vmem:[#allocation3 + $0x90] sm:$0xff] %vm680, %v2029
      %2062 = vst.msk [vmem:[#allocation3 + $0x98] sm:$0xff] %vm680, %v2030
      %2063 = vst.msk [vmem:[#allocation3 + $0xa0] sm:$0xff] %vm680, %v2031
      %2064 = vst.msk [vmem:[#allocation3 + $0xa8] sm:$0xff] %vm680, %v2032
      %2065 = vst.msk [vmem:[#allocation3 + $0xb0] sm:$0xff] %vm680, %v2033
      %2066 = vst.msk [vmem:[#allocation3 + $0xb8] sm:$0xff] %vm680, %v2034
      %2067 = vst.msk [vmem:[#allocation3 + $0xc0] sm:$0xff] %vm680, %v2035
      %2068 = vst.msk [vmem:[#allocation3 + $0xc8] sm:$0xff] %vm680, %v2036
      %2069 = vst.msk [vmem:[#allocation3 + $0xd0] sm:$0xff] %vm680, %v2037
      %2070 = vst.msk [vmem:[#allocation3 + $0xd8] sm:$0xff] %vm680, %v2038
      %2071 = vst.msk [vmem:[#allocation3 + $0xe0] sm:$0xff] %vm680, %v2039
      %2072 = vst.msk [vmem:[#allocation3 + $0xe8] sm:$0xff] %vm680, %v2040
      %2073 = vst.msk [vmem:[#allocation3 + $0xf0] sm:$0xff] %vm680, %v2041
      %2074 = vst.msk [vmem:[#allocation3 + $0xf8] sm:$0xff] %vm680, %v2042
      %v2075 = vld [vmem:[%s224 + $0x1] sm:$0xff]
      %v2076 = vld [vmem:[%s224 + $0x9] sm:$0xff]
      %v2077 = vld [vmem:[%s224 + $0x19] sm:$0xff]
      %v2078 = vld [vmem:[%s224 + $0x21] sm:$0xff]
      %v2079 = vld [vmem:[%s224 + $0x31] sm:$0xff]
      %v2080 = vld [vmem:[%s224 + $0x39] sm:$0xff]
      %v2081 = vld [vmem:[%s224 + $0x49] sm:$0xff]
      %v2082 = vld [vmem:[%s224 + $0x51] sm:$0xff]
      %v2083 = vld [vmem:[%s224 + $0x61] sm:$0xff]
      %v2084 = vld [vmem:[%s224 + $0x69] sm:$0xff]
      %v2085 = vld [vmem:[%s224 + $0x79] sm:$0xff]
      %v2086 = vld [vmem:[%s224 + $0x81] sm:$0xff]
      %v2087 = vld [vmem:[%s224 + $0x91] sm:$0xff]
      %v2088 = vld [vmem:[%s224 + $0x99] sm:$0xff]
      %v2089 = vld [vmem:[%s224 + $0xa9] sm:$0xff]
      %v2090 = vld [vmem:[%s224 + $0xb1] sm:$0xff]
      %v2091 = vld [vmem:[%s224 + $0xc1] sm:$0xff]
      %v2092 = vld [vmem:[%s224 + $0xc9] sm:$0xff]
      %v2093 = vld [vmem:[%s224 + $0xd9] sm:$0xff]
      %v2094 = vld [vmem:[%s224 + $0xe1] sm:$0xff]
      %v2095 = vld [vmem:[%s224 + $0xf1] sm:$0xff]
      %v2096 = vld [vmem:[%s224 + $0xf9] sm:$0xff]
      %v2097 = vld [vmem:[%s224 + $0x109] sm:$0xff]
      %v2098 = vld [vmem:[%s224 + $0x111] sm:$0xff]
      %v2099 = vld [vmem:[%s224 + $0x121] sm:$0xff]
      %v2100 = vld [vmem:[%s224 + $0x129] sm:$0xff]
      %v2101 = vld [vmem:[%s224 + $0x139] sm:$0xff]
      %v2102 = vld [vmem:[%s224 + $0x141] sm:$0xff]
      %v2103 = vld [vmem:[%s224 + $0x151] sm:$0xff]
      %v2104 = vld [vmem:[%s224 + $0x159] sm:$0xff]
      %v2105 = vld [vmem:[%s224 + $0x169] sm:$0xff]
      %v2106 = vld [vmem:[%s224 + $0x171] sm:$0xff]
      %s2107 = scalar_lea.vmem %s1, 16
      %v2108 = vld [vmem:[%s2107] sm:$0xf]
      %v2110 = vsel %vm215, %v2075, 0
      %v2113 = vsel %vm215, %v2076, 0
      %v2116 = vsel %vm215, %v2077, 0
      %v2119 = vsel %vm215, %v2078, 0
      %v2122 = vsel %vm215, %v2079, 0
      %v2125 = vsel %vm215, %v2080, 0
      %v2128 = vsel %vm215, %v2081, 0
      %v2131 = vsel %vm215, %v2082, 0
      %v2134 = vsel %vm215, %v2083, 0
      %v2137 = vsel %vm215, %v2084, 0
      %v2140 = vsel %vm215, %v2085, 0
      %v2143 = vsel %vm215, %v2086, 0
      %v2146 = vsel %vm215, %v2087, 0
      %v2149 = vsel %vm215, %v2088, 0
      %v2152 = vsel %vm215, %v2089, 0
      %v2155 = vsel %vm215, %v2090, 0
      %v2158 = vsel %vm215, %v2091, 0
      %v2161 = vsel %vm215, %v2092, 0
      %v2164 = vsel %vm215, %v2093, 0
      %v2167 = vsel %vm215, %v2094, 0
      %v2170 = vsel %vm215, %v2095, 0
      %v2173 = vsel %vm215, %v2096, 0
      %v2176 = vsel %vm215, %v2097, 0
      %v2179 = vsel %vm215, %v2098, 0
      %v2182 = vsel %vm215, %v2099, 0
      %v2185 = vsel %vm215, %v2100, 0
      %v2188 = vsel %vm215, %v2101, 0
      %v2191 = vsel %vm215, %v2102, 0
      %v2194 = vsel %vm215, %v2103, 0
      %v2197 = vsel %vm215, %v2104, 0
      %v2200 = vsel %vm215, %v2105, 0
      %v2203 = vsel %vm215, %v2106, 0
      %v2206 = vsel %vm451, %v2108, 0
      %2208 = vmatprep.subr.mxu0 0.0
      %2209 = vmatpush1.msra.mxu0 0.0
      %2210 = vmatprep.subr.mxu0 0.0
      %2211 = vmatpush1.msra.mxu0 0.0
      %2212 = vmatprep.subr.mxu0 0.0
      %2213 = vmatpush1.msra.mxu0 0.0
      %2214 = vmatprep.subr.mxu0 0.0
      %2215 = vmatpush1.msra.mxu0 0.0
      %2216 = vmatprep.subr.mxu0 0.0
      %2217 = vmatpush1.msra.mxu0 0.0
      %2218 = vmatprep.subr.mxu0 0.0
      %2219 = vmatpush1.msra.mxu0 0.0
      %2220 = vmatprep.subr.mxu0 0.0
      %2221 = vmatpush1.msra.mxu0 0.0
      %2222 = vmatprep.subr.mxu0 0.0
      %2223 = vmatpush1.msra.mxu0 0.0
      %2224 = vmatprep.subr.mxu0 0.0
      %2225 = vmatpush1.msra.mxu0 0.0
      %2226 = vmatprep.subr.mxu0 0.0
      %2227 = vmatpush1.msra.mxu0 0.0
      %2228 = vmatprep.subr.mxu0 0.0
      %2229 = vmatpush1.msra.mxu0 0.0
      %2230 = vmatprep.subr.mxu0 0.0
      %2231 = vmatpush1.msra.mxu0 0.0
      %2232 = vmatprep.subr.mxu0 0.0
      %2233 = vmatpush1.msra.mxu0 0.0
      %2234 = vmatprep.subr.mxu0 0.0
      %2235 = vmatpush1.msra.mxu0 0.0
      %2236 = vmatprep.subr.mxu0 0.0
      %2237 = vmatpush1.msra.mxu0 0.0
      %2238 = vmatprep.subr.mxu0 0.0
      %2239 = vmatpush1.msra.mxu0 %v2206
      %2240 = vmatprep.subr.mxu0 0.0
      %2241 = vmatpush2.msra.mxu0 0.0
      %2242 = vmatprep.subr.mxu0 0.0
      %2243 = vmatpush2.msra.mxu0 0.0
      %2244 = vmatprep.subr.mxu0 0.0
      %2245 = vmatpush2.msra.mxu0 0.0
      %2246 = vmatprep.subr.mxu0 0.0
      %2247 = vmatpush2.msra.mxu0 0.0
      %2248 = vmatprep.subr.mxu0 0.0
      %2249 = vmatpush2.msra.mxu0 0.0
      %2250 = vmatprep.subr.mxu0 0.0
      %2251 = vmatpush2.msra.mxu0 0.0
      %2252 = vmatprep.subr.mxu0 0.0
      %2253 = vmatpush2.msra.mxu0 0.0
      %2254 = vmatprep.subr.mxu0 0.0
      %2255 = vmatpush2.msra.mxu0 0.0
      %2256 = vmatprep.subr.mxu0 0.0
      %2257 = vmatpush2.msra.mxu0 0.0
      %2258 = vmatprep.subr.mxu0 0.0
      %2259 = vmatpush2.msra.mxu0 0.0
      %2260 = vmatprep.subr.mxu0 0.0
      %2261 = vmatpush2.msra.mxu0 0.0
      %2262 = vmatprep.subr.mxu0 0.0
      %2263 = vmatpush2.msra.mxu0 0.0
      %2264 = vmatprep.subr.mxu0 0.0
      %2265 = vmatpush2.msra.mxu0 0.0
      %2266 = vmatprep.subr.mxu0 0.0
      %2267 = vmatpush2.msra.mxu0 0.0
      %2268 = vmatprep.subr.mxu0 0.0
      %2269 = vmatpush2.msra.mxu0 0.0
      %2270 = vmatprep.subr.mxu0 0.0
      %2271 = vmatpush2.msra.mxu0 0.0
      %2272 = vmatprep.mubr.f32.mxu0 0.0
      %2273 = vmatmul.mubr.f32.gmra.mxu0 %v2110
      %v2274 = vpop.f32.mrf.mxu0
      %v2275 = vadd.f32 0.0, %v2274
      %v2276 = vpop.f32.mrf.mxu0
      %2277 = vmatprep.mubr.f32.mxu0 0.0
      %2278 = vmatmul.mubr.f32.gmra.mxu0 %v2113
      %v2279 = vpop.f32.mrf.mxu0
      %v2280 = vadd.f32 0.0, %v2279
      %v2281 = vpop.f32.mrf.mxu0
      %2282 = vmatprep.mubr.f32.mxu0 0.0
      %2283 = vmatmul.mubr.f32.gmra.mxu0 %v2116
      %v2284 = vpop.f32.mrf.mxu0
      %v2285 = vadd.f32 0.0, %v2284
      %v2286 = vpop.f32.mrf.mxu0
      %2287 = vmatprep.mubr.f32.mxu0 0.0
      %2288 = vmatmul.mubr.f32.gmra.mxu0 %v2119
      %v2289 = vpop.f32.mrf.mxu0
      %v2290 = vadd.f32 0.0, %v2289
      %v2291 = vpop.f32.mrf.mxu0
      %2292 = vmatprep.mubr.f32.mxu0 0.0
      %2293 = vmatmul.mubr.f32.gmra.mxu0 %v2122
      %v2294 = vpop.f32.mrf.mxu0
      %v2295 = vadd.f32 0.0, %v2294
      %v2296 = vpop.f32.mrf.mxu0
      %2297 = vmatprep.mubr.f32.mxu0 0.0
      %2298 = vmatmul.mubr.f32.gmra.mxu0 %v2125
      %v2299 = vpop.f32.mrf.mxu0
      %v2300 = vadd.f32 0.0, %v2299
      %v2301 = vpop.f32.mrf.mxu0
      %2302 = vmatprep.mubr.f32.mxu0 0.0
      %2303 = vmatmul.mubr.f32.gmra.mxu0 %v2128
      %v2304 = vpop.f32.mrf.mxu0
      %v2305 = vadd.f32 0.0, %v2304
      %v2306 = vpop.f32.mrf.mxu0
      %2307 = vmatprep.mubr.f32.mxu0 0.0
      %2308 = vmatmul.mubr.f32.gmra.mxu0 %v2131
      %v2309 = vpop.f32.mrf.mxu0
      %v2310 = vadd.f32 0.0, %v2309
      %v2311 = vpop.f32.mrf.mxu0
      %2312 = vmatprep.mubr.f32.mxu0 0.0
      %2313 = vmatmul.mubr.f32.gmra.mxu0 %v2134
      %v2314 = vpop.f32.mrf.mxu0
      %v2315 = vadd.f32 0.0, %v2314
      %v2316 = vpop.f32.mrf.mxu0
      %2317 = vmatprep.mubr.f32.mxu0 0.0
      %2318 = vmatmul.mubr.f32.gmra.mxu0 %v2137
      %v2319 = vpop.f32.mrf.mxu0
      %v2320 = vadd.f32 0.0, %v2319
      %v2321 = vpop.f32.mrf.mxu0
      %2322 = vmatprep.mubr.f32.mxu0 0.0
      %2323 = vmatmul.mubr.f32.gmra.mxu0 %v2140
      %v2324 = vpop.f32.mrf.mxu0
      %v2325 = vadd.f32 0.0, %v2324
      %v2326 = vpop.f32.mrf.mxu0
      %2327 = vmatprep.mubr.f32.mxu0 0.0
      %2328 = vmatmul.mubr.f32.gmra.mxu0 %v2143
      %v2329 = vpop.f32.mrf.mxu0
      %v2330 = vadd.f32 0.0, %v2329
      %v2331 = vpop.f32.mrf.mxu0
      %2332 = vmatprep.mubr.f32.mxu0 0.0
      %2333 = vmatmul.mubr.f32.gmra.mxu0 %v2146
      %v2334 = vpop.f32.mrf.mxu0
      %v2335 = vadd.f32 0.0, %v2334
      %v2336 = vpop.f32.mrf.mxu0
      %2337 = vmatprep.mubr.f32.mxu0 0.0
      %2338 = vmatmul.mubr.f32.gmra.mxu0 %v2149
      %v2339 = vpop.f32.mrf.mxu0
      %v2340 = vadd.f32 0.0, %v2339
      %v2341 = vpop.f32.mrf.mxu0
      %2342 = vmatprep.mubr.f32.mxu0 0.0
      %2343 = vmatmul.mubr.f32.gmra.mxu0 %v2152
      %v2344 = vpop.f32.mrf.mxu0
      %v2345 = vadd.f32 0.0, %v2344
      %v2346 = vpop.f32.mrf.mxu0
      %2347 = vmatprep.mubr.f32.mxu0 0.0
      %2348 = vmatmul.mubr.f32.gmra.mxu0 %v2155
      %v2349 = vpop.f32.mrf.mxu0
      %v2350 = vadd.f32 0.0, %v2349
      %v2351 = vpop.f32.mrf.mxu0
      %2352 = vmatprep.mubr.f32.mxu0 0.0
      %2353 = vmatmul.mubr.f32.gmra.mxu0 %v2158
      %v2354 = vpop.f32.mrf.mxu0
      %v2355 = vadd.f32 0.0, %v2354
      %v2356 = vpop.f32.mrf.mxu0
      %2357 = vmatprep.mubr.f32.mxu0 0.0
      %2358 = vmatmul.mubr.f32.gmra.mxu0 %v2161
      %v2359 = vpop.f32.mrf.mxu0
      %v2360 = vadd.f32 0.0, %v2359
      %v2361 = vpop.f32.mrf.mxu0
      %2362 = vmatprep.mubr.f32.mxu0 0.0
      %2363 = vmatmul.mubr.f32.gmra.mxu0 %v2164
      %v2364 = vpop.f32.mrf.mxu0
      %v2365 = vadd.f32 0.0, %v2364
      %v2366 = vpop.f32.mrf.mxu0
      %2367 = vmatprep.mubr.f32.mxu0 0.0
      %2368 = vmatmul.mubr.f32.gmra.mxu0 %v2167
      %v2369 = vpop.f32.mrf.mxu0
      %v2370 = vadd.f32 0.0, %v2369
      %v2371 = vpop.f32.mrf.mxu0
      %2372 = vmatprep.mubr.f32.mxu0 0.0
      %2373 = vmatmul.mubr.f32.gmra.mxu0 %v2170
      %v2374 = vpop.f32.mrf.mxu0
      %v2375 = vadd.f32 0.0, %v2374
      %v2376 = vpop.f32.mrf.mxu0
      %2377 = vmatprep.mubr.f32.mxu0 0.0
      %2378 = vmatmul.mubr.f32.gmra.mxu0 %v2173
      %v2379 = vpop.f32.mrf.mxu0
      %v2380 = vadd.f32 0.0, %v2379
      %v2381 = vpop.f32.mrf.mxu0
      %2382 = vmatprep.mubr.f32.mxu0 0.0
      %2383 = vmatmul.mubr.f32.gmra.mxu0 %v2176
      %v2384 = vpop.f32.mrf.mxu0
      %v2385 = vadd.f32 0.0, %v2384
      %v2386 = vpop.f32.mrf.mxu0
      %2387 = vmatprep.mubr.f32.mxu0 0.0
      %2388 = vmatmul.mubr.f32.gmra.mxu0 %v2179
      %v2389 = vpop.f32.mrf.mxu0
      %v2390 = vadd.f32 0.0, %v2389
      %v2391 = vpop.f32.mrf.mxu0
      %2392 = vmatprep.mubr.f32.mxu0 0.0
      %2393 = vmatmul.mubr.f32.gmra.mxu0 %v2182
      %v2394 = vpop.f32.mrf.mxu0
      %v2395 = vadd.f32 0.0, %v2394
      %v2396 = vpop.f32.mrf.mxu0
      %2397 = vmatprep.mubr.f32.mxu0 0.0
      %2398 = vmatmul.mubr.f32.gmra.mxu0 %v2185
      %v2399 = vpop.f32.mrf.mxu0
      %v2400 = vadd.f32 0.0, %v2399
      %v2401 = vpop.f32.mrf.mxu0
      %2402 = vmatprep.mubr.f32.mxu0 0.0
      %2403 = vmatmul.mubr.f32.gmra.mxu0 %v2188
      %v2404 = vpop.f32.mrf.mxu0
      %v2405 = vadd.f32 0.0, %v2404
      %v2406 = vpop.f32.mrf.mxu0
      %2407 = vmatprep.mubr.f32.mxu0 0.0
      %2408 = vmatmul.mubr.f32.gmra.mxu0 %v2191
      %v2409 = vpop.f32.mrf.mxu0
      %v2410 = vadd.f32 0.0, %v2409
      %v2411 = vpop.f32.mrf.mxu0
      %2412 = vmatprep.mubr.f32.mxu0 0.0
      %2413 = vmatmul.mubr.f32.gmra.mxu0 %v2194
      %v2414 = vpop.f32.mrf.mxu0
      %v2415 = vadd.f32 0.0, %v2414
      %v2416 = vpop.f32.mrf.mxu0
      %2417 = vmatprep.mubr.f32.mxu0 0.0
      %2418 = vmatmul.mubr.f32.gmra.mxu0 %v2197
      %v2419 = vpop.f32.mrf.mxu0
      %v2420 = vadd.f32 0.0, %v2419
      %v2421 = vpop.f32.mrf.mxu0
      %2422 = vmatprep.mubr.f32.mxu0 0.0
      %2423 = vmatmul.mubr.f32.gmra.mxu0 %v2200
      %v2424 = vpop.f32.mrf.mxu0
      %v2425 = vadd.f32 0.0, %v2424
      %v2426 = vpop.f32.mrf.mxu0
      %2427 = vmatprep.mubr.f32.mxu0 0.0
      %2428 = vmatmul.mubr.f32.gmra.mxu0 %v2203
      %v2429 = vpop.f32.mrf.mxu0
      %v2430 = vadd.f32 0.0, %v2429
      %v2431 = vpop.f32.mrf.mxu0
      %2432 = vdwg.mxu0
      %v2433 = vld [vmem:[#allocation3] sm:$0xff]
      %v2434 = vld [vmem:[#allocation3 + $0x8] sm:$0xff]
      %v2435 = vld [vmem:[#allocation3 + $0x10] sm:$0xff]
      %v2436 = vld [vmem:[#allocation3 + $0x18] sm:$0xff]
      %v2437 = vld [vmem:[#allocation3 + $0x20] sm:$0xff]
      %v2438 = vld [vmem:[#allocation3 + $0x28] sm:$0xff]
      %v2439 = vld [vmem:[#allocation3 + $0x30] sm:$0xff]
      %v2440 = vld [vmem:[#allocation3 + $0x38] sm:$0xff]
      %v2441 = vld [vmem:[#allocation3 + $0x40] sm:$0xff]
      %v2442 = vld [vmem:[#allocation3 + $0x48] sm:$0xff]
      %v2443 = vld [vmem:[#allocation3 + $0x50] sm:$0xff]
      %v2444 = vld [vmem:[#allocation3 + $0x58] sm:$0xff]
      %v2445 = vld [vmem:[#allocation3 + $0x60] sm:$0xff]
      %v2446 = vld [vmem:[#allocation3 + $0x68] sm:$0xff]
      %v2447 = vld [vmem:[#allocation3 + $0x70] sm:$0xff]
      %v2448 = vld [vmem:[#allocation3 + $0x78] sm:$0xff]
      %v2449 = vld [vmem:[#allocation3 + $0x80] sm:$0xff]
      %v2450 = vld [vmem:[#allocation3 + $0x88] sm:$0xff]
      %v2451 = vld [vmem:[#allocation3 + $0x90] sm:$0xff]
      %v2452 = vld [vmem:[#allocation3 + $0x98] sm:$0xff]
      %v2453 = vld [vmem:[#allocation3 + $0xa0] sm:$0xff]
      %v2454 = vld [vmem:[#allocation3 + $0xa8] sm:$0xff]
      %v2455 = vld [vmem:[#allocation3 + $0xb0] sm:$0xff]
      %v2456 = vld [vmem:[#allocation3 + $0xb8] sm:$0xff]
      %v2457 = vld [vmem:[#allocation3 + $0xc0] sm:$0xff]
      %v2458 = vld [vmem:[#allocation3 + $0xc8] sm:$0xff]
      %v2459 = vld [vmem:[#allocation3 + $0xd0] sm:$0xff]
      %v2460 = vld [vmem:[#allocation3 + $0xd8] sm:$0xff]
      %v2461 = vld [vmem:[#allocation3 + $0xe0] sm:$0xff]
      %v2462 = vld [vmem:[#allocation3 + $0xe8] sm:$0xff]
      %v2463 = vld [vmem:[#allocation3 + $0xf0] sm:$0xff]
      %v2464 = vld [vmem:[#allocation3 + $0xf8] sm:$0xff]
      %v2465 = vadd.f32 %v2433, %v2275
      %v2466 = vadd.f32 %v2434, %v2280
      %v2467 = vadd.f32 %v2435, %v2285
      %v2468 = vadd.f32 %v2436, %v2290
      %v2469 = vadd.f32 %v2437, %v2295
      %v2470 = vadd.f32 %v2438, %v2300
      %v2471 = vadd.f32 %v2439, %v2305
      %v2472 = vadd.f32 %v2440, %v2310
      %v2473 = vadd.f32 %v2441, %v2315
      %v2474 = vadd.f32 %v2442, %v2320
      %v2475 = vadd.f32 %v2443, %v2325
      %v2476 = vadd.f32 %v2444, %v2330
      %v2477 = vadd.f32 %v2445, %v2335
      %v2478 = vadd.f32 %v2446, %v2340
      %v2479 = vadd.f32 %v2447, %v2345
      %v2480 = vadd.f32 %v2448, %v2350
      %v2481 = vadd.f32 %v2449, %v2355
      %v2482 = vadd.f32 %v2450, %v2360
      %v2483 = vadd.f32 %v2451, %v2365
      %v2484 = vadd.f32 %v2452, %v2370
      %v2485 = vadd.f32 %v2453, %v2375
      %v2486 = vadd.f32 %v2454, %v2380
      %v2487 = vadd.f32 %v2455, %v2385
      %v2488 = vadd.f32 %v2456, %v2390
      %v2489 = vadd.f32 %v2457, %v2395
      %v2490 = vadd.f32 %v2458, %v2400
      %v2491 = vadd.f32 %v2459, %v2405
      %v2492 = vadd.f32 %v2460, %v2410
      %v2493 = vadd.f32 %v2461, %v2415
      %v2494 = vadd.f32 %v2462, %v2420
      %v2495 = vadd.f32 %v2463, %v2425
      %v2496 = vadd.f32 %v2464, %v2430
      %2497 = vst.msk [vmem:[#allocation3] sm:$0xff] %vm680, %v2465
      %2498 = vst.msk [vmem:[#allocation3 + $0x8] sm:$0xff] %vm680, %v2466
      %2499 = vst.msk [vmem:[#allocation3 + $0x10] sm:$0xff] %vm680, %v2467
      %2500 = vst.msk [vmem:[#allocation3 + $0x18] sm:$0xff] %vm680, %v2468
      %2501 = vst.msk [vmem:[#allocation3 + $0x20] sm:$0xff] %vm680, %v2469
      %2502 = vst.msk [vmem:[#allocation3 + $0x28] sm:$0xff] %vm680, %v2470
      %2503 = vst.msk [vmem:[#allocation3 + $0x30] sm:$0xff] %vm680, %v2471
      %2504 = vst.msk [vmem:[#allocation3 + $0x38] sm:$0xff] %vm680, %v2472
      %2505 = vst.msk [vmem:[#allocation3 + $0x40] sm:$0xff] %vm680, %v2473
      %2506 = vst.msk [vmem:[#allocation3 + $0x48] sm:$0xff] %vm680, %v2474
      %2507 = vst.msk [vmem:[#allocation3 + $0x50] sm:$0xff] %vm680, %v2475
      %2508 = vst.msk [vmem:[#allocation3 + $0x58] sm:$0xff] %vm680, %v2476
      %2509 = vst.msk [vmem:[#allocation3 + $0x60] sm:$0xff] %vm680, %v2477
      %2510 = vst.msk [vmem:[#allocation3 + $0x68] sm:$0xff] %vm680, %v2478
      %2511 = vst.msk [vmem:[#allocation3 + $0x70] sm:$0xff] %vm680, %v2479
      %2512 = vst.msk [vmem:[#allocation3 + $0x78] sm:$0xff] %vm680, %v2480
      %2513 = vst.msk [vmem:[#allocation3 + $0x80] sm:$0xff] %vm680, %v2481
      %2514 = vst.msk [vmem:[#allocation3 + $0x88] sm:$0xff] %vm680, %v2482
      %2515 = vst.msk [vmem:[#allocation3 + $0x90] sm:$0xff] %vm680, %v2483
      %2516 = vst.msk [vmem:[#allocation3 + $0x98] sm:$0xff] %vm680, %v2484
      %2517 = vst.msk [vmem:[#allocation3 + $0xa0] sm:$0xff] %vm680, %v2485
      %2518 = vst.msk [vmem:[#allocation3 + $0xa8] sm:$0xff] %vm680, %v2486
      %2519 = vst.msk [vmem:[#allocation3 + $0xb0] sm:$0xff] %vm680, %v2487
      %2520 = vst.msk [vmem:[#allocation3 + $0xb8] sm:$0xff] %vm680, %v2488
      %2521 = vst.msk [vmem:[#allocation3 + $0xc0] sm:$0xff] %vm680, %v2489
      %2522 = vst.msk [vmem:[#allocation3 + $0xc8] sm:$0xff] %vm680, %v2490
      %2523 = vst.msk [vmem:[#allocation3 + $0xd0] sm:$0xff] %vm680, %v2491
      %2524 = vst.msk [vmem:[#allocation3 + $0xd8] sm:$0xff] %vm680, %v2492
      %2525 = vst.msk [vmem:[#allocation3 + $0xe0] sm:$0xff] %vm680, %v2493
      %2526 = vst.msk [vmem:[#allocation3 + $0xe8] sm:$0xff] %vm680, %v2494
      %2527 = vst.msk [vmem:[#allocation3 + $0xf0] sm:$0xff] %vm680, %v2495
      %2528 = vst.msk [vmem:[#allocation3 + $0xf8] sm:$0xff] %vm680, %v2496
      %v2529 = vld [vmem:[%s224 + $0x2] sm:$0xff]
      %v2530 = vld [vmem:[%s224 + $0xa] sm:$0xff]
      %v2531 = vld [vmem:[%s224 + $0x1a] sm:$0xff]
      %v2532 = vld [vmem:[%s224 + $0x22] sm:$0xff]
      %v2533 = vld [vmem:[%s224 + $0x32] sm:$0xff]
      %v2534 = vld [vmem:[%s224 + $0x3a] sm:$0xff]
      %v2535 = vld [vmem:[%s224 + $0x4a] sm:$0xff]
      %v2536 = vld [vmem:[%s224 + $0x52] sm:$0xff]
      %v2537 = vld [vmem:[%s224 + $0x62] sm:$0xff]
      %v2538 = vld [vmem:[%s224 + $0x6a] sm:$0xff]
      %v2539 = vld [vmem:[%s224 + $0x7a] sm:$0xff]
      %v2540 = vld [vmem:[%s224 + $0x82] sm:$0xff]
      %v2541 = vld [vmem:[%s224 + $0x92] sm:$0xff]
      %v2542 = vld [vmem:[%s224 + $0x9a] sm:$0xff]
      %v2543 = vld [vmem:[%s224 + $0xaa] sm:$0xff]
      %v2544 = vld [vmem:[%s224 + $0xb2] sm:$0xff]
      %v2545 = vld [vmem:[%s224 + $0xc2] sm:$0xff]
      %v2546 = vld [vmem:[%s224 + $0xca] sm:$0xff]
      %v2547 = vld [vmem:[%s224 + $0xda] sm:$0xff]
      %v2548 = vld [vmem:[%s224 + $0xe2] sm:$0xff]
      %v2549 = vld [vmem:[%s224 + $0xf2] sm:$0xff]
      %v2550 = vld [vmem:[%s224 + $0xfa] sm:$0xff]
      %v2551 = vld [vmem:[%s224 + $0x10a] sm:$0xff]
      %v2552 = vld [vmem:[%s224 + $0x112] sm:$0xff]
      %v2553 = vld [vmem:[%s224 + $0x122] sm:$0xff]
      %v2554 = vld [vmem:[%s224 + $0x12a] sm:$0xff]
      %v2555 = vld [vmem:[%s224 + $0x13a] sm:$0xff]
      %v2556 = vld [vmem:[%s224 + $0x142] sm:$0xff]
      %v2557 = vld [vmem:[%s224 + $0x152] sm:$0xff]
      %v2558 = vld [vmem:[%s224 + $0x15a] sm:$0xff]
      %v2559 = vld [vmem:[%s224 + $0x16a] sm:$0xff]
      %v2560 = vld [vmem:[%s224 + $0x172] sm:$0xff]
      %s2561 = scalar_lea.vmem %s1, 20
      %v2562 = vld [vmem:[%s2561] sm:$0xf]
      %v2564 = vsel %vm215, %v2529, 0
      %v2567 = vsel %vm215, %v2530, 0
      %v2570 = vsel %vm215, %v2531, 0
      %v2573 = vsel %vm215, %v2532, 0
      %v2576 = vsel %vm215, %v2533, 0
      %v2579 = vsel %vm215, %v2534, 0
      %v2582 = vsel %vm215, %v2535, 0
      %v2585 = vsel %vm215, %v2536, 0
      %v2588 = vsel %vm215, %v2537, 0
      %v2591 = vsel %vm215, %v2538, 0
      %v2594 = vsel %vm215, %v2539, 0
      %v2597 = vsel %vm215, %v2540, 0
      %v2600 = vsel %vm215, %v2541, 0
      %v2603 = vsel %vm215, %v2542, 0
      %v2606 = vsel %vm215, %v2543, 0
      %v2609 = vsel %vm215, %v2544, 0
      %v2612 = vsel %vm215, %v2545, 0
      %v2615 = vsel %vm215, %v2546, 0
      %v2618 = vsel %vm215, %v2547, 0
      %v2621 = vsel %vm215, %v2548, 0
      %v2624 = vsel %vm215, %v2549, 0
      %v2627 = vsel %vm215, %v2550, 0
      %v2630 = vsel %vm215, %v2551, 0
      %v2633 = vsel %vm215, %v2552, 0
      %v2636 = vsel %vm215, %v2553, 0
      %v2639 = vsel %vm215, %v2554, 0
      %v2642 = vsel %vm215, %v2555, 0
      %v2645 = vsel %vm215, %v2556, 0
      %v2648 = vsel %vm215, %v2557, 0
      %v2651 = vsel %vm215, %v2558, 0
      %v2654 = vsel %vm215, %v2559, 0
      %v2657 = vsel %vm215, %v2560, 0
      %v2660 = vsel %vm451, %v2562, 0
      %2662 = vmatprep.subr.mxu0 0.0
      %2663 = vmatpush1.msra.mxu0 0.0
      %2664 = vmatprep.subr.mxu0 0.0
      %2665 = vmatpush1.msra.mxu0 0.0
      %2666 = vmatprep.subr.mxu0 0.0
      %2667 = vmatpush1.msra.mxu0 0.0
      %2668 = vmatprep.subr.mxu0 0.0
      %2669 = vmatpush1.msra.mxu0 0.0
      %2670 = vmatprep.subr.mxu0 0.0
      %2671 = vmatpush1.msra.mxu0 0.0
      %2672 = vmatprep.subr.mxu0 0.0
      %2673 = vmatpush1.msra.mxu0 0.0
      %2674 = vmatprep.subr.mxu0 0.0
      %2675 = vmatpush1.msra.mxu0 0.0
      %2676 = vmatprep.subr.mxu0 0.0
      %2677 = vmatpush1.msra.mxu0 0.0
      %2678 = vmatprep.subr.mxu0 0.0
      %2679 = vmatpush1.msra.mxu0 0.0
      %2680 = vmatprep.subr.mxu0 0.0
      %2681 = vmatpush1.msra.mxu0 0.0
      %2682 = vmatprep.subr.mxu0 0.0
      %2683 = vmatpush1.msra.mxu0 0.0
      %2684 = vmatprep.subr.mxu0 0.0
      %2685 = vmatpush1.msra.mxu0 0.0
      %2686 = vmatprep.subr.mxu0 0.0
      %2687 = vmatpush1.msra.mxu0 0.0
      %2688 = vmatprep.subr.mxu0 0.0
      %2689 = vmatpush1.msra.mxu0 0.0
      %2690 = vmatprep.subr.mxu0 0.0
      %2691 = vmatpush1.msra.mxu0 0.0
      %2692 = vmatprep.subr.mxu0 0.0
      %2693 = vmatpush1.msra.mxu0 %v2660
      %2694 = vmatprep.subr.mxu0 0.0
      %2695 = vmatpush2.msra.mxu0 0.0
      %2696 = vmatprep.subr.mxu0 0.0
      %2697 = vmatpush2.msra.mxu0 0.0
      %2698 = vmatprep.subr.mxu0 0.0
      %2699 = vmatpush2.msra.mxu0 0.0
      %2700 = vmatprep.subr.mxu0 0.0
      %2701 = vmatpush2.msra.mxu0 0.0
      %2702 = vmatprep.subr.mxu0 0.0
      %2703 = vmatpush2.msra.mxu0 0.0
      %2704 = vmatprep.subr.mxu0 0.0
      %2705 = vmatpush2.msra.mxu0 0.0
      %2706 = vmatprep.subr.mxu0 0.0
      %2707 = vmatpush2.msra.mxu0 0.0
      %2708 = vmatprep.subr.mxu0 0.0
      %2709 = vmatpush2.msra.mxu0 0.0
      %2710 = vmatprep.subr.mxu0 0.0
      %2711 = vmatpush2.msra.mxu0 0.0
      %2712 = vmatprep.subr.mxu0 0.0
      %2713 = vmatpush2.msra.mxu0 0.0
      %2714 = vmatprep.subr.mxu0 0.0
      %2715 = vmatpush2.msra.mxu0 0.0
      %2716 = vmatprep.subr.mxu0 0.0
      %2717 = vmatpush2.msra.mxu0 0.0
      %2718 = vmatprep.subr.mxu0 0.0
      %2719 = vmatpush2.msra.mxu0 0.0
      %2720 = vmatprep.subr.mxu0 0.0
      %2721 = vmatpush2.msra.mxu0 0.0
      %2722 = vmatprep.subr.mxu0 0.0
      %2723 = vmatpush2.msra.mxu0 0.0
      %2724 = vmatprep.subr.mxu0 0.0
      %2725 = vmatpush2.msra.mxu0 0.0
      %2726 = vmatprep.mubr.f32.mxu0 0.0
      %2727 = vmatmul.mubr.f32.gmra.mxu0 %v2564
      %v2728 = vpop.f32.mrf.mxu0
      %v2729 = vadd.f32 0.0, %v2728
      %v2730 = vpop.f32.mrf.mxu0
      %2731 = vmatprep.mubr.f32.mxu0 0.0
      %2732 = vmatmul.mubr.f32.gmra.mxu0 %v2567
      %v2733 = vpop.f32.mrf.mxu0
      %v2734 = vadd.f32 0.0, %v2733
      %v2735 = vpop.f32.mrf.mxu0
      %2736 = vmatprep.mubr.f32.mxu0 0.0
      %2737 = vmatmul.mubr.f32.gmra.mxu0 %v2570
      %v2738 = vpop.f32.mrf.mxu0
      %v2739 = vadd.f32 0.0, %v2738
      %v2740 = vpop.f32.mrf.mxu0
      %2741 = vmatprep.mubr.f32.mxu0 0.0
      %2742 = vmatmul.mubr.f32.gmra.mxu0 %v2573
      %v2743 = vpop.f32.mrf.mxu0
      %v2744 = vadd.f32 0.0, %v2743
      %v2745 = vpop.f32.mrf.mxu0
      %2746 = vmatprep.mubr.f32.mxu0 0.0
      %2747 = vmatmul.mubr.f32.gmra.mxu0 %v2576
      %v2748 = vpop.f32.mrf.mxu0
      %v2749 = vadd.f32 0.0, %v2748
      %v2750 = vpop.f32.mrf.mxu0
      %2751 = vmatprep.mubr.f32.mxu0 0.0
      %2752 = vmatmul.mubr.f32.gmra.mxu0 %v2579
      %v2753 = vpop.f32.mrf.mxu0
      %v2754 = vadd.f32 0.0, %v2753
      %v2755 = vpop.f32.mrf.mxu0
      %2756 = vmatprep.mubr.f32.mxu0 0.0
      %2757 = vmatmul.mubr.f32.gmra.mxu0 %v2582
      %v2758 = vpop.f32.mrf.mxu0
      %v2759 = vadd.f32 0.0, %v2758
      %v2760 = vpop.f32.mrf.mxu0
      %2761 = vmatprep.mubr.f32.mxu0 0.0
      %2762 = vmatmul.mubr.f32.gmra.mxu0 %v2585
      %v2763 = vpop.f32.mrf.mxu0
      %v2764 = vadd.f32 0.0, %v2763
      %v2765 = vpop.f32.mrf.mxu0
      %2766 = vmatprep.mubr.f32.mxu0 0.0
      %2767 = vmatmul.mubr.f32.gmra.mxu0 %v2588
      %v2768 = vpop.f32.mrf.mxu0
      %v2769 = vadd.f32 0.0, %v2768
      %v2770 = vpop.f32.mrf.mxu0
      %2771 = vmatprep.mubr.f32.mxu0 0.0
      %2772 = vmatmul.mubr.f32.gmra.mxu0 %v2591
      %v2773 = vpop.f32.mrf.mxu0
      %v2774 = vadd.f32 0.0, %v2773
      %v2775 = vpop.f32.mrf.mxu0
      %2776 = vmatprep.mubr.f32.mxu0 0.0
      %2777 = vmatmul.mubr.f32.gmra.mxu0 %v2594
      %v2778 = vpop.f32.mrf.mxu0
      %v2779 = vadd.f32 0.0, %v2778
      %v2780 = vpop.f32.mrf.mxu0
      %2781 = vmatprep.mubr.f32.mxu0 0.0
      %2782 = vmatmul.mubr.f32.gmra.mxu0 %v2597
      %v2783 = vpop.f32.mrf.mxu0
      %v2784 = vadd.f32 0.0, %v2783
      %v2785 = vpop.f32.mrf.mxu0
      %2786 = vmatprep.mubr.f32.mxu0 0.0
      %2787 = vmatmul.mubr.f32.gmra.mxu0 %v2600
      %v2788 = vpop.f32.mrf.mxu0
      %v2789 = vadd.f32 0.0, %v2788
      %v2790 = vpop.f32.mrf.mxu0
      %2791 = vmatprep.mubr.f32.mxu0 0.0
      %2792 = vmatmul.mubr.f32.gmra.mxu0 %v2603
      %v2793 = vpop.f32.mrf.mxu0
      %v2794 = vadd.f32 0.0, %v2793
      %v2795 = vpop.f32.mrf.mxu0
      %2796 = vmatprep.mubr.f32.mxu0 0.0
      %2797 = vmatmul.mubr.f32.gmra.mxu0 %v2606
      %v2798 = vpop.f32.mrf.mxu0
      %v2799 = vadd.f32 0.0, %v2798
      %v2800 = vpop.f32.mrf.mxu0
      %2801 = vmatprep.mubr.f32.mxu0 0.0
      %2802 = vmatmul.mubr.f32.gmra.mxu0 %v2609
      %v2803 = vpop.f32.mrf.mxu0
      %v2804 = vadd.f32 0.0, %v2803
      %v2805 = vpop.f32.mrf.mxu0
      %2806 = vmatprep.mubr.f32.mxu0 0.0
      %2807 = vmatmul.mubr.f32.gmra.mxu0 %v2612
      %v2808 = vpop.f32.mrf.mxu0
      %v2809 = vadd.f32 0.0, %v2808
      %v2810 = vpop.f32.mrf.mxu0
      %2811 = vmatprep.mubr.f32.mxu0 0.0
      %2812 = vmatmul.mubr.f32.gmra.mxu0 %v2615
      %v2813 = vpop.f32.mrf.mxu0
      %v2814 = vadd.f32 0.0, %v2813
      %v2815 = vpop.f32.mrf.mxu0
      %2816 = vmatprep.mubr.f32.mxu0 0.0
      %2817 = vmatmul.mubr.f32.gmra.mxu0 %v2618
      %v2818 = vpop.f32.mrf.mxu0
      %v2819 = vadd.f32 0.0, %v2818
      %v2820 = vpop.f32.mrf.mxu0
      %2821 = vmatprep.mubr.f32.mxu0 0.0
      %2822 = vmatmul.mubr.f32.gmra.mxu0 %v2621
      %v2823 = vpop.f32.mrf.mxu0
      %v2824 = vadd.f32 0.0, %v2823
      %v2825 = vpop.f32.mrf.mxu0
      %2826 = vmatprep.mubr.f32.mxu0 0.0
      %2827 = vmatmul.mubr.f32.gmra.mxu0 %v2624
      %v2828 = vpop.f32.mrf.mxu0
      %v2829 = vadd.f32 0.0, %v2828
      %v2830 = vpop.f32.mrf.mxu0
      %2831 = vmatprep.mubr.f32.mxu0 0.0
      %2832 = vmatmul.mubr.f32.gmra.mxu0 %v2627
      %v2833 = vpop.f32.mrf.mxu0
      %v2834 = vadd.f32 0.0, %v2833
      %v2835 = vpop.f32.mrf.mxu0
      %2836 = vmatprep.mubr.f32.mxu0 0.0
      %2837 = vmatmul.mubr.f32.gmra.mxu0 %v2630
      %v2838 = vpop.f32.mrf.mxu0
      %v2839 = vadd.f32 0.0, %v2838
      %v2840 = vpop.f32.mrf.mxu0
      %2841 = vmatprep.mubr.f32.mxu0 0.0
      %2842 = vmatmul.mubr.f32.gmra.mxu0 %v2633
      %v2843 = vpop.f32.mrf.mxu0
      %v2844 = vadd.f32 0.0, %v2843
      %v2845 = vpop.f32.mrf.mxu0
      %2846 = vmatprep.mubr.f32.mxu0 0.0
      %2847 = vmatmul.mubr.f32.gmra.mxu0 %v2636
      %v2848 = vpop.f32.mrf.mxu0
      %v2849 = vadd.f32 0.0, %v2848
      %v2850 = vpop.f32.mrf.mxu0
      %2851 = vmatprep.mubr.f32.mxu0 0.0
      %2852 = vmatmul.mubr.f32.gmra.mxu0 %v2639
      %v2853 = vpop.f32.mrf.mxu0
      %v2854 = vadd.f32 0.0, %v2853
      %v2855 = vpop.f32.mrf.mxu0
      %2856 = vmatprep.mubr.f32.mxu0 0.0
      %2857 = vmatmul.mubr.f32.gmra.mxu0 %v2642
      %v2858 = vpop.f32.mrf.mxu0
      %v2859 = vadd.f32 0.0, %v2858
      %v2860 = vpop.f32.mrf.mxu0
      %2861 = vmatprep.mubr.f32.mxu0 0.0
      %2862 = vmatmul.mubr.f32.gmra.mxu0 %v2645
      %v2863 = vpop.f32.mrf.mxu0
      %v2864 = vadd.f32 0.0, %v2863
      %v2865 = vpop.f32.mrf.mxu0
      %2866 = vmatprep.mubr.f32.mxu0 0.0
      %2867 = vmatmul.mubr.f32.gmra.mxu0 %v2648
      %v2868 = vpop.f32.mrf.mxu0
      %v2869 = vadd.f32 0.0, %v2868
      %v2870 = vpop.f32.mrf.mxu0
      %2871 = vmatprep.mubr.f32.mxu0 0.0
      %2872 = vmatmul.mubr.f32.gmra.mxu0 %v2651
      %v2873 = vpop.f32.mrf.mxu0
      %v2874 = vadd.f32 0.0, %v2873
      %v2875 = vpop.f32.mrf.mxu0
      %2876 = vmatprep.mubr.f32.mxu0 0.0
      %2877 = vmatmul.mubr.f32.gmra.mxu0 %v2654
      %v2878 = vpop.f32.mrf.mxu0
      %v2879 = vadd.f32 0.0, %v2878
      %v2880 = vpop.f32.mrf.mxu0
      %2881 = vmatprep.mubr.f32.mxu0 0.0
      %2882 = vmatmul.mubr.f32.gmra.mxu0 %v2657
      %v2883 = vpop.f32.mrf.mxu0
      %v2884 = vadd.f32 0.0, %v2883
      %v2885 = vpop.f32.mrf.mxu0
      %2886 = vdwg.mxu0
      %v2887 = vld [vmem:[#allocation3] sm:$0xff]
      %v2888 = vld [vmem:[#allocation3 + $0x8] sm:$0xff]
      %v2889 = vld [vmem:[#allocation3 + $0x10] sm:$0xff]
      %v2890 = vld [vmem:[#allocation3 + $0x18] sm:$0xff]
      %v2891 = vld [vmem:[#allocation3 + $0x20] sm:$0xff]
      %v2892 = vld [vmem:[#allocation3 + $0x28] sm:$0xff]
      %v2893 = vld [vmem:[#allocation3 + $0x30] sm:$0xff]
      %v2894 = vld [vmem:[#allocation3 + $0x38] sm:$0xff]
      %v2895 = vld [vmem:[#allocation3 + $0x40] sm:$0xff]
      %v2896 = vld [vmem:[#allocation3 + $0x48] sm:$0xff]
      %v2897 = vld [vmem:[#allocation3 + $0x50] sm:$0xff]
      %v2898 = vld [vmem:[#allocation3 + $0x58] sm:$0xff]
      %v2899 = vld [vmem:[#allocation3 + $0x60] sm:$0xff]
      %v2900 = vld [vmem:[#allocation3 + $0x68] sm:$0xff]
      %v2901 = vld [vmem:[#allocation3 + $0x70] sm:$0xff]
      %v2902 = vld [vmem:[#allocation3 + $0x78] sm:$0xff]
      %v2903 = vld [vmem:[#allocation3 + $0x80] sm:$0xff]
      %v2904 = vld [vmem:[#allocation3 + $0x88] sm:$0xff]
      %v2905 = vld [vmem:[#allocation3 + $0x90] sm:$0xff]
      %v2906 = vld [vmem:[#allocation3 + $0x98] sm:$0xff]
      %v2907 = vld [vmem:[#allocation3 + $0xa0] sm:$0xff]
      %v2908 = vld [vmem:[#allocation3 + $0xa8] sm:$0xff]
      %v2909 = vld [vmem:[#allocation3 + $0xb0] sm:$0xff]
      %v2910 = vld [vmem:[#allocation3 + $0xb8] sm:$0xff]
      %v2911 = vld [vmem:[#allocation3 + $0xc0] sm:$0xff]
      %v2912 = vld [vmem:[#allocation3 + $0xc8] sm:$0xff]
      %v2913 = vld [vmem:[#allocation3 + $0xd0] sm:$0xff]
      %v2914 = vld [vmem:[#allocation3 + $0xd8] sm:$0xff]
      %v2915 = vld [vmem:[#allocation3 + $0xe0] sm:$0xff]
      %v2916 = vld [vmem:[#allocation3 + $0xe8] sm:$0xff]
      %v2917 = vld [vmem:[#allocation3 + $0xf0] sm:$0xff]
      %v2918 = vld [vmem:[#allocation3 + $0xf8] sm:$0xff]
      %v2919 = vadd.f32 %v2887, %v2729
      %v2920 = vadd.f32 %v2888, %v2734
      %v2921 = vadd.f32 %v2889, %v2739
      %v2922 = vadd.f32 %v2890, %v2744
      %v2923 = vadd.f32 %v2891, %v2749
      %v2924 = vadd.f32 %v2892, %v2754
      %v2925 = vadd.f32 %v2893, %v2759
      %v2926 = vadd.f32 %v2894, %v2764
      %v2927 = vadd.f32 %v2895, %v2769
      %v2928 = vadd.f32 %v2896, %v2774
      %v2929 = vadd.f32 %v2897, %v2779
      %v2930 = vadd.f32 %v2898, %v2784
      %v2931 = vadd.f32 %v2899, %v2789
      %v2932 = vadd.f32 %v2900, %v2794
      %v2933 = vadd.f32 %v2901, %v2799
      %v2934 = vadd.f32 %v2902, %v2804
      %v2935 = vadd.f32 %v2903, %v2809
      %v2936 = vadd.f32 %v2904, %v2814
      %v2937 = vadd.f32 %v2905, %v2819
      %v2938 = vadd.f32 %v2906, %v2824
      %v2939 = vadd.f32 %v2907, %v2829
      %v2940 = vadd.f32 %v2908, %v2834
      %v2941 = vadd.f32 %v2909, %v2839
      %v2942 = vadd.f32 %v2910, %v2844
      %v2943 = vadd.f32 %v2911, %v2849
      %v2944 = vadd.f32 %v2912, %v2854
      %v2945 = vadd.f32 %v2913, %v2859
      %v2946 = vadd.f32 %v2914, %v2864
      %v2947 = vadd.f32 %v2915, %v2869
      %v2948 = vadd.f32 %v2916, %v2874
      %v2949 = vadd.f32 %v2917, %v2879
      %v2950 = vadd.f32 %v2918, %v2884
      %2951 = vst.msk [vmem:[#allocation3] sm:$0xff] %vm680, %v2919
      %2952 = vst.msk [vmem:[#allocation3 + $0x8] sm:$0xff] %vm680, %v2920
      %2953 = vst.msk [vmem:[#allocation3 + $0x10] sm:$0xff] %vm680, %v2921
      %2954 = vst.msk [vmem:[#allocation3 + $0x18] sm:$0xff] %vm680, %v2922
      %2955 = vst.msk [vmem:[#allocation3 + $0x20] sm:$0xff] %vm680, %v2923
      %2956 = vst.msk [vmem:[#allocation3 + $0x28] sm:$0xff] %vm680, %v2924
      %2957 = vst.msk [vmem:[#allocation3 + $0x30] sm:$0xff] %vm680, %v2925
      %2958 = vst.msk [vmem:[#allocation3 + $0x38] sm:$0xff] %vm680, %v2926
      %2959 = vst.msk [vmem:[#allocation3 + $0x40] sm:$0xff] %vm680, %v2927
      %2960 = vst.msk [vmem:[#allocation3 + $0x48] sm:$0xff] %vm680, %v2928
      %2961 = vst.msk [vmem:[#allocation3 + $0x50] sm:$0xff] %vm680, %v2929
      %2962 = vst.msk [vmem:[#allocation3 + $0x58] sm:$0xff] %vm680, %v2930
      %2963 = vst.msk [vmem:[#allocation3 + $0x60] sm:$0xff] %vm680, %v2931
      %2964 = vst.msk [vmem:[#allocation3 + $0x68] sm:$0xff] %vm680, %v2932
      %2965 = vst.msk [vmem:[#allocation3 + $0x70] sm:$0xff] %vm680, %v2933
      %2966 = vst.msk [vmem:[#allocation3 + $0x78] sm:$0xff] %vm680, %v2934
      %2967 = vst.msk [vmem:[#allocation3 + $0x80] sm:$0xff] %vm680, %v2935
      %2968 = vst.msk [vmem:[#allocation3 + $0x88] sm:$0xff] %vm680, %v2936
      %2969 = vst.msk [vmem:[#allocation3 + $0x90] sm:$0xff] %vm680, %v2937
      %2970 = vst.msk [vmem:[#allocation3 + $0x98] sm:$0xff] %vm680, %v2938
      %2971 = vst.msk [vmem:[#allocation3 + $0xa0] sm:$0xff] %vm680, %v2939
      %2972 = vst.msk [vmem:[#allocation3 + $0xa8] sm:$0xff] %vm680, %v2940
      %2973 = vst.msk [vmem:[#allocation3 + $0xb0] sm:$0xff] %vm680, %v2941
      %2974 = vst.msk [vmem:[#allocation3 + $0xb8] sm:$0xff] %vm680, %v2942
      %2975 = vst.msk [vmem:[#allocation3 + $0xc0] sm:$0xff] %vm680, %v2943
      %2976 = vst.msk [vmem:[#allocation3 + $0xc8] sm:$0xff] %vm680, %v2944
      %2977 = vst.msk [vmem:[#allocation3 + $0xd0] sm:$0xff] %vm680, %v2945
      %2978 = vst.msk [vmem:[#allocation3 + $0xd8] sm:$0xff] %vm680, %v2946
      %2979 = vst.msk [vmem:[#allocation3 + $0xe0] sm:$0xff] %vm680, %v2947
      %2980 = vst.msk [vmem:[#allocation3 + $0xe8] sm:$0xff] %vm680, %v2948
      %2981 = vst.msk [vmem:[#allocation3 + $0xf0] sm:$0xff] %vm680, %v2949
      %2982 = vst.msk [vmem:[#allocation3 + $0xf8] sm:$0xff] %vm680, %v2950
      %s2983 = scalar_lea.vmem [#allocation2], 48
      %v2984 = vld [vmem:[%s2983] sm:$0xff]
      %v2985 = vld [vmem:[%s2983 + $0x8] sm:$0xff]
      %v2986 = vld [vmem:[%s2983 + $0x18] sm:$0xff]
      %v2987 = vld [vmem:[%s2983 + $0x20] sm:$0xff]
      %v2988 = vld [vmem:[%s2983 + $0x30] sm:$0xff]
      %v2989 = vld [vmem:[%s2983 + $0x38] sm:$0xff]
      %v2990 = vld [vmem:[%s2983 + $0x48] sm:$0xff]
      %v2991 = vld [vmem:[%s2983 + $0x50] sm:$0xff]
      %v2992 = vld [vmem:[%s2983 + $0x60] sm:$0xff]
      %v2993 = vld [vmem:[%s2983 + $0x68] sm:$0xff]
      %v2994 = vld [vmem:[%s2983 + $0x78] sm:$0xff]
      %v2995 = vld [vmem:[%s2983 + $0x80] sm:$0xff]
      %v2996 = vld [vmem:[%s2983 + $0x90] sm:$0xff]
      %v2997 = vld [vmem:[%s2983 + $0x98] sm:$0xff]
      %v2998 = vld [vmem:[%s2983 + $0xa8] sm:$0xff]
      %v2999 = vld [vmem:[%s2983 + $0xb0] sm:$0xff]
      %v3000 = vld [vmem:[%s2983 + $0xc0] sm:$0xff]
      %v3001 = vld [vmem:[%s2983 + $0xc8] sm:$0xff]
      %v3002 = vld [vmem:[%s2983 + $0xd8] sm:$0xff]
      %v3003 = vld [vmem:[%s2983 + $0xe0] sm:$0xff]
      %v3004 = vld [vmem:[%s2983 + $0xf0] sm:$0xff]
      %v3005 = vld [vmem:[%s2983 + $0xf8] sm:$0xff]
      %v3006 = vld [vmem:[%s2983 + $0x108] sm:$0xff]
      %v3007 = vld [vmem:[%s2983 + $0x110] sm:$0xff]
      %v3008 = vld [vmem:[%s2983 + $0x120] sm:$0xff]
      %v3009 = vld [vmem:[%s2983 + $0x128] sm:$0xff]
      %v3010 = vld [vmem:[%s2983 + $0x138] sm:$0xff]
      %v3011 = vld [vmem:[%s2983 + $0x140] sm:$0xff]
      %v3012 = vld [vmem:[%s2983 + $0x150] sm:$0xff]
      %v3013 = vld [vmem:[%s2983 + $0x158] sm:$0xff]
      %v3014 = vld [vmem:[%s2983 + $0x168] sm:$0xff]
      %v3015 = vld [vmem:[%s2983 + $0x170] sm:$0xff]
      %s3016 = scalar_lea.vmem %s1, 24
      %v3017 = vld [vmem:[%s3016] sm:$0xf]
      %v3019 = vsel %vm215, %v2984, 0
      %v3022 = vsel %vm215, %v2985, 0
      %v3025 = vsel %vm215, %v2986, 0
      %v3028 = vsel %vm215, %v2987, 0
      %v3031 = vsel %vm215, %v2988, 0
      %v3034 = vsel %vm215, %v2989, 0
      %v3037 = vsel %vm215, %v2990, 0
      %v3040 = vsel %vm215, %v2991, 0
      %v3043 = vsel %vm215, %v2992, 0
      %v3046 = vsel %vm215, %v2993, 0
      %v3049 = vsel %vm215, %v2994, 0
      %v3052 = vsel %vm215, %v2995, 0
      %v3055 = vsel %vm215, %v2996, 0
      %v3058 = vsel %vm215, %v2997, 0
      %v3061 = vsel %vm215, %v2998, 0
      %v3064 = vsel %vm215, %v2999, 0
      %v3067 = vsel %vm215, %v3000, 0
      %v3070 = vsel %vm215, %v3001, 0
      %v3073 = vsel %vm215, %v3002, 0
      %v3076 = vsel %vm215, %v3003, 0
      %v3079 = vsel %vm215, %v3004, 0
      %v3082 = vsel %vm215, %v3005, 0
      %v3085 = vsel %vm215, %v3006, 0
      %v3088 = vsel %vm215, %v3007, 0
      %v3091 = vsel %vm215, %v3008, 0
      %v3094 = vsel %vm215, %v3009, 0
      %v3097 = vsel %vm215, %v3010, 0
      %v3100 = vsel %vm215, %v3011, 0
      %v3103 = vsel %vm215, %v3012, 0
      %v3106 = vsel %vm215, %v3013, 0
      %v3109 = vsel %vm215, %v3014, 0
      %v3112 = vsel %vm215, %v3015, 0
      %v3115 = vsel %vm451, %v3017, 0
      %3117 = vmatprep.subr.mxu0 0.0
      %3118 = vmatpush1.msra.mxu0 0.0
      %3119 = vmatprep.subr.mxu0 0.0
      %3120 = vmatpush1.msra.mxu0 0.0
      %3121 = vmatprep.subr.mxu0 0.0
      %3122 = vmatpush1.msra.mxu0 0.0
      %3123 = vmatprep.subr.mxu0 0.0
      %3124 = vmatpush1.msra.mxu0 0.0
      %3125 = vmatprep.subr.mxu0 0.0
      %3126 = vmatpush1.msra.mxu0 0.0
      %3127 = vmatprep.subr.mxu0 0.0
      %3128 = vmatpush1.msra.mxu0 0.0
      %3129 = vmatprep.subr.mxu0 0.0
      %3130 = vmatpush1.msra.mxu0 0.0
      %3131 = vmatprep.subr.mxu0 0.0
      %3132 = vmatpush1.msra.mxu0 0.0
      %3133 = vmatprep.subr.mxu0 0.0
      %3134 = vmatpush1.msra.mxu0 0.0
      %3135 = vmatprep.subr.mxu0 0.0
      %3136 = vmatpush1.msra.mxu0 0.0
      %3137 = vmatprep.subr.mxu0 0.0
      %3138 = vmatpush1.msra.mxu0 0.0
      %3139 = vmatprep.subr.mxu0 0.0
      %3140 = vmatpush1.msra.mxu0 0.0
      %3141 = vmatprep.subr.mxu0 0.0
      %3142 = vmatpush1.msra.mxu0 0.0
      %3143 = vmatprep.subr.mxu0 0.0
      %3144 = vmatpush1.msra.mxu0 0.0
      %3145 = vmatprep.subr.mxu0 0.0
      %3146 = vmatpush1.msra.mxu0 0.0
      %3147 = vmatprep.subr.mxu0 0.0
      %3148 = vmatpush1.msra.mxu0 %v3115
      %3149 = vmatprep.subr.mxu0 0.0
      %3150 = vmatpush2.msra.mxu0 0.0
      %3151 = vmatprep.subr.mxu0 0.0
      %3152 = vmatpush2.msra.mxu0 0.0
      %3153 = vmatprep.subr.mxu0 0.0
      %3154 = vmatpush2.msra.mxu0 0.0
      %3155 = vmatprep.subr.mxu0 0.0
      %3156 = vmatpush2.msra.mxu0 0.0
      %3157 = vmatprep.subr.mxu0 0.0
      %3158 = vmatpush2.msra.mxu0 0.0
      %3159 = vmatprep.subr.mxu0 0.0
      %3160 = vmatpush2.msra.mxu0 0.0
      %3161 = vmatprep.subr.mxu0 0.0
      %3162 = vmatpush2.msra.mxu0 0.0
      %3163 = vmatprep.subr.mxu0 0.0
      %3164 = vmatpush2.msra.mxu0 0.0
      %3165 = vmatprep.subr.mxu0 0.0
      %3166 = vmatpush2.msra.mxu0 0.0
      %3167 = vmatprep.subr.mxu0 0.0
      %3168 = vmatpush2.msra.mxu0 0.0
      %3169 = vmatprep.subr.mxu0 0.0
      %3170 = vmatpush2.msra.mxu0 0.0
      %3171 = vmatprep.subr.mxu0 0.0
      %3172 = vmatpush2.msra.mxu0 0.0
      %3173 = vmatprep.subr.mxu0 0.0
      %3174 = vmatpush2.msra.mxu0 0.0
      %3175 = vmatprep.subr.mxu0 0.0
      %3176 = vmatpush2.msra.mxu0 0.0
      %3177 = vmatprep.subr.mxu0 0.0
      %3178 = vmatpush2.msra.mxu0 0.0
      %3179 = vmatprep.subr.mxu0 0.0
      %3180 = vmatpush2.msra.mxu0 0.0
      %3181 = vmatprep.mubr.f32.mxu0 0.0
      %3182 = vmatmul.mubr.f32.gmra.mxu0 %v3019
      %v3183 = vpop.f32.mrf.mxu0
      %v3184 = vadd.f32 0.0, %v3183
      %v3185 = vpop.f32.mrf.mxu0
      %3186 = vmatprep.mubr.f32.mxu0 0.0
      %3187 = vmatmul.mubr.f32.gmra.mxu0 %v3022
      %v3188 = vpop.f32.mrf.mxu0
      %v3189 = vadd.f32 0.0, %v3188
      %v3190 = vpop.f32.mrf.mxu0
      %3191 = vmatprep.mubr.f32.mxu0 0.0
      %3192 = vmatmul.mubr.f32.gmra.mxu0 %v3025
      %v3193 = vpop.f32.mrf.mxu0
      %v3194 = vadd.f32 0.0, %v3193
      %v3195 = vpop.f32.mrf.mxu0
      %3196 = vmatprep.mubr.f32.mxu0 0.0
      %3197 = vmatmul.mubr.f32.gmra.mxu0 %v3028
      %v3198 = vpop.f32.mrf.mxu0
      %v3199 = vadd.f32 0.0, %v3198
      %v3200 = vpop.f32.mrf.mxu0
      %3201 = vmatprep.mubr.f32.mxu0 0.0
      %3202 = vmatmul.mubr.f32.gmra.mxu0 %v3031
      %v3203 = vpop.f32.mrf.mxu0
      %v3204 = vadd.f32 0.0, %v3203
      %v3205 = vpop.f32.mrf.mxu0
      %3206 = vmatprep.mubr.f32.mxu0 0.0
      %3207 = vmatmul.mubr.f32.gmra.mxu0 %v3034
      %v3208 = vpop.f32.mrf.mxu0
      %v3209 = vadd.f32 0.0, %v3208
      %v3210 = vpop.f32.mrf.mxu0
      %3211 = vmatprep.mubr.f32.mxu0 0.0
      %3212 = vmatmul.mubr.f32.gmra.mxu0 %v3037
      %v3213 = vpop.f32.mrf.mxu0
      %v3214 = vadd.f32 0.0, %v3213
      %v3215 = vpop.f32.mrf.mxu0
      %3216 = vmatprep.mubr.f32.mxu0 0.0
      %3217 = vmatmul.mubr.f32.gmra.mxu0 %v3040
      %v3218 = vpop.f32.mrf.mxu0
      %v3219 = vadd.f32 0.0, %v3218
      %v3220 = vpop.f32.mrf.mxu0
      %3221 = vmatprep.mubr.f32.mxu0 0.0
      %3222 = vmatmul.mubr.f32.gmra.mxu0 %v3043
      %v3223 = vpop.f32.mrf.mxu0
      %v3224 = vadd.f32 0.0, %v3223
      %v3225 = vpop.f32.mrf.mxu0
      %3226 = vmatprep.mubr.f32.mxu0 0.0
      %3227 = vmatmul.mubr.f32.gmra.mxu0 %v3046
      %v3228 = vpop.f32.mrf.mxu0
      %v3229 = vadd.f32 0.0, %v3228
      %v3230 = vpop.f32.mrf.mxu0
      %3231 = vmatprep.mubr.f32.mxu0 0.0
      %3232 = vmatmul.mubr.f32.gmra.mxu0 %v3049
      %v3233 = vpop.f32.mrf.mxu0
      %v3234 = vadd.f32 0.0, %v3233
      %v3235 = vpop.f32.mrf.mxu0
      %3236 = vmatprep.mubr.f32.mxu0 0.0
      %3237 = vmatmul.mubr.f32.gmra.mxu0 %v3052
      %v3238 = vpop.f32.mrf.mxu0
      %v3239 = vadd.f32 0.0, %v3238
      %v3240 = vpop.f32.mrf.mxu0
      %3241 = vmatprep.mubr.f32.mxu0 0.0
      %3242 = vmatmul.mubr.f32.gmra.mxu0 %v3055
      %v3243 = vpop.f32.mrf.mxu0
      %v3244 = vadd.f32 0.0, %v3243
      %v3245 = vpop.f32.mrf.mxu0
      %3246 = vmatprep.mubr.f32.mxu0 0.0
      %3247 = vmatmul.mubr.f32.gmra.mxu0 %v3058
      %v3248 = vpop.f32.mrf.mxu0
      %v3249 = vadd.f32 0.0, %v3248
      %v3250 = vpop.f32.mrf.mxu0
      %3251 = vmatprep.mubr.f32.mxu0 0.0
      %3252 = vmatmul.mubr.f32.gmra.mxu0 %v3061
      %v3253 = vpop.f32.mrf.mxu0
      %v3254 = vadd.f32 0.0, %v3253
      %v3255 = vpop.f32.mrf.mxu0
      %3256 = vmatprep.mubr.f32.mxu0 0.0
      %3257 = vmatmul.mubr.f32.gmra.mxu0 %v3064
      %v3258 = vpop.f32.mrf.mxu0
      %v3259 = vadd.f32 0.0, %v3258
      %v3260 = vpop.f32.mrf.mxu0
      %3261 = vmatprep.mubr.f32.mxu0 0.0
      %3262 = vmatmul.mubr.f32.gmra.mxu0 %v3067
      %v3263 = vpop.f32.mrf.mxu0
      %v3264 = vadd.f32 0.0, %v3263
      %v3265 = vpop.f32.mrf.mxu0
      %3266 = vmatprep.mubr.f32.mxu0 0.0
      %3267 = vmatmul.mubr.f32.gmra.mxu0 %v3070
      %v3268 = vpop.f32.mrf.mxu0
      %v3269 = vadd.f32 0.0, %v3268
      %v3270 = vpop.f32.mrf.mxu0
      %3271 = vmatprep.mubr.f32.mxu0 0.0
      %3272 = vmatmul.mubr.f32.gmra.mxu0 %v3073
      %v3273 = vpop.f32.mrf.mxu0
      %v3274 = vadd.f32 0.0, %v3273
      %v3275 = vpop.f32.mrf.mxu0
      %3276 = vmatprep.mubr.f32.mxu0 0.0
      %3277 = vmatmul.mubr.f32.gmra.mxu0 %v3076
      %v3278 = vpop.f32.mrf.mxu0
      %v3279 = vadd.f32 0.0, %v3278
      %v3280 = vpop.f32.mrf.mxu0
      %3281 = vmatprep.mubr.f32.mxu0 0.0
      %3282 = vmatmul.mubr.f32.gmra.mxu0 %v3079
      %v3283 = vpop.f32.mrf.mxu0
      %v3284 = vadd.f32 0.0, %v3283
      %v3285 = vpop.f32.mrf.mxu0
      %3286 = vmatprep.mubr.f32.mxu0 0.0
      %3287 = vmatmul.mubr.f32.gmra.mxu0 %v3082
      %v3288 = vpop.f32.mrf.mxu0
      %v3289 = vadd.f32 0.0, %v3288
      %v3290 = vpop.f32.mrf.mxu0
      %3291 = vmatprep.mubr.f32.mxu0 0.0
      %3292 = vmatmul.mubr.f32.gmra.mxu0 %v3085
      %v3293 = vpop.f32.mrf.mxu0
      %v3294 = vadd.f32 0.0, %v3293
      %v3295 = vpop.f32.mrf.mxu0
      %3296 = vmatprep.mubr.f32.mxu0 0.0
      %3297 = vmatmul.mubr.f32.gmra.mxu0 %v3088
      %v3298 = vpop.f32.mrf.mxu0
      %v3299 = vadd.f32 0.0, %v3298
      %v3300 = vpop.f32.mrf.mxu0
      %3301 = vmatprep.mubr.f32.mxu0 0.0
      %3302 = vmatmul.mubr.f32.gmra.mxu0 %v3091
      %v3303 = vpop.f32.mrf.mxu0
      %v3304 = vadd.f32 0.0, %v3303
      %v3305 = vpop.f32.mrf.mxu0
      %3306 = vmatprep.mubr.f32.mxu0 0.0
      %3307 = vmatmul.mubr.f32.gmra.mxu0 %v3094
      %v3308 = vpop.f32.mrf.mxu0
      %v3309 = vadd.f32 0.0, %v3308
      %v3310 = vpop.f32.mrf.mxu0
      %3311 = vmatprep.mubr.f32.mxu0 0.0
      %3312 = vmatmul.mubr.f32.gmra.mxu0 %v3097
      %v3313 = vpop.f32.mrf.mxu0
      %v3314 = vadd.f32 0.0, %v3313
      %v3315 = vpop.f32.mrf.mxu0
      %3316 = vmatprep.mubr.f32.mxu0 0.0
      %3317 = vmatmul.mubr.f32.gmra.mxu0 %v3100
      %v3318 = vpop.f32.mrf.mxu0
      %v3319 = vadd.f32 0.0, %v3318
      %v3320 = vpop.f32.mrf.mxu0
      %3321 = vmatprep.mubr.f32.mxu0 0.0
      %3322 = vmatmul.mubr.f32.gmra.mxu0 %v3103
      %v3323 = vpop.f32.mrf.mxu0
      %v3324 = vadd.f32 0.0, %v3323
      %v3325 = vpop.f32.mrf.mxu0
      %3326 = vmatprep.mubr.f32.mxu0 0.0
      %3327 = vmatmul.mubr.f32.gmra.mxu0 %v3106
      %v3328 = vpop.f32.mrf.mxu0
      %v3329 = vadd.f32 0.0, %v3328
      %v3330 = vpop.f32.mrf.mxu0
      %3331 = vmatprep.mubr.f32.mxu0 0.0
      %3332 = vmatmul.mubr.f32.gmra.mxu0 %v3109
      %v3333 = vpop.f32.mrf.mxu0
      %v3334 = vadd.f32 0.0, %v3333
      %v3335 = vpop.f32.mrf.mxu0
      %3336 = vmatprep.mubr.f32.mxu0 0.0
      %3337 = vmatmul.mubr.f32.gmra.mxu0 %v3112
      %v3338 = vpop.f32.mrf.mxu0
      %v3339 = vadd.f32 0.0, %v3338
      %v3340 = vpop.f32.mrf.mxu0
      %3341 = vdwg.mxu0
      %v3342 = vld [vmem:[#allocation3] sm:$0xff]
      %v3343 = vld [vmem:[#allocation3 + $0x8] sm:$0xff]
      %v3344 = vld [vmem:[#allocation3 + $0x10] sm:$0xff]
      %v3345 = vld [vmem:[#allocation3 + $0x18] sm:$0xff]
      %v3346 = vld [vmem:[#allocation3 + $0x20] sm:$0xff]
      %v3347 = vld [vmem:[#allocation3 + $0x28] sm:$0xff]
      %v3348 = vld [vmem:[#allocation3 + $0x30] sm:$0xff]
      %v3349 = vld [vmem:[#allocation3 + $0x38] sm:$0xff]
      %v3350 = vld [vmem:[#allocation3 + $0x40] sm:$0xff]
      %v3351 = vld [vmem:[#allocation3 + $0x48] sm:$0xff]
      %v3352 = vld [vmem:[#allocation3 + $0x50] sm:$0xff]
      %v3353 = vld [vmem:[#allocation3 + $0x58] sm:$0xff]
      %v3354 = vld [vmem:[#allocation3 + $0x60] sm:$0xff]
      %v3355 = vld [vmem:[#allocation3 + $0x68] sm:$0xff]
      %v3356 = vld [vmem:[#allocation3 + $0x70] sm:$0xff]
      %v3357 = vld [vmem:[#allocation3 + $0x78] sm:$0xff]
      %v3358 = vld [vmem:[#allocation3 + $0x80] sm:$0xff]
      %v3359 = vld [vmem:[#allocation3 + $0x88] sm:$0xff]
      %v3360 = vld [vmem:[#allocation3 + $0x90] sm:$0xff]
      %v3361 = vld [vmem:[#allocation3 + $0x98] sm:$0xff]
      %v3362 = vld [vmem:[#allocation3 + $0xa0] sm:$0xff]
      %v3363 = vld [vmem:[#allocation3 + $0xa8] sm:$0xff]
      %v3364 = vld [vmem:[#allocation3 + $0xb0] sm:$0xff]
      %v3365 = vld [vmem:[#allocation3 + $0xb8] sm:$0xff]
      %v3366 = vld [vmem:[#allocation3 + $0xc0] sm:$0xff]
      %v3367 = vld [vmem:[#allocation3 + $0xc8] sm:$0xff]
      %v3368 = vld [vmem:[#allocation3 + $0xd0] sm:$0xff]
      %v3369 = vld [vmem:[#allocation3 + $0xd8] sm:$0xff]
      %v3370 = vld [vmem:[#allocation3 + $0xe0] sm:$0xff]
      %v3371 = vld [vmem:[#allocation3 + $0xe8] sm:$0xff]
      %v3372 = vld [vmem:[#allocation3 + $0xf0] sm:$0xff]
      %v3373 = vld [vmem:[#allocation3 + $0xf8] sm:$0xff]
      %v3374 = vadd.f32 %v3342, %v3184
      %v3375 = vadd.f32 %v3343, %v3189
      %v3376 = vadd.f32 %v3344, %v3194
      %v3377 = vadd.f32 %v3345, %v3199
      %v3378 = vadd.f32 %v3346, %v3204
      %v3379 = vadd.f32 %v3347, %v3209
      %v3380 = vadd.f32 %v3348, %v3214
      %v3381 = vadd.f32 %v3349, %v3219
      %v3382 = vadd.f32 %v3350, %v3224
      %v3383 = vadd.f32 %v3351, %v3229
      %v3384 = vadd.f32 %v3352, %v3234
      %v3385 = vadd.f32 %v3353, %v3239
      %v3386 = vadd.f32 %v3354, %v3244
      %v3387 = vadd.f32 %v3355, %v3249
      %v3388 = vadd.f32 %v3356, %v3254
      %v3389 = vadd.f32 %v3357, %v3259
      %v3390 = vadd.f32 %v3358, %v3264
      %v3391 = vadd.f32 %v3359, %v3269
      %v3392 = vadd.f32 %v3360, %v3274
      %v3393 = vadd.f32 %v3361, %v3279
      %v3394 = vadd.f32 %v3362, %v3284
      %v3395 = vadd.f32 %v3363, %v3289
      %v3396 = vadd.f32 %v3364, %v3294
      %v3397 = vadd.f32 %v3365, %v3299
      %v3398 = vadd.f32 %v3366, %v3304
      %v3399 = vadd.f32 %v3367, %v3309
      %v3400 = vadd.f32 %v3368, %v3314
      %v3401 = vadd.f32 %v3369, %v3319
      %v3402 = vadd.f32 %v3370, %v3324
      %v3403 = vadd.f32 %v3371, %v3329
      %v3404 = vadd.f32 %v3372, %v3334
      %v3405 = vadd.f32 %v3373, %v3339
      %3406 = vst.msk [vmem:[#allocation3] sm:$0xff] %vm680, %v3374
      %3407 = vst.msk [vmem:[#allocation3 + $0x8] sm:$0xff] %vm680, %v3375
      %3408 = vst.msk [vmem:[#allocation3 + $0x10] sm:$0xff] %vm680, %v3376
      %3409 = vst.msk [vmem:[#allocation3 + $0x18] sm:$0xff] %vm680, %v3377
      %3410 = vst.msk [vmem:[#allocation3 + $0x20] sm:$0xff] %vm680, %v3378
      %3411 = vst.msk [vmem:[#allocation3 + $0x28] sm:$0xff] %vm680, %v3379
      %3412 = vst.msk [vmem:[#allocation3 + $0x30] sm:$0xff] %vm680, %v3380
      %3413 = vst.msk [vmem:[#allocation3 + $0x38] sm:$0xff] %vm680, %v3381
      %3414 = vst.msk [vmem:[#allocation3 + $0x40] sm:$0xff] %vm680, %v3382
      %3415 = vst.msk [vmem:[#allocation3 + $0x48] sm:$0xff] %vm680, %v3383
      %3416 = vst.msk [vmem:[#allocation3 + $0x50] sm:$0xff] %vm680, %v3384
      %3417 = vst.msk [vmem:[#allocation3 + $0x58] sm:$0xff] %vm680, %v3385
      %3418 = vst.msk [vmem:[#allocation3 + $0x60] sm:$0xff] %vm680, %v3386
      %3419 = vst.msk [vmem:[#allocation3 + $0x68] sm:$0xff] %vm680, %v3387
      %3420 = vst.msk [vmem:[#allocation3 + $0x70] sm:$0xff] %vm680, %v3388
      %3421 = vst.msk [vmem:[#allocation3 + $0x78] sm:$0xff] %vm680, %v3389
      %3422 = vst.msk [vmem:[#allocation3 + $0x80] sm:$0xff] %vm680, %v3390
      %3423 = vst.msk [vmem:[#allocation3 + $0x88] sm:$0xff] %vm680, %v3391
      %3424 = vst.msk [vmem:[#allocation3 + $0x90] sm:$0xff] %vm680, %v3392
      %3425 = vst.msk [vmem:[#allocation3 + $0x98] sm:$0xff] %vm680, %v3393
      %3426 = vst.msk [vmem:[#allocation3 + $0xa0] sm:$0xff] %vm680, %v3394
      %3427 = vst.msk [vmem:[#allocation3 + $0xa8] sm:$0xff] %vm680, %v3395
      %3428 = vst.msk [vmem:[#allocation3 + $0xb0] sm:$0xff] %vm680, %v3396
      %3429 = vst.msk [vmem:[#allocation3 + $0xb8] sm:$0xff] %vm680, %v3397
      %3430 = vst.msk [vmem:[#allocation3 + $0xc0] sm:$0xff] %vm680, %v3398
      %3431 = vst.msk [vmem:[#allocation3 + $0xc8] sm:$0xff] %vm680, %v3399
      %3432 = vst.msk [vmem:[#allocation3 + $0xd0] sm:$0xff] %vm680, %v3400
      %3433 = vst.msk [vmem:[#allocation3 + $0xd8] sm:$0xff] %vm680, %v3401
      %3434 = vst.msk [vmem:[#allocation3 + $0xe0] sm:$0xff] %vm680, %v3402
      %3435 = vst.msk [vmem:[#allocation3 + $0xe8] sm:$0xff] %vm680, %v3403
      %3436 = vst.msk [vmem:[#allocation3 + $0xf0] sm:$0xff] %vm680, %v3404
      %3437 = vst.msk [vmem:[#allocation3 + $0xf8] sm:$0xff] %vm680, %v3405
      %v3438 = vld [vmem:[%s2983 + $0x1] sm:$0xff]
      %v3439 = vld [vmem:[%s2983 + $0x9] sm:$0xff]
      %v3440 = vld [vmem:[%s2983 + $0x19] sm:$0xff]
      %v3441 = vld [vmem:[%s2983 + $0x21] sm:$0xff]
      %v3442 = vld [vmem:[%s2983 + $0x31] sm:$0xff]
      %v3443 = vld [vmem:[%s2983 + $0x39] sm:$0xff]
      %v3444 = vld [vmem:[%s2983 + $0x49] sm:$0xff]
      %v3445 = vld [vmem:[%s2983 + $0x51] sm:$0xff]
      %v3446 = vld [vmem:[%s2983 + $0x61] sm:$0xff]
      %v3447 = vld [vmem:[%s2983 + $0x69] sm:$0xff]
      %v3448 = vld [vmem:[%s2983 + $0x79] sm:$0xff]
      %v3449 = vld [vmem:[%s2983 + $0x81] sm:$0xff]
      %v3450 = vld [vmem:[%s2983 + $0x91] sm:$0xff]
      %v3451 = vld [vmem:[%s2983 + $0x99] sm:$0xff]
      %v3452 = vld [vmem:[%s2983 + $0xa9] sm:$0xff]
      %v3453 = vld [vmem:[%s2983 + $0xb1] sm:$0xff]
      %v3454 = vld [vmem:[%s2983 + $0xc1] sm:$0xff]
      %v3455 = vld [vmem:[%s2983 + $0xc9] sm:$0xff]
      %v3456 = vld [vmem:[%s2983 + $0xd9] sm:$0xff]
      %v3457 = vld [vmem:[%s2983 + $0xe1] sm:$0xff]
      %v3458 = vld [vmem:[%s2983 + $0xf1] sm:$0xff]
      %v3459 = vld [vmem:[%s2983 + $0xf9] sm:$0xff]
      %v3460 = vld [vmem:[%s2983 + $0x109] sm:$0xff]
      %v3461 = vld [vmem:[%s2983 + $0x111] sm:$0xff]
      %v3462 = vld [vmem:[%s2983 + $0x121] sm:$0xff]
      %v3463 = vld [vmem:[%s2983 + $0x129] sm:$0xff]
      %v3464 = vld [vmem:[%s2983 + $0x139] sm:$0xff]
      %v3465 = vld [vmem:[%s2983 + $0x141] sm:$0xff]
      %v3466 = vld [vmem:[%s2983 + $0x151] sm:$0xff]
      %v3467 = vld [vmem:[%s2983 + $0x159] sm:$0xff]
      %v3468 = vld [vmem:[%s2983 + $0x169] sm:$0xff]
      %v3469 = vld [vmem:[%s2983 + $0x171] sm:$0xff]
      %s3470 = scalar_lea.vmem %s1, 28
      %v3471 = vld [vmem:[%s3470] sm:$0xf]
      %v3473 = vsel %vm215, %v3438, 0
      %v3476 = vsel %vm215, %v3439, 0
      %v3479 = vsel %vm215, %v3440, 0
      %v3482 = vsel %vm215, %v3441, 0
      %v3485 = vsel %vm215, %v3442, 0
      %v3488 = vsel %vm215, %v3443, 0
      %v3491 = vsel %vm215, %v3444, 0
      %v3494 = vsel %vm215, %v3445, 0
      %v3497 = vsel %vm215, %v3446, 0
      %v3500 = vsel %vm215, %v3447, 0
      %v3503 = vsel %vm215, %v3448, 0
      %v3506 = vsel %vm215, %v3449, 0
      %v3509 = vsel %vm215, %v3450, 0
      %v3512 = vsel %vm215, %v3451, 0
      %v3515 = vsel %vm215, %v3452, 0
      %v3518 = vsel %vm215, %v3453, 0
      %v3521 = vsel %vm215, %v3454, 0
      %v3524 = vsel %vm215, %v3455, 0
      %v3527 = vsel %vm215, %v3456, 0
      %v3530 = vsel %vm215, %v3457, 0
      %v3533 = vsel %vm215, %v3458, 0
      %v3536 = vsel %vm215, %v3459, 0
      %v3539 = vsel %vm215, %v3460, 0
      %v3542 = vsel %vm215, %v3461, 0
      %v3545 = vsel %vm215, %v3462, 0
      %v3548 = vsel %vm215, %v3463, 0
      %v3551 = vsel %vm215, %v3464, 0
      %v3554 = vsel %vm215, %v3465, 0
      %v3557 = vsel %vm215, %v3466, 0
      %v3560 = vsel %vm215, %v3467, 0
      %v3563 = vsel %vm215, %v3468, 0
      %v3566 = vsel %vm215, %v3469, 0
      %v3569 = vsel %vm451, %v3471, 0
      %3571 = vmatprep.subr.mxu0 0.0
      %3572 = vmatpush1.msra.mxu0 0.0
      %3573 = vmatprep.subr.mxu0 0.0
      %3574 = vmatpush1.msra.mxu0 0.0
      %3575 = vmatprep.subr.mxu0 0.0
      %3576 = vmatpush1.msra.mxu0 0.0
      %3577 = vmatprep.subr.mxu0 0.0
      %3578 = vmatpush1.msra.mxu0 0.0
      %3579 = vmatprep.subr.mxu0 0.0
      %3580 = vmatpush1.msra.mxu0 0.0
      %3581 = vmatprep.subr.mxu0 0.0
      %3582 = vmatpush1.msra.mxu0 0.0
      %3583 = vmatprep.subr.mxu0 0.0
      %3584 = vmatpush1.msra.mxu0 0.0
      %3585 = vmatprep.subr.mxu0 0.0
      %3586 = vmatpush1.msra.mxu0 0.0
      %3587 = vmatprep.subr.mxu0 0.0
      %3588 = vmatpush1.msra.mxu0 0.0
      %3589 = vmatprep.subr.mxu0 0.0
      %3590 = vmatpush1.msra.mxu0 0.0
      %3591 = vmatprep.subr.mxu0 0.0
      %3592 = vmatpush1.msra.mxu0 0.0
      %3593 = vmatprep.subr.mxu0 0.0
      %3594 = vmatpush1.msra.mxu0 0.0
      %3595 = vmatprep.subr.mxu0 0.0
      %3596 = vmatpush1.msra.mxu0 0.0
      %3597 = vmatprep.subr.mxu0 0.0
      %3598 = vmatpush1.msra.mxu0 0.0
      %3599 = vmatprep.subr.mxu0 0.0
      %3600 = vmatpush1.msra.mxu0 0.0
      %3601 = vmatprep.subr.mxu0 0.0
      %3602 = vmatpush1.msra.mxu0 %v3569
      %3603 = vmatprep.subr.mxu0 0.0
      %3604 = vmatpush2.msra.mxu0 0.0
      %3605 = vmatprep.subr.mxu0 0.0
      %3606 = vmatpush2.msra.mxu0 0.0
      %3607 = vmatprep.subr.mxu0 0.0
      %3608 = vmatpush2.msra.mxu0 0.0
      %3609 = vmatprep.subr.mxu0 0.0
      %3610 = vmatpush2.msra.mxu0 0.0
      %3611 = vmatprep.subr.mxu0 0.0
      %3612 = vmatpush2.msra.mxu0 0.0
      %3613 = vmatprep.subr.mxu0 0.0
      %3614 = vmatpush2.msra.mxu0 0.0
      %3615 = vmatprep.subr.mxu0 0.0
      %3616 = vmatpush2.msra.mxu0 0.0
      %3617 = vmatprep.subr.mxu0 0.0
      %3618 = vmatpush2.msra.mxu0 0.0
      %3619 = vmatprep.subr.mxu0 0.0
      %3620 = vmatpush2.msra.mxu0 0.0
      %3621 = vmatprep.subr.mxu0 0.0
      %3622 = vmatpush2.msra.mxu0 0.0
      %3623 = vmatprep.subr.mxu0 0.0
      %3624 = vmatpush2.msra.mxu0 0.0
      %3625 = vmatprep.subr.mxu0 0.0
      %3626 = vmatpush2.msra.mxu0 0.0
      %3627 = vmatprep.subr.mxu0 0.0
      %3628 = vmatpush2.msra.mxu0 0.0
      %3629 = vmatprep.subr.mxu0 0.0
      %3630 = vmatpush2.msra.mxu0 0.0
      %3631 = vmatprep.subr.mxu0 0.0
      %3632 = vmatpush2.msra.mxu0 0.0
      %3633 = vmatprep.subr.mxu0 0.0
      %3634 = vmatpush2.msra.mxu0 0.0
      %3635 = vmatprep.mubr.f32.mxu0 0.0
      %3636 = vmatmul.mubr.f32.gmra.mxu0 %v3473
      %v3637 = vpop.f32.mrf.mxu0
      %v3638 = vadd.f32 0.0, %v3637
      %v3639 = vpop.f32.mrf.mxu0
      %3640 = vmatprep.mubr.f32.mxu0 0.0
      %3641 = vmatmul.mubr.f32.gmra.mxu0 %v3476
      %v3642 = vpop.f32.mrf.mxu0
      %v3643 = vadd.f32 0.0, %v3642
      %v3644 = vpop.f32.mrf.mxu0
      %3645 = vmatprep.mubr.f32.mxu0 0.0
      %3646 = vmatmul.mubr.f32.gmra.mxu0 %v3479
      %v3647 = vpop.f32.mrf.mxu0
      %v3648 = vadd.f32 0.0, %v3647
      %v3649 = vpop.f32.mrf.mxu0
      %3650 = vmatprep.mubr.f32.mxu0 0.0
      %3651 = vmatmul.mubr.f32.gmra.mxu0 %v3482
      %v3652 = vpop.f32.mrf.mxu0
      %v3653 = vadd.f32 0.0, %v3652
      %v3654 = vpop.f32.mrf.mxu0
      %3655 = vmatprep.mubr.f32.mxu0 0.0
      %3656 = vmatmul.mubr.f32.gmra.mxu0 %v3485
      %v3657 = vpop.f32.mrf.mxu0
      %v3658 = vadd.f32 0.0, %v3657
      %v3659 = vpop.f32.mrf.mxu0
      %3660 = vmatprep.mubr.f32.mxu0 0.0
      %3661 = vmatmul.mubr.f32.gmra.mxu0 %v3488
      %v3662 = vpop.f32.mrf.mxu0
      %v3663 = vadd.f32 0.0, %v3662
      %v3664 = vpop.f32.mrf.mxu0
      %3665 = vmatprep.mubr.f32.mxu0 0.0
      %3666 = vmatmul.mubr.f32.gmra.mxu0 %v3491
      %v3667 = vpop.f32.mrf.mxu0
      %v3668 = vadd.f32 0.0, %v3667
      %v3669 = vpop.f32.mrf.mxu0
      %3670 = vmatprep.mubr.f32.mxu0 0.0
      %3671 = vmatmul.mubr.f32.gmra.mxu0 %v3494
      %v3672 = vpop.f32.mrf.mxu0
      %v3673 = vadd.f32 0.0, %v3672
      %v3674 = vpop.f32.mrf.mxu0
      %3675 = vmatprep.mubr.f32.mxu0 0.0
      %3676 = vmatmul.mubr.f32.gmra.mxu0 %v3497
      %v3677 = vpop.f32.mrf.mxu0
      %v3678 = vadd.f32 0.0, %v3677
      %v3679 = vpop.f32.mrf.mxu0
      %3680 = vmatprep.mubr.f32.mxu0 0.0
      %3681 = vmatmul.mubr.f32.gmra.mxu0 %v3500
      %v3682 = vpop.f32.mrf.mxu0
      %v3683 = vadd.f32 0.0, %v3682
      %v3684 = vpop.f32.mrf.mxu0
      %3685 = vmatprep.mubr.f32.mxu0 0.0
      %3686 = vmatmul.mubr.f32.gmra.mxu0 %v3503
      %v3687 = vpop.f32.mrf.mxu0
      %v3688 = vadd.f32 0.0, %v3687
      %v3689 = vpop.f32.mrf.mxu0
      %3690 = vmatprep.mubr.f32.mxu0 0.0
      %3691 = vmatmul.mubr.f32.gmra.mxu0 %v3506
      %v3692 = vpop.f32.mrf.mxu0
      %v3693 = vadd.f32 0.0, %v3692
      %v3694 = vpop.f32.mrf.mxu0
      %3695 = vmatprep.mubr.f32.mxu0 0.0
      %3696 = vmatmul.mubr.f32.gmra.mxu0 %v3509
      %v3697 = vpop.f32.mrf.mxu0
      %v3698 = vadd.f32 0.0, %v3697
      %v3699 = vpop.f32.mrf.mxu0
      %3700 = vmatprep.mubr.f32.mxu0 0.0
      %3701 = vmatmul.mubr.f32.gmra.mxu0 %v3512
      %v3702 = vpop.f32.mrf.mxu0
      %v3703 = vadd.f32 0.0, %v3702
      %v3704 = vpop.f32.mrf.mxu0
      %3705 = vmatprep.mubr.f32.mxu0 0.0
      %3706 = vmatmul.mubr.f32.gmra.mxu0 %v3515
      %v3707 = vpop.f32.mrf.mxu0
      %v3708 = vadd.f32 0.0, %v3707
      %v3709 = vpop.f32.mrf.mxu0
      %3710 = vmatprep.mubr.f32.mxu0 0.0
      %3711 = vmatmul.mubr.f32.gmra.mxu0 %v3518
      %v3712 = vpop.f32.mrf.mxu0
      %v3713 = vadd.f32 0.0, %v3712
      %v3714 = vpop.f32.mrf.mxu0
      %3715 = vmatprep.mubr.f32.mxu0 0.0
      %3716 = vmatmul.mubr.f32.gmra.mxu0 %v3521
      %v3717 = vpop.f32.mrf.mxu0
      %v3718 = vadd.f32 0.0, %v3717
      %v3719 = vpop.f32.mrf.mxu0
      %3720 = vmatprep.mubr.f32.mxu0 0.0
      %3721 = vmatmul.mubr.f32.gmra.mxu0 %v3524
      %v3722 = vpop.f32.mrf.mxu0
      %v3723 = vadd.f32 0.0, %v3722
      %v3724 = vpop.f32.mrf.mxu0
      %3725 = vmatprep.mubr.f32.mxu0 0.0
      %3726 = vmatmul.mubr.f32.gmra.mxu0 %v3527
      %v3727 = vpop.f32.mrf.mxu0
      %v3728 = vadd.f32 0.0, %v3727
      %v3729 = vpop.f32.mrf.mxu0
      %3730 = vmatprep.mubr.f32.mxu0 0.0
      %3731 = vmatmul.mubr.f32.gmra.mxu0 %v3530
      %v3732 = vpop.f32.mrf.mxu0
      %v3733 = vadd.f32 0.0, %v3732
      %v3734 = vpop.f32.mrf.mxu0
      %3735 = vmatprep.mubr.f32.mxu0 0.0
      %3736 = vmatmul.mubr.f32.gmra.mxu0 %v3533
      %v3737 = vpop.f32.mrf.mxu0
      %v3738 = vadd.f32 0.0, %v3737
      %v3739 = vpop.f32.mrf.mxu0
      %3740 = vmatprep.mubr.f32.mxu0 0.0
      %3741 = vmatmul.mubr.f32.gmra.mxu0 %v3536
      %v3742 = vpop.f32.mrf.mxu0
      %v3743 = vadd.f32 0.0, %v3742
      %v3744 = vpop.f32.mrf.mxu0
      %3745 = vmatprep.mubr.f32.mxu0 0.0
      %3746 = vmatmul.mubr.f32.gmra.mxu0 %v3539
      %v3747 = vpop.f32.mrf.mxu0
      %v3748 = vadd.f32 0.0, %v3747
      %v3749 = vpop.f32.mrf.mxu0
      %3750 = vmatprep.mubr.f32.mxu0 0.0
      %3751 = vmatmul.mubr.f32.gmra.mxu0 %v3542
      %v3752 = vpop.f32.mrf.mxu0
      %v3753 = vadd.f32 0.0, %v3752
      %v3754 = vpop.f32.mrf.mxu0
      %3755 = vmatprep.mubr.f32.mxu0 0.0
      %3756 = vmatmul.mubr.f32.gmra.mxu0 %v3545
      %v3757 = vpop.f32.mrf.mxu0
      %v3758 = vadd.f32 0.0, %v3757
      %v3759 = vpop.f32.mrf.mxu0
      %3760 = vmatprep.mubr.f32.mxu0 0.0
      %3761 = vmatmul.mubr.f32.gmra.mxu0 %v3548
      %v3762 = vpop.f32.mrf.mxu0
      %v3763 = vadd.f32 0.0, %v3762
      %v3764 = vpop.f32.mrf.mxu0
      %3765 = vmatprep.mubr.f32.mxu0 0.0
      %3766 = vmatmul.mubr.f32.gmra.mxu0 %v3551
      %v3767 = vpop.f32.mrf.mxu0
      %v3768 = vadd.f32 0.0, %v3767
      %v3769 = vpop.f32.mrf.mxu0
      %3770 = vmatprep.mubr.f32.mxu0 0.0
      %3771 = vmatmul.mubr.f32.gmra.mxu0 %v3554
      %v3772 = vpop.f32.mrf.mxu0
      %v3773 = vadd.f32 0.0, %v3772
      %v3774 = vpop.f32.mrf.mxu0
      %3775 = vmatprep.mubr.f32.mxu0 0.0
      %3776 = vmatmul.mubr.f32.gmra.mxu0 %v3557
      %v3777 = vpop.f32.mrf.mxu0
      %v3778 = vadd.f32 0.0, %v3777
      %v3779 = vpop.f32.mrf.mxu0
      %3780 = vmatprep.mubr.f32.mxu0 0.0
      %3781 = vmatmul.mubr.f32.gmra.mxu0 %v3560
      %v3782 = vpop.f32.mrf.mxu0
      %v3783 = vadd.f32 0.0, %v3782
      %v3784 = vpop.f32.mrf.mxu0
      %3785 = vmatprep.mubr.f32.mxu0 0.0
      %3786 = vmatmul.mubr.f32.gmra.mxu0 %v3563
      %v3787 = vpop.f32.mrf.mxu0
      %v3788 = vadd.f32 0.0, %v3787
      %v3789 = vpop.f32.mrf.mxu0
      %3790 = vmatprep.mubr.f32.mxu0 0.0
      %3791 = vmatmul.mubr.f32.gmra.mxu0 %v3566
      %v3792 = vpop.f32.mrf.mxu0
      %v3793 = vadd.f32 0.0, %v3792
      %v3794 = vpop.f32.mrf.mxu0
      %3795 = vdwg.mxu0
      %v3796 = vld [vmem:[#allocation3] sm:$0xff]
      %v3797 = vld [vmem:[#allocation3 + $0x8] sm:$0xff]
      %v3798 = vld [vmem:[#allocation3 + $0x10] sm:$0xff]
      %v3799 = vld [vmem:[#allocation3 + $0x18] sm:$0xff]
      %v3800 = vld [vmem:[#allocation3 + $0x20] sm:$0xff]
      %v3801 = vld [vmem:[#allocation3 + $0x28] sm:$0xff]
      %v3802 = vld [vmem:[#allocation3 + $0x30] sm:$0xff]
      %v3803 = vld [vmem:[#allocation3 + $0x38] sm:$0xff]
      %v3804 = vld [vmem:[#allocation3 + $0x40] sm:$0xff]
      %v3805 = vld [vmem:[#allocation3 + $0x48] sm:$0xff]
      %v3806 = vld [vmem:[#allocation3 + $0x50] sm:$0xff]
      %v3807 = vld [vmem:[#allocation3 + $0x58] sm:$0xff]
      %v3808 = vld [vmem:[#allocation3 + $0x60] sm:$0xff]
      %v3809 = vld [vmem:[#allocation3 + $0x68] sm:$0xff]
      %v3810 = vld [vmem:[#allocation3 + $0x70] sm:$0xff]
      %v3811 = vld [vmem:[#allocation3 + $0x78] sm:$0xff]
      %v3812 = vld [vmem:[#allocation3 + $0x80] sm:$0xff]
      %v3813 = vld [vmem:[#allocation3 + $0x88] sm:$0xff]
      %v3814 = vld [vmem:[#allocation3 + $0x90] sm:$0xff]
      %v3815 = vld [vmem:[#allocation3 + $0x98] sm:$0xff]
      %v3816 = vld [vmem:[#allocation3 + $0xa0] sm:$0xff]
      %v3817 = vld [vmem:[#allocation3 + $0xa8] sm:$0xff]
      %v3818 = vld [vmem:[#allocation3 + $0xb0] sm:$0xff]
      %v3819 = vld [vmem:[#allocation3 + $0xb8] sm:$0xff]
      %v3820 = vld [vmem:[#allocation3 + $0xc0] sm:$0xff]
      %v3821 = vld [vmem:[#allocation3 + $0xc8] sm:$0xff]
      %v3822 = vld [vmem:[#allocation3 + $0xd0] sm:$0xff]
      %v3823 = vld [vmem:[#allocation3 + $0xd8] sm:$0xff]
      %v3824 = vld [vmem:[#allocation3 + $0xe0] sm:$0xff]
      %v3825 = vld [vmem:[#allocation3 + $0xe8] sm:$0xff]
      %v3826 = vld [vmem:[#allocation3 + $0xf0] sm:$0xff]
      %v3827 = vld [vmem:[#allocation3 + $0xf8] sm:$0xff]
      %v3828 = vadd.f32 %v3796, %v3638
      %v3829 = vadd.f32 %v3797, %v3643
      %v3830 = vadd.f32 %v3798, %v3648
      %v3831 = vadd.f32 %v3799, %v3653
      %v3832 = vadd.f32 %v3800, %v3658
      %v3833 = vadd.f32 %v3801, %v3663
      %v3834 = vadd.f32 %v3802, %v3668
      %v3835 = vadd.f32 %v3803, %v3673
      %v3836 = vadd.f32 %v3804, %v3678
      %v3837 = vadd.f32 %v3805, %v3683
      %v3838 = vadd.f32 %v3806, %v3688
      %v3839 = vadd.f32 %v3807, %v3693
      %v3840 = vadd.f32 %v3808, %v3698
      %v3841 = vadd.f32 %v3809, %v3703
      %v3842 = vadd.f32 %v3810, %v3708
      %v3843 = vadd.f32 %v3811, %v3713
      %v3844 = vadd.f32 %v3812, %v3718
      %v3845 = vadd.f32 %v3813, %v3723
      %v3846 = vadd.f32 %v3814, %v3728
      %v3847 = vadd.f32 %v3815, %v3733
      %v3848 = vadd.f32 %v3816, %v3738
      %v3849 = vadd.f32 %v3817, %v3743
      %v3850 = vadd.f32 %v3818, %v3748
      %v3851 = vadd.f32 %v3819, %v3753
      %v3852 = vadd.f32 %v3820, %v3758
      %v3853 = vadd.f32 %v3821, %v3763
      %v3854 = vadd.f32 %v3822, %v3768
      %v3855 = vadd.f32 %v3823, %v3773
      %v3856 = vadd.f32 %v3824, %v3778
      %v3857 = vadd.f32 %v3825, %v3783
      %v3858 = vadd.f32 %v3826, %v3788
      %v3859 = vadd.f32 %v3827, %v3793
      %3860 = vst.msk [vmem:[#allocation3] sm:$0xff] %vm680, %v3828
      %3861 = vst.msk [vmem:[#allocation3 + $0x8] sm:$0xff] %vm680, %v3829
      %3862 = vst.msk [vmem:[#allocation3 + $0x10] sm:$0xff] %vm680, %v3830
      %3863 = vst.msk [vmem:[#allocation3 + $0x18] sm:$0xff] %vm680, %v3831
      %3864 = vst.msk [vmem:[#allocation3 + $0x20] sm:$0xff] %vm680, %v3832
      %3865 = vst.msk [vmem:[#allocation3 + $0x28] sm:$0xff] %vm680, %v3833
      %3866 = vst.msk [vmem:[#allocation3 + $0x30] sm:$0xff] %vm680, %v3834
      %3867 = vst.msk [vmem:[#allocation3 + $0x38] sm:$0xff] %vm680, %v3835
      %3868 = vst.msk [vmem:[#allocation3 + $0x40] sm:$0xff] %vm680, %v3836
      %3869 = vst.msk [vmem:[#allocation3 + $0x48] sm:$0xff] %vm680, %v3837
      %3870 = vst.msk [vmem:[#allocation3 + $0x50] sm:$0xff] %vm680, %v3838
      %3871 = vst.msk [vmem:[#allocation3 + $0x58] sm:$0xff] %vm680, %v3839
      %3872 = vst.msk [vmem:[#allocation3 + $0x60] sm:$0xff] %vm680, %v3840
      %3873 = vst.msk [vmem:[#allocation3 + $0x68] sm:$0xff] %vm680, %v3841
      %3874 = vst.msk [vmem:[#allocation3 + $0x70] sm:$0xff] %vm680, %v3842
      %3875 = vst.msk [vmem:[#allocation3 + $0x78] sm:$0xff] %vm680, %v3843
      %3876 = vst.msk [vmem:[#allocation3 + $0x80] sm:$0xff] %vm680, %v3844
      %3877 = vst.msk [vmem:[#allocation3 + $0x88] sm:$0xff] %vm680, %v3845
      %3878 = vst.msk [vmem:[#allocation3 + $0x90] sm:$0xff] %vm680, %v3846
      %3879 = vst.msk [vmem:[#allocation3 + $0x98] sm:$0xff] %vm680, %v3847
      %3880 = vst.msk [vmem:[#allocation3 + $0xa0] sm:$0xff] %vm680, %v3848
      %3881 = vst.msk [vmem:[#allocation3 + $0xa8] sm:$0xff] %vm680, %v3849
      %3882 = vst.msk [vmem:[#allocation3 + $0xb0] sm:$0xff] %vm680, %v3850
      %3883 = vst.msk [vmem:[#allocation3 + $0xb8] sm:$0xff] %vm680, %v3851
      %3884 = vst.msk [vmem:[#allocation3 + $0xc0] sm:$0xff] %vm680, %v3852
      %3885 = vst.msk [vmem:[#allocation3 + $0xc8] sm:$0xff] %vm680, %v3853
      %3886 = vst.msk [vmem:[#allocation3 + $0xd0] sm:$0xff] %vm680, %v3854
      %3887 = vst.msk [vmem:[#allocation3 + $0xd8] sm:$0xff] %vm680, %v3855
      %3888 = vst.msk [vmem:[#allocation3 + $0xe0] sm:$0xff] %vm680, %v3856
      %3889 = vst.msk [vmem:[#allocation3 + $0xe8] sm:$0xff] %vm680, %v3857
      %3890 = vst.msk [vmem:[#allocation3 + $0xf0] sm:$0xff] %vm680, %v3858
      %3891 = vst.msk [vmem:[#allocation3 + $0xf8] sm:$0xff] %vm680, %v3859
      %v3892 = vld [vmem:[%s2983 + $0x2] sm:$0xff]
      %v3893 = vld [vmem:[%s2983 + $0xa] sm:$0xff]
      %v3894 = vld [vmem:[%s2983 + $0x1a] sm:$0xff]
      %v3895 = vld [vmem:[%s2983 + $0x22] sm:$0xff]
      %v3896 = vld [vmem:[%s2983 + $0x32] sm:$0xff]
      %v3897 = vld [vmem:[%s2983 + $0x3a] sm:$0xff]
      %v3898 = vld [vmem:[%s2983 + $0x4a] sm:$0xff]
      %v3899 = vld [vmem:[%s2983 + $0x52] sm:$0xff]
      %v3900 = vld [vmem:[%s2983 + $0x62] sm:$0xff]
      %v3901 = vld [vmem:[%s2983 + $0x6a] sm:$0xff]
      %v3902 = vld [vmem:[%s2983 + $0x7a] sm:$0xff]
      %v3903 = vld [vmem:[%s2983 + $0x82] sm:$0xff]
      %v3904 = vld [vmem:[%s2983 + $0x92] sm:$0xff]
      %v3905 = vld [vmem:[%s2983 + $0x9a] sm:$0xff]
      %v3906 = vld [vmem:[%s2983 + $0xaa] sm:$0xff]
      %v3907 = vld [vmem:[%s2983 + $0xb2] sm:$0xff]
      %v3908 = vld [vmem:[%s2983 + $0xc2] sm:$0xff]
      %v3909 = vld [vmem:[%s2983 + $0xca] sm:$0xff]
      %v3910 = vld [vmem:[%s2983 + $0xda] sm:$0xff]
      %v3911 = vld [vmem:[%s2983 + $0xe2] sm:$0xff]
      %v3912 = vld [vmem:[%s2983 + $0xf2] sm:$0xff]
      %v3913 = vld [vmem:[%s2983 + $0xfa] sm:$0xff]
      %v3914 = vld [vmem:[%s2983 + $0x10a] sm:$0xff]
      %v3915 = vld [vmem:[%s2983 + $0x112] sm:$0xff]
      %v3916 = vld [vmem:[%s2983 + $0x122] sm:$0xff]
      %v3917 = vld [vmem:[%s2983 + $0x12a] sm:$0xff]
      %v3918 = vld [vmem:[%s2983 + $0x13a] sm:$0xff]
      %v3919 = vld [vmem:[%s2983 + $0x142] sm:$0xff]
      %v3920 = vld [vmem:[%s2983 + $0x152] sm:$0xff]
      %v3921 = vld [vmem:[%s2983 + $0x15a] sm:$0xff]
      %v3922 = vld [vmem:[%s2983 + $0x16a] sm:$0xff]
      %v3923 = vld [vmem:[%s2983 + $0x172] sm:$0xff]
      %s3924 = scalar_lea.vmem %s1, 32
      %v3925 = vld [vmem:[%s3924] sm:$0xf]
      %v3927 = vsel %vm215, %v3892, 0
      %v3930 = vsel %vm215, %v3893, 0
      %v3933 = vsel %vm215, %v3894, 0
      %v3936 = vsel %vm215, %v3895, 0
      %v3939 = vsel %vm215, %v3896, 0
      %v3942 = vsel %vm215, %v3897, 0
      %v3945 = vsel %vm215, %v3898, 0
      %v3948 = vsel %vm215, %v3899, 0
      %v3951 = vsel %vm215, %v3900, 0
      %v3954 = vsel %vm215, %v3901, 0
      %v3957 = vsel %vm215, %v3902, 0
      %v3960 = vsel %vm215, %v3903, 0
      %v3963 = vsel %vm215, %v3904, 0
      %v3966 = vsel %vm215, %v3905, 0
      %v3969 = vsel %vm215, %v3906, 0
      %v3972 = vsel %vm215, %v3907, 0
      %v3975 = vsel %vm215, %v3908, 0
      %v3978 = vsel %vm215, %v3909, 0
      %v3981 = vsel %vm215, %v3910, 0
      %v3984 = vsel %vm215, %v3911, 0
      %v3987 = vsel %vm215, %v3912, 0
      %v3990 = vsel %vm215, %v3913, 0
      %v3993 = vsel %vm215, %v3914, 0
      %v3996 = vsel %vm215, %v3915, 0
      %v3999 = vsel %vm215, %v3916, 0
      %v4002 = vsel %vm215, %v3917, 0
      %v4005 = vsel %vm215, %v3918, 0
      %v4008 = vsel %vm215, %v3919, 0
      %v4011 = vsel %vm215, %v3920, 0
      %v4014 = vsel %vm215, %v3921, 0
      %v4017 = vsel %vm215, %v3922, 0
      %v4020 = vsel %vm215, %v3923, 0
      %v4023 = vsel %vm451, %v3925, 0
      %4025 = vmatprep.subr.mxu0 0.0
      %4026 = vmatpush1.msra.mxu0 0.0
      %4027 = vmatprep.subr.mxu0 0.0
      %4028 = vmatpush1.msra.mxu0 0.0
      %4029 = vmatprep.subr.mxu0 0.0
      %4030 = vmatpush1.msra.mxu0 0.0
      %4031 = vmatprep.subr.mxu0 0.0
      %4032 = vmatpush1.msra.mxu0 0.0
      %4033 = vmatprep.subr.mxu0 0.0
      %4034 = vmatpush1.msra.mxu0 0.0
      %4035 = vmatprep.subr.mxu0 0.0
      %4036 = vmatpush1.msra.mxu0 0.0
      %4037 = vmatprep.subr.mxu0 0.0
      %4038 = vmatpush1.msra.mxu0 0.0
      %4039 = vmatprep.subr.mxu0 0.0
      %4040 = vmatpush1.msra.mxu0 0.0
      %4041 = vmatprep.subr.mxu0 0.0
      %4042 = vmatpush1.msra.mxu0 0.0
      %4043 = vmatprep.subr.mxu0 0.0
      %4044 = vmatpush1.msra.mxu0 0.0
      %4045 = vmatprep.subr.mxu0 0.0
      %4046 = vmatpush1.msra.mxu0 0.0
      %4047 = vmatprep.subr.mxu0 0.0
      %4048 = vmatpush1.msra.mxu0 0.0
      %4049 = vmatprep.subr.mxu0 0.0
      %4050 = vmatpush1.msra.mxu0 0.0
      %4051 = vmatprep.subr.mxu0 0.0
      %4052 = vmatpush1.msra.mxu0 0.0
      %4053 = vmatprep.subr.mxu0 0.0
      %4054 = vmatpush1.msra.mxu0 0.0
      %4055 = vmatprep.subr.mxu0 0.0
      %4056 = vmatpush1.msra.mxu0 %v4023
      %4057 = vmatprep.subr.mxu0 0.0
      %4058 = vmatpush2.msra.mxu0 0.0
      %4059 = vmatprep.subr.mxu0 0.0
      %4060 = vmatpush2.msra.mxu0 0.0
      %4061 = vmatprep.subr.mxu0 0.0
      %4062 = vmatpush2.msra.mxu0 0.0
      %4063 = vmatprep.subr.mxu0 0.0
      %4064 = vmatpush2.msra.mxu0 0.0
      %4065 = vmatprep.subr.mxu0 0.0
      %4066 = vmatpush2.msra.mxu0 0.0
      %4067 = vmatprep.subr.mxu0 0.0
      %4068 = vmatpush2.msra.mxu0 0.0
      %4069 = vmatprep.subr.mxu0 0.0
      %4070 = vmatpush2.msra.mxu0 0.0
      %4071 = vmatprep.subr.mxu0 0.0
      %4072 = vmatpush2.msra.mxu0 0.0
      %4073 = vmatprep.subr.mxu0 0.0
      %4074 = vmatpush2.msra.mxu0 0.0
      %4075 = vmatprep.subr.mxu0 0.0
      %4076 = vmatpush2.msra.mxu0 0.0
      %4077 = vmatprep.subr.mxu0 0.0
      %4078 = vmatpush2.msra.mxu0 0.0
      %4079 = vmatprep.subr.mxu0 0.0
      %4080 = vmatpush2.msra.mxu0 0.0
      %4081 = vmatprep.subr.mxu0 0.0
      %4082 = vmatpush2.msra.mxu0 0.0
      %4083 = vmatprep.subr.mxu0 0.0
      %4084 = vmatpush2.msra.mxu0 0.0
      %4085 = vmatprep.subr.mxu0 0.0
      %4086 = vmatpush2.msra.mxu0 0.0
      %4087 = vmatprep.subr.mxu0 0.0
      %4088 = vmatpush2.msra.mxu0 0.0
      %4089 = vmatprep.mubr.f32.mxu0 0.0
      %4090 = vmatmul.mubr.f32.gmra.mxu0 %v3927
      %v4091 = vpop.f32.mrf.mxu0
      %v4092 = vadd.f32 0.0, %v4091
      %v4093 = vpop.f32.mrf.mxu0
      %4094 = vmatprep.mubr.f32.mxu0 0.0
      %4095 = vmatmul.mubr.f32.gmra.mxu0 %v3930
      %v4096 = vpop.f32.mrf.mxu0
      %v4097 = vadd.f32 0.0, %v4096
      %v4098 = vpop.f32.mrf.mxu0
      %4099 = vmatprep.mubr.f32.mxu0 0.0
      %4100 = vmatmul.mubr.f32.gmra.mxu0 %v3933
      %v4101 = vpop.f32.mrf.mxu0
      %v4102 = vadd.f32 0.0, %v4101
      %v4103 = vpop.f32.mrf.mxu0
      %4104 = vmatprep.mubr.f32.mxu0 0.0
      %4105 = vmatmul.mubr.f32.gmra.mxu0 %v3936
      %v4106 = vpop.f32.mrf.mxu0
      %v4107 = vadd.f32 0.0, %v4106
      %v4108 = vpop.f32.mrf.mxu0
      %4109 = vmatprep.mubr.f32.mxu0 0.0
      %4110 = vmatmul.mubr.f32.gmra.mxu0 %v3939
      %v4111 = vpop.f32.mrf.mxu0
      %v4112 = vadd.f32 0.0, %v4111
      %v4113 = vpop.f32.mrf.mxu0
      %4114 = vmatprep.mubr.f32.mxu0 0.0
      %4115 = vmatmul.mubr.f32.gmra.mxu0 %v3942
      %v4116 = vpop.f32.mrf.mxu0
      %v4117 = vadd.f32 0.0, %v4116
      %v4118 = vpop.f32.mrf.mxu0
      %4119 = vmatprep.mubr.f32.mxu0 0.0
      %4120 = vmatmul.mubr.f32.gmra.mxu0 %v3945
      %v4121 = vpop.f32.mrf.mxu0
      %v4122 = vadd.f32 0.0, %v4121
      %v4123 = vpop.f32.mrf.mxu0
      %4124 = vmatprep.mubr.f32.mxu0 0.0
      %4125 = vmatmul.mubr.f32.gmra.mxu0 %v3948
      %v4126 = vpop.f32.mrf.mxu0
      %v4127 = vadd.f32 0.0, %v4126
      %v4128 = vpop.f32.mrf.mxu0
      %4129 = vmatprep.mubr.f32.mxu0 0.0
      %4130 = vmatmul.mubr.f32.gmra.mxu0 %v3951
      %v4131 = vpop.f32.mrf.mxu0
      %v4132 = vadd.f32 0.0, %v4131
      %v4133 = vpop.f32.mrf.mxu0
      %4134 = vmatprep.mubr.f32.mxu0 0.0
      %4135 = vmatmul.mubr.f32.gmra.mxu0 %v3954
      %v4136 = vpop.f32.mrf.mxu0
      %v4137 = vadd.f32 0.0, %v4136
      %v4138 = vpop.f32.mrf.mxu0
      %4139 = vmatprep.mubr.f32.mxu0 0.0
      %4140 = vmatmul.mubr.f32.gmra.mxu0 %v3957
      %v4141 = vpop.f32.mrf.mxu0
      %v4142 = vadd.f32 0.0, %v4141
      %v4143 = vpop.f32.mrf.mxu0
      %4144 = vmatprep.mubr.f32.mxu0 0.0
      %4145 = vmatmul.mubr.f32.gmra.mxu0 %v3960
      %v4146 = vpop.f32.mrf.mxu0
      %v4147 = vadd.f32 0.0, %v4146
      %v4148 = vpop.f32.mrf.mxu0
      %4149 = vmatprep.mubr.f32.mxu0 0.0
      %4150 = vmatmul.mubr.f32.gmra.mxu0 %v3963
      %v4151 = vpop.f32.mrf.mxu0
      %v4152 = vadd.f32 0.0, %v4151
      %v4153 = vpop.f32.mrf.mxu0
      %4154 = vmatprep.mubr.f32.mxu0 0.0
      %4155 = vmatmul.mubr.f32.gmra.mxu0 %v3966
      %v4156 = vpop.f32.mrf.mxu0
      %v4157 = vadd.f32 0.0, %v4156
      %v4158 = vpop.f32.mrf.mxu0
      %4159 = vmatprep.mubr.f32.mxu0 0.0
      %4160 = vmatmul.mubr.f32.gmra.mxu0 %v3969
      %v4161 = vpop.f32.mrf.mxu0
      %v4162 = vadd.f32 0.0, %v4161
      %v4163 = vpop.f32.mrf.mxu0
      %4164 = vmatprep.mubr.f32.mxu0 0.0
      %4165 = vmatmul.mubr.f32.gmra.mxu0 %v3972
      %v4166 = vpop.f32.mrf.mxu0
      %v4167 = vadd.f32 0.0, %v4166
      %v4168 = vpop.f32.mrf.mxu0
      %4169 = vmatprep.mubr.f32.mxu0 0.0
      %4170 = vmatmul.mubr.f32.gmra.mxu0 %v3975
      %v4171 = vpop.f32.mrf.mxu0
      %v4172 = vadd.f32 0.0, %v4171
      %v4173 = vpop.f32.mrf.mxu0
      %4174 = vmatprep.mubr.f32.mxu0 0.0
      %4175 = vmatmul.mubr.f32.gmra.mxu0 %v3978
      %v4176 = vpop.f32.mrf.mxu0
      %v4177 = vadd.f32 0.0, %v4176
      %v4178 = vpop.f32.mrf.mxu0
      %4179 = vmatprep.mubr.f32.mxu0 0.0
      %4180 = vmatmul.mubr.f32.gmra.mxu0 %v3981
      %v4181 = vpop.f32.mrf.mxu0
      %v4182 = vadd.f32 0.0, %v4181
      %v4183 = vpop.f32.mrf.mxu0
      %4184 = vmatprep.mubr.f32.mxu0 0.0
      %4185 = vmatmul.mubr.f32.gmra.mxu0 %v3984
      %v4186 = vpop.f32.mrf.mxu0
      %v4187 = vadd.f32 0.0, %v4186
      %v4188 = vpop.f32.mrf.mxu0
      %4189 = vmatprep.mubr.f32.mxu0 0.0
      %4190 = vmatmul.mubr.f32.gmra.mxu0 %v3987
      %v4191 = vpop.f32.mrf.mxu0
      %v4192 = vadd.f32 0.0, %v4191
      %v4193 = vpop.f32.mrf.mxu0
      %4194 = vmatprep.mubr.f32.mxu0 0.0
      %4195 = vmatmul.mubr.f32.gmra.mxu0 %v3990
      %v4196 = vpop.f32.mrf.mxu0
      %v4197 = vadd.f32 0.0, %v4196
      %v4198 = vpop.f32.mrf.mxu0
      %4199 = vmatprep.mubr.f32.mxu0 0.0
      %4200 = vmatmul.mubr.f32.gmra.mxu0 %v3993
      %v4201 = vpop.f32.mrf.mxu0
      %v4202 = vadd.f32 0.0, %v4201
      %v4203 = vpop.f32.mrf.mxu0
      %4204 = vmatprep.mubr.f32.mxu0 0.0
      %4205 = vmatmul.mubr.f32.gmra.mxu0 %v3996
      %v4206 = vpop.f32.mrf.mxu0
      %v4207 = vadd.f32 0.0, %v4206
      %v4208 = vpop.f32.mrf.mxu0
      %4209 = vmatprep.mubr.f32.mxu0 0.0
      %4210 = vmatmul.mubr.f32.gmra.mxu0 %v3999
      %v4211 = vpop.f32.mrf.mxu0
      %v4212 = vadd.f32 0.0, %v4211
      %v4213 = vpop.f32.mrf.mxu0
      %4214 = vmatprep.mubr.f32.mxu0 0.0
      %4215 = vmatmul.mubr.f32.gmra.mxu0 %v4002
      %v4216 = vpop.f32.mrf.mxu0
      %v4217 = vadd.f32 0.0, %v4216
      %v4218 = vpop.f32.mrf.mxu0
      %4219 = vmatprep.mubr.f32.mxu0 0.0
      %4220 = vmatmul.mubr.f32.gmra.mxu0 %v4005
      %v4221 = vpop.f32.mrf.mxu0
      %v4222 = vadd.f32 0.0, %v4221
      %v4223 = vpop.f32.mrf.mxu0
      %4224 = vmatprep.mubr.f32.mxu0 0.0
      %4225 = vmatmul.mubr.f32.gmra.mxu0 %v4008
      %v4226 = vpop.f32.mrf.mxu0
      %v4227 = vadd.f32 0.0, %v4226
      %v4228 = vpop.f32.mrf.mxu0
      %4229 = vmatprep.mubr.f32.mxu0 0.0
      %4230 = vmatmul.mubr.f32.gmra.mxu0 %v4011
      %v4231 = vpop.f32.mrf.mxu0
      %v4232 = vadd.f32 0.0, %v4231
      %v4233 = vpop.f32.mrf.mxu0
      %4234 = vmatprep.mubr.f32.mxu0 0.0
      %4235 = vmatmul.mubr.f32.gmra.mxu0 %v4014
      %v4236 = vpop.f32.mrf.mxu0
      %v4237 = vadd.f32 0.0, %v4236
      %v4238 = vpop.f32.mrf.mxu0
      %4239 = vmatprep.mubr.f32.mxu0 0.0
      %4240 = vmatmul.mubr.f32.gmra.mxu0 %v4017
      %v4241 = vpop.f32.mrf.mxu0
      %v4242 = vadd.f32 0.0, %v4241
      %v4243 = vpop.f32.mrf.mxu0
      %4244 = vmatprep.mubr.f32.mxu0 0.0
      %4245 = vmatmul.mubr.f32.gmra.mxu0 %v4020
      %v4246 = vpop.f32.mrf.mxu0
      %v4247 = vadd.f32 0.0, %v4246
      %v4248 = vpop.f32.mrf.mxu0
      %4249 = vdwg.mxu0
      %v4250 = vld [vmem:[#allocation3] sm:$0xff]
      %v4251 = vld [vmem:[#allocation3 + $0x8] sm:$0xff]
      %v4252 = vld [vmem:[#allocation3 + $0x10] sm:$0xff]
      %v4253 = vld [vmem:[#allocation3 + $0x18] sm:$0xff]
      %v4254 = vld [vmem:[#allocation3 + $0x20] sm:$0xff]
      %v4255 = vld [vmem:[#allocation3 + $0x28] sm:$0xff]
      %v4256 = vld [vmem:[#allocation3 + $0x30] sm:$0xff]
      %v4257 = vld [vmem:[#allocation3 + $0x38] sm:$0xff]
      %v4258 = vld [vmem:[#allocation3 + $0x40] sm:$0xff]
      %v4259 = vld [vmem:[#allocation3 + $0x48] sm:$0xff]
      %v4260 = vld [vmem:[#allocation3 + $0x50] sm:$0xff]
      %v4261 = vld [vmem:[#allocation3 + $0x58] sm:$0xff]
      %v4262 = vld [vmem:[#allocation3 + $0x60] sm:$0xff]
      %v4263 = vld [vmem:[#allocation3 + $0x68] sm:$0xff]
      %v4264 = vld [vmem:[#allocation3 + $0x70] sm:$0xff]
      %v4265 = vld [vmem:[#allocation3 + $0x78] sm:$0xff]
      %v4266 = vld [vmem:[#allocation3 + $0x80] sm:$0xff]
      %v4267 = vld [vmem:[#allocation3 + $0x88] sm:$0xff]
      %v4268 = vld [vmem:[#allocation3 + $0x90] sm:$0xff]
      %v4269 = vld [vmem:[#allocation3 + $0x98] sm:$0xff]
      %v4270 = vld [vmem:[#allocation3 + $0xa0] sm:$0xff]
      %v4271 = vld [vmem:[#allocation3 + $0xa8] sm:$0xff]
      %v4272 = vld [vmem:[#allocation3 + $0xb0] sm:$0xff]
      %v4273 = vld [vmem:[#allocation3 + $0xb8] sm:$0xff]
      %v4274 = vld [vmem:[#allocation3 + $0xc0] sm:$0xff]
      %v4275 = vld [vmem:[#allocation3 + $0xc8] sm:$0xff]
      %v4276 = vld [vmem:[#allocation3 + $0xd0] sm:$0xff]
      %v4277 = vld [vmem:[#allocation3 + $0xd8] sm:$0xff]
      %v4278 = vld [vmem:[#allocation3 + $0xe0] sm:$0xff]
      %v4279 = vld [vmem:[#allocation3 + $0xe8] sm:$0xff]
      %v4280 = vld [vmem:[#allocation3 + $0xf0] sm:$0xff]
      %v4281 = vld [vmem:[#allocation3 + $0xf8] sm:$0xff]
      %v4282 = vadd.f32 %v4250, %v4092
      %v4283 = vadd.f32 %v4251, %v4097
      %v4284 = vadd.f32 %v4252, %v4102
      %v4285 = vadd.f32 %v4253, %v4107
      %v4286 = vadd.f32 %v4254, %v4112
      %v4287 = vadd.f32 %v4255, %v4117
      %v4288 = vadd.f32 %v4256, %v4122
      %v4289 = vadd.f32 %v4257, %v4127
      %v4290 = vadd.f32 %v4258, %v4132
      %v4291 = vadd.f32 %v4259, %v4137
      %v4292 = vadd.f32 %v4260, %v4142
      %v4293 = vadd.f32 %v4261, %v4147
      %v4294 = vadd.f32 %v4262, %v4152
      %v4295 = vadd.f32 %v4263, %v4157
      %v4296 = vadd.f32 %v4264, %v4162
      %v4297 = vadd.f32 %v4265, %v4167
      %v4298 = vadd.f32 %v4266, %v4172
      %v4299 = vadd.f32 %v4267, %v4177
      %v4300 = vadd.f32 %v4268, %v4182
      %v4301 = vadd.f32 %v4269, %v4187
      %v4302 = vadd.f32 %v4270, %v4192
      %v4303 = vadd.f32 %v4271, %v4197
      %v4304 = vadd.f32 %v4272, %v4202
      %v4305 = vadd.f32 %v4273, %v4207
      %v4306 = vadd.f32 %v4274, %v4212
      %v4307 = vadd.f32 %v4275, %v4217
      %v4308 = vadd.f32 %v4276, %v4222
      %v4309 = vadd.f32 %v4277, %v4227
      %v4310 = vadd.f32 %v4278, %v4232
      %v4311 = vadd.f32 %v4279, %v4237
      %v4312 = vadd.f32 %v4280, %v4242
      %v4313 = vadd.f32 %v4281, %v4247
      %4314 = vst.msk [vmem:[#allocation3] sm:$0xff] %vm680, %v4282
      %4315 = vst.msk [vmem:[#allocation3 + $0x8] sm:$0xff] %vm680, %v4283
      %4316 = vst.msk [vmem:[#allocation3 + $0x10] sm:$0xff] %vm680, %v4284
      %4317 = vst.msk [vmem:[#allocation3 + $0x18] sm:$0xff] %vm680, %v4285
      %4318 = vst.msk [vmem:[#allocation3 + $0x20] sm:$0xff] %vm680, %v4286
      %4319 = vst.msk [vmem:[#allocation3 + $0x28] sm:$0xff] %vm680, %v4287
      %4320 = vst.msk [vmem:[#allocation3 + $0x30] sm:$0xff] %vm680, %v4288
      %4321 = vst.msk [vmem:[#allocation3 + $0x38] sm:$0xff] %vm680, %v4289
      %4322 = vst.msk [vmem:[#allocation3 + $0x40] sm:$0xff] %vm680, %v4290
      %4323 = vst.msk [vmem:[#allocation3 + $0x48] sm:$0xff] %vm680, %v4291
      %4324 = vst.msk [vmem:[#allocation3 + $0x50] sm:$0xff] %vm680, %v4292
      %4325 = vst.msk [vmem:[#allocation3 + $0x58] sm:$0xff] %vm680, %v4293
      %4326 = vst.msk [vmem:[#allocation3 + $0x60] sm:$0xff] %vm680, %v4294
      %4327 = vst.msk [vmem:[#allocation3 + $0x68] sm:$0xff] %vm680, %v4295
      %4328 = vst.msk [vmem:[#allocation3 + $0x70] sm:$0xff] %vm680, %v4296
      %4329 = vst.msk [vmem:[#allocation3 + $0x78] sm:$0xff] %vm680, %v4297
      %4330 = vst.msk [vmem:[#allocation3 + $0x80] sm:$0xff] %vm680, %v4298
      %4331 = vst.msk [vmem:[#allocation3 + $0x88] sm:$0xff] %vm680, %v4299
      %4332 = vst.msk [vmem:[#allocation3 + $0x90] sm:$0xff] %vm680, %v4300
      %4333 = vst.msk [vmem:[#allocation3 + $0x98] sm:$0xff] %vm680, %v4301
      %4334 = vst.msk [vmem:[#allocation3 + $0xa0] sm:$0xff] %vm680, %v4302
      %4335 = vst.msk [vmem:[#allocation3 + $0xa8] sm:$0xff] %vm680, %v4303
      %4336 = vst.msk [vmem:[#allocation3 + $0xb0] sm:$0xff] %vm680, %v4304
      %4337 = vst.msk [vmem:[#allocation3 + $0xb8] sm:$0xff] %vm680, %v4305
      %4338 = vst.msk [vmem:[#allocation3 + $0xc0] sm:$0xff] %vm680, %v4306
      %4339 = vst.msk [vmem:[#allocation3 + $0xc8] sm:$0xff] %vm680, %v4307
      %4340 = vst.msk [vmem:[#allocation3 + $0xd0] sm:$0xff] %vm680, %v4308
      %4341 = vst.msk [vmem:[#allocation3 + $0xd8] sm:$0xff] %vm680, %v4309
      %4342 = vst.msk [vmem:[#allocation3 + $0xe0] sm:$0xff] %vm680, %v4310
      %4343 = vst.msk [vmem:[#allocation3 + $0xe8] sm:$0xff] %vm680, %v4311
      %4344 = vst.msk [vmem:[#allocation3 + $0xf0] sm:$0xff] %vm680, %v4312
      %4345 = vst.msk [vmem:[#allocation3 + $0xf8] sm:$0xff] %vm680, %v4313
      %v4346 = vld [vmem:[#allocation3] sm:$0xff]
      %v4347 = vld [vmem:[#allocation3 + $0x8] sm:$0xff]
      %v4348 = vld [vmem:[#allocation3 + $0x10] sm:$0xff]
      %v4349 = vld [vmem:[#allocation3 + $0x18] sm:$0xff]
      %v4350 = vld [vmem:[#allocation3 + $0x20] sm:$0xff]
      %v4351 = vld [vmem:[#allocation3 + $0x28] sm:$0xff]
      %v4352 = vld [vmem:[#allocation3 + $0x30] sm:$0xff]
      %v4353 = vld [vmem:[#allocation3 + $0x38] sm:$0xff]
      %v4354 = vld [vmem:[#allocation3 + $0x40] sm:$0xff]
      %v4355 = vld [vmem:[#allocation3 + $0x48] sm:$0xff]
      %v4356 = vld [vmem:[#allocation3 + $0x50] sm:$0xff]
      %v4357 = vld [vmem:[#allocation3 + $0x58] sm:$0xff]
      %v4358 = vld [vmem:[#allocation3 + $0x60] sm:$0xff]
      %v4359 = vld [vmem:[#allocation3 + $0x68] sm:$0xff]
      %v4360 = vld [vmem:[#allocation3 + $0x70] sm:$0xff]
      %v4361 = vld [vmem:[#allocation3 + $0x78] sm:$0xff]
      %v4362 = vld [vmem:[#allocation3 + $0x80] sm:$0xff]
      %v4363 = vld [vmem:[#allocation3 + $0x88] sm:$0xff]
      %v4364 = vld [vmem:[#allocation3 + $0x90] sm:$0xff]
      %v4365 = vld [vmem:[#allocation3 + $0x98] sm:$0xff]
      %v4366 = vld [vmem:[#allocation3 + $0xa0] sm:$0xff]
      %v4367 = vld [vmem:[#allocation3 + $0xa8] sm:$0xff]
      %v4368 = vld [vmem:[#allocation3 + $0xb0] sm:$0xff]
      %v4369 = vld [vmem:[#allocation3 + $0xb8] sm:$0xff]
      %v4370 = vld [vmem:[#allocation3 + $0xc0] sm:$0xff]
      %v4371 = vld [vmem:[#allocation3 + $0xc8] sm:$0xff]
      %v4372 = vld [vmem:[#allocation3 + $0xd0] sm:$0xff]
      %v4373 = vld [vmem:[#allocation3 + $0xd8] sm:$0xff]
      %v4374 = vld [vmem:[#allocation3 + $0xe0] sm:$0xff]
      %v4375 = vld [vmem:[#allocation3 + $0xe8] sm:$0xff]
      %v4376 = vld [vmem:[#allocation3 + $0xf0] sm:$0xff]
      %v4377 = vld [vmem:[#allocation3 + $0xf8] sm:$0xff]
      %4378 = vst.msk [vmem:[%s208] sm:$0xff] %vm680, %v4346
      %4379 = vst.msk [vmem:[%s208 + $0x8] sm:$0xff] %vm680, %v4347
      %4380 = vst.msk [vmem:[%s208 + $0x10] sm:$0xff] %vm680, %v4348
      %4381 = vst.msk [vmem:[%s208 + $0x18] sm:$0xff] %vm680, %v4349
      %4382 = vst.msk [vmem:[%s208 + $0x20] sm:$0xff] %vm680, %v4350
      %4383 = vst.msk [vmem:[%s208 + $0x28] sm:$0xff] %vm680, %v4351
      %4384 = vst.msk [vmem:[%s208 + $0x30] sm:$0xff] %vm680, %v4352
      %4385 = vst.msk [vmem:[%s208 + $0x38] sm:$0xff] %vm680, %v4353
      %4386 = vst.msk [vmem:[%s208 + $0x40] sm:$0xff] %vm680, %v4354
      %4387 = vst.msk [vmem:[%s208 + $0x48] sm:$0xff] %vm680, %v4355
      %4388 = vst.msk [vmem:[%s208 + $0x50] sm:$0xff] %vm680, %v4356
      %4389 = vst.msk [vmem:[%s208 + $0x58] sm:$0xff] %vm680, %v4357
      %4390 = vst.msk [vmem:[%s208 + $0x60] sm:$0xff] %vm680, %v4358
      %4391 = vst.msk [vmem:[%s208 + $0x68] sm:$0xff] %vm680, %v4359
      %4392 = vst.msk [vmem:[%s208 + $0x70] sm:$0xff] %vm680, %v4360
      %4393 = vst.msk [vmem:[%s208 + $0x78] sm:$0xff] %vm680, %v4361
      %4394 = vst.msk [vmem:[%s208 + $0x80] sm:$0xff] %vm680, %v4362
      %4395 = vst.msk [vmem:[%s208 + $0x88] sm:$0xff] %vm680, %v4363
      %4396 = vst.msk [vmem:[%s208 + $0x90] sm:$0xff] %vm680, %v4364
      %4397 = vst.msk [vmem:[%s208 + $0x98] sm:$0xff] %vm680, %v4365
      %4398 = vst.msk [vmem:[%s208 + $0xa0] sm:$0xff] %vm680, %v4366
      %4399 = vst.msk [vmem:[%s208 + $0xa8] sm:$0xff] %vm680, %v4367
      %4400 = vst.msk [vmem:[%s208 + $0xb0] sm:$0xff] %vm680, %v4368
      %4401 = vst.msk [vmem:[%s208 + $0xb8] sm:$0xff] %vm680, %v4369
      %4402 = vst.msk [vmem:[%s208 + $0xc0] sm:$0xff] %vm680, %v4370
      %4403 = vst.msk [vmem:[%s208 + $0xc8] sm:$0xff] %vm680, %v4371
      %4404 = vst.msk [vmem:[%s208 + $0xd0] sm:$0xff] %vm680, %v4372
      %4405 = vst.msk [vmem:[%s208 + $0xd8] sm:$0xff] %vm680, %v4373
      %4406 = vst.msk [vmem:[%s208 + $0xe0] sm:$0xff] %vm680, %v4374
      %4407 = vst.msk [vmem:[%s208 + $0xe8] sm:$0xff] %vm680, %v4375
      %4408 = vst.msk [vmem:[%s208 + $0xf0] sm:$0xff] %vm680, %v4376
      %4409 = vst.msk [vmem:[%s208 + $0xf8] sm:$0xff] %vm680, %v4377
      %v4410 = vsel %vm680, %v4346, 0.0
      %v4411 = vsel %vm680, %v4347, 0.0
      %v4412 = vadd.f32 %v4410, %v4411
      %v4413 = vsel %vm680, %v4348, 0.0
      %v4414 = vadd.f32 %v4412, %v4413
      %v4415 = vsel %vm680, %v4349, 0.0
      %v4416 = vadd.f32 %v4414, %v4415
      %v4417 = vsel %vm680, %v4350, 0.0
      %v4418 = vadd.f32 %v4416, %v4417
      %v4419 = vsel %vm680, %v4351, 0.0
      %v4420 = vadd.f32 %v4418, %v4419
      %v4421 = vsel %vm680, %v4352, 0.0
      %v4422 = vadd.f32 %v4420, %v4421
      %v4423 = vsel %vm680, %v4353, 0.0
      %v4424 = vadd.f32 %v4422, %v4423
      %v4425 = vsel %vm680, %v4354, 0.0
      %v4426 = vadd.f32 %v4424, %v4425
      %v4427 = vsel %vm680, %v4355, 0.0
      %v4428 = vadd.f32 %v4426, %v4427
      %v4429 = vsel %vm680, %v4356, 0.0
      %v4430 = vadd.f32 %v4428, %v4429
      %v4431 = vsel %vm680, %v4357, 0.0
      %v4432 = vadd.f32 %v4430, %v4431
      %v4433 = vsel %vm680, %v4358, 0.0
      %v4434 = vadd.f32 %v4432, %v4433
      %v4435 = vsel %vm680, %v4359, 0.0
      %v4436 = vadd.f32 %v4434, %v4435
      %v4437 = vsel %vm680, %v4360, 0.0
      %v4438 = vadd.f32 %v4436, %v4437
      %v4439 = vsel %vm680, %v4361, 0.0
      %v4440 = vadd.f32 %v4438, %v4439
      %v4441 = vsel %vm680, %v4362, 0.0
      %v4442 = vadd.f32 %v4440, %v4441
      %v4443 = vsel %vm680, %v4363, 0.0
      %v4444 = vadd.f32 %v4442, %v4443
      %v4445 = vsel %vm680, %v4364, 0.0
      %v4446 = vadd.f32 %v4444, %v4445
      %v4447 = vsel %vm680, %v4365, 0.0
      %v4448 = vadd.f32 %v4446, %v4447
      %v4449 = vsel %vm680, %v4366, 0.0
      %v4450 = vadd.f32 %v4448, %v4449
      %v4451 = vsel %vm680, %v4367, 0.0
      %v4452 = vadd.f32 %v4450, %v4451
      %v4453 = vsel %vm680, %v4368, 0.0
      %v4454 = vadd.f32 %v4452, %v4453
      %v4455 = vsel %vm680, %v4369, 0.0
      %v4456 = vadd.f32 %v4454, %v4455
      %v4457 = vsel %vm680, %v4370, 0.0
      %v4458 = vadd.f32 %v4456, %v4457
      %v4459 = vsel %vm680, %v4371, 0.0
      %v4460 = vadd.f32 %v4458, %v4459
      %v4461 = vsel %vm680, %v4372, 0.0
      %v4462 = vadd.f32 %v4460, %v4461
      %v4463 = vsel %vm680, %v4373, 0.0
      %v4464 = vadd.f32 %v4462, %v4463
      %v4465 = vsel %vm680, %v4374, 0.0
      %v4466 = vadd.f32 %v4464, %v4465
      %v4467 = vsel %vm680, %v4375, 0.0
      %v4468 = vadd.f32 %v4466, %v4467
      %v4469 = vsel %vm680, %v4376, 0.0
      %v4470 = vadd.f32 %v4468, %v4469
      %v4471 = vsel %vm680, %v4377, 0.0
      %v4472 = vadd.f32 %v4470, %v4471
      %v4473 = vrot.slane %v4472, 4
      %v4474 = vadd.f32 %v4472, %v4473
      %v4475 = vrot.slane %v4474, 2
      %v4476 = vadd.f32 %v4474, %v4475
      %v4477 = vrot.slane %v4476, 1
      %v4478 = vadd.f32 %v4476, %v4477
      %vm4479 = vcmask 57344
      %4480 = vst.msk [vmem:[%s211] sm:$0x1] %vm4479, %v4478
      %v4481 = vmul.f32 %v4346, %v4346
      %v4482 = vmul.f32 %v4347, %v4347
      %v4483 = vmul.f32 %v4348, %v4348
      %v4484 = vmul.f32 %v4349, %v4349
      %v4485 = vmul.f32 %v4350, %v4350
      %v4486 = vmul.f32 %v4351, %v4351
      %v4487 = vmul.f32 %v4352, %v4352
      %v4488 = vmul.f32 %v4353, %v4353
      %v4489 = vmul.f32 %v4354, %v4354
      %v4490 = vmul.f32 %v4355, %v4355
      %v4491 = vmul.f32 %v4356, %v4356
      %v4492 = vmul.f32 %v4357, %v4357
      %v4493 = vmul.f32 %v4358, %v4358
      %v4494 = vmul.f32 %v4359, %v4359
      %v4495 = vmul.f32 %v4360, %v4360
      %v4496 = vmul.f32 %v4361, %v4361
      %v4497 = vmul.f32 %v4362, %v4362
      %v4498 = vmul.f32 %v4363, %v4363
      %v4499 = vmul.f32 %v4364, %v4364
      %v4500 = vmul.f32 %v4365, %v4365
      %v4501 = vmul.f32 %v4366, %v4366
      %v4502 = vmul.f32 %v4367, %v4367
      %v4503 = vmul.f32 %v4368, %v4368
      %v4504 = vmul.f32 %v4369, %v4369
      %v4505 = vmul.f32 %v4370, %v4370
      %v4506 = vmul.f32 %v4371, %v4371
      %v4507 = vmul.f32 %v4372, %v4372
      %v4508 = vmul.f32 %v4373, %v4373
      %v4509 = vmul.f32 %v4374, %v4374
      %v4510 = vmul.f32 %v4375, %v4375
      %v4511 = vmul.f32 %v4376, %v4376
      %v4512 = vmul.f32 %v4377, %v4377
      %v4513 = vsel %vm680, %v4481, 0.0
      %v4514 = vsel %vm680, %v4482, 0.0
      %v4515 = vadd.f32 %v4513, %v4514
      %v4516 = vsel %vm680, %v4483, 0.0
      %v4517 = vadd.f32 %v4515, %v4516
      %v4518 = vsel %vm680, %v4484, 0.0
      %v4519 = vadd.f32 %v4517, %v4518
      %v4520 = vsel %vm680, %v4485, 0.0
      %v4521 = vadd.f32 %v4519, %v4520
      %v4522 = vsel %vm680, %v4486, 0.0
      %v4523 = vadd.f32 %v4521, %v4522
      %v4524 = vsel %vm680, %v4487, 0.0
      %v4525 = vadd.f32 %v4523, %v4524
      %v4526 = vsel %vm680, %v4488, 0.0
      %v4527 = vadd.f32 %v4525, %v4526
      %v4528 = vsel %vm680, %v4489, 0.0
      %v4529 = vadd.f32 %v4527, %v4528
      %v4530 = vsel %vm680, %v4490, 0.0
      %v4531 = vadd.f32 %v4529, %v4530
      %v4532 = vsel %vm680, %v4491, 0.0
      %v4533 = vadd.f32 %v4531, %v4532
      %v4534 = vsel %vm680, %v4492, 0.0
      %v4535 = vadd.f32 %v4533, %v4534
      %v4536 = vsel %vm680, %v4493, 0.0
      %v4537 = vadd.f32 %v4535, %v4536
      %v4538 = vsel %vm680, %v4494, 0.0
      %v4539 = vadd.f32 %v4537, %v4538
      %v4540 = vsel %vm680, %v4495, 0.0
      %v4541 = vadd.f32 %v4539, %v4540
      %v4542 = vsel %vm680, %v4496, 0.0
      %v4543 = vadd.f32 %v4541, %v4542
      %v4544 = vsel %vm680, %v4497, 0.0
      %v4545 = vadd.f32 %v4543, %v4544
      %v4546 = vsel %vm680, %v4498, 0.0
      %v4547 = vadd.f32 %v4545, %v4546
      %v4548 = vsel %vm680, %v4499, 0.0
      %v4549 = vadd.f32 %v4547, %v4548
      %v4550 = vsel %vm680, %v4500, 0.0
      %v4551 = vadd.f32 %v4549, %v4550
      %v4552 = vsel %vm680, %v4501, 0.0
      %v4553 = vadd.f32 %v4551, %v4552
      %v4554 = vsel %vm680, %v4502, 0.0
      %v4555 = vadd.f32 %v4553, %v4554
      %v4556 = vsel %vm680, %v4503, 0.0
      %v4557 = vadd.f32 %v4555, %v4556
      %v4558 = vsel %vm680, %v4504, 0.0
      %v4559 = vadd.f32 %v4557, %v4558
      %v4560 = vsel %vm680, %v4505, 0.0
      %v4561 = vadd.f32 %v4559, %v4560
      %v4562 = vsel %vm680, %v4506, 0.0
      %v4563 = vadd.f32 %v4561, %v4562
      %v4564 = vsel %vm680, %v4507, 0.0
      %v4565 = vadd.f32 %v4563, %v4564
      %v4566 = vsel %vm680, %v4508, 0.0
      %v4567 = vadd.f32 %v4565, %v4566
      %v4568 = vsel %vm680, %v4509, 0.0
      %v4569 = vadd.f32 %v4567, %v4568
      %v4570 = vsel %vm680, %v4510, 0.0
      %v4571 = vadd.f32 %v4569, %v4570
      %v4572 = vsel %vm680, %v4511, 0.0
      %v4573 = vadd.f32 %v4571, %v4572
      %v4574 = vsel %vm680, %v4512, 0.0
      %v4575 = vadd.f32 %v4573, %v4574
      %v4576 = vrot.slane %v4575, 4
      %v4577 = vadd.f32 %v4575, %v4576
      %v4578 = vrot.slane %v4577, 2
      %v4579 = vadd.f32 %v4577, %v4578
      %v4580 = vrot.slane %v4579, 1
      %v4581 = vadd.f32 %v4579, %v4580
      %4582 = vst.msk [vmem:[%s214] sm:$0x1] %vm4479, %v4581
      %p4583 = scmp.lt.s32.totalorder %s16, 1
      %s4584 = scalar_select %p4583, %s16, 1
      %s4585 = smul.addr %s4584, 32
      %s4586 = smul.addr %s4585, 8
      %s4587 = scalar_lea.vmem %s2, %s4586
      %p4588 = scmp.lt.s32.totalorder %s16, 1
      %s4589 = scalar_select %p4588, %s16, 1
      %s4590 = scalar_lea.vmem %s3, %s4589
      %p4591 = scmp.lt.s32.totalorder %s16, 1
      %s4592 = scalar_select %p4591, %s16, 1
      %s4593 = scalar_lea.vmem %s4, %s4592
      // Predicated region
      $region29: #{double_conv.3} parent=27 // pred_check
        %p4594 = pneg %p81
      $region30: #{double_conv.3} parent=27 // pred_check_branch
        %4596 = sbr.rel (%p4594) target = $region32
      $region31: #{double_conv.3} parent=27 // pred_region
        _
      $region32: #{double_conv.3} parent=27 // pred_fallthru
        _
      // Predicated region
      $region33: #{double_conv.3} parent=27 // pred_check
        %p4597 = pneg %p107
      $region34: #{double_conv.3} parent=27 // pred_check_branch
        %4599 = sbr.rel (%p4597) target = $region36
      $region35: #{double_conv.3} parent=27 // pred_region
        _
      $region36: #{double_conv.3} parent=27 // pred_fallthru
        _
      // Predicated region
      $region37: #{double_conv.3} parent=27 // pred_check
        %p4600 = pneg %p133
      $region38: #{double_conv.3} parent=27 // pred_check_branch
        %4602 = sbr.rel (%p4600) target = $region40
      $region39: #{double_conv.3} parent=27 // pred_region
        _
      $region40: #{double_conv.3} parent=27 // pred_fallthru
        _
    $region28: #{double_conv.3} parent=5 // pred_fallthru
      _
    %p4603 = scmp.le.s32.totalorder 2, %s11
    // Predicated region
    $region41: #{double_conv.3} parent=5 // pred_check
      %p4604 = pneg %p4603
    $region42: #{double_conv.3} parent=5 // pred_check_branch
      %4606 = sbr.rel (%p4604) target = $region44
    $region43: #{double_conv.3} parent=5 // pred_region
      %s4607 = ssub.s32 %s11, 2
      // Predicated region
      $region45: #{double_conv.3} parent=43 // pred_check
        %p4608 = pneg %p87
      $region46: #{double_conv.3} parent=43 // pred_check_branch
        %4610 = sbr.rel (%p4608) target = $region48
      $region47: #{double_conv.3} parent=43 // pred_region
        %p4611 = scmp.lt.s32.totalorder %s17, 1
        %s4612 = scalar_select %p4611, %s17, 1
        %s4613 = smul.addr %s4612, 32
        %s4614 = smul.addr %s4613, 8
        %s4615 = scalar_lea.vmem %s2, %s4614
      $region48: #{double_conv.3} parent=43 // pred_fallthru
        _
      // Predicated region
      $region49: #{double_conv.3} parent=43 // pred_check
        %p4616 = pneg %p113
      $region50: #{double_conv.3} parent=43 // pred_check_branch
        %4618 = sbr.rel (%p4616) target = $region52
      $region51: #{double_conv.3} parent=43 // pred_region
        %p4619 = scmp.lt.s32.totalorder %s17, 1
        %s4620 = scalar_select %p4619, %s17, 1
        %s4621 = scalar_lea.vmem %s3, %s4620
      $region52: #{double_conv.3} parent=43 // pred_fallthru
        _
      // Predicated region
      $region53: #{double_conv.3} parent=43 // pred_check
        %p4622 = pneg %p139
      $region54: #{double_conv.3} parent=43 // pred_check_branch
        %4624 = sbr.rel (%p4622) target = $region56
      $region55: #{double_conv.3} parent=43 // pred_region
        %p4625 = scmp.lt.s32.totalorder %s17, 1
        %s4626 = scalar_select %p4625, %s17, 1
        %s4627 = scalar_lea.vmem %s4, %s4626
      $region56: #{double_conv.3} parent=43 // pred_fallthru
        _
    $region44: #{double_conv.3} parent=5 // pred_fallthru
      _
  $region6: #{double_conv.3} parent=0 // loop_footer
    %s15 = sadd.s32 1, %s11
  $region7: #{double_conv.3} parent=0 // loop_footer_branch
    %10 = sbr.rel target = $region3
  $region8: #{double_conv.3} parent=0 // loop_exit
    _

// kernel: double_conv.4
$region0: #{double_conv.4}
  #allocation0 [shape = 'u32[]', space=smem, size = 0x4, offset = 0x4, fixed_abs, tag = 'smem constant byte address 0x4 - core index']
  #allocation1 [shape = 'u32[144,128]{1,0:T(1,128)}', space=vmem, size = 0x12000, scoped, tag = 'internal scratch']
  #allocation2 [shape = 'f32[18,18,8]{2,1,0:T(8,128)}', space=vmem, size = 0x36000, scoped, tag = 'scratch operand']
  #allocation3 [shape = 'f32[256,8]{1,0:T(8,128)}', space=vmem, size = 0x20000, scoped, tag = 'scratch operand']
  %s0 = inlined_call_operand.vmem [shape: f32[2,16,16,8], index: 0, kind: input, shape index: {}]
  %s1 = inlined_call_operand.vmem [shape: f32[1,8], index: 1, kind: input, shape index: {}]
  %s2 = inlined_call_operand.vmem [shape: f32[1,8], index: 2, kind: input, shape index: {}]
  %s3 = inlined_call_operand.vmem [shape: f32[9,8,8], index: 3, kind: input, shape index: {}]
  %s4 = inlined_call_operand.vmem [shape: f32[2,16,16,8], index: 4, kind: output, shape index: {0}]
  %s5 = inlined_call_operand.vmem [shape: f32[2,1,8], index: 5, kind: output, shape index: {1}]
  %s6 = inlined_call_operand.vmem [shape: f32[2,1,8], index: 6, kind: output, shape index: {2}]
  %7 = xla_tuple %s4, %s5, %s6
  %s8 = sld [smem:[#allocation0]]
  $region65: #{double_conv.4} parent=0
    _
  %s10 = ssub.s32 1, %s8
  %s11 = scalar_select 0, %s10, %s8
  loop: start=0, step=1, limit=4
  $region2: #{double_conv.4} parent=0 // loop_pre_header
    _
  $region3: #{double_conv.4} parent=0 // loop_header
    %s13 = sphi 0, %s17
    %p14 = scmp.ge.s32.totalorder %s13, 4
    %s23 = sphi 0, %s25
    %s26 = sphi 0, %s23
    %s27 = sphi 0, %s26
    %s43 = sphi 0, %s27
    %s47 = sphi 0, %s47
    %s49 = sphi 0, %s47
    %s50 = sphi 0, %s49
    %s64 = sphi 0, %s50
    %s68 = sphi 0, %s68
    %s70 = sphi 0, %s68
    %s71 = sphi 0, %s70
    %s85 = sphi 0, %s71
    %s89 = sphi 0, %s89
    %s91 = sphi 0, %s89
    %s92 = sphi 0, %s91
    %s106 = sphi 0, %s92
    %s112 = sphi 0, %s114
    %s115 = sphi 0, %s112
    %s116 = sphi 0, %s115
    %s132 = sphi 0, %s116
    %s138 = sphi 0, %s140
    %s141 = sphi 0, %s138
    %s142 = sphi 0, %s141
    %s158 = sphi 0, %s142
    %s164 = sphi 0, %s166
    %s167 = sphi 0, %s164
    %s168 = sphi 0, %s167
    %s184 = sphi 0, %s168
  $region4: #{double_conv.4} parent=0 // loop_header_branch
    %16 = sbr.rel (%p14) target = $region8
  $region5: #{double_conv.4} parent=0 // loop_body
    %s18 = ssub.s32 %s13, 1
    %s19 = ssub.s32 %s13, 2
    %s20 = sadd.s32 %s13, 1
    %s21 = ssub.s32 %s13, %s20
    %p22 = scmp.eq.s32.totalorder %s21, 0
    %s24 = sadd.s32 %s23, 1
    %s25 = scalar_select %p22, %s23, %s24
    %p28 = pneg %p22
    %p29 = scmp.eq.s32.totalorder %s13, 1
    %p30 = por %p28, %p29
    %p31 = scmp.ne.s32.totalorder %s23, %s26
    %p32 = scmp.eq.s32.totalorder %s13, 0
    %p33 = por %p31, %p32
    %p34 = scmp.ne.s32.totalorder %s23, %s26
    %p35 = scmp.eq.s32.totalorder %s18, 1
    %p36 = por %p34, %p35
    %p37 = scmp.ne.s32.totalorder %s26, %s27
    %p38 = scmp.eq.s32.totalorder %s18, 0
    %p39 = por %p37, %p38
    %p40 = scmp.ne.s32.totalorder %s26, %s27
    %p41 = scmp.eq.s32.totalorder %s19, 1
    %p42 = por %p40, %p41
    %p44 = scmp.ne.s32.totalorder %s27, %s43
    %p45 = scmp.eq.s32.totalorder %s19, 0
    %p46 = por %p44, %p45
    %s48 = sadd.s32 %s47, 1
    %p51 = scmp.eq.s32.totalorder %s13, 1
    %p52 = scmp.ne.s32.totalorder %s47, %s49
    %p53 = scmp.eq.s32.totalorder %s13, 0
    %p54 = por %p52, %p53
    %p55 = scmp.ne.s32.totalorder %s47, %s49
    %p56 = scmp.eq.s32.totalorder %s18, 1
    %p57 = por %p55, %p56
    %p58 = scmp.ne.s32.totalorder %s49, %s50
    %p59 = scmp.eq.s32.totalorder %s18, 0
    %p60 = por %p58, %p59
    %p61 = scmp.ne.s32.totalorder %s49, %s50
    %p62 = scmp.eq.s32.totalorder %s19, 1
    %p63 = por %p61, %p62
    %p65 = scmp.ne.s32.totalorder %s50, %s64
    %p66 = scmp.eq.s32.totalorder %s19, 0
    %p67 = por %p65, %p66
    %s69 = sadd.s32 %s68, 1
    %p72 = scmp.eq.s32.totalorder %s13, 1
    %p73 = scmp.ne.s32.totalorder %s68, %s70
    %p74 = scmp.eq.s32.totalorder %s13, 0
    %p75 = por %p73, %p74
    %p76 = scmp.ne.s32.totalorder %s68, %s70
    %p77 = scmp.eq.s32.totalorder %s18, 1
    %p78 = por %p76, %p77
    %p79 = scmp.ne.s32.totalorder %s70, %s71
    %p80 = scmp.eq.s32.totalorder %s18, 0
    %p81 = por %p79, %p80
    %p82 = scmp.ne.s32.totalorder %s70, %s71
    %p83 = scmp.eq.s32.totalorder %s19, 1
    %p84 = por %p82, %p83
    %p86 = scmp.ne.s32.totalorder %s71, %s85
    %p87 = scmp.eq.s32.totalorder %s19, 0
    %p88 = por %p86, %p87
    %s90 = sadd.s32 %s89, 1
    %p93 = scmp.eq.s32.totalorder %s13, 1
    %p94 = scmp.ne.s32.totalorder %s89, %s91
    %p95 = scmp.eq.s32.totalorder %s13, 0
    %p96 = por %p94, %p95
    %p97 = scmp.ne.s32.totalorder %s89, %s91
    %p98 = scmp.eq.s32.totalorder %s18, 1
    %p99 = por %p97, %p98
    %p100 = scmp.ne.s32.totalorder %s91, %s92
    %p101 = scmp.eq.s32.totalorder %s18, 0
    %p102 = por %p100, %p101
    %p103 = scmp.ne.s32.totalorder %s91, %s92
    %p104 = scmp.eq.s32.totalorder %s19, 1
    %p105 = por %p103, %p104
    %p107 = scmp.ne.s32.totalorder %s92, %s106
    %p108 = scmp.eq.s32.totalorder %s19, 0
    %p109 = por %p107, %p108
    %s110 = ssub.s32 %s13, %s20
    %p111 = scmp.eq.s32.totalorder %s110, 0
    %s113 = sadd.s32 %s112, 1
    %s114 = scalar_select %p111, %s112, %s113
    %p117 = pneg %p111
    %p118 = scmp.eq.s32.totalorder %s13, 1
    %p119 = por %p117, %p118
    %p120 = scmp.ne.s32.totalorder %s112, %s115
    %p121 = scmp.eq.s32.totalorder %s13, 0
    %p122 = por %p120, %p121
    %p123 = scmp.ne.s32.totalorder %s112, %s115
    %p124 = scmp.eq.s32.totalorder %s18, 1
    %p125 = por %p123, %p124
    %p126 = scmp.ne.s32.totalorder %s115, %s116
    %p127 = scmp.eq.s32.totalorder %s18, 0
    %p128 = por %p126, %p127
    %p129 = scmp.ne.s32.totalorder %s115, %s116
    %p130 = scmp.eq.s32.totalorder %s19, 1
    %p131 = por %p129, %p130
    %p133 = scmp.ne.s32.totalorder %s116, %s132
    %p134 = scmp.eq.s32.totalorder %s19, 0
    %p135 = por %p133, %p134
    %s136 = ssub.s32 %s13, %s20
    %p137 = scmp.eq.s32.totalorder %s136, 0
    %s139 = sadd.s32 %s138, 1
    %s140 = scalar_select %p137, %s138, %s139
    %p143 = pneg %p137
    %p144 = scmp.eq.s32.totalorder %s13, 1
    %p145 = por %p143, %p144
    %p146 = scmp.ne.s32.totalorder %s138, %s141
    %p147 = scmp.eq.s32.totalorder %s13, 0
    %p148 = por %p146, %p147
    %p149 = scmp.ne.s32.totalorder %s138, %s141
    %p150 = scmp.eq.s32.totalorder %s18, 1
    %p151 = por %p149, %p150
    %p152 = scmp.ne.s32.totalorder %s141, %s142
    %p153 = scmp.eq.s32.totalorder %s18, 0
    %p154 = por %p152, %p153
    %p155 = scmp.ne.s32.totalorder %s141, %s142
    %p156 = scmp.eq.s32.totalorder %s19, 1
    %p157 = por %p155, %p156
    %p159 = scmp.ne.s32.totalorder %s142, %s158
    %p160 = scmp.eq.s32.totalorder %s19, 0
    %p161 = por %p159, %p160
    %s162 = ssub.s32 %s13, %s20
    %p163 = scmp.eq.s32.totalorder %s162, 0
    %s165 = sadd.s32 %s164, 1
    %s166 = scalar_select %p163, %s164, %s165
    %p169 = pneg %p163
    %p170 = scmp.eq.s32.totalorder %s13, 1
    %p171 = por %p169, %p170
    %p172 = scmp.ne.s32.totalorder %s164, %s167
    %p173 = scmp.eq.s32.totalorder %s13, 0
    %p174 = por %p172, %p173
    %p175 = scmp.ne.s32.totalorder %s164, %s167
    %p176 = scmp.eq.s32.totalorder %s18, 1
    %p177 = por %p175, %p176
    %p178 = scmp.ne.s32.totalorder %s167, %s168
    %p179 = scmp.eq.s32.totalorder %s18, 0
    %p180 = por %p178, %p179
    %p181 = scmp.ne.s32.totalorder %s167, %s168
    %p182 = scmp.eq.s32.totalorder %s19, 1
    %p183 = por %p181, %p182
    %p185 = scmp.ne.s32.totalorder %s168, %s184
    %p186 = scmp.eq.s32.totalorder %s19, 0
    %p187 = por %p185, %p186
    %p188 = scmp.le.s32.totalorder 1, %s13
    %p189 = scmp.lt.s32.totalorder %s13, 3
    %p190 = pnand %p188, %p189
    %p191 = pneg %p190
    // Predicated region
    $region9: #{double_conv.4} parent=5 // pred_check
      _
    $region10: #{double_conv.4} parent=5 // pred_check_branch
      %193 = sbr.rel (%p190) target = $region12
    $region11: #{double_conv.4} parent=5 // pred_region
      %s194 = ssub.s32 %s13, 1
      // Predicated region
      $region13: #{double_conv.4} parent=11 // pred_check
        %p195 = pneg %p60
      $region14: #{double_conv.4} parent=11 // pred_check_branch
        %197 = sbr.rel (%p195) target = $region16
      $region15: #{double_conv.4} parent=11 // pred_region
        _
      $region16: #{double_conv.4} parent=11 // pred_fallthru
        _
      // Predicated region
      $region17: #{double_conv.4} parent=11 // pred_check
        %p198 = pneg %p81
      $region18: #{double_conv.4} parent=11 // pred_check_branch
        %200 = sbr.rel (%p198) target = $region20
      $region19: #{double_conv.4} parent=11 // pred_region
        _
      $region20: #{double_conv.4} parent=11 // pred_fallthru
        _
      // Predicated region
      $region21: #{double_conv.4} parent=11 // pred_check
        %p201 = pneg %p102
      $region22: #{double_conv.4} parent=11 // pred_check_branch
        %203 = sbr.rel (%p201) target = $region24
      $region23: #{double_conv.4} parent=11 // pred_region
        _
      $region24: #{double_conv.4} parent=11 // pred_fallthru
        _
    $region12: #{double_conv.4} parent=5 // pred_fallthru
      _
    %p204 = scmp.lt.s32.totalorder %s13, 2
    // Predicated region
    $region25: #{double_conv.4} parent=5 // pred_check
      %p205 = pneg %p204
    $region26: #{double_conv.4} parent=5 // pred_check_branch
      %207 = sbr.rel (%p205) target = $region28
    $region27: #{double_conv.4} parent=5 // pred_region
      // Predicated region
      $region29: #{double_conv.4} parent=27 // pred_check
        %p208 = pneg %p33
      $region30: #{double_conv.4} parent=27 // pred_check_branch
        %210 = sbr.rel (%p208) target = $region32
      $region31: #{double_conv.4} parent=27 // pred_region
        %p211 = scmp.lt.s32.totalorder %s13, 1
        %s212 = scalar_select %p211, %s13, 1
        %s213 = smul.addr %s212, 32
        %s214 = smul.addr %s213, 8
        %s215 = scalar_lea.vmem %s0, %s214
      $region32: #{double_conv.4} parent=27 // pred_fallthru
        _
    $region28: #{double_conv.4} parent=5 // pred_fallthru
      _
    %p216 = scmp.le.s32.totalorder 1, %s13
    %p217 = scmp.lt.s32.totalorder %s13, 3
    %p218 = pnand %p216, %p217
    %p219 = pneg %p218
    // Predicated region
    $region33: #{double_conv.4} parent=5 // pred_check
      _
    $region34: #{double_conv.4} parent=5 // pred_check_branch
      %221 = sbr.rel (%p218) target = $region36
    $region35: #{double_conv.4} parent=5 // pred_region
      %s222 = ssub.s32 %s13, 1
      %p223 = scmp.lt.s32.totalorder %s18, 1
      %s224 = scalar_select %p223, %s18, 1
      %s225 = smul.addr %s224, 32
      %s226 = smul.addr %s225, 8
      %s227 = scalar_lea.vmem %s0, %s226
      %p228 = pneg %p39
      %p229 = pneg %p36
      %p230 = pneg %p60
      %p231 = pneg %p57
      %p232 = pneg %p81
      %p233 = pneg %p78
      %p234 = pneg %p102
      %p235 = pneg %p99
      %p236 = pneg %p128
      %p237 = pneg %p125
      %p238 = scmp.lt.s32.totalorder %s18, 1
      %s239 = scalar_select %p238, %s18, 1
      %s240 = smul.addr %s239, 32
      %s241 = smul.addr %s240, 8
      %s242 = scalar_lea.vmem %s4, %s241
      %p243 = pneg %p154
      %p244 = pneg %p151
      %p245 = scmp.lt.s32.totalorder %s18, 1
      %s246 = scalar_select %p245, %s18, 1
      %s247 = scalar_lea.vmem %s5, %s246
      %p248 = pneg %p180
      %p249 = pneg %p177
      %p250 = scmp.lt.s32.totalorder %s18, 1
      %s251 = scalar_select %p250, %s18, 1
      %s252 = scalar_lea.vmem %s6, %s251
      %p253 = scmp.lt.s32.totalorder %s18, 1
      %s254 = scalar_select %p253, %s18, 1
      %s255 = smul.addr %s254, 32
      %s256 = smul.addr %s255, 8
      %s257 = scalar_lea.vmem %s0, %s256
      %p258 = scmp.lt.s32.totalorder %s18, 1
      %s259 = scalar_select %p258, %s18, 1
      %s260 = smul.addr %s259, 32
      %s261 = smul.addr %s260, 8
      %s262 = scalar_lea.vmem %s4, %s261
      %p263 = scmp.lt.s32.totalorder %s18, 1
      %s264 = scalar_select %p263, %s18, 1
      %s265 = scalar_lea.vmem %s5, %s264
      %p266 = scmp.lt.s32.totalorder %s18, 1
      %s267 = scalar_select %p266, %s18, 1
      %s268 = scalar_lea.vmem %s6, %s267
      %v269 = vld [vmem:[%s257] sm:$0xff]
      %v270 = vld [vmem:[%s257 + $0x8] sm:$0xff]
      %v271 = vld [vmem:[%s257 + $0x10] sm:$0xff]
      %v272 = vld [vmem:[%s257 + $0x18] sm:$0xff]
      %v273 = vld [vmem:[%s257 + $0x20] sm:$0xff]
      %v274 = vld [vmem:[%s257 + $0x28] sm:$0xff]
      %v275 = vld [vmem:[%s257 + $0x30] sm:$0xff]
      %v276 = vld [vmem:[%s257 + $0x38] sm:$0xff]
      %v277 = vld [vmem:[%s257 + $0x40] sm:$0xff]
      %v278 = vld [vmem:[%s257 + $0x48] sm:$0xff]
      %v279 = vld [vmem:[%s257 + $0x50] sm:$0xff]
      %v280 = vld [vmem:[%s257 + $0x58] sm:$0xff]
      %v281 = vld [vmem:[%s257 + $0x60] sm:$0xff]
      %v282 = vld [vmem:[%s257 + $0x68] sm:$0xff]
      %v283 = vld [vmem:[%s257 + $0x70] sm:$0xff]
      %v284 = vld [vmem:[%s257 + $0x78] sm:$0xff]
      %v285 = vld [vmem:[%s257 + $0x80] sm:$0xff]
      %v286 = vld [vmem:[%s257 + $0x88] sm:$0xff]
      %v287 = vld [vmem:[%s257 + $0x90] sm:$0xff]
      %v288 = vld [vmem:[%s257 + $0x98] sm:$0xff]
      %v289 = vld [vmem:[%s257 + $0xa0] sm:$0xff]
      %v290 = vld [vmem:[%s257 + $0xa8] sm:$0xff]
      %v291 = vld [vmem:[%s257 + $0xb0] sm:$0xff]
      %v292 = vld [vmem:[%s257 + $0xb8] sm:$0xff]
      %v293 = vld [vmem:[%s257 + $0xc0] sm:$0xff]
      %v294 = vld [vmem:[%s257 + $0xc8] sm:$0xff]
      %v295 = vld [vmem:[%s257 + $0xd0] sm:$0xff]
      %v296 = vld [vmem:[%s257 + $0xd8] sm:$0xff]
      %v297 = vld [vmem:[%s257 + $0xe0] sm:$0xff]
      %v298 = vld [vmem:[%s257 + $0xe8] sm:$0xff]
      %v299 = vld [vmem:[%s257 + $0xf0] sm:$0xff]
      %v300 = vld [vmem:[%s257 + $0xf8] sm:$0xff]
      %v301 = vld [vmem:[%s1] sm:$0x1]
      %v303 = vlaneseq
      %v304 = vshrl.u32 %v303, 7
      %v305 = vsub.s32 0, %v304
      %v306 = vrot.slane %v301, %v305
      %v308 = vmul.f32 %v269, %v306
      %v309 = vmul.f32 %v270, %v306
      %v310 = vmul.f32 %v271, %v306
      %v311 = vmul.f32 %v272, %v306
      %v312 = vmul.f32 %v273, %v306
      %v313 = vmul.f32 %v274, %v306
      %v314 = vmul.f32 %v275, %v306
      %v315 = vmul.f32 %v276, %v306
      %v316 = vmul.f32 %v277, %v306
      %v317 = vmul.f32 %v278, %v306
      %v318 = vmul.f32 %v279, %v306
      %v319 = vmul.f32 %v280, %v306
      %v320 = vmul.f32 %v281, %v306
      %v321 = vmul.f32 %v282, %v306
      %v322 = vmul.f32 %v283, %v306
      %v323 = vmul.f32 %v284, %v306
      %v324 = vmul.f32 %v285, %v306
      %v325 = vmul.f32 %v286, %v306
      %v326 = vmul.f32 %v287, %v306
      %v327 = vmul.f32 %v288, %v306
      %v328 = vmul.f32 %v289, %v306
      %v329 = vmul.f32 %v290, %v306
      %v330 = vmul.f32 %v291, %v306
      %v331 = vmul.f32 %v292, %v306
      %v332 = vmul.f32 %v293, %v306
      %v333 = vmul.f32 %v294, %v306
      %v334 = vmul.f32 %v295, %v306
      %v335 = vmul.f32 %v296, %v306
      %v336 = vmul.f32 %v297, %v306
      %v337 = vmul.f32 %v298, %v306
      %v338 = vmul.f32 %v299, %v306
      %v339 = vmul.f32 %v300, %v306
      %v340 = vld [vmem:[%s2] sm:$0x1]
      %v342 = vlaneseq
      %v343 = vshrl.u32 %v342, 7
      %v344 = vsub.s32 0, %v343
      %v345 = vrot.slane %v340, %v344
      %v347 = vadd.f32 %v308, %v345
      %v348 = vadd.f32 %v309, %v345
      %v349 = vadd.f32 %v310, %v345
      %v350 = vadd.f32 %v311, %v345
      %v351 = vadd.f32 %v312, %v345
      %v352 = vadd.f32 %v313, %v345
      %v353 = vadd.f32 %v314, %v345
      %v354 = vadd.f32 %v315, %v345
      %v355 = vadd.f32 %v316, %v345
      %v356 = vadd.f32 %v317, %v345
      %v357 = vadd.f32 %v318, %v345
      %v358 = vadd.f32 %v319, %v345
      %v359 = vadd.f32 %v320, %v345
      %v360 = vadd.f32 %v321, %v345
      %v361 = vadd.f32 %v322, %v345
      %v362 = vadd.f32 %v323, %v345
      %v363 = vadd.f32 %v324, %v345
      %v364 = vadd.f32 %v325, %v345
      %v365 = vadd.f32 %v326, %v345
      %v366 = vadd.f32 %v327, %v345
      %v367 = vadd.f32 %v328, %v345
      %v368 = vadd.f32 %v329, %v345
      %v369 = vadd.f32 %v330, %v345
      %v370 = vadd.f32 %v331, %v345
      %v371 = vadd.f32 %v332, %v345
      %v372 = vadd.f32 %v333, %v345
      %v373 = vadd.f32 %v334, %v345
      %v374 = vadd.f32 %v335, %v345
      %v375 = vadd.f32 %v336, %v345
      %v376 = vadd.f32 %v337, %v345
      %v377 = vadd.f32 %v338, %v345
      %v378 = vadd.f32 %v339, %v345
      %v379 = vmax.f32 %v347, 0.0
      %v380 = vmax.f32 %v348, 0.0
      %v381 = vmax.f32 %v349, 0.0
      %v382 = vmax.f32 %v350, 0.0
      %v383 = vmax.f32 %v351, 0.0
      %v384 = vmax.f32 %v352, 0.0
      %v385 = vmax.f32 %v353, 0.0
      %v386 = vmax.f32 %v354, 0.0
      %v387 = vmax.f32 %v355, 0.0
      %v388 = vmax.f32 %v356, 0.0
      %v389 = vmax.f32 %v357, 0.0
      %v390 = vmax.f32 %v358, 0.0
      %v391 = vmax.f32 %v359, 0.0
      %v392 = vmax.f32 %v360, 0.0
      %v393 = vmax.f32 %v361, 0.0
      %v394 = vmax.f32 %v362, 0.0
      %v395 = vmax.f32 %v363, 0.0
      %v396 = vmax.f32 %v364, 0.0
      %v397 = vmax.f32 %v365, 0.0
      %v398 = vmax.f32 %v366, 0.0
      %v399 = vmax.f32 %v367, 0.0
      %v400 = vmax.f32 %v368, 0.0
      %v401 = vmax.f32 %v369, 0.0
      %v402 = vmax.f32 %v370, 0.0
      %v403 = vmax.f32 %v371, 0.0
      %v404 = vmax.f32 %v372, 0.0
      %v405 = vmax.f32 %v373, 0.0
      %v406 = vmax.f32 %v374, 0.0
      %v407 = vmax.f32 %v375, 0.0
      %v408 = vmax.f32 %v376, 0.0
      %v409 = vmax.f32 %v377, 0.0
      %v410 = vmax.f32 %v378, 0.0
      %vm411 = vcmask 64512
      %412 = vst.msk [vmem:[#allocation2] sm:$0xff] %vm411, 0.0
      %413 = vst.msk [vmem:[#allocation2 + $0x8] sm:$0xff] %vm411, 0.0
      %vm414 = vcmask 58368
      %415 = vst.msk [vmem:[#allocation2 + $0x10] sm:$0x3] %vm414, 0.0
      %s416 = scalar_lea.vmem [#allocation2], 408
      %417 = vst.msk [vmem:[%s416] sm:$0xff] %vm411, 0.0
      %418 = vst.msk [vmem:[%s416 + $0x8] sm:$0xff] %vm411, 0.0
      %419 = vst.msk [vmem:[%s416 + $0x10] sm:$0x3] %vm414, 0.0
      %s420 = scalar_lea.vmem [#allocation2], 24
      %vm421 = vcmask 57344
      %422 = vst.msk [vmem:[%s420] sm:$0x1] %vm421, 0.0
      %423 = vst.msk [vmem:[%s420 + $0x18] sm:$0x1] %vm421, 0.0
      %424 = vst.msk [vmem:[%s420 + $0x30] sm:$0x1] %vm421, 0.0
      %425 = vst.msk [vmem:[%s420 + $0x48] sm:$0x1] %vm421, 0.0
      %426 = vst.msk [vmem:[%s420 + $0x60] sm:$0x1] %vm421, 0.0
      %427 = vst.msk [vmem:[%s420 + $0x78] sm:$0x1] %vm421, 0.0
      %428 = vst.msk [vmem:[%s420 + $0x90] sm:$0x1] %vm421, 0.0
      %429 = vst.msk [vmem:[%s420 + $0xa8] sm:$0x1] %vm421, 0.0
      %430 = vst.msk [vmem:[%s420 + $0xc0] sm:$0x1] %vm421, 0.0
      %431 = vst.msk [vmem:[%s420 + $0xd8] sm:$0x1] %vm421, 0.0
      %432 = vst.msk [vmem:[%s420 + $0xf0] sm:$0x1] %vm421, 0.0
      %433 = vst.msk [vmem:[%s420 + $0x108] sm:$0x1] %vm421, 0.0
      %434 = vst.msk [vmem:[%s420 + $0x120] sm:$0x1] %vm421, 0.0
      %435 = vst.msk [vmem:[%s420 + $0x138] sm:$0x1] %vm421, 0.0
      %436 = vst.msk [vmem:[%s420 + $0x150] sm:$0x1] %vm421, 0.0
      %437 = vst.msk [vmem:[%s420 + $0x168] sm:$0x1] %vm421, 0.0
      %438 = vst.msk [vmem:[%s420 + $0x11] sm:$0x1] %vm421, 0.0
      %439 = vst.msk [vmem:[%s420 + $0x29] sm:$0x1] %vm421, 0.0
      %440 = vst.msk [vmem:[%s420 + $0x41] sm:$0x1] %vm421, 0.0
      %441 = vst.msk [vmem:[%s420 + $0x59] sm:$0x1] %vm421, 0.0
      %442 = vst.msk [vmem:[%s420 + $0x71] sm:$0x1] %vm421, 0.0
      %443 = vst.msk [vmem:[%s420 + $0x89] sm:$0x1] %vm421, 0.0
      %444 = vst.msk [vmem:[%s420 + $0xa1] sm:$0x1] %vm421, 0.0
      %445 = vst.msk [vmem:[%s420 + $0xb9] sm:$0x1] %vm421, 0.0
      %446 = vst.msk [vmem:[%s420 + $0xd1] sm:$0x1] %vm421, 0.0
      %447 = vst.msk [vmem:[%s420 + $0xe9] sm:$0x1] %vm421, 0.0
      %448 = vst.msk [vmem:[%s420 + $0x101] sm:$0x1] %vm421, 0.0
      %449 = vst.msk [vmem:[%s420 + $0x119] sm:$0x1] %vm421, 0.0
      %450 = vst.msk [vmem:[%s420 + $0x131] sm:$0x1] %vm421, 0.0
      %451 = vst.msk [vmem:[%s420 + $0x149] sm:$0x1] %vm421, 0.0
      %452 = vst.msk [vmem:[%s420 + $0x161] sm:$0x1] %vm421, 0.0
      %453 = vst.msk [vmem:[%s420 + $0x179] sm:$0x1] %vm421, 0.0
      %454 = vst.msk [vmem:[%s420 + $0x1] sm:$0xff] %vm411, %v379
      %455 = vst.msk [vmem:[%s420 + $0x9] sm:$0xff] %vm411, %v380
      %456 = vst.msk [vmem:[%s420 + $0x19] sm:$0xff] %vm411, %v381
      %457 = vst.msk [vmem:[%s420 + $0x21] sm:$0xff] %vm411, %v382
      %458 = vst.msk [vmem:[%s420 + $0x31] sm:$0xff] %vm411, %v383
      %459 = vst.msk [vmem:[%s420 + $0x39] sm:$0xff] %vm411, %v384
      %460 = vst.msk [vmem:[%s420 + $0x49] sm:$0xff] %vm411, %v385
      %461 = vst.msk [vmem:[%s420 + $0x51] sm:$0xff] %vm411, %v386
      %462 = vst.msk [vmem:[%s420 + $0x61] sm:$0xff] %vm411, %v387
      %463 = vst.msk [vmem:[%s420 + $0x69] sm:$0xff] %vm411, %v388
      %464 = vst.msk [vmem:[%s420 + $0x79] sm:$0xff] %vm411, %v389
      %465 = vst.msk [vmem:[%s420 + $0x81] sm:$0xff] %vm411, %v390
      %466 = vst.msk [vmem:[%s420 + $0x91] sm:$0xff] %vm411, %v391
      %467 = vst.msk [vmem:[%s420 + $0x99] sm:$0xff] %vm411, %v392
      %468 = vst.msk [vmem:[%s420 + $0xa9] sm:$0xff] %vm411, %v393
      %469 = vst.msk [vmem:[%s420 + $0xb1] sm:$0xff] %vm411, %v394
      %470 = vst.msk [vmem:[%s420 + $0xc1] sm:$0xff] %vm411, %v395
      %471 = vst.msk [vmem:[%s420 + $0xc9] sm:$0xff] %vm411, %v396
      %472 = vst.msk [vmem:[%s420 + $0xd9] sm:$0xff] %vm411, %v397
      %473 = vst.msk [vmem:[%s420 + $0xe1] sm:$0xff] %vm411, %v398
      %474 = vst.msk [vmem:[%s420 + $0xf1] sm:$0xff] %vm411, %v399
      %475 = vst.msk [vmem:[%s420 + $0xf9] sm:$0xff] %vm411, %v400
      %476 = vst.msk [vmem:[%s420 + $0x109] sm:$0xff] %vm411, %v401
      %477 = vst.msk [vmem:[%s420 + $0x111] sm:$0xff] %vm411, %v402
      %478 = vst.msk [vmem:[%s420 + $0x121] sm:$0xff] %vm411, %v403
      %479 = vst.msk [vmem:[%s420 + $0x129] sm:$0xff] %vm411, %v404
      %480 = vst.msk [vmem:[%s420 + $0x139] sm:$0xff] %vm411, %v405
      %481 = vst.msk [vmem:[%s420 + $0x141] sm:$0xff] %vm411, %v406
      %482 = vst.msk [vmem:[%s420 + $0x151] sm:$0xff] %vm411, %v407
      %483 = vst.msk [vmem:[%s420 + $0x159] sm:$0xff] %vm411, %v408
      %484 = vst.msk [vmem:[%s420 + $0x169] sm:$0xff] %vm411, %v409
      %485 = vst.msk [vmem:[%s420 + $0x171] sm:$0xff] %vm411, %v410
      %v486 = vld [vmem:[#allocation2] sm:$0xff]
      %v487 = vld [vmem:[#allocation2 + $0x8] sm:$0xff]
      %v488 = vld [vmem:[#allocation2 + $0x18] sm:$0xff]
      %v489 = vld [vmem:[#allocation2 + $0x20] sm:$0xff]
      %v490 = vld [vmem:[#allocation2 + $0x30] sm:$0xff]
      %v491 = vld [vmem:[#allocation2 + $0x38] sm:$0xff]
      %v492 = vld [vmem:[#allocation2 + $0x48] sm:$0xff]
      %v493 = vld [vmem:[#allocation2 + $0x50] sm:$0xff]
      %v494 = vld [vmem:[#allocation2 + $0x60] sm:$0xff]
      %v495 = vld [vmem:[#allocation2 + $0x68] sm:$0xff]
      %v496 = vld [vmem:[#allocation2 + $0x78] sm:$0xff]
      %v497 = vld [vmem:[#allocation2 + $0x80] sm:$0xff]
      %v498 = vld [vmem:[#allocation2 + $0x90] sm:$0xff]
      %v499 = vld [vmem:[#allocation2 + $0x98] sm:$0xff]
      %v500 = vld [vmem:[#allocation2 + $0xa8] sm:$0xff]
      %v501 = vld [vmem:[#allocation2 + $0xb0] sm:$0xff]
      %v502 = vld [vmem:[#allocation2 + $0xc0] sm:$0xff]
      %v503 = vld [vmem:[#allocation2 + $0xc8] sm:$0xff]
      %v504 = vld [vmem:[#allocation2 + $0xd8] sm:$0xff]
      %v505 = vld [vmem:[#allocation2 + $0xe0] sm:$0xff]
      %v506 = vld [vmem:[#allocation2 + $0xf0] sm:$0xff]
      %v507 = vld [vmem:[#allocation2 + $0xf8] sm:$0xff]
      %v508 = vld [vmem:[#allocation2 + $0x108] sm:$0xff]
      %v509 = vld [vmem:[#allocation2 + $0x110] sm:$0xff]
      %v510 = vld [vmem:[#allocation2 + $0x120] sm:$0xff]
      %v511 = vld [vmem:[#allocation2 + $0x128] sm:$0xff]
      %v512 = vld [vmem:[#allocation2 + $0x138] sm:$0xff]
      %v513 = vld [vmem:[#allocation2 + $0x140] sm:$0xff]
      %v514 = vld [vmem:[#allocation2 + $0x150] sm:$0xff]
      %v515 = vld [vmem:[#allocation2 + $0x158] sm:$0xff]
      %v516 = vld [vmem:[#allocation2 + $0x168] sm:$0xff]
      %v517 = vld [vmem:[#allocation2 + $0x170] sm:$0xff]
      %v518 = vld [vmem:[%s3] sm:$0xff]
      %v520 = vsel %vm411, %v486, 0
      %v523 = vsel %vm411, %v487, 0
      %v526 = vsel %vm411, %v488, 0
      %v529 = vsel %vm411, %v489, 0
      %v532 = vsel %vm411, %v490, 0
      %v535 = vsel %vm411, %v491, 0
      %v538 = vsel %vm411, %v492, 0
      %v541 = vsel %vm411, %v493, 0
      %v544 = vsel %vm411, %v494, 0
      %v547 = vsel %vm411, %v495, 0
      %v550 = vsel %vm411, %v496, 0
      %v553 = vsel %vm411, %v497, 0
      %v556 = vsel %vm411, %v498, 0
      %v559 = vsel %vm411, %v499, 0
      %v562 = vsel %vm411, %v500, 0
      %v565 = vsel %vm411, %v501, 0
      %v568 = vsel %vm411, %v502, 0
      %v571 = vsel %vm411, %v503, 0
      %v574 = vsel %vm411, %v504, 0
      %v577 = vsel %vm411, %v505, 0
      %v580 = vsel %vm411, %v506, 0
      %v583 = vsel %vm411, %v507, 0
      %v586 = vsel %vm411, %v508, 0
      %v589 = vsel %vm411, %v509, 0
      %v592 = vsel %vm411, %v510, 0
      %v595 = vsel %vm411, %v511, 0
      %v598 = vsel %vm411, %v512, 0
      %v601 = vsel %vm411, %v513, 0
      %v604 = vsel %vm411, %v514, 0
      %v607 = vsel %vm411, %v515, 0
      %v610 = vsel %vm411, %v516, 0
      %v613 = vsel %vm411, %v517, 0
      %615 = vmatprep.subr.mxu0 0.0
      %616 = vmatpush1.msra.mxu0 0.0
      %617 = vmatprep.subr.mxu0 0.0
      %618 = vmatpush1.msra.mxu0 0.0
      %619 = vmatprep.subr.mxu0 0.0
      %620 = vmatpush1.msra.mxu0 0.0
      %621 = vmatprep.subr.mxu0 0.0
      %622 = vmatpush1.msra.mxu0 0.0
      %623 = vmatprep.subr.mxu0 0.0
      %624 = vmatpush1.msra.mxu0 0.0
      %625 = vmatprep.subr.mxu0 0.0
      %626 = vmatpush1.msra.mxu0 0.0
      %627 = vmatprep.subr.mxu0 0.0
      %628 = vmatpush1.msra.mxu0 0.0
      %629 = vmatprep.subr.mxu0 0.0
      %630 = vmatpush1.msra.mxu0 0.0
      %631 = vmatprep.subr.mxu0 0.0
      %632 = vmatpush1.msra.mxu0 0.0
      %633 = vmatprep.subr.mxu0 0.0
      %634 = vmatpush1.msra.mxu0 0.0
      %635 = vmatprep.subr.mxu0 0.0
      %636 = vmatpush1.msra.mxu0 0.0
      %637 = vmatprep.subr.mxu0 0.0
      %638 = vmatpush1.msra.mxu0 0.0
      %639 = vmatprep.subr.mxu0 0.0
      %640 = vmatpush1.msra.mxu0 0.0
      %641 = vmatprep.subr.mxu0 0.0
      %642 = vmatpush1.msra.mxu0 0.0
      %643 = vmatprep.subr.mxu0 0.0
      %644 = vmatpush1.msra.mxu0 0.0
      %645 = vmatprep.subr.mxu0 0.0
      %646 = vmatpush1.msra.mxu0 %v518
      %647 = vmatprep.subr.mxu0 0.0
      %648 = vmatpush2.msra.mxu0 0.0
      %649 = vmatprep.subr.mxu0 0.0
      %650 = vmatpush2.msra.mxu0 0.0
      %651 = vmatprep.subr.mxu0 0.0
      %652 = vmatpush2.msra.mxu0 0.0
      %653 = vmatprep.subr.mxu0 0.0
      %654 = vmatpush2.msra.mxu0 0.0
      %655 = vmatprep.subr.mxu0 0.0
      %656 = vmatpush2.msra.mxu0 0.0
      %657 = vmatprep.subr.mxu0 0.0
      %658 = vmatpush2.msra.mxu0 0.0
      %659 = vmatprep.subr.mxu0 0.0
      %660 = vmatpush2.msra.mxu0 0.0
      %661 = vmatprep.subr.mxu0 0.0
      %662 = vmatpush2.msra.mxu0 0.0
      %663 = vmatprep.subr.mxu0 0.0
      %664 = vmatpush2.msra.mxu0 0.0
      %665 = vmatprep.subr.mxu0 0.0
      %666 = vmatpush2.msra.mxu0 0.0
      %667 = vmatprep.subr.mxu0 0.0
      %668 = vmatpush2.msra.mxu0 0.0
      %669 = vmatprep.subr.mxu0 0.0
      %670 = vmatpush2.msra.mxu0 0.0
      %671 = vmatprep.subr.mxu0 0.0
      %672 = vmatpush2.msra.mxu0 0.0
      %673 = vmatprep.subr.mxu0 0.0
      %674 = vmatpush2.msra.mxu0 0.0
      %675 = vmatprep.subr.mxu0 0.0
      %676 = vmatpush2.msra.mxu0 0.0
      %677 = vmatprep.subr.mxu0 0.0
      %678 = vmatpush2.msra.mxu0 0.0
      %679 = vmatprep.mubr.f32.mxu0 0.0
      %680 = vmatmul.mubr.f32.gmra.mxu0 %v520
      %v681 = vpop.f32.mrf.mxu0
      %v682 = vadd.f32 0.0, %v681
      %v683 = vpop.f32.mrf.mxu0
      %684 = vmatprep.mubr.f32.mxu0 0.0
      %685 = vmatmul.mubr.f32.gmra.mxu0 %v523
      %v686 = vpop.f32.mrf.mxu0
      %v687 = vadd.f32 0.0, %v686
      %v688 = vpop.f32.mrf.mxu0
      %689 = vmatprep.mubr.f32.mxu0 0.0
      %690 = vmatmul.mubr.f32.gmra.mxu0 %v526
      %v691 = vpop.f32.mrf.mxu0
      %v692 = vadd.f32 0.0, %v691
      %v693 = vpop.f32.mrf.mxu0
      %694 = vmatprep.mubr.f32.mxu0 0.0
      %695 = vmatmul.mubr.f32.gmra.mxu0 %v529
      %v696 = vpop.f32.mrf.mxu0
      %v697 = vadd.f32 0.0, %v696
      %v698 = vpop.f32.mrf.mxu0
      %699 = vmatprep.mubr.f32.mxu0 0.0
      %700 = vmatmul.mubr.f32.gmra.mxu0 %v532
      %v701 = vpop.f32.mrf.mxu0
      %v702 = vadd.f32 0.0, %v701
      %v703 = vpop.f32.mrf.mxu0
      %704 = vmatprep.mubr.f32.mxu0 0.0
      %705 = vmatmul.mubr.f32.gmra.mxu0 %v535
      %v706 = vpop.f32.mrf.mxu0
      %v707 = vadd.f32 0.0, %v706
      %v708 = vpop.f32.mrf.mxu0
      %709 = vmatprep.mubr.f32.mxu0 0.0
      %710 = vmatmul.mubr.f32.gmra.mxu0 %v538
      %v711 = vpop.f32.mrf.mxu0
      %v712 = vadd.f32 0.0, %v711
      %v713 = vpop.f32.mrf.mxu0
      %714 = vmatprep.mubr.f32.mxu0 0.0
      %715 = vmatmul.mubr.f32.gmra.mxu0 %v541
      %v716 = vpop.f32.mrf.mxu0
      %v717 = vadd.f32 0.0, %v716
      %v718 = vpop.f32.mrf.mxu0
      %719 = vmatprep.mubr.f32.mxu0 0.0
      %720 = vmatmul.mubr.f32.gmra.mxu0 %v544
      %v721 = vpop.f32.mrf.mxu0
      %v722 = vadd.f32 0.0, %v721
      %v723 = vpop.f32.mrf.mxu0
      %724 = vmatprep.mubr.f32.mxu0 0.0
      %725 = vmatmul.mubr.f32.gmra.mxu0 %v547
      %v726 = vpop.f32.mrf.mxu0
      %v727 = vadd.f32 0.0, %v726
      %v728 = vpop.f32.mrf.mxu0
      %729 = vmatprep.mubr.f32.mxu0 0.0
      %730 = vmatmul.mubr.f32.gmra.mxu0 %v550
      %v731 = vpop.f32.mrf.mxu0
      %v732 = vadd.f32 0.0, %v731
      %v733 = vpop.f32.mrf.mxu0
      %734 = vmatprep.mubr.f32.mxu0 0.0
      %735 = vmatmul.mubr.f32.gmra.mxu0 %v553
      %v736 = vpop.f32.mrf.mxu0
      %v737 = vadd.f32 0.0, %v736
      %v738 = vpop.f32.mrf.mxu0
      %739 = vmatprep.mubr.f32.mxu0 0.0
      %740 = vmatmul.mubr.f32.gmra.mxu0 %v556
      %v741 = vpop.f32.mrf.mxu0
      %v742 = vadd.f32 0.0, %v741
      %v743 = vpop.f32.mrf.mxu0
      %744 = vmatprep.mubr.f32.mxu0 0.0
      %745 = vmatmul.mubr.f32.gmra.mxu0 %v559
      %v746 = vpop.f32.mrf.mxu0
      %v747 = vadd.f32 0.0, %v746
      %v748 = vpop.f32.mrf.mxu0
      %749 = vmatprep.mubr.f32.mxu0 0.0
      %750 = vmatmul.mubr.f32.gmra.mxu0 %v562
      %v751 = vpop.f32.mrf.mxu0
      %v752 = vadd.f32 0.0, %v751
      %v753 = vpop.f32.mrf.mxu0
      %754 = vmatprep.mubr.f32.mxu0 0.0
      %755 = vmatmul.mubr.f32.gmra.mxu0 %v565
      %v756 = vpop.f32.mrf.mxu0
      %v757 = vadd.f32 0.0, %v756
      %v758 = vpop.f32.mrf.mxu0
      %759 = vmatprep.mubr.f32.mxu0 0.0
      %760 = vmatmul.mubr.f32.gmra.mxu0 %v568
      %v761 = vpop.f32.mrf.mxu0
      %v762 = vadd.f32 0.0, %v761
      %v763 = vpop.f32.mrf.mxu0
      %764 = vmatprep.mubr.f32.mxu0 0.0
      %765 = vmatmul.mubr.f32.gmra.mxu0 %v571
      %v766 = vpop.f32.mrf.mxu0
      %v767 = vadd.f32 0.0, %v766
      %v768 = vpop.f32.mrf.mxu0
      %769 = vmatprep.mubr.f32.mxu0 0.0
      %770 = vmatmul.mubr.f32.gmra.mxu0 %v574
      %v771 = vpop.f32.mrf.mxu0
      %v772 = vadd.f32 0.0, %v771
      %v773 = vpop.f32.mrf.mxu0
      %774 = vmatprep.mubr.f32.mxu0 0.0
      %775 = vmatmul.mubr.f32.gmra.mxu0 %v577
      %v776 = vpop.f32.mrf.mxu0
      %v777 = vadd.f32 0.0, %v776
      %v778 = vpop.f32.mrf.mxu0
      %779 = vmatprep.mubr.f32.mxu0 0.0
      %780 = vmatmul.mubr.f32.gmra.mxu0 %v580
      %v781 = vpop.f32.mrf.mxu0
      %v782 = vadd.f32 0.0, %v781
      %v783 = vpop.f32.mrf.mxu0
      %784 = vmatprep.mubr.f32.mxu0 0.0
      %785 = vmatmul.mubr.f32.gmra.mxu0 %v583
      %v786 = vpop.f32.mrf.mxu0
      %v787 = vadd.f32 0.0, %v786
      %v788 = vpop.f32.mrf.mxu0
      %789 = vmatprep.mubr.f32.mxu0 0.0
      %790 = vmatmul.mubr.f32.gmra.mxu0 %v586
      %v791 = vpop.f32.mrf.mxu0
      %v792 = vadd.f32 0.0, %v791
      %v793 = vpop.f32.mrf.mxu0
      %794 = vmatprep.mubr.f32.mxu0 0.0
      %795 = vmatmul.mubr.f32.gmra.mxu0 %v589
      %v796 = vpop.f32.mrf.mxu0
      %v797 = vadd.f32 0.0, %v796
      %v798 = vpop.f32.mrf.mxu0
      %799 = vmatprep.mubr.f32.mxu0 0.0
      %800 = vmatmul.mubr.f32.gmra.mxu0 %v592
      %v801 = vpop.f32.mrf.mxu0
      %v802 = vadd.f32 0.0, %v801
      %v803 = vpop.f32.mrf.mxu0
      %804 = vmatprep.mubr.f32.mxu0 0.0
      %805 = vmatmul.mubr.f32.gmra.mxu0 %v595
      %v806 = vpop.f32.mrf.mxu0
      %v807 = vadd.f32 0.0, %v806
      %v808 = vpop.f32.mrf.mxu0
      %809 = vmatprep.mubr.f32.mxu0 0.0
      %810 = vmatmul.mubr.f32.gmra.mxu0 %v598
      %v811 = vpop.f32.mrf.mxu0
      %v812 = vadd.f32 0.0, %v811
      %v813 = vpop.f32.mrf.mxu0
      %814 = vmatprep.mubr.f32.mxu0 0.0
      %815 = vmatmul.mubr.f32.gmra.mxu0 %v601
      %v816 = vpop.f32.mrf.mxu0
      %v817 = vadd.f32 0.0, %v816
      %v818 = vpop.f32.mrf.mxu0
      %819 = vmatprep.mubr.f32.mxu0 0.0
      %820 = vmatmul.mubr.f32.gmra.mxu0 %v604
      %v821 = vpop.f32.mrf.mxu0
      %v822 = vadd.f32 0.0, %v821
      %v823 = vpop.f32.mrf.mxu0
      %824 = vmatprep.mubr.f32.mxu0 0.0
      %825 = vmatmul.mubr.f32.gmra.mxu0 %v607
      %v826 = vpop.f32.mrf.mxu0
      %v827 = vadd.f32 0.0, %v826
      %v828 = vpop.f32.mrf.mxu0
      %829 = vmatprep.mubr.f32.mxu0 0.0
      %830 = vmatmul.mubr.f32.gmra.mxu0 %v610
      %v831 = vpop.f32.mrf.mxu0
      %v832 = vadd.f32 0.0, %v831
      %v833 = vpop.f32.mrf.mxu0
      %834 = vmatprep.mubr.f32.mxu0 0.0
      %835 = vmatmul.mubr.f32.gmra.mxu0 %v613
      %v836 = vpop.f32.mrf.mxu0
      %v837 = vadd.f32 0.0, %v836
      %v838 = vpop.f32.mrf.mxu0
      %839 = vdwg.mxu0
      %840 = vst.msk [vmem:[#allocation3] sm:$0xff] %vm411, %v682
      %841 = vst.msk [vmem:[#allocation3 + $0x8] sm:$0xff] %vm411, %v687
      %842 = vst.msk [vmem:[#allocation3 + $0x10] sm:$0xff] %vm411, %v692
      %843 = vst.msk [vmem:[#allocation3 + $0x18] sm:$0xff] %vm411, %v697
      %844 = vst.msk [vmem:[#allocation3 + $0x20] sm:$0xff] %vm411, %v702
      %845 = vst.msk [vmem:[#allocation3 + $0x28] sm:$0xff] %vm411, %v707
      %846 = vst.msk [vmem:[#allocation3 + $0x30] sm:$0xff] %vm411, %v712
      %847 = vst.msk [vmem:[#allocation3 + $0x38] sm:$0xff] %vm411, %v717
      %848 = vst.msk [vmem:[#allocation3 + $0x40] sm:$0xff] %vm411, %v722
      %849 = vst.msk [vmem:[#allocation3 + $0x48] sm:$0xff] %vm411, %v727
      %850 = vst.msk [vmem:[#allocation3 + $0x50] sm:$0xff] %vm411, %v732
      %851 = vst.msk [vmem:[#allocation3 + $0x58] sm:$0xff] %vm411, %v737
      %852 = vst.msk [vmem:[#allocation3 + $0x60] sm:$0xff] %vm411, %v742
      %853 = vst.msk [vmem:[#allocation3 + $0x68] sm:$0xff] %vm411, %v747
      %854 = vst.msk [vmem:[#allocation3 + $0x70] sm:$0xff] %vm411, %v752
      %855 = vst.msk [vmem:[#allocation3 + $0x78] sm:$0xff] %vm411, %v757
      %856 = vst.msk [vmem:[#allocation3 + $0x80] sm:$0xff] %vm411, %v762
      %857 = vst.msk [vmem:[#allocation3 + $0x88] sm:$0xff] %vm411, %v767
      %858 = vst.msk [vmem:[#allocation3 + $0x90] sm:$0xff] %vm411, %v772
      %859 = vst.msk [vmem:[#allocation3 + $0x98] sm:$0xff] %vm411, %v777
      %860 = vst.msk [vmem:[#allocation3 + $0xa0] sm:$0xff] %vm411, %v782
      %861 = vst.msk [vmem:[#allocation3 + $0xa8] sm:$0xff] %vm411, %v787
      %862 = vst.msk [vmem:[#allocation3 + $0xb0] sm:$0xff] %vm411, %v792
      %863 = vst.msk [vmem:[#allocation3 + $0xb8] sm:$0xff] %vm411, %v797
      %864 = vst.msk [vmem:[#allocation3 + $0xc0] sm:$0xff] %vm411, %v802
      %865 = vst.msk [vmem:[#allocation3 + $0xc8] sm:$0xff] %vm411, %v807
      %866 = vst.msk [vmem:[#allocation3 + $0xd0] sm:$0xff] %vm411, %v812
      %867 = vst.msk [vmem:[#allocation3 + $0xd8] sm:$0xff] %vm411, %v817
      %868 = vst.msk [vmem:[#allocation3 + $0xe0] sm:$0xff] %vm411, %v822
      %869 = vst.msk [vmem:[#allocation3 + $0xe8] sm:$0xff] %vm411, %v827
      %870 = vst.msk [vmem:[#allocation3 + $0xf0] sm:$0xff] %vm411, %v832
      %871 = vst.msk [vmem:[#allocation3 + $0xf8] sm:$0xff] %vm411, %v837
      %v872 = vld [vmem:[#allocation2 + $0x1] sm:$0xff]
      %v873 = vld [vmem:[#allocation2 + $0x9] sm:$0xff]
      %v874 = vld [vmem:[#allocation2 + $0x19] sm:$0xff]
      %v875 = vld [vmem:[#allocation2 + $0x21] sm:$0xff]
      %v876 = vld [vmem:[#allocation2 + $0x31] sm:$0xff]
      %v877 = vld [vmem:[#allocation2 + $0x39] sm:$0xff]
      %v878 = vld [vmem:[#allocation2 + $0x49] sm:$0xff]
      %v879 = vld [vmem:[#allocation2 + $0x51] sm:$0xff]
      %v880 = vld [vmem:[#allocation2 + $0x61] sm:$0xff]
      %v881 = vld [vmem:[#allocation2 + $0x69] sm:$0xff]
      %v882 = vld [vmem:[#allocation2 + $0x79] sm:$0xff]
      %v883 = vld [vmem:[#allocation2 + $0x81] sm:$0xff]
      %v884 = vld [vmem:[#allocation2 + $0x91] sm:$0xff]
      %v885 = vld [vmem:[#allocation2 + $0x99] sm:$0xff]
      %v886 = vld [vmem:[#allocation2 + $0xa9] sm:$0xff]
      %v887 = vld [vmem:[#allocation2 + $0xb1] sm:$0xff]
      %v888 = vld [vmem:[#allocation2 + $0xc1] sm:$0xff]
      %v889 = vld [vmem:[#allocation2 + $0xc9] sm:$0xff]
      %v890 = vld [vmem:[#allocation2 + $0xd9] sm:$0xff]
      %v891 = vld [vmem:[#allocation2 + $0xe1] sm:$0xff]
      %v892 = vld [vmem:[#allocation2 + $0xf1] sm:$0xff]
      %v893 = vld [vmem:[#allocation2 + $0xf9] sm:$0xff]
      %v894 = vld [vmem:[#allocation2 + $0x109] sm:$0xff]
      %v895 = vld [vmem:[#allocation2 + $0x111] sm:$0xff]
      %v896 = vld [vmem:[#allocation2 + $0x121] sm:$0xff]
      %v897 = vld [vmem:[#allocation2 + $0x129] sm:$0xff]
      %v898 = vld [vmem:[#allocation2 + $0x139] sm:$0xff]
      %v899 = vld [vmem:[#allocation2 + $0x141] sm:$0xff]
      %v900 = vld [vmem:[#allocation2 + $0x151] sm:$0xff]
      %v901 = vld [vmem:[#allocation2 + $0x159] sm:$0xff]
      %v902 = vld [vmem:[#allocation2 + $0x169] sm:$0xff]
      %v903 = vld [vmem:[#allocation2 + $0x171] sm:$0xff]
      %s904 = scalar_lea.vmem %s3, 8
      %v905 = vld [vmem:[%s904] sm:$0xff]
      %v907 = vsel %vm411, %v872, 0
      %v910 = vsel %vm411, %v873, 0
      %v913 = vsel %vm411, %v874, 0
      %v916 = vsel %vm411, %v875, 0
      %v919 = vsel %vm411, %v876, 0
      %v922 = vsel %vm411, %v877, 0
      %v925 = vsel %vm411, %v878, 0
      %v928 = vsel %vm411, %v879, 0
      %v931 = vsel %vm411, %v880, 0
      %v934 = vsel %vm411, %v881, 0
      %v937 = vsel %vm411, %v882, 0
      %v940 = vsel %vm411, %v883, 0
      %v943 = vsel %vm411, %v884, 0
      %v946 = vsel %vm411, %v885, 0
      %v949 = vsel %vm411, %v886, 0
      %v952 = vsel %vm411, %v887, 0
      %v955 = vsel %vm411, %v888, 0
      %v958 = vsel %vm411, %v889, 0
      %v961 = vsel %vm411, %v890, 0
      %v964 = vsel %vm411, %v891, 0
      %v967 = vsel %vm411, %v892, 0
      %v970 = vsel %vm411, %v893, 0
      %v973 = vsel %vm411, %v894, 0
      %v976 = vsel %vm411, %v895, 0
      %v979 = vsel %vm411, %v896, 0
      %v982 = vsel %vm411, %v897, 0
      %v985 = vsel %vm411, %v898, 0
      %v988 = vsel %vm411, %v899, 0
      %v991 = vsel %vm411, %v900, 0
      %v994 = vsel %vm411, %v901, 0
      %v997 = vsel %vm411, %v902, 0
      %v1000 = vsel %vm411, %v903, 0
      %1002 = vmatprep.subr.mxu0 0.0
      %1003 = vmatpush1.msra.mxu0 0.0
      %1004 = vmatprep.subr.mxu0 0.0
      %1005 = vmatpush1.msra.mxu0 0.0
      %1006 = vmatprep.subr.mxu0 0.0
      %1007 = vmatpush1.msra.mxu0 0.0
      %1008 = vmatprep.subr.mxu0 0.0
      %1009 = vmatpush1.msra.mxu0 0.0
      %1010 = vmatprep.subr.mxu0 0.0
      %1011 = vmatpush1.msra.mxu0 0.0
      %1012 = vmatprep.subr.mxu0 0.0
      %1013 = vmatpush1.msra.mxu0 0.0
      %1014 = vmatprep.subr.mxu0 0.0
      %1015 = vmatpush1.msra.mxu0 0.0
      %1016 = vmatprep.subr.mxu0 0.0
      %1017 = vmatpush1.msra.mxu0 0.0
      %1018 = vmatprep.subr.mxu0 0.0
      %1019 = vmatpush1.msra.mxu0 0.0
      %1020 = vmatprep.subr.mxu0 0.0
      %1021 = vmatpush1.msra.mxu0 0.0
      %1022 = vmatprep.subr.mxu0 0.0
      %1023 = vmatpush1.msra.mxu0 0.0
      %1024 = vmatprep.subr.mxu0 0.0
      %1025 = vmatpush1.msra.mxu0 0.0
      %1026 = vmatprep.subr.mxu0 0.0
      %1027 = vmatpush1.msra.mxu0 0.0
      %1028 = vmatprep.subr.mxu0 0.0
      %1029 = vmatpush1.msra.mxu0 0.0
      %1030 = vmatprep.subr.mxu0 0.0
      %1031 = vmatpush1.msra.mxu0 0.0
      %1032 = vmatprep.subr.mxu0 0.0
      %1033 = vmatpush1.msra.mxu0 %v905
      %1034 = vmatprep.subr.mxu0 0.0
      %1035 = vmatpush2.msra.mxu0 0.0
      %1036 = vmatprep.subr.mxu0 0.0
      %1037 = vmatpush2.msra.mxu0 0.0
      %1038 = vmatprep.subr.mxu0 0.0
      %1039 = vmatpush2.msra.mxu0 0.0
      %1040 = vmatprep.subr.mxu0 0.0
      %1041 = vmatpush2.msra.mxu0 0.0
      %1042 = vmatprep.subr.mxu0 0.0
      %1043 = vmatpush2.msra.mxu0 0.0
      %1044 = vmatprep.subr.mxu0 0.0
      %1045 = vmatpush2.msra.mxu0 0.0
      %1046 = vmatprep.subr.mxu0 0.0
      %1047 = vmatpush2.msra.mxu0 0.0
      %1048 = vmatprep.subr.mxu0 0.0
      %1049 = vmatpush2.msra.mxu0 0.0
      %1050 = vmatprep.subr.mxu0 0.0
      %1051 = vmatpush2.msra.mxu0 0.0
      %1052 = vmatprep.subr.mxu0 0.0
      %1053 = vmatpush2.msra.mxu0 0.0
      %1054 = vmatprep.subr.mxu0 0.0
      %1055 = vmatpush2.msra.mxu0 0.0
      %1056 = vmatprep.subr.mxu0 0.0
      %1057 = vmatpush2.msra.mxu0 0.0
      %1058 = vmatprep.subr.mxu0 0.0
      %1059 = vmatpush2.msra.mxu0 0.0
      %1060 = vmatprep.subr.mxu0 0.0
      %1061 = vmatpush2.msra.mxu0 0.0
      %1062 = vmatprep.subr.mxu0 0.0
      %1063 = vmatpush2.msra.mxu0 0.0
      %1064 = vmatprep.subr.mxu0 0.0
      %1065 = vmatpush2.msra.mxu0 0.0
      %1066 = vmatprep.mubr.f32.mxu0 0.0
      %1067 = vmatmul.mubr.f32.gmra.mxu0 %v907
      %v1068 = vpop.f32.mrf.mxu0
      %v1069 = vadd.f32 0.0, %v1068
      %v1070 = vpop.f32.mrf.mxu0
      %1071 = vmatprep.mubr.f32.mxu0 0.0
      %1072 = vmatmul.mubr.f32.gmra.mxu0 %v910
      %v1073 = vpop.f32.mrf.mxu0
      %v1074 = vadd.f32 0.0, %v1073
      %v1075 = vpop.f32.mrf.mxu0
      %1076 = vmatprep.mubr.f32.mxu0 0.0
      %1077 = vmatmul.mubr.f32.gmra.mxu0 %v913
      %v1078 = vpop.f32.mrf.mxu0
      %v1079 = vadd.f32 0.0, %v1078
      %v1080 = vpop.f32.mrf.mxu0
      %1081 = vmatprep.mubr.f32.mxu0 0.0
      %1082 = vmatmul.mubr.f32.gmra.mxu0 %v916
      %v1083 = vpop.f32.mrf.mxu0
      %v1084 = vadd.f32 0.0, %v1083
      %v1085 = vpop.f32.mrf.mxu0
      %1086 = vmatprep.mubr.f32.mxu0 0.0
      %1087 = vmatmul.mubr.f32.gmra.mxu0 %v919
      %v1088 = vpop.f32.mrf.mxu0
      %v1089 = vadd.f32 0.0, %v1088
      %v1090 = vpop.f32.mrf.mxu0
      %1091 = vmatprep.mubr.f32.mxu0 0.0
      %1092 = vmatmul.mubr.f32.gmra.mxu0 %v922
      %v1093 = vpop.f32.mrf.mxu0
      %v1094 = vadd.f32 0.0, %v1093
      %v1095 = vpop.f32.mrf.mxu0
      %1096 = vmatprep.mubr.f32.mxu0 0.0
      %1097 = vmatmul.mubr.f32.gmra.mxu0 %v925
      %v1098 = vpop.f32.mrf.mxu0
      %v1099 = vadd.f32 0.0, %v1098
      %v1100 = vpop.f32.mrf.mxu0
      %1101 = vmatprep.mubr.f32.mxu0 0.0
      %1102 = vmatmul.mubr.f32.gmra.mxu0 %v928
      %v1103 = vpop.f32.mrf.mxu0
      %v1104 = vadd.f32 0.0, %v1103
      %v1105 = vpop.f32.mrf.mxu0
      %1106 = vmatprep.mubr.f32.mxu0 0.0
      %1107 = vmatmul.mubr.f32.gmra.mxu0 %v931
      %v1108 = vpop.f32.mrf.mxu0
      %v1109 = vadd.f32 0.0, %v1108
      %v1110 = vpop.f32.mrf.mxu0
      %1111 = vmatprep.mubr.f32.mxu0 0.0
      %1112 = vmatmul.mubr.f32.gmra.mxu0 %v934
      %v1113 = vpop.f32.mrf.mxu0
      %v1114 = vadd.f32 0.0, %v1113
      %v1115 = vpop.f32.mrf.mxu0
      %1116 = vmatprep.mubr.f32.mxu0 0.0
      %1117 = vmatmul.mubr.f32.gmra.mxu0 %v937
      %v1118 = vpop.f32.mrf.mxu0
      %v1119 = vadd.f32 0.0, %v1118
      %v1120 = vpop.f32.mrf.mxu0
      %1121 = vmatprep.mubr.f32.mxu0 0.0
      %1122 = vmatmul.mubr.f32.gmra.mxu0 %v940
      %v1123 = vpop.f32.mrf.mxu0
      %v1124 = vadd.f32 0.0, %v1123
      %v1125 = vpop.f32.mrf.mxu0
      %1126 = vmatprep.mubr.f32.mxu0 0.0
      %1127 = vmatmul.mubr.f32.gmra.mxu0 %v943
      %v1128 = vpop.f32.mrf.mxu0
      %v1129 = vadd.f32 0.0, %v1128
      %v1130 = vpop.f32.mrf.mxu0
      %1131 = vmatprep.mubr.f32.mxu0 0.0
      %1132 = vmatmul.mubr.f32.gmra.mxu0 %v946
      %v1133 = vpop.f32.mrf.mxu0
      %v1134 = vadd.f32 0.0, %v1133
      %v1135 = vpop.f32.mrf.mxu0
      %1136 = vmatprep.mubr.f32.mxu0 0.0
      %1137 = vmatmul.mubr.f32.gmra.mxu0 %v949
      %v1138 = vpop.f32.mrf.mxu0
      %v1139 = vadd.f32 0.0, %v1138
      %v1140 = vpop.f32.mrf.mxu0
      %1141 = vmatprep.mubr.f32.mxu0 0.0
      %1142 = vmatmul.mubr.f32.gmra.mxu0 %v952
      %v1143 = vpop.f32.mrf.mxu0
      %v1144 = vadd.f32 0.0, %v1143
      %v1145 = vpop.f32.mrf.mxu0
      %1146 = vmatprep.mubr.f32.mxu0 0.0
      %1147 = vmatmul.mubr.f32.gmra.mxu0 %v955
      %v1148 = vpop.f32.mrf.mxu0
      %v1149 = vadd.f32 0.0, %v1148
      %v1150 = vpop.f32.mrf.mxu0
      %1151 = vmatprep.mubr.f32.mxu0 0.0
      %1152 = vmatmul.mubr.f32.gmra.mxu0 %v958
      %v1153 = vpop.f32.mrf.mxu0
      %v1154 = vadd.f32 0.0, %v1153
      %v1155 = vpop.f32.mrf.mxu0
      %1156 = vmatprep.mubr.f32.mxu0 0.0
      %1157 = vmatmul.mubr.f32.gmra.mxu0 %v961
      %v1158 = vpop.f32.mrf.mxu0
      %v1159 = vadd.f32 0.0, %v1158
      %v1160 = vpop.f32.mrf.mxu0
      %1161 = vmatprep.mubr.f32.mxu0 0.0
      %1162 = vmatmul.mubr.f32.gmra.mxu0 %v964
      %v1163 = vpop.f32.mrf.mxu0
      %v1164 = vadd.f32 0.0, %v1163
      %v1165 = vpop.f32.mrf.mxu0
      %1166 = vmatprep.mubr.f32.mxu0 0.0
      %1167 = vmatmul.mubr.f32.gmra.mxu0 %v967
      %v1168 = vpop.f32.mrf.mxu0
      %v1169 = vadd.f32 0.0, %v1168
      %v1170 = vpop.f32.mrf.mxu0
      %1171 = vmatprep.mubr.f32.mxu0 0.0
      %1172 = vmatmul.mubr.f32.gmra.mxu0 %v970
      %v1173 = vpop.f32.mrf.mxu0
      %v1174 = vadd.f32 0.0, %v1173
      %v1175 = vpop.f32.mrf.mxu0
      %1176 = vmatprep.mubr.f32.mxu0 0.0
      %1177 = vmatmul.mubr.f32.gmra.mxu0 %v973
      %v1178 = vpop.f32.mrf.mxu0
      %v1179 = vadd.f32 0.0, %v1178
      %v1180 = vpop.f32.mrf.mxu0
      %1181 = vmatprep.mubr.f32.mxu0 0.0
      %1182 = vmatmul.mubr.f32.gmra.mxu0 %v976
      %v1183 = vpop.f32.mrf.mxu0
      %v1184 = vadd.f32 0.0, %v1183
      %v1185 = vpop.f32.mrf.mxu0
      %1186 = vmatprep.mubr.f32.mxu0 0.0
      %1187 = vmatmul.mubr.f32.gmra.mxu0 %v979
      %v1188 = vpop.f32.mrf.mxu0
      %v1189 = vadd.f32 0.0, %v1188
      %v1190 = vpop.f32.mrf.mxu0
      %1191 = vmatprep.mubr.f32.mxu0 0.0
      %1192 = vmatmul.mubr.f32.gmra.mxu0 %v982
      %v1193 = vpop.f32.mrf.mxu0
      %v1194 = vadd.f32 0.0, %v1193
      %v1195 = vpop.f32.mrf.mxu0
      %1196 = vmatprep.mubr.f32.mxu0 0.0
      %1197 = vmatmul.mubr.f32.gmra.mxu0 %v985
      %v1198 = vpop.f32.mrf.mxu0
      %v1199 = vadd.f32 0.0, %v1198
      %v1200 = vpop.f32.mrf.mxu0
      %1201 = vmatprep.mubr.f32.mxu0 0.0
      %1202 = vmatmul.mubr.f32.gmra.mxu0 %v988
      %v1203 = vpop.f32.mrf.mxu0
      %v1204 = vadd.f32 0.0, %v1203
      %v1205 = vpop.f32.mrf.mxu0
      %1206 = vmatprep.mubr.f32.mxu0 0.0
      %1207 = vmatmul.mubr.f32.gmra.mxu0 %v991
      %v1208 = vpop.f32.mrf.mxu0
      %v1209 = vadd.f32 0.0, %v1208
      %v1210 = vpop.f32.mrf.mxu0
      %1211 = vmatprep.mubr.f32.mxu0 0.0
      %1212 = vmatmul.mubr.f32.gmra.mxu0 %v994
      %v1213 = vpop.f32.mrf.mxu0
      %v1214 = vadd.f32 0.0, %v1213
      %v1215 = vpop.f32.mrf.mxu0
      %1216 = vmatprep.mubr.f32.mxu0 0.0
      %1217 = vmatmul.mubr.f32.gmra.mxu0 %v997
      %v1218 = vpop.f32.mrf.mxu0
      %v1219 = vadd.f32 0.0, %v1218
      %v1220 = vpop.f32.mrf.mxu0
      %1221 = vmatprep.mubr.f32.mxu0 0.0
      %1222 = vmatmul.mubr.f32.gmra.mxu0 %v1000
      %v1223 = vpop.f32.mrf.mxu0
      %v1224 = vadd.f32 0.0, %v1223
      %v1225 = vpop.f32.mrf.mxu0
      %1226 = vdwg.mxu0
      %v1227 = vld [vmem:[#allocation3] sm:$0xff]
      %v1228 = vld [vmem:[#allocation3 + $0x8] sm:$0xff]
      %v1229 = vld [vmem:[#allocation3 + $0x10] sm:$0xff]
      %v1230 = vld [vmem:[#allocation3 + $0x18] sm:$0xff]
      %v1231 = vld [vmem:[#allocation3 + $0x20] sm:$0xff]
      %v1232 = vld [vmem:[#allocation3 + $0x28] sm:$0xff]
      %v1233 = vld [vmem:[#allocation3 + $0x30] sm:$0xff]
      %v1234 = vld [vmem:[#allocation3 + $0x38] sm:$0xff]
      %v1235 = vld [vmem:[#allocation3 + $0x40] sm:$0xff]
      %v1236 = vld [vmem:[#allocation3 + $0x48] sm:$0xff]
      %v1237 = vld [vmem:[#allocation3 + $0x50] sm:$0xff]
      %v1238 = vld [vmem:[#allocation3 + $0x58] sm:$0xff]
      %v1239 = vld [vmem:[#allocation3 + $0x60] sm:$0xff]
      %v1240 = vld [vmem:[#allocation3 + $0x68] sm:$0xff]
      %v1241 = vld [vmem:[#allocation3 + $0x70] sm:$0xff]
      %v1242 = vld [vmem:[#allocation3 + $0x78] sm:$0xff]
      %v1243 = vld [vmem:[#allocation3 + $0x80] sm:$0xff]
      %v1244 = vld [vmem:[#allocation3 + $0x88] sm:$0xff]
      %v1245 = vld [vmem:[#allocation3 + $0x90] sm:$0xff]
      %v1246 = vld [vmem:[#allocation3 + $0x98] sm:$0xff]
      %v1247 = vld [vmem:[#allocation3 + $0xa0] sm:$0xff]
      %v1248 = vld [vmem:[#allocation3 + $0xa8] sm:$0xff]
      %v1249 = vld [vmem:[#allocation3 + $0xb0] sm:$0xff]
      %v1250 = vld [vmem:[#allocation3 + $0xb8] sm:$0xff]
      %v1251 = vld [vmem:[#allocation3 + $0xc0] sm:$0xff]
      %v1252 = vld [vmem:[#allocation3 + $0xc8] sm:$0xff]
      %v1253 = vld [vmem:[#allocation3 + $0xd0] sm:$0xff]
      %v1254 = vld [vmem:[#allocation3 + $0xd8] sm:$0xff]
      %v1255 = vld [vmem:[#allocation3 + $0xe0] sm:$0xff]
      %v1256 = vld [vmem:[#allocation3 + $0xe8] sm:$0xff]
      %v1257 = vld [vmem:[#allocation3 + $0xf0] sm:$0xff]
      %v1258 = vld [vmem:[#allocation3 + $0xf8] sm:$0xff]
      %v1259 = vadd.f32 %v1227, %v1069
      %v1260 = vadd.f32 %v1228, %v1074
      %v1261 = vadd.f32 %v1229, %v1079
      %v1262 = vadd.f32 %v1230, %v1084
      %v1263 = vadd.f32 %v1231, %v1089
      %v1264 = vadd.f32 %v1232, %v1094
      %v1265 = vadd.f32 %v1233, %v1099
      %v1266 = vadd.f32 %v1234, %v1104
      %v1267 = vadd.f32 %v1235, %v1109
      %v1268 = vadd.f32 %v1236, %v1114
      %v1269 = vadd.f32 %v1237, %v1119
      %v1270 = vadd.f32 %v1238, %v1124
      %v1271 = vadd.f32 %v1239, %v1129
      %v1272 = vadd.f32 %v1240, %v1134
      %v1273 = vadd.f32 %v1241, %v1139
      %v1274 = vadd.f32 %v1242, %v1144
      %v1275 = vadd.f32 %v1243, %v1149
      %v1276 = vadd.f32 %v1244, %v1154
      %v1277 = vadd.f32 %v1245, %v1159
      %v1278 = vadd.f32 %v1246, %v1164
      %v1279 = vadd.f32 %v1247, %v1169
      %v1280 = vadd.f32 %v1248, %v1174
      %v1281 = vadd.f32 %v1249, %v1179
      %v1282 = vadd.f32 %v1250, %v1184
      %v1283 = vadd.f32 %v1251, %v1189
      %v1284 = vadd.f32 %v1252, %v1194
      %v1285 = vadd.f32 %v1253, %v1199
      %v1286 = vadd.f32 %v1254, %v1204
      %v1287 = vadd.f32 %v1255, %v1209
      %v1288 = vadd.f32 %v1256, %v1214
      %v1289 = vadd.f32 %v1257, %v1219
      %v1290 = vadd.f32 %v1258, %v1224
      %1291 = vst.msk [vmem:[#allocation3] sm:$0xff] %vm411, %v1259
      %1292 = vst.msk [vmem:[#allocation3 + $0x8] sm:$0xff] %vm411, %v1260
      %1293 = vst.msk [vmem:[#allocation3 + $0x10] sm:$0xff] %vm411, %v1261
      %1294 = vst.msk [vmem:[#allocation3 + $0x18] sm:$0xff] %vm411, %v1262
      %1295 = vst.msk [vmem:[#allocation3 + $0x20] sm:$0xff] %vm411, %v1263
      %1296 = vst.msk [vmem:[#allocation3 + $0x28] sm:$0xff] %vm411, %v1264
      %1297 = vst.msk [vmem:[#allocation3 + $0x30] sm:$0xff] %vm411, %v1265
      %1298 = vst.msk [vmem:[#allocation3 + $0x38] sm:$0xff] %vm411, %v1266
      %1299 = vst.msk [vmem:[#allocation3 + $0x40] sm:$0xff] %vm411, %v1267
      %1300 = vst.msk [vmem:[#allocation3 + $0x48] sm:$0xff] %vm411, %v1268
      %1301 = vst.msk [vmem:[#allocation3 + $0x50] sm:$0xff] %vm411, %v1269
      %1302 = vst.msk [vmem:[#allocation3 + $0x58] sm:$0xff] %vm411, %v1270
      %1303 = vst.msk [vmem:[#allocation3 + $0x60] sm:$0xff] %vm411, %v1271
      %1304 = vst.msk [vmem:[#allocation3 + $0x68] sm:$0xff] %vm411, %v1272
      %1305 = vst.msk [vmem:[#allocation3 + $0x70] sm:$0xff] %vm411, %v1273
      %1306 = vst.msk [vmem:[#allocation3 + $0x78] sm:$0xff] %vm411, %v1274
      %1307 = vst.msk [vmem:[#allocation3 + $0x80] sm:$0xff] %vm411, %v1275
      %1308 = vst.msk [vmem:[#allocation3 + $0x88] sm:$0xff] %vm411, %v1276
      %1309 = vst.msk [vmem:[#allocation3 + $0x90] sm:$0xff] %vm411, %v1277
      %1310 = vst.msk [vmem:[#allocation3 + $0x98] sm:$0xff] %vm411, %v1278
      %1311 = vst.msk [vmem:[#allocation3 + $0xa0] sm:$0xff] %vm411, %v1279
      %1312 = vst.msk [vmem:[#allocation3 + $0xa8] sm:$0xff] %vm411, %v1280
      %1313 = vst.msk [vmem:[#allocation3 + $0xb0] sm:$0xff] %vm411, %v1281
      %1314 = vst.msk [vmem:[#allocation3 + $0xb8] sm:$0xff] %vm411, %v1282
      %1315 = vst.msk [vmem:[#allocation3 + $0xc0] sm:$0xff] %vm411, %v1283
      %1316 = vst.msk [vmem:[#allocation3 + $0xc8] sm:$0xff] %vm411, %v1284
      %1317 = vst.msk [vmem:[#allocation3 + $0xd0] sm:$0xff] %vm411, %v1285
      %1318 = vst.msk [vmem:[#allocation3 + $0xd8] sm:$0xff] %vm411, %v1286
      %1319 = vst.msk [vmem:[#allocation3 + $0xe0] sm:$0xff] %vm411, %v1287
      %1320 = vst.msk [vmem:[#allocation3 + $0xe8] sm:$0xff] %vm411, %v1288
      %1321 = vst.msk [vmem:[#allocation3 + $0xf0] sm:$0xff] %vm411, %v1289
      %1322 = vst.msk [vmem:[#allocation3 + $0xf8] sm:$0xff] %vm411, %v1290
      %v1323 = vld [vmem:[#allocation2 + $0x2] sm:$0xff]
      %v1324 = vld [vmem:[#allocation2 + $0xa] sm:$0xff]
      %v1325 = vld [vmem:[#allocation2 + $0x1a] sm:$0xff]
      %v1326 = vld [vmem:[#allocation2 + $0x22] sm:$0xff]
      %v1327 = vld [vmem:[#allocation2 + $0x32] sm:$0xff]
      %v1328 = vld [vmem:[#allocation2 + $0x3a] sm:$0xff]
      %v1329 = vld [vmem:[#allocation2 + $0x4a] sm:$0xff]
      %v1330 = vld [vmem:[#allocation2 + $0x52] sm:$0xff]
      %v1331 = vld [vmem:[#allocation2 + $0x62] sm:$0xff]
      %v1332 = vld [vmem:[#allocation2 + $0x6a] sm:$0xff]
      %v1333 = vld [vmem:[#allocation2 + $0x7a] sm:$0xff]
      %v1334 = vld [vmem:[#allocation2 + $0x82] sm:$0xff]
      %v1335 = vld [vmem:[#allocation2 + $0x92] sm:$0xff]
      %v1336 = vld [vmem:[#allocation2 + $0x9a] sm:$0xff]
      %v1337 = vld [vmem:[#allocation2 + $0xaa] sm:$0xff]
      %v1338 = vld [vmem:[#allocation2 + $0xb2] sm:$0xff]
      %v1339 = vld [vmem:[#allocation2 + $0xc2] sm:$0xff]
      %v1340 = vld [vmem:[#allocation2 + $0xca] sm:$0xff]
      %v1341 = vld [vmem:[#allocation2 + $0xda] sm:$0xff]
      %v1342 = vld [vmem:[#allocation2 + $0xe2] sm:$0xff]
      %v1343 = vld [vmem:[#allocation2 + $0xf2] sm:$0xff]
      %v1344 = vld [vmem:[#allocation2 + $0xfa] sm:$0xff]
      %v1345 = vld [vmem:[#allocation2 + $0x10a] sm:$0xff]
      %v1346 = vld [vmem:[#allocation2 + $0x112] sm:$0xff]
      %v1347 = vld [vmem:[#allocation2 + $0x122] sm:$0xff]
      %v1348 = vld [vmem:[#allocation2 + $0x12a] sm:$0xff]
      %v1349 = vld [vmem:[#allocation2 + $0x13a] sm:$0xff]
      %v1350 = vld [vmem:[#allocation2 + $0x142] sm:$0xff]
      %v1351 = vld [vmem:[#allocation2 + $0x152] sm:$0xff]
      %v1352 = vld [vmem:[#allocation2 + $0x15a] sm:$0xff]
      %v1353 = vld [vmem:[#allocation2 + $0x16a] sm:$0xff]
      %v1354 = vld [vmem:[#allocation2 + $0x172] sm:$0xff]
      %s1355 = scalar_lea.vmem %s3, 16
      %v1356 = vld [vmem:[%s1355] sm:$0xff]
      %v1358 = vsel %vm411, %v1323, 0
      %v1361 = vsel %vm411, %v1324, 0
      %v1364 = vsel %vm411, %v1325, 0
      %v1367 = vsel %vm411, %v1326, 0
      %v1370 = vsel %vm411, %v1327, 0
      %v1373 = vsel %vm411, %v1328, 0
      %v1376 = vsel %vm411, %v1329, 0
      %v1379 = vsel %vm411, %v1330, 0
      %v1382 = vsel %vm411, %v1331, 0
      %v1385 = vsel %vm411, %v1332, 0
      %v1388 = vsel %vm411, %v1333, 0
      %v1391 = vsel %vm411, %v1334, 0
      %v1394 = vsel %vm411, %v1335, 0
      %v1397 = vsel %vm411, %v1336, 0
      %v1400 = vsel %vm411, %v1337, 0
      %v1403 = vsel %vm411, %v1338, 0
      %v1406 = vsel %vm411, %v1339, 0
      %v1409 = vsel %vm411, %v1340, 0
      %v1412 = vsel %vm411, %v1341, 0
      %v1415 = vsel %vm411, %v1342, 0
      %v1418 = vsel %vm411, %v1343, 0
      %v1421 = vsel %vm411, %v1344, 0
      %v1424 = vsel %vm411, %v1345, 0
      %v1427 = vsel %vm411, %v1346, 0
      %v1430 = vsel %vm411, %v1347, 0
      %v1433 = vsel %vm411, %v1348, 0
      %v1436 = vsel %vm411, %v1349, 0
      %v1439 = vsel %vm411, %v1350, 0
      %v1442 = vsel %vm411, %v1351, 0
      %v1445 = vsel %vm411, %v1352, 0
      %v1448 = vsel %vm411, %v1353, 0
      %v1451 = vsel %vm411, %v1354, 0
      %1453 = vmatprep.subr.mxu0 0.0
      %1454 = vmatpush1.msra.mxu0 0.0
      %1455 = vmatprep.subr.mxu0 0.0
      %1456 = vmatpush1.msra.mxu0 0.0
      %1457 = vmatprep.subr.mxu0 0.0
      %1458 = vmatpush1.msra.mxu0 0.0
      %1459 = vmatprep.subr.mxu0 0.0
      %1460 = vmatpush1.msra.mxu0 0.0
      %1461 = vmatprep.subr.mxu0 0.0
      %1462 = vmatpush1.msra.mxu0 0.0
      %1463 = vmatprep.subr.mxu0 0.0
      %1464 = vmatpush1.msra.mxu0 0.0
      %1465 = vmatprep.subr.mxu0 0.0
      %1466 = vmatpush1.msra.mxu0 0.0
      %1467 = vmatprep.subr.mxu0 0.0
      %1468 = vmatpush1.msra.mxu0 0.0
      %1469 = vmatprep.subr.mxu0 0.0
      %1470 = vmatpush1.msra.mxu0 0.0
      %1471 = vmatprep.subr.mxu0 0.0
      %1472 = vmatpush1.msra.mxu0 0.0
      %1473 = vmatprep.subr.mxu0 0.0
      %1474 = vmatpush1.msra.mxu0 0.0
      %1475 = vmatprep.subr.mxu0 0.0
      %1476 = vmatpush1.msra.mxu0 0.0
      %1477 = vmatprep.subr.mxu0 0.0
      %1478 = vmatpush1.msra.mxu0 0.0
      %1479 = vmatprep.subr.mxu0 0.0
      %1480 = vmatpush1.msra.mxu0 0.0
      %1481 = vmatprep.subr.mxu0 0.0
      %1482 = vmatpush1.msra.mxu0 0.0
      %1483 = vmatprep.subr.mxu0 0.0
      %1484 = vmatpush1.msra.mxu0 %v1356
      %1485 = vmatprep.subr.mxu0 0.0
      %1486 = vmatpush2.msra.mxu0 0.0
      %1487 = vmatprep.subr.mxu0 0.0
      %1488 = vmatpush2.msra.mxu0 0.0
      %1489 = vmatprep.subr.mxu0 0.0
      %1490 = vmatpush2.msra.mxu0 0.0
      %1491 = vmatprep.subr.mxu0 0.0
      %1492 = vmatpush2.msra.mxu0 0.0
      %1493 = vmatprep.subr.mxu0 0.0
      %1494 = vmatpush2.msra.mxu0 0.0
      %1495 = vmatprep.subr.mxu0 0.0
      %1496 = vmatpush2.msra.mxu0 0.0
      %1497 = vmatprep.subr.mxu0 0.0
      %1498 = vmatpush2.msra.mxu0 0.0
      %1499 = vmatprep.subr.mxu0 0.0
      %1500 = vmatpush2.msra.mxu0 0.0
      %1501 = vmatprep.subr.mxu0 0.0
      %1502 = vmatpush2.msra.mxu0 0.0
      %1503 = vmatprep.subr.mxu0 0.0
      %1504 = vmatpush2.msra.mxu0 0.0
      %1505 = vmatprep.subr.mxu0 0.0
      %1506 = vmatpush2.msra.mxu0 0.0
      %1507 = vmatprep.subr.mxu0 0.0
      %1508 = vmatpush2.msra.mxu0 0.0
      %1509 = vmatprep.subr.mxu0 0.0
      %1510 = vmatpush2.msra.mxu0 0.0
      %1511 = vmatprep.subr.mxu0 0.0
      %1512 = vmatpush2.msra.mxu0 0.0
      %1513 = vmatprep.subr.mxu0 0.0
      %1514 = vmatpush2.msra.mxu0 0.0
      %1515 = vmatprep.subr.mxu0 0.0
      %1516 = vmatpush2.msra.mxu0 0.0
      %1517 = vmatprep.mubr.f32.mxu0 0.0
      %1518 = vmatmul.mubr.f32.gmra.mxu0 %v1358
      %v1519 = vpop.f32.mrf.mxu0
      %v1520 = vadd.f32 0.0, %v1519
      %v1521 = vpop.f32.mrf.mxu0
      %1522 = vmatprep.mubr.f32.mxu0 0.0
      %1523 = vmatmul.mubr.f32.gmra.mxu0 %v1361
      %v1524 = vpop.f32.mrf.mxu0
      %v1525 = vadd.f32 0.0, %v1524
      %v1526 = vpop.f32.mrf.mxu0
      %1527 = vmatprep.mubr.f32.mxu0 0.0
      %1528 = vmatmul.mubr.f32.gmra.mxu0 %v1364
      %v1529 = vpop.f32.mrf.mxu0
      %v1530 = vadd.f32 0.0, %v1529
      %v1531 = vpop.f32.mrf.mxu0
      %1532 = vmatprep.mubr.f32.mxu0 0.0
      %1533 = vmatmul.mubr.f32.gmra.mxu0 %v1367
      %v1534 = vpop.f32.mrf.mxu0
      %v1535 = vadd.f32 0.0, %v1534
      %v1536 = vpop.f32.mrf.mxu0
      %1537 = vmatprep.mubr.f32.mxu0 0.0
      %1538 = vmatmul.mubr.f32.gmra.mxu0 %v1370
      %v1539 = vpop.f32.mrf.mxu0
      %v1540 = vadd.f32 0.0, %v1539
      %v1541 = vpop.f32.mrf.mxu0
      %1542 = vmatprep.mubr.f32.mxu0 0.0
      %1543 = vmatmul.mubr.f32.gmra.mxu0 %v1373
      %v1544 = vpop.f32.mrf.mxu0
      %v1545 = vadd.f32 0.0, %v1544
      %v1546 = vpop.f32.mrf.mxu0
      %1547 = vmatprep.mubr.f32.mxu0 0.0
      %1548 = vmatmul.mubr.f32.gmra.mxu0 %v1376
      %v1549 = vpop.f32.mrf.mxu0
      %v1550 = vadd.f32 0.0, %v1549
      %v1551 = vpop.f32.mrf.mxu0
      %1552 = vmatprep.mubr.f32.mxu0 0.0
      %1553 = vmatmul.mubr.f32.gmra.mxu0 %v1379
      %v1554 = vpop.f32.mrf.mxu0
      %v1555 = vadd.f32 0.0, %v1554
      %v1556 = vpop.f32.mrf.mxu0
      %1557 = vmatprep.mubr.f32.mxu0 0.0
      %1558 = vmatmul.mubr.f32.gmra.mxu0 %v1382
      %v1559 = vpop.f32.mrf.mxu0
      %v1560 = vadd.f32 0.0, %v1559
      %v1561 = vpop.f32.mrf.mxu0
      %1562 = vmatprep.mubr.f32.mxu0 0.0
      %1563 = vmatmul.mubr.f32.gmra.mxu0 %v1385
      %v1564 = vpop.f32.mrf.mxu0
      %v1565 = vadd.f32 0.0, %v1564
      %v1566 = vpop.f32.mrf.mxu0
      %1567 = vmatprep.mubr.f32.mxu0 0.0
      %1568 = vmatmul.mubr.f32.gmra.mxu0 %v1388
      %v1569 = vpop.f32.mrf.mxu0
      %v1570 = vadd.f32 0.0, %v1569
      %v1571 = vpop.f32.mrf.mxu0
      %1572 = vmatprep.mubr.f32.mxu0 0.0
      %1573 = vmatmul.mubr.f32.gmra.mxu0 %v1391
      %v1574 = vpop.f32.mrf.mxu0
      %v1575 = vadd.f32 0.0, %v1574
      %v1576 = vpop.f32.mrf.mxu0
      %1577 = vmatprep.mubr.f32.mxu0 0.0
      %1578 = vmatmul.mubr.f32.gmra.mxu0 %v1394
      %v1579 = vpop.f32.mrf.mxu0
      %v1580 = vadd.f32 0.0, %v1579
      %v1581 = vpop.f32.mrf.mxu0
      %1582 = vmatprep.mubr.f32.mxu0 0.0
      %1583 = vmatmul.mubr.f32.gmra.mxu0 %v1397
      %v1584 = vpop.f32.mrf.mxu0
      %v1585 = vadd.f32 0.0, %v1584
      %v1586 = vpop.f32.mrf.mxu0
      %1587 = vmatprep.mubr.f32.mxu0 0.0
      %1588 = vmatmul.mubr.f32.gmra.mxu0 %v1400
      %v1589 = vpop.f32.mrf.mxu0
      %v1590 = vadd.f32 0.0, %v1589
      %v1591 = vpop.f32.mrf.mxu0
      %1592 = vmatprep.mubr.f32.mxu0 0.0
      %1593 = vmatmul.mubr.f32.gmra.mxu0 %v1403
      %v1594 = vpop.f32.mrf.mxu0
      %v1595 = vadd.f32 0.0, %v1594
      %v1596 = vpop.f32.mrf.mxu0
      %1597 = vmatprep.mubr.f32.mxu0 0.0
      %1598 = vmatmul.mubr.f32.gmra.mxu0 %v1406
      %v1599 = vpop.f32.mrf.mxu0
      %v1600 = vadd.f32 0.0, %v1599
      %v1601 = vpop.f32.mrf.mxu0
      %1602 = vmatprep.mubr.f32.mxu0 0.0
      %1603 = vmatmul.mubr.f32.gmra.mxu0 %v1409
      %v1604 = vpop.f32.mrf.mxu0
      %v1605 = vadd.f32 0.0, %v1604
      %v1606 = vpop.f32.mrf.mxu0
      %1607 = vmatprep.mubr.f32.mxu0 0.0
      %1608 = vmatmul.mubr.f32.gmra.mxu0 %v1412
      %v1609 = vpop.f32.mrf.mxu0
      %v1610 = vadd.f32 0.0, %v1609
      %v1611 = vpop.f32.mrf.mxu0
      %1612 = vmatprep.mubr.f32.mxu0 0.0
      %1613 = vmatmul.mubr.f32.gmra.mxu0 %v1415
      %v1614 = vpop.f32.mrf.mxu0
      %v1615 = vadd.f32 0.0, %v1614
      %v1616 = vpop.f32.mrf.mxu0
      %1617 = vmatprep.mubr.f32.mxu0 0.0
      %1618 = vmatmul.mubr.f32.gmra.mxu0 %v1418
      %v1619 = vpop.f32.mrf.mxu0
      %v1620 = vadd.f32 0.0, %v1619
      %v1621 = vpop.f32.mrf.mxu0
      %1622 = vmatprep.mubr.f32.mxu0 0.0
      %1623 = vmatmul.mubr.f32.gmra.mxu0 %v1421
      %v1624 = vpop.f32.mrf.mxu0
      %v1625 = vadd.f32 0.0, %v1624
      %v1626 = vpop.f32.mrf.mxu0
      %1627 = vmatprep.mubr.f32.mxu0 0.0
      %1628 = vmatmul.mubr.f32.gmra.mxu0 %v1424
      %v1629 = vpop.f32.mrf.mxu0
      %v1630 = vadd.f32 0.0, %v1629
      %v1631 = vpop.f32.mrf.mxu0
      %1632 = vmatprep.mubr.f32.mxu0 0.0
      %1633 = vmatmul.mubr.f32.gmra.mxu0 %v1427
      %v1634 = vpop.f32.mrf.mxu0
      %v1635 = vadd.f32 0.0, %v1634
      %v1636 = vpop.f32.mrf.mxu0
      %1637 = vmatprep.mubr.f32.mxu0 0.0
      %1638 = vmatmul.mubr.f32.gmra.mxu0 %v1430
      %v1639 = vpop.f32.mrf.mxu0
      %v1640 = vadd.f32 0.0, %v1639
      %v1641 = vpop.f32.mrf.mxu0
      %1642 = vmatprep.mubr.f32.mxu0 0.0
      %1643 = vmatmul.mubr.f32.gmra.mxu0 %v1433
      %v1644 = vpop.f32.mrf.mxu0
      %v1645 = vadd.f32 0.0, %v1644
      %v1646 = vpop.f32.mrf.mxu0
      %1647 = vmatprep.mubr.f32.mxu0 0.0
      %1648 = vmatmul.mubr.f32.gmra.mxu0 %v1436
      %v1649 = vpop.f32.mrf.mxu0
      %v1650 = vadd.f32 0.0, %v1649
      %v1651 = vpop.f32.mrf.mxu0
      %1652 = vmatprep.mubr.f32.mxu0 0.0
      %1653 = vmatmul.mubr.f32.gmra.mxu0 %v1439
      %v1654 = vpop.f32.mrf.mxu0
      %v1655 = vadd.f32 0.0, %v1654
      %v1656 = vpop.f32.mrf.mxu0
      %1657 = vmatprep.mubr.f32.mxu0 0.0
      %1658 = vmatmul.mubr.f32.gmra.mxu0 %v1442
      %v1659 = vpop.f32.mrf.mxu0
      %v1660 = vadd.f32 0.0, %v1659
      %v1661 = vpop.f32.mrf.mxu0
      %1662 = vmatprep.mubr.f32.mxu0 0.0
      %1663 = vmatmul.mubr.f32.gmra.mxu0 %v1445
      %v1664 = vpop.f32.mrf.mxu0
      %v1665 = vadd.f32 0.0, %v1664
      %v1666 = vpop.f32.mrf.mxu0
      %1667 = vmatprep.mubr.f32.mxu0 0.0
      %1668 = vmatmul.mubr.f32.gmra.mxu0 %v1448
      %v1669 = vpop.f32.mrf.mxu0
      %v1670 = vadd.f32 0.0, %v1669
      %v1671 = vpop.f32.mrf.mxu0
      %1672 = vmatprep.mubr.f32.mxu0 0.0
      %1673 = vmatmul.mubr.f32.gmra.mxu0 %v1451
      %v1674 = vpop.f32.mrf.mxu0
      %v1675 = vadd.f32 0.0, %v1674
      %v1676 = vpop.f32.mrf.mxu0
      %1677 = vdwg.mxu0
      %v1678 = vld [vmem:[#allocation3] sm:$0xff]
      %v1679 = vld [vmem:[#allocation3 + $0x8] sm:$0xff]
      %v1680 = vld [vmem:[#allocation3 + $0x10] sm:$0xff]
      %v1681 = vld [vmem:[#allocation3 + $0x18] sm:$0xff]
      %v1682 = vld [vmem:[#allocation3 + $0x20] sm:$0xff]
      %v1683 = vld [vmem:[#allocation3 + $0x28] sm:$0xff]
      %v1684 = vld [vmem:[#allocation3 + $0x30] sm:$0xff]
      %v1685 = vld [vmem:[#allocation3 + $0x38] sm:$0xff]
      %v1686 = vld [vmem:[#allocation3 + $0x40] sm:$0xff]
      %v1687 = vld [vmem:[#allocation3 + $0x48] sm:$0xff]
      %v1688 = vld [vmem:[#allocation3 + $0x50] sm:$0xff]
      %v1689 = vld [vmem:[#allocation3 + $0x58] sm:$0xff]
      %v1690 = vld [vmem:[#allocation3 + $0x60] sm:$0xff]
      %v1691 = vld [vmem:[#allocation3 + $0x68] sm:$0xff]
      %v1692 = vld [vmem:[#allocation3 + $0x70] sm:$0xff]
      %v1693 = vld [vmem:[#allocation3 + $0x78] sm:$0xff]
      %v1694 = vld [vmem:[#allocation3 + $0x80] sm:$0xff]
      %v1695 = vld [vmem:[#allocation3 + $0x88] sm:$0xff]
      %v1696 = vld [vmem:[#allocation3 + $0x90] sm:$0xff]
      %v1697 = vld [vmem:[#allocation3 + $0x98] sm:$0xff]
      %v1698 = vld [vmem:[#allocation3 + $0xa0] sm:$0xff]
      %v1699 = vld [vmem:[#allocation3 + $0xa8] sm:$0xff]
      %v1700 = vld [vmem:[#allocation3 + $0xb0] sm:$0xff]
      %v1701 = vld [vmem:[#allocation3 + $0xb8] sm:$0xff]
      %v1702 = vld [vmem:[#allocation3 + $0xc0] sm:$0xff]
      %v1703 = vld [vmem:[#allocation3 + $0xc8] sm:$0xff]
      %v1704 = vld [vmem:[#allocation3 + $0xd0] sm:$0xff]
      %v1705 = vld [vmem:[#allocation3 + $0xd8] sm:$0xff]
      %v1706 = vld [vmem:[#allocation3 + $0xe0] sm:$0xff]
      %v1707 = vld [vmem:[#allocation3 + $0xe8] sm:$0xff]
      %v1708 = vld [vmem:[#allocation3 + $0xf0] sm:$0xff]
      %v1709 = vld [vmem:[#allocation3 + $0xf8] sm:$0xff]
      %v1710 = vadd.f32 %v1678, %v1520
      %v1711 = vadd.f32 %v1679, %v1525
      %v1712 = vadd.f32 %v1680, %v1530
      %v1713 = vadd.f32 %v1681, %v1535
      %v1714 = vadd.f32 %v1682, %v1540
      %v1715 = vadd.f32 %v1683, %v1545
      %v1716 = vadd.f32 %v1684, %v1550
      %v1717 = vadd.f32 %v1685, %v1555
      %v1718 = vadd.f32 %v1686, %v1560
      %v1719 = vadd.f32 %v1687, %v1565
      %v1720 = vadd.f32 %v1688, %v1570
      %v1721 = vadd.f32 %v1689, %v1575
      %v1722 = vadd.f32 %v1690, %v1580
      %v1723 = vadd.f32 %v1691, %v1585
      %v1724 = vadd.f32 %v1692, %v1590
      %v1725 = vadd.f32 %v1693, %v1595
      %v1726 = vadd.f32 %v1694, %v1600
      %v1727 = vadd.f32 %v1695, %v1605
      %v1728 = vadd.f32 %v1696, %v1610
      %v1729 = vadd.f32 %v1697, %v1615
      %v1730 = vadd.f32 %v1698, %v1620
      %v1731 = vadd.f32 %v1699, %v1625
      %v1732 = vadd.f32 %v1700, %v1630
      %v1733 = vadd.f32 %v1701, %v1635
      %v1734 = vadd.f32 %v1702, %v1640
      %v1735 = vadd.f32 %v1703, %v1645
      %v1736 = vadd.f32 %v1704, %v1650
      %v1737 = vadd.f32 %v1705, %v1655
      %v1738 = vadd.f32 %v1706, %v1660
      %v1739 = vadd.f32 %v1707, %v1665
      %v1740 = vadd.f32 %v1708, %v1670
      %v1741 = vadd.f32 %v1709, %v1675
      %1742 = vst.msk [vmem:[#allocation3] sm:$0xff] %vm411, %v1710
      %1743 = vst.msk [vmem:[#allocation3 + $0x8] sm:$0xff] %vm411, %v1711
      %1744 = vst.msk [vmem:[#allocation3 + $0x10] sm:$0xff] %vm411, %v1712
      %1745 = vst.msk [vmem:[#allocation3 + $0x18] sm:$0xff] %vm411, %v1713
      %1746 = vst.msk [vmem:[#allocation3 + $0x20] sm:$0xff] %vm411, %v1714
      %1747 = vst.msk [vmem:[#allocation3 + $0x28] sm:$0xff] %vm411, %v1715
      %1748 = vst.msk [vmem:[#allocation3 + $0x30] sm:$0xff] %vm411, %v1716
      %1749 = vst.msk [vmem:[#allocation3 + $0x38] sm:$0xff] %vm411, %v1717
      %1750 = vst.msk [vmem:[#allocation3 + $0x40] sm:$0xff] %vm411, %v1718
      %1751 = vst.msk [vmem:[#allocation3 + $0x48] sm:$0xff] %vm411, %v1719
      %1752 = vst.msk [vmem:[#allocation3 + $0x50] sm:$0xff] %vm411, %v1720
      %1753 = vst.msk [vmem:[#allocation3 + $0x58] sm:$0xff] %vm411, %v1721
      %1754 = vst.msk [vmem:[#allocation3 + $0x60] sm:$0xff] %vm411, %v1722
      %1755 = vst.msk [vmem:[#allocation3 + $0x68] sm:$0xff] %vm411, %v1723
      %1756 = vst.msk [vmem:[#allocation3 + $0x70] sm:$0xff] %vm411, %v1724
      %1757 = vst.msk [vmem:[#allocation3 + $0x78] sm:$0xff] %vm411, %v1725
      %1758 = vst.msk [vmem:[#allocation3 + $0x80] sm:$0xff] %vm411, %v1726
      %1759 = vst.msk [vmem:[#allocation3 + $0x88] sm:$0xff] %vm411, %v1727
      %1760 = vst.msk [vmem:[#allocation3 + $0x90] sm:$0xff] %vm411, %v1728
      %1761 = vst.msk [vmem:[#allocation3 + $0x98] sm:$0xff] %vm411, %v1729
      %1762 = vst.msk [vmem:[#allocation3 + $0xa0] sm:$0xff] %vm411, %v1730
      %1763 = vst.msk [vmem:[#allocation3 + $0xa8] sm:$0xff] %vm411, %v1731
      %1764 = vst.msk [vmem:[#allocation3 + $0xb0] sm:$0xff] %vm411, %v1732
      %1765 = vst.msk [vmem:[#allocation3 + $0xb8] sm:$0xff] %vm411, %v1733
      %1766 = vst.msk [vmem:[#allocation3 + $0xc0] sm:$0xff] %vm411, %v1734
      %1767 = vst.msk [vmem:[#allocation3 + $0xc8] sm:$0xff] %vm411, %v1735
      %1768 = vst.msk [vmem:[#allocation3 + $0xd0] sm:$0xff] %vm411, %v1736
      %1769 = vst.msk [vmem:[#allocation3 + $0xd8] sm:$0xff] %vm411, %v1737
      %1770 = vst.msk [vmem:[#allocation3 + $0xe0] sm:$0xff] %vm411, %v1738
      %1771 = vst.msk [vmem:[#allocation3 + $0xe8] sm:$0xff] %vm411, %v1739
      %1772 = vst.msk [vmem:[#allocation3 + $0xf0] sm:$0xff] %vm411, %v1740
      %1773 = vst.msk [vmem:[#allocation3 + $0xf8] sm:$0xff] %vm411, %v1741
      %v1774 = vld [vmem:[%s420] sm:$0xff]
      %v1775 = vld [vmem:[%s420 + $0x8] sm:$0xff]
      %v1776 = vld [vmem:[%s420 + $0x18] sm:$0xff]
      %v1777 = vld [vmem:[%s420 + $0x20] sm:$0xff]
      %v1778 = vld [vmem:[%s420 + $0x30] sm:$0xff]
      %v1779 = vld [vmem:[%s420 + $0x38] sm:$0xff]
      %v1780 = vld [vmem:[%s420 + $0x48] sm:$0xff]
      %v1781 = vld [vmem:[%s420 + $0x50] sm:$0xff]
      %v1782 = vld [vmem:[%s420 + $0x60] sm:$0xff]
      %v1783 = vld [vmem:[%s420 + $0x68] sm:$0xff]
      %v1784 = vld [vmem:[%s420 + $0x78] sm:$0xff]
      %v1785 = vld [vmem:[%s420 + $0x80] sm:$0xff]
      %v1786 = vld [vmem:[%s420 + $0x90] sm:$0xff]
      %v1787 = vld [vmem:[%s420 + $0x98] sm:$0xff]
      %v1788 = vld [vmem:[%s420 + $0xa8] sm:$0xff]
      %v1789 = vld [vmem:[%s420 + $0xb0] sm:$0xff]
      %v1790 = vld [vmem:[%s420 + $0xc0] sm:$0xff]
      %v1791 = vld [vmem:[%s420 + $0xc8] sm:$0xff]
      %v1792 = vld [vmem:[%s420 + $0xd8] sm:$0xff]
      %v1793 = vld [vmem:[%s420 + $0xe0] sm:$0xff]
      %v1794 = vld [vmem:[%s420 + $0xf0] sm:$0xff]
      %v1795 = vld [vmem:[%s420 + $0xf8] sm:$0xff]
      %v1796 = vld [vmem:[%s420 + $0x108] sm:$0xff]
      %v1797 = vld [vmem:[%s420 + $0x110] sm:$0xff]
      %v1798 = vld [vmem:[%s420 + $0x120] sm:$0xff]
      %v1799 = vld [vmem:[%s420 + $0x128] sm:$0xff]
      %v1800 = vld [vmem:[%s420 + $0x138] sm:$0xff]
      %v1801 = vld [vmem:[%s420 + $0x140] sm:$0xff]
      %v1802 = vld [vmem:[%s420 + $0x150] sm:$0xff]
      %v1803 = vld [vmem:[%s420 + $0x158] sm:$0xff]
      %v1804 = vld [vmem:[%s420 + $0x168] sm:$0xff]
      %v1805 = vld [vmem:[%s420 + $0x170] sm:$0xff]
      %s1806 = scalar_lea.vmem %s3, 24
      %v1807 = vld [vmem:[%s1806] sm:$0xff]
      %v1809 = vsel %vm411, %v1774, 0
      %v1812 = vsel %vm411, %v1775, 0
      %v1815 = vsel %vm411, %v1776, 0
      %v1818 = vsel %vm411, %v1777, 0
      %v1821 = vsel %vm411, %v1778, 0
      %v1824 = vsel %vm411, %v1779, 0
      %v1827 = vsel %vm411, %v1780, 0
      %v1830 = vsel %vm411, %v1781, 0
      %v1833 = vsel %vm411, %v1782, 0
      %v1836 = vsel %vm411, %v1783, 0
      %v1839 = vsel %vm411, %v1784, 0
      %v1842 = vsel %vm411, %v1785, 0
      %v1845 = vsel %vm411, %v1786, 0
      %v1848 = vsel %vm411, %v1787, 0
      %v1851 = vsel %vm411, %v1788, 0
      %v1854 = vsel %vm411, %v1789, 0
      %v1857 = vsel %vm411, %v1790, 0
      %v1860 = vsel %vm411, %v1791, 0
      %v1863 = vsel %vm411, %v1792, 0
      %v1866 = vsel %vm411, %v1793, 0
      %v1869 = vsel %vm411, %v1794, 0
      %v1872 = vsel %vm411, %v1795, 0
      %v1875 = vsel %vm411, %v1796, 0
      %v1878 = vsel %vm411, %v1797, 0
      %v1881 = vsel %vm411, %v1798, 0
      %v1884 = vsel %vm411, %v1799, 0
      %v1887 = vsel %vm411, %v1800, 0
      %v1890 = vsel %vm411, %v1801, 0
      %v1893 = vsel %vm411, %v1802, 0
      %v1896 = vsel %vm411, %v1803, 0
      %v1899 = vsel %vm411, %v1804, 0
      %v1902 = vsel %vm411, %v1805, 0
      %1904 = vmatprep.subr.mxu0 0.0
      %1905 = vmatpush1.msra.mxu0 0.0
      %1906 = vmatprep.subr.mxu0 0.0
      %1907 = vmatpush1.msra.mxu0 0.0
      %1908 = vmatprep.subr.mxu0 0.0
      %1909 = vmatpush1.msra.mxu0 0.0
      %1910 = vmatprep.subr.mxu0 0.0
      %1911 = vmatpush1.msra.mxu0 0.0
      %1912 = vmatprep.subr.mxu0 0.0
      %1913 = vmatpush1.msra.mxu0 0.0
      %1914 = vmatprep.subr.mxu0 0.0
      %1915 = vmatpush1.msra.mxu0 0.0
      %1916 = vmatprep.subr.mxu0 0.0
      %1917 = vmatpush1.msra.mxu0 0.0
      %1918 = vmatprep.subr.mxu0 0.0
      %1919 = vmatpush1.msra.mxu0 0.0
      %1920 = vmatprep.subr.mxu0 0.0
      %1921 = vmatpush1.msra.mxu0 0.0
      %1922 = vmatprep.subr.mxu0 0.0
      %1923 = vmatpush1.msra.mxu0 0.0
      %1924 = vmatprep.subr.mxu0 0.0
      %1925 = vmatpush1.msra.mxu0 0.0
      %1926 = vmatprep.subr.mxu0 0.0
      %1927 = vmatpush1.msra.mxu0 0.0
      %1928 = vmatprep.subr.mxu0 0.0
      %1929 = vmatpush1.msra.mxu0 0.0
      %1930 = vmatprep.subr.mxu0 0.0
      %1931 = vmatpush1.msra.mxu0 0.0
      %1932 = vmatprep.subr.mxu0 0.0
      %1933 = vmatpush1.msra.mxu0 0.0
      %1934 = vmatprep.subr.mxu0 0.0
      %1935 = vmatpush1.msra.mxu0 %v1807
      %1936 = vmatprep.subr.mxu0 0.0
      %1937 = vmatpush2.msra.mxu0 0.0
      %1938 = vmatprep.subr.mxu0 0.0
      %1939 = vmatpush2.msra.mxu0 0.0
      %1940 = vmatprep.subr.mxu0 0.0
      %1941 = vmatpush2.msra.mxu0 0.0
      %1942 = vmatprep.subr.mxu0 0.0
      %1943 = vmatpush2.msra.mxu0 0.0
      %1944 = vmatprep.subr.mxu0 0.0
      %1945 = vmatpush2.msra.mxu0 0.0
      %1946 = vmatprep.subr.mxu0 0.0
      %1947 = vmatpush2.msra.mxu0 0.0
      %1948 = vmatprep.subr.mxu0 0.0
      %1949 = vmatpush2.msra.mxu0 0.0
      %1950 = vmatprep.subr.mxu0 0.0
      %1951 = vmatpush2.msra.mxu0 0.0
      %1952 = vmatprep.subr.mxu0 0.0
      %1953 = vmatpush2.msra.mxu0 0.0
      %1954 = vmatprep.subr.mxu0 0.0
      %1955 = vmatpush2.msra.mxu0 0.0
      %1956 = vmatprep.subr.mxu0 0.0
      %1957 = vmatpush2.msra.mxu0 0.0
      %1958 = vmatprep.subr.mxu0 0.0
      %1959 = vmatpush2.msra.mxu0 0.0
      %1960 = vmatprep.subr.mxu0 0.0
      %1961 = vmatpush2.msra.mxu0 0.0
      %1962 = vmatprep.subr.mxu0 0.0
      %1963 = vmatpush2.msra.mxu0 0.0
      %1964 = vmatprep.subr.mxu0 0.0
      %1965 = vmatpush2.msra.mxu0 0.0
      %1966 = vmatprep.subr.mxu0 0.0
      %1967 = vmatpush2.msra.mxu0 0.0
      %1968 = vmatprep.mubr.f32.mxu0 0.0
      %1969 = vmatmul.mubr.f32.gmra.mxu0 %v1809
      %v1970 = vpop.f32.mrf.mxu0
      %v1971 = vadd.f32 0.0, %v1970
      %v1972 = vpop.f32.mrf.mxu0
      %1973 = vmatprep.mubr.f32.mxu0 0.0
      %1974 = vmatmul.mubr.f32.gmra.mxu0 %v1812
      %v1975 = vpop.f32.mrf.mxu0
      %v1976 = vadd.f32 0.0, %v1975
      %v1977 = vpop.f32.mrf.mxu0
      %1978 = vmatprep.mubr.f32.mxu0 0.0
      %1979 = vmatmul.mubr.f32.gmra.mxu0 %v1815
      %v1980 = vpop.f32.mrf.mxu0
      %v1981 = vadd.f32 0.0, %v1980
      %v1982 = vpop.f32.mrf.mxu0
      %1983 = vmatprep.mubr.f32.mxu0 0.0
      %1984 = vmatmul.mubr.f32.gmra.mxu0 %v1818
      %v1985 = vpop.f32.mrf.mxu0
      %v1986 = vadd.f32 0.0, %v1985
      %v1987 = vpop.f32.mrf.mxu0
      %1988 = vmatprep.mubr.f32.mxu0 0.0
      %1989 = vmatmul.mubr.f32.gmra.mxu0 %v1821
      %v1990 = vpop.f32.mrf.mxu0
      %v1991 = vadd.f32 0.0, %v1990
      %v1992 = vpop.f32.mrf.mxu0
      %1993 = vmatprep.mubr.f32.mxu0 0.0
      %1994 = vmatmul.mubr.f32.gmra.mxu0 %v1824
      %v1995 = vpop.f32.mrf.mxu0
      %v1996 = vadd.f32 0.0, %v1995
      %v1997 = vpop.f32.mrf.mxu0
      %1998 = vmatprep.mubr.f32.mxu0 0.0
      %1999 = vmatmul.mubr.f32.gmra.mxu0 %v1827
      %v2000 = vpop.f32.mrf.mxu0
      %v2001 = vadd.f32 0.0, %v2000
      %v2002 = vpop.f32.mrf.mxu0
      %2003 = vmatprep.mubr.f32.mxu0 0.0
      %2004 = vmatmul.mubr.f32.gmra.mxu0 %v1830
      %v2005 = vpop.f32.mrf.mxu0
      %v2006 = vadd.f32 0.0, %v2005
      %v2007 = vpop.f32.mrf.mxu0
      %2008 = vmatprep.mubr.f32.mxu0 0.0
      %2009 = vmatmul.mubr.f32.gmra.mxu0 %v1833
      %v2010 = vpop.f32.mrf.mxu0
      %v2011 = vadd.f32 0.0, %v2010
      %v2012 = vpop.f32.mrf.mxu0
      %2013 = vmatprep.mubr.f32.mxu0 0.0
      %2014 = vmatmul.mubr.f32.gmra.mxu0 %v1836
      %v2015 = vpop.f32.mrf.mxu0
      %v2016 = vadd.f32 0.0, %v2015
      %v2017 = vpop.f32.mrf.mxu0
      %2018 = vmatprep.mubr.f32.mxu0 0.0
      %2019 = vmatmul.mubr.f32.gmra.mxu0 %v1839
      %v2020 = vpop.f32.mrf.mxu0
      %v2021 = vadd.f32 0.0, %v2020
      %v2022 = vpop.f32.mrf.mxu0
      %2023 = vmatprep.mubr.f32.mxu0 0.0
      %2024 = vmatmul.mubr.f32.gmra.mxu0 %v1842
      %v2025 = vpop.f32.mrf.mxu0
      %v2026 = vadd.f32 0.0, %v2025
      %v2027 = vpop.f32.mrf.mxu0
      %2028 = vmatprep.mubr.f32.mxu0 0.0
      %2029 = vmatmul.mubr.f32.gmra.mxu0 %v1845
      %v2030 = vpop.f32.mrf.mxu0
      %v2031 = vadd.f32 0.0, %v2030
      %v2032 = vpop.f32.mrf.mxu0
      %2033 = vmatprep.mubr.f32.mxu0 0.0
      %2034 = vmatmul.mubr.f32.gmra.mxu0 %v1848
      %v2035 = vpop.f32.mrf.mxu0
      %v2036 = vadd.f32 0.0, %v2035
      %v2037 = vpop.f32.mrf.mxu0
      %2038 = vmatprep.mubr.f32.mxu0 0.0
      %2039 = vmatmul.mubr.f32.gmra.mxu0 %v1851
      %v2040 = vpop.f32.mrf.mxu0
      %v2041 = vadd.f32 0.0, %v2040
      %v2042 = vpop.f32.mrf.mxu0
      %2043 = vmatprep.mubr.f32.mxu0 0.0
      %2044 = vmatmul.mubr.f32.gmra.mxu0 %v1854
      %v2045 = vpop.f32.mrf.mxu0
      %v2046 = vadd.f32 0.0, %v2045
      %v2047 = vpop.f32.mrf.mxu0
      %2048 = vmatprep.mubr.f32.mxu0 0.0
      %2049 = vmatmul.mubr.f32.gmra.mxu0 %v1857
      %v2050 = vpop.f32.mrf.mxu0
      %v2051 = vadd.f32 0.0, %v2050
      %v2052 = vpop.f32.mrf.mxu0
      %2053 = vmatprep.mubr.f32.mxu0 0.0
      %2054 = vmatmul.mubr.f32.gmra.mxu0 %v1860
      %v2055 = vpop.f32.mrf.mxu0
      %v2056 = vadd.f32 0.0, %v2055
      %v2057 = vpop.f32.mrf.mxu0
      %2058 = vmatprep.mubr.f32.mxu0 0.0
      %2059 = vmatmul.mubr.f32.gmra.mxu0 %v1863
      %v2060 = vpop.f32.mrf.mxu0
      %v2061 = vadd.f32 0.0, %v2060
      %v2062 = vpop.f32.mrf.mxu0
      %2063 = vmatprep.mubr.f32.mxu0 0.0
      %2064 = vmatmul.mubr.f32.gmra.mxu0 %v1866
      %v2065 = vpop.f32.mrf.mxu0
      %v2066 = vadd.f32 0.0, %v2065
      %v2067 = vpop.f32.mrf.mxu0
      %2068 = vmatprep.mubr.f32.mxu0 0.0
      %2069 = vmatmul.mubr.f32.gmra.mxu0 %v1869
      %v2070 = vpop.f32.mrf.mxu0
      %v2071 = vadd.f32 0.0, %v2070
      %v2072 = vpop.f32.mrf.mxu0
      %2073 = vmatprep.mubr.f32.mxu0 0.0
      %2074 = vmatmul.mubr.f32.gmra.mxu0 %v1872
      %v2075 = vpop.f32.mrf.mxu0
      %v2076 = vadd.f32 0.0, %v2075
      %v2077 = vpop.f32.mrf.mxu0
      %2078 = vmatprep.mubr.f32.mxu0 0.0
      %2079 = vmatmul.mubr.f32.gmra.mxu0 %v1875
      %v2080 = vpop.f32.mrf.mxu0
      %v2081 = vadd.f32 0.0, %v2080
      %v2082 = vpop.f32.mrf.mxu0
      %2083 = vmatprep.mubr.f32.mxu0 0.0
      %2084 = vmatmul.mubr.f32.gmra.mxu0 %v1878
      %v2085 = vpop.f32.mrf.mxu0
      %v2086 = vadd.f32 0.0, %v2085
      %v2087 = vpop.f32.mrf.mxu0
      %2088 = vmatprep.mubr.f32.mxu0 0.0
      %2089 = vmatmul.mubr.f32.gmra.mxu0 %v1881
      %v2090 = vpop.f32.mrf.mxu0
      %v2091 = vadd.f32 0.0, %v2090
      %v2092 = vpop.f32.mrf.mxu0
      %2093 = vmatprep.mubr.f32.mxu0 0.0
      %2094 = vmatmul.mubr.f32.gmra.mxu0 %v1884
      %v2095 = vpop.f32.mrf.mxu0
      %v2096 = vadd.f32 0.0, %v2095
      %v2097 = vpop.f32.mrf.mxu0
      %2098 = vmatprep.mubr.f32.mxu0 0.0
      %2099 = vmatmul.mubr.f32.gmra.mxu0 %v1887
      %v2100 = vpop.f32.mrf.mxu0
      %v2101 = vadd.f32 0.0, %v2100
      %v2102 = vpop.f32.mrf.mxu0
      %2103 = vmatprep.mubr.f32.mxu0 0.0
      %2104 = vmatmul.mubr.f32.gmra.mxu0 %v1890
      %v2105 = vpop.f32.mrf.mxu0
      %v2106 = vadd.f32 0.0, %v2105
      %v2107 = vpop.f32.mrf.mxu0
      %2108 = vmatprep.mubr.f32.mxu0 0.0
      %2109 = vmatmul.mubr.f32.gmra.mxu0 %v1893
      %v2110 = vpop.f32.mrf.mxu0
      %v2111 = vadd.f32 0.0, %v2110
      %v2112 = vpop.f32.mrf.mxu0
      %2113 = vmatprep.mubr.f32.mxu0 0.0
      %2114 = vmatmul.mubr.f32.gmra.mxu0 %v1896
      %v2115 = vpop.f32.mrf.mxu0
      %v2116 = vadd.f32 0.0, %v2115
      %v2117 = vpop.f32.mrf.mxu0
      %2118 = vmatprep.mubr.f32.mxu0 0.0
      %2119 = vmatmul.mubr.f32.gmra.mxu0 %v1899
      %v2120 = vpop.f32.mrf.mxu0
      %v2121 = vadd.f32 0.0, %v2120
      %v2122 = vpop.f32.mrf.mxu0
      %2123 = vmatprep.mubr.f32.mxu0 0.0
      %2124 = vmatmul.mubr.f32.gmra.mxu0 %v1902
      %v2125 = vpop.f32.mrf.mxu0
      %v2126 = vadd.f32 0.0, %v2125
      %v2127 = vpop.f32.mrf.mxu0
      %2128 = vdwg.mxu0
      %v2129 = vld [vmem:[#allocation3] sm:$0xff]
      %v2130 = vld [vmem:[#allocation3 + $0x8] sm:$0xff]
      %v2131 = vld [vmem:[#allocation3 + $0x10] sm:$0xff]
      %v2132 = vld [vmem:[#allocation3 + $0x18] sm:$0xff]
      %v2133 = vld [vmem:[#allocation3 + $0x20] sm:$0xff]
      %v2134 = vld [vmem:[#allocation3 + $0x28] sm:$0xff]
      %v2135 = vld [vmem:[#allocation3 + $0x30] sm:$0xff]
      %v2136 = vld [vmem:[#allocation3 + $0x38] sm:$0xff]
      %v2137 = vld [vmem:[#allocation3 + $0x40] sm:$0xff]
      %v2138 = vld [vmem:[#allocation3 + $0x48] sm:$0xff]
      %v2139 = vld [vmem:[#allocation3 + $0x50] sm:$0xff]
      %v2140 = vld [vmem:[#allocation3 + $0x58] sm:$0xff]
      %v2141 = vld [vmem:[#allocation3 + $0x60] sm:$0xff]
      %v2142 = vld [vmem:[#allocation3 + $0x68] sm:$0xff]
      %v2143 = vld [vmem:[#allocation3 + $0x70] sm:$0xff]
      %v2144 = vld [vmem:[#allocation3 + $0x78] sm:$0xff]
      %v2145 = vld [vmem:[#allocation3 + $0x80] sm:$0xff]
      %v2146 = vld [vmem:[#allocation3 + $0x88] sm:$0xff]
      %v2147 = vld [vmem:[#allocation3 + $0x90] sm:$0xff]
      %v2148 = vld [vmem:[#allocation3 + $0x98] sm:$0xff]
      %v2149 = vld [vmem:[#allocation3 + $0xa0] sm:$0xff]
      %v2150 = vld [vmem:[#allocation3 + $0xa8] sm:$0xff]
      %v2151 = vld [vmem:[#allocation3 + $0xb0] sm:$0xff]
      %v2152 = vld [vmem:[#allocation3 + $0xb8] sm:$0xff]
      %v2153 = vld [vmem:[#allocation3 + $0xc0] sm:$0xff]
      %v2154 = vld [vmem:[#allocation3 + $0xc8] sm:$0xff]
      %v2155 = vld [vmem:[#allocation3 + $0xd0] sm:$0xff]
      %v2156 = vld [vmem:[#allocation3 + $0xd8] sm:$0xff]
      %v2157 = vld [vmem:[#allocation3 + $0xe0] sm:$0xff]
      %v2158 = vld [vmem:[#allocation3 + $0xe8] sm:$0xff]
      %v2159 = vld [vmem:[#allocation3 + $0xf0] sm:$0xff]
      %v2160 = vld [vmem:[#allocation3 + $0xf8] sm:$0xff]
      %v2161 = vadd.f32 %v2129, %v1971
      %v2162 = vadd.f32 %v2130, %v1976
      %v2163 = vadd.f32 %v2131, %v1981
      %v2164 = vadd.f32 %v2132, %v1986
      %v2165 = vadd.f32 %v2133, %v1991
      %v2166 = vadd.f32 %v2134, %v1996
      %v2167 = vadd.f32 %v2135, %v2001
      %v2168 = vadd.f32 %v2136, %v2006
      %v2169 = vadd.f32 %v2137, %v2011
      %v2170 = vadd.f32 %v2138, %v2016
      %v2171 = vadd.f32 %v2139, %v2021
      %v2172 = vadd.f32 %v2140, %v2026
      %v2173 = vadd.f32 %v2141, %v2031
      %v2174 = vadd.f32 %v2142, %v2036
      %v2175 = vadd.f32 %v2143, %v2041
      %v2176 = vadd.f32 %v2144, %v2046
      %v2177 = vadd.f32 %v2145, %v2051
      %v2178 = vadd.f32 %v2146, %v2056
      %v2179 = vadd.f32 %v2147, %v2061
      %v2180 = vadd.f32 %v2148, %v2066
      %v2181 = vadd.f32 %v2149, %v2071
      %v2182 = vadd.f32 %v2150, %v2076
      %v2183 = vadd.f32 %v2151, %v2081
      %v2184 = vadd.f32 %v2152, %v2086
      %v2185 = vadd.f32 %v2153, %v2091
      %v2186 = vadd.f32 %v2154, %v2096
      %v2187 = vadd.f32 %v2155, %v2101
      %v2188 = vadd.f32 %v2156, %v2106
      %v2189 = vadd.f32 %v2157, %v2111
      %v2190 = vadd.f32 %v2158, %v2116
      %v2191 = vadd.f32 %v2159, %v2121
      %v2192 = vadd.f32 %v2160, %v2126
      %2193 = vst.msk [vmem:[#allocation3] sm:$0xff] %vm411, %v2161
      %2194 = vst.msk [vmem:[#allocation3 + $0x8] sm:$0xff] %vm411, %v2162
      %2195 = vst.msk [vmem:[#allocation3 + $0x10] sm:$0xff] %vm411, %v2163
      %2196 = vst.msk [vmem:[#allocation3 + $0x18] sm:$0xff] %vm411, %v2164
      %2197 = vst.msk [vmem:[#allocation3 + $0x20] sm:$0xff] %vm411, %v2165
      %2198 = vst.msk [vmem:[#allocation3 + $0x28] sm:$0xff] %vm411, %v2166
      %2199 = vst.msk [vmem:[#allocation3 + $0x30] sm:$0xff] %vm411, %v2167
      %2200 = vst.msk [vmem:[#allocation3 + $0x38] sm:$0xff] %vm411, %v2168
      %2201 = vst.msk [vmem:[#allocation3 + $0x40] sm:$0xff] %vm411, %v2169
      %2202 = vst.msk [vmem:[#allocation3 + $0x48] sm:$0xff] %vm411, %v2170
      %2203 = vst.msk [vmem:[#allocation3 + $0x50] sm:$0xff] %vm411, %v2171
      %2204 = vst.msk [vmem:[#allocation3 + $0x58] sm:$0xff] %vm411, %v2172
      %2205 = vst.msk [vmem:[#allocation3 + $0x60] sm:$0xff] %vm411, %v2173
      %2206 = vst.msk [vmem:[#allocation3 + $0x68] sm:$0xff] %vm411, %v2174
      %2207 = vst.msk [vmem:[#allocation3 + $0x70] sm:$0xff] %vm411, %v2175
      %2208 = vst.msk [vmem:[#allocation3 + $0x78] sm:$0xff] %vm411, %v2176
      %2209 = vst.msk [vmem:[#allocation3 + $0x80] sm:$0xff] %vm411, %v2177
      %2210 = vst.msk [vmem:[#allocation3 + $0x88] sm:$0xff] %vm411, %v2178
      %2211 = vst.msk [vmem:[#allocation3 + $0x90] sm:$0xff] %vm411, %v2179
      %2212 = vst.msk [vmem:[#allocation3 + $0x98] sm:$0xff] %vm411, %v2180
      %2213 = vst.msk [vmem:[#allocation3 + $0xa0] sm:$0xff] %vm411, %v2181
      %2214 = vst.msk [vmem:[#allocation3 + $0xa8] sm:$0xff] %vm411, %v2182
      %2215 = vst.msk [vmem:[#allocation3 + $0xb0] sm:$0xff] %vm411, %v2183
      %2216 = vst.msk [vmem:[#allocation3 + $0xb8] sm:$0xff] %vm411, %v2184
      %2217 = vst.msk [vmem:[#allocation3 + $0xc0] sm:$0xff] %vm411, %v2185
      %2218 = vst.msk [vmem:[#allocation3 + $0xc8] sm:$0xff] %vm411, %v2186
      %2219 = vst.msk [vmem:[#allocation3 + $0xd0] sm:$0xff] %vm411, %v2187
      %2220 = vst.msk [vmem:[#allocation3 + $0xd8] sm:$0xff] %vm411, %v2188
      %2221 = vst.msk [vmem:[#allocation3 + $0xe0] sm:$0xff] %vm411, %v2189
      %2222 = vst.msk [vmem:[#allocation3 + $0xe8] sm:$0xff] %vm411, %v2190
      %2223 = vst.msk [vmem:[#allocation3 + $0xf0] sm:$0xff] %vm411, %v2191
      %2224 = vst.msk [vmem:[#allocation3 + $0xf8] sm:$0xff] %vm411, %v2192
      %v2225 = vld [vmem:[%s420 + $0x1] sm:$0xff]
      %v2226 = vld [vmem:[%s420 + $0x9] sm:$0xff]
      %v2227 = vld [vmem:[%s420 + $0x19] sm:$0xff]
      %v2228 = vld [vmem:[%s420 + $0x21] sm:$0xff]
      %v2229 = vld [vmem:[%s420 + $0x31] sm:$0xff]
      %v2230 = vld [vmem:[%s420 + $0x39] sm:$0xff]
      %v2231 = vld [vmem:[%s420 + $0x49] sm:$0xff]
      %v2232 = vld [vmem:[%s420 + $0x51] sm:$0xff]
      %v2233 = vld [vmem:[%s420 + $0x61] sm:$0xff]
      %v2234 = vld [vmem:[%s420 + $0x69] sm:$0xff]
      %v2235 = vld [vmem:[%s420 + $0x79] sm:$0xff]
      %v2236 = vld [vmem:[%s420 + $0x81] sm:$0xff]
      %v2237 = vld [vmem:[%s420 + $0x91] sm:$0xff]
      %v2238 = vld [vmem:[%s420 + $0x99] sm:$0xff]
      %v2239 = vld [vmem:[%s420 + $0xa9] sm:$0xff]
      %v2240 = vld [vmem:[%s420 + $0xb1] sm:$0xff]
      %v2241 = vld [vmem:[%s420 + $0xc1] sm:$0xff]
      %v2242 = vld [vmem:[%s420 + $0xc9] sm:$0xff]
      %v2243 = vld [vmem:[%s420 + $0xd9] sm:$0xff]
      %v2244 = vld [vmem:[%s420 + $0xe1] sm:$0xff]
      %v2245 = vld [vmem:[%s420 + $0xf1] sm:$0xff]
      %v2246 = vld [vmem:[%s420 + $0xf9] sm:$0xff]
      %v2247 = vld [vmem:[%s420 + $0x109] sm:$0xff]
      %v2248 = vld [vmem:[%s420 + $0x111] sm:$0xff]
      %v2249 = vld [vmem:[%s420 + $0x121] sm:$0xff]
      %v2250 = vld [vmem:[%s420 + $0x129] sm:$0xff]
      %v2251 = vld [vmem:[%s420 + $0x139] sm:$0xff]
      %v2252 = vld [vmem:[%s420 + $0x141] sm:$0xff]
      %v2253 = vld [vmem:[%s420 + $0x151] sm:$0xff]
      %v2254 = vld [vmem:[%s420 + $0x159] sm:$0xff]
      %v2255 = vld [vmem:[%s420 + $0x169] sm:$0xff]
      %v2256 = vld [vmem:[%s420 + $0x171] sm:$0xff]
      %s2257 = scalar_lea.vmem %s3, 32
      %v2258 = vld [vmem:[%s2257] sm:$0xff]
      %v2260 = vsel %vm411, %v2225, 0
      %v2263 = vsel %vm411, %v2226, 0
      %v2266 = vsel %vm411, %v2227, 0
      %v2269 = vsel %vm411, %v2228, 0
      %v2272 = vsel %vm411, %v2229, 0
      %v2275 = vsel %vm411, %v2230, 0
      %v2278 = vsel %vm411, %v2231, 0
      %v2281 = vsel %vm411, %v2232, 0
      %v2284 = vsel %vm411, %v2233, 0
      %v2287 = vsel %vm411, %v2234, 0
      %v2290 = vsel %vm411, %v2235, 0
      %v2293 = vsel %vm411, %v2236, 0
      %v2296 = vsel %vm411, %v2237, 0
      %v2299 = vsel %vm411, %v2238, 0
      %v2302 = vsel %vm411, %v2239, 0
      %v2305 = vsel %vm411, %v2240, 0
      %v2308 = vsel %vm411, %v2241, 0
      %v2311 = vsel %vm411, %v2242, 0
      %v2314 = vsel %vm411, %v2243, 0
      %v2317 = vsel %vm411, %v2244, 0
      %v2320 = vsel %vm411, %v2245, 0
      %v2323 = vsel %vm411, %v2246, 0
      %v2326 = vsel %vm411, %v2247, 0
      %v2329 = vsel %vm411, %v2248, 0
      %v2332 = vsel %vm411, %v2249, 0
      %v2335 = vsel %vm411, %v2250, 0
      %v2338 = vsel %vm411, %v2251, 0
      %v2341 = vsel %vm411, %v2252, 0
      %v2344 = vsel %vm411, %v2253, 0
      %v2347 = vsel %vm411, %v2254, 0
      %v2350 = vsel %vm411, %v2255, 0
      %v2353 = vsel %vm411, %v2256, 0
      %2355 = vmatprep.subr.mxu0 0.0
      %2356 = vmatpush1.msra.mxu0 0.0
      %2357 = vmatprep.subr.mxu0 0.0
      %2358 = vmatpush1.msra.mxu0 0.0
      %2359 = vmatprep.subr.mxu0 0.0
      %2360 = vmatpush1.msra.mxu0 0.0
      %2361 = vmatprep.subr.mxu0 0.0
      %2362 = vmatpush1.msra.mxu0 0.0
      %2363 = vmatprep.subr.mxu0 0.0
      %2364 = vmatpush1.msra.mxu0 0.0
      %2365 = vmatprep.subr.mxu0 0.0
      %2366 = vmatpush1.msra.mxu0 0.0
      %2367 = vmatprep.subr.mxu0 0.0
      %2368 = vmatpush1.msra.mxu0 0.0
      %2369 = vmatprep.subr.mxu0 0.0
      %2370 = vmatpush1.msra.mxu0 0.0
      %2371 = vmatprep.subr.mxu0 0.0
      %2372 = vmatpush1.msra.mxu0 0.0
      %2373 = vmatprep.subr.mxu0 0.0
      %2374 = vmatpush1.msra.mxu0 0.0
      %2375 = vmatprep.subr.mxu0 0.0
      %2376 = vmatpush1.msra.mxu0 0.0
      %2377 = vmatprep.subr.mxu0 0.0
      %2378 = vmatpush1.msra.mxu0 0.0
      %2379 = vmatprep.subr.mxu0 0.0
      %2380 = vmatpush1.msra.mxu0 0.0
      %2381 = vmatprep.subr.mxu0 0.0
      %2382 = vmatpush1.msra.mxu0 0.0
      %2383 = vmatprep.subr.mxu0 0.0
      %2384 = vmatpush1.msra.mxu0 0.0
      %2385 = vmatprep.subr.mxu0 0.0
      %2386 = vmatpush1.msra.mxu0 %v2258
      %2387 = vmatprep.subr.mxu0 0.0
      %2388 = vmatpush2.msra.mxu0 0.0
      %2389 = vmatprep.subr.mxu0 0.0
      %2390 = vmatpush2.msra.mxu0 0.0
      %2391 = vmatprep.subr.mxu0 0.0
      %2392 = vmatpush2.msra.mxu0 0.0
      %2393 = vmatprep.subr.mxu0 0.0
      %2394 = vmatpush2.msra.mxu0 0.0
      %2395 = vmatprep.subr.mxu0 0.0
      %2396 = vmatpush2.msra.mxu0 0.0
      %2397 = vmatprep.subr.mxu0 0.0
      %2398 = vmatpush2.msra.mxu0 0.0
      %2399 = vmatprep.subr.mxu0 0.0
      %2400 = vmatpush2.msra.mxu0 0.0
      %2401 = vmatprep.subr.mxu0 0.0
      %2402 = vmatpush2.msra.mxu0 0.0
      %2403 = vmatprep.subr.mxu0 0.0
      %2404 = vmatpush2.msra.mxu0 0.0
      %2405 = vmatprep.subr.mxu0 0.0
      %2406 = vmatpush2.msra.mxu0 0.0
      %2407 = vmatprep.subr.mxu0 0.0
      %2408 = vmatpush2.msra.mxu0 0.0
      %2409 = vmatprep.subr.mxu0 0.0
      %2410 = vmatpush2.msra.mxu0 0.0
      %2411 = vmatprep.subr.mxu0 0.0
      %2412 = vmatpush2.msra.mxu0 0.0
      %2413 = vmatprep.subr.mxu0 0.0
      %2414 = vmatpush2.msra.mxu0 0.0
      %2415 = vmatprep.subr.mxu0 0.0
      %2416 = vmatpush2.msra.mxu0 0.0
      %2417 = vmatprep.subr.mxu0 0.0
      %2418 = vmatpush2.msra.mxu0 0.0
      %2419 = vmatprep.mubr.f32.mxu0 0.0
      %2420 = vmatmul.mubr.f32.gmra.mxu0 %v2260
      %v2421 = vpop.f32.mrf.mxu0
      %v2422 = vadd.f32 0.0, %v2421
      %v2423 = vpop.f32.mrf.mxu0
      %2424 = vmatprep.mubr.f32.mxu0 0.0
      %2425 = vmatmul.mubr.f32.gmra.mxu0 %v2263
      %v2426 = vpop.f32.mrf.mxu0
      %v2427 = vadd.f32 0.0, %v2426
      %v2428 = vpop.f32.mrf.mxu0
      %2429 = vmatprep.mubr.f32.mxu0 0.0
      %2430 = vmatmul.mubr.f32.gmra.mxu0 %v2266
      %v2431 = vpop.f32.mrf.mxu0
      %v2432 = vadd.f32 0.0, %v2431
      %v2433 = vpop.f32.mrf.mxu0
      %2434 = vmatprep.mubr.f32.mxu0 0.0
      %2435 = vmatmul.mubr.f32.gmra.mxu0 %v2269
      %v2436 = vpop.f32.mrf.mxu0
      %v2437 = vadd.f32 0.0, %v2436
      %v2438 = vpop.f32.mrf.mxu0
      %2439 = vmatprep.mubr.f32.mxu0 0.0
      %2440 = vmatmul.mubr.f32.gmra.mxu0 %v2272
      %v2441 = vpop.f32.mrf.mxu0
      %v2442 = vadd.f32 0.0, %v2441
      %v2443 = vpop.f32.mrf.mxu0
      %2444 = vmatprep.mubr.f32.mxu0 0.0
      %2445 = vmatmul.mubr.f32.gmra.mxu0 %v2275
      %v2446 = vpop.f32.mrf.mxu0
      %v2447 = vadd.f32 0.0, %v2446
      %v2448 = vpop.f32.mrf.mxu0
      %2449 = vmatprep.mubr.f32.mxu0 0.0
      %2450 = vmatmul.mubr.f32.gmra.mxu0 %v2278
      %v2451 = vpop.f32.mrf.mxu0
      %v2452 = vadd.f32 0.0, %v2451
      %v2453 = vpop.f32.mrf.mxu0
      %2454 = vmatprep.mubr.f32.mxu0 0.0
      %2455 = vmatmul.mubr.f32.gmra.mxu0 %v2281
      %v2456 = vpop.f32.mrf.mxu0
      %v2457 = vadd.f32 0.0, %v2456
      %v2458 = vpop.f32.mrf.mxu0
      %2459 = vmatprep.mubr.f32.mxu0 0.0
      %2460 = vmatmul.mubr.f32.gmra.mxu0 %v2284
      %v2461 = vpop.f32.mrf.mxu0
      %v2462 = vadd.f32 0.0, %v2461
      %v2463 = vpop.f32.mrf.mxu0
      %2464 = vmatprep.mubr.f32.mxu0 0.0
      %2465 = vmatmul.mubr.f32.gmra.mxu0 %v2287
      %v2466 = vpop.f32.mrf.mxu0
      %v2467 = vadd.f32 0.0, %v2466
      %v2468 = vpop.f32.mrf.mxu0
      %2469 = vmatprep.mubr.f32.mxu0 0.0
      %2470 = vmatmul.mubr.f32.gmra.mxu0 %v2290
      %v2471 = vpop.f32.mrf.mxu0
      %v2472 = vadd.f32 0.0, %v2471
      %v2473 = vpop.f32.mrf.mxu0
      %2474 = vmatprep.mubr.f32.mxu0 0.0
      %2475 = vmatmul.mubr.f32.gmra.mxu0 %v2293
      %v2476 = vpop.f32.mrf.mxu0
      %v2477 = vadd.f32 0.0, %v2476
      %v2478 = vpop.f32.mrf.mxu0
      %2479 = vmatprep.mubr.f32.mxu0 0.0
      %2480 = vmatmul.mubr.f32.gmra.mxu0 %v2296
      %v2481 = vpop.f32.mrf.mxu0
      %v2482 = vadd.f32 0.0, %v2481
      %v2483 = vpop.f32.mrf.mxu0
      %2484 = vmatprep.mubr.f32.mxu0 0.0
      %2485 = vmatmul.mubr.f32.gmra.mxu0 %v2299
      %v2486 = vpop.f32.mrf.mxu0
      %v2487 = vadd.f32 0.0, %v2486
      %v2488 = vpop.f32.mrf.mxu0
      %2489 = vmatprep.mubr.f32.mxu0 0.0
      %2490 = vmatmul.mubr.f32.gmra.mxu0 %v2302
      %v2491 = vpop.f32.mrf.mxu0
      %v2492 = vadd.f32 0.0, %v2491
      %v2493 = vpop.f32.mrf.mxu0
      %2494 = vmatprep.mubr.f32.mxu0 0.0
      %2495 = vmatmul.mubr.f32.gmra.mxu0 %v2305
      %v2496 = vpop.f32.mrf.mxu0
      %v2497 = vadd.f32 0.0, %v2496
      %v2498 = vpop.f32.mrf.mxu0
      %2499 = vmatprep.mubr.f32.mxu0 0.0
      %2500 = vmatmul.mubr.f32.gmra.mxu0 %v2308
      %v2501 = vpop.f32.mrf.mxu0
      %v2502 = vadd.f32 0.0, %v2501
      %v2503 = vpop.f32.mrf.mxu0
      %2504 = vmatprep.mubr.f32.mxu0 0.0
      %2505 = vmatmul.mubr.f32.gmra.mxu0 %v2311
      %v2506 = vpop.f32.mrf.mxu0
      %v2507 = vadd.f32 0.0, %v2506
      %v2508 = vpop.f32.mrf.mxu0
      %2509 = vmatprep.mubr.f32.mxu0 0.0
      %2510 = vmatmul.mubr.f32.gmra.mxu0 %v2314
      %v2511 = vpop.f32.mrf.mxu0
      %v2512 = vadd.f32 0.0, %v2511
      %v2513 = vpop.f32.mrf.mxu0
      %2514 = vmatprep.mubr.f32.mxu0 0.0
      %2515 = vmatmul.mubr.f32.gmra.mxu0 %v2317
      %v2516 = vpop.f32.mrf.mxu0
      %v2517 = vadd.f32 0.0, %v2516
      %v2518 = vpop.f32.mrf.mxu0
      %2519 = vmatprep.mubr.f32.mxu0 0.0
      %2520 = vmatmul.mubr.f32.gmra.mxu0 %v2320
      %v2521 = vpop.f32.mrf.mxu0
      %v2522 = vadd.f32 0.0, %v2521
      %v2523 = vpop.f32.mrf.mxu0
      %2524 = vmatprep.mubr.f32.mxu0 0.0
      %2525 = vmatmul.mubr.f32.gmra.mxu0 %v2323
      %v2526 = vpop.f32.mrf.mxu0
      %v2527 = vadd.f32 0.0, %v2526
      %v2528 = vpop.f32.mrf.mxu0
      %2529 = vmatprep.mubr.f32.mxu0 0.0
      %2530 = vmatmul.mubr.f32.gmra.mxu0 %v2326
      %v2531 = vpop.f32.mrf.mxu0
      %v2532 = vadd.f32 0.0, %v2531
      %v2533 = vpop.f32.mrf.mxu0
      %2534 = vmatprep.mubr.f32.mxu0 0.0
      %2535 = vmatmul.mubr.f32.gmra.mxu0 %v2329
      %v2536 = vpop.f32.mrf.mxu0
      %v2537 = vadd.f32 0.0, %v2536
      %v2538 = vpop.f32.mrf.mxu0
      %2539 = vmatprep.mubr.f32.mxu0 0.0
      %2540 = vmatmul.mubr.f32.gmra.mxu0 %v2332
      %v2541 = vpop.f32.mrf.mxu0
      %v2542 = vadd.f32 0.0, %v2541
      %v2543 = vpop.f32.mrf.mxu0
      %2544 = vmatprep.mubr.f32.mxu0 0.0
      %2545 = vmatmul.mubr.f32.gmra.mxu0 %v2335
      %v2546 = vpop.f32.mrf.mxu0
      %v2547 = vadd.f32 0.0, %v2546
      %v2548 = vpop.f32.mrf.mxu0
      %2549 = vmatprep.mubr.f32.mxu0 0.0
      %2550 = vmatmul.mubr.f32.gmra.mxu0 %v2338
      %v2551 = vpop.f32.mrf.mxu0
      %v2552 = vadd.f32 0.0, %v2551
      %v2553 = vpop.f32.mrf.mxu0
      %2554 = vmatprep.mubr.f32.mxu0 0.0
      %2555 = vmatmul.mubr.f32.gmra.mxu0 %v2341
      %v2556 = vpop.f32.mrf.mxu0
      %v2557 = vadd.f32 0.0, %v2556
      %v2558 = vpop.f32.mrf.mxu0
      %2559 = vmatprep.mubr.f32.mxu0 0.0
      %2560 = vmatmul.mubr.f32.gmra.mxu0 %v2344
      %v2561 = vpop.f32.mrf.mxu0
      %v2562 = vadd.f32 0.0, %v2561
      %v2563 = vpop.f32.mrf.mxu0
      %2564 = vmatprep.mubr.f32.mxu0 0.0
      %2565 = vmatmul.mubr.f32.gmra.mxu0 %v2347
      %v2566 = vpop.f32.mrf.mxu0
      %v2567 = vadd.f32 0.0, %v2566
      %v2568 = vpop.f32.mrf.mxu0
      %2569 = vmatprep.mubr.f32.mxu0 0.0
      %2570 = vmatmul.mubr.f32.gmra.mxu0 %v2350
      %v2571 = vpop.f32.mrf.mxu0
      %v2572 = vadd.f32 0.0, %v2571
      %v2573 = vpop.f32.mrf.mxu0
      %2574 = vmatprep.mubr.f32.mxu0 0.0
      %2575 = vmatmul.mubr.f32.gmra.mxu0 %v2353
      %v2576 = vpop.f32.mrf.mxu0
      %v2577 = vadd.f32 0.0, %v2576
      %v2578 = vpop.f32.mrf.mxu0
      %2579 = vdwg.mxu0
      %v2580 = vld [vmem:[#allocation3] sm:$0xff]
      %v2581 = vld [vmem:[#allocation3 + $0x8] sm:$0xff]
      %v2582 = vld [vmem:[#allocation3 + $0x10] sm:$0xff]
      %v2583 = vld [vmem:[#allocation3 + $0x18] sm:$0xff]
      %v2584 = vld [vmem:[#allocation3 + $0x20] sm:$0xff]
      %v2585 = vld [vmem:[#allocation3 + $0x28] sm:$0xff]
      %v2586 = vld [vmem:[#allocation3 + $0x30] sm:$0xff]
      %v2587 = vld [vmem:[#allocation3 + $0x38] sm:$0xff]
      %v2588 = vld [vmem:[#allocation3 + $0x40] sm:$0xff]
      %v2589 = vld [vmem:[#allocation3 + $0x48] sm:$0xff]
      %v2590 = vld [vmem:[#allocation3 + $0x50] sm:$0xff]
      %v2591 = vld [vmem:[#allocation3 + $0x58] sm:$0xff]
      %v2592 = vld [vmem:[#allocation3 + $0x60] sm:$0xff]
      %v2593 = vld [vmem:[#allocation3 + $0x68] sm:$0xff]
      %v2594 = vld [vmem:[#allocation3 + $0x70] sm:$0xff]
      %v2595 = vld [vmem:[#allocation3 + $0x78] sm:$0xff]
      %v2596 = vld [vmem:[#allocation3 + $0x80] sm:$0xff]
      %v2597 = vld [vmem:[#allocation3 + $0x88] sm:$0xff]
      %v2598 = vld [vmem:[#allocation3 + $0x90] sm:$0xff]
      %v2599 = vld [vmem:[#allocation3 + $0x98] sm:$0xff]
      %v2600 = vld [vmem:[#allocation3 + $0xa0] sm:$0xff]
      %v2601 = vld [vmem:[#allocation3 + $0xa8] sm:$0xff]
      %v2602 = vld [vmem:[#allocation3 + $0xb0] sm:$0xff]
      %v2603 = vld [vmem:[#allocation3 + $0xb8] sm:$0xff]
      %v2604 = vld [vmem:[#allocation3 + $0xc0] sm:$0xff]
      %v2605 = vld [vmem:[#allocation3 + $0xc8] sm:$0xff]
      %v2606 = vld [vmem:[#allocation3 + $0xd0] sm:$0xff]
      %v2607 = vld [vmem:[#allocation3 + $0xd8] sm:$0xff]
      %v2608 = vld [vmem:[#allocation3 + $0xe0] sm:$0xff]
      %v2609 = vld [vmem:[#allocation3 + $0xe8] sm:$0xff]
      %v2610 = vld [vmem:[#allocation3 + $0xf0] sm:$0xff]
      %v2611 = vld [vmem:[#allocation3 + $0xf8] sm:$0xff]
      %v2612 = vadd.f32 %v2580, %v2422
      %v2613 = vadd.f32 %v2581, %v2427
      %v2614 = vadd.f32 %v2582, %v2432
      %v2615 = vadd.f32 %v2583, %v2437
      %v2616 = vadd.f32 %v2584, %v2442
      %v2617 = vadd.f32 %v2585, %v2447
      %v2618 = vadd.f32 %v2586, %v2452
      %v2619 = vadd.f32 %v2587, %v2457
      %v2620 = vadd.f32 %v2588, %v2462
      %v2621 = vadd.f32 %v2589, %v2467
      %v2622 = vadd.f32 %v2590, %v2472
      %v2623 = vadd.f32 %v2591, %v2477
      %v2624 = vadd.f32 %v2592, %v2482
      %v2625 = vadd.f32 %v2593, %v2487
      %v2626 = vadd.f32 %v2594, %v2492
      %v2627 = vadd.f32 %v2595, %v2497
      %v2628 = vadd.f32 %v2596, %v2502
      %v2629 = vadd.f32 %v2597, %v2507
      %v2630 = vadd.f32 %v2598, %v2512
      %v2631 = vadd.f32 %v2599, %v2517
      %v2632 = vadd.f32 %v2600, %v2522
      %v2633 = vadd.f32 %v2601, %v2527
      %v2634 = vadd.f32 %v2602, %v2532
      %v2635 = vadd.f32 %v2603, %v2537
      %v2636 = vadd.f32 %v2604, %v2542
      %v2637 = vadd.f32 %v2605, %v2547
      %v2638 = vadd.f32 %v2606, %v2552
      %v2639 = vadd.f32 %v2607, %v2557
      %v2640 = vadd.f32 %v2608, %v2562
      %v2641 = vadd.f32 %v2609, %v2567
      %v2642 = vadd.f32 %v2610, %v2572
      %v2643 = vadd.f32 %v2611, %v2577
      %2644 = vst.msk [vmem:[#allocation3] sm:$0xff] %vm411, %v2612
      %2645 = vst.msk [vmem:[#allocation3 + $0x8] sm:$0xff] %vm411, %v2613
      %2646 = vst.msk [vmem:[#allocation3 + $0x10] sm:$0xff] %vm411, %v2614
      %2647 = vst.msk [vmem:[#allocation3 + $0x18] sm:$0xff] %vm411, %v2615
      %2648 = vst.msk [vmem:[#allocation3 + $0x20] sm:$0xff] %vm411, %v2616
      %2649 = vst.msk [vmem:[#allocation3 + $0x28] sm:$0xff] %vm411, %v2617
      %2650 = vst.msk [vmem:[#allocation3 + $0x30] sm:$0xff] %vm411, %v2618
      %2651 = vst.msk [vmem:[#allocation3 + $0x38] sm:$0xff] %vm411, %v2619
      %2652 = vst.msk [vmem:[#allocation3 + $0x40] sm:$0xff] %vm411, %v2620
      %2653 = vst.msk [vmem:[#allocation3 + $0x48] sm:$0xff] %vm411, %v2621
      %2654 = vst.msk [vmem:[#allocation3 + $0x50] sm:$0xff] %vm411, %v2622
      %2655 = vst.msk [vmem:[#allocation3 + $0x58] sm:$0xff] %vm411, %v2623
      %2656 = vst.msk [vmem:[#allocation3 + $0x60] sm:$0xff] %vm411, %v2624
      %2657 = vst.msk [vmem:[#allocation3 + $0x68] sm:$0xff] %vm411, %v2625
      %2658 = vst.msk [vmem:[#allocation3 + $0x70] sm:$0xff] %vm411, %v2626
      %2659 = vst.msk [vmem:[#allocation3 + $0x78] sm:$0xff] %vm411, %v2627
      %2660 = vst.msk [vmem:[#allocation3 + $0x80] sm:$0xff] %vm411, %v2628
      %2661 = vst.msk [vmem:[#allocation3 + $0x88] sm:$0xff] %vm411, %v2629
      %2662 = vst.msk [vmem:[#allocation3 + $0x90] sm:$0xff] %vm411, %v2630
      %2663 = vst.msk [vmem:[#allocation3 + $0x98] sm:$0xff] %vm411, %v2631
      %2664 = vst.msk [vmem:[#allocation3 + $0xa0] sm:$0xff] %vm411, %v2632
      %2665 = vst.msk [vmem:[#allocation3 + $0xa8] sm:$0xff] %vm411, %v2633
      %2666 = vst.msk [vmem:[#allocation3 + $0xb0] sm:$0xff] %vm411, %v2634
      %2667 = vst.msk [vmem:[#allocation3 + $0xb8] sm:$0xff] %vm411, %v2635
      %2668 = vst.msk [vmem:[#allocation3 + $0xc0] sm:$0xff] %vm411, %v2636
      %2669 = vst.msk [vmem:[#allocation3 + $0xc8] sm:$0xff] %vm411, %v2637
      %2670 = vst.msk [vmem:[#allocation3 + $0xd0] sm:$0xff] %vm411, %v2638
      %2671 = vst.msk [vmem:[#allocation3 + $0xd8] sm:$0xff] %vm411, %v2639
      %2672 = vst.msk [vmem:[#allocation3 + $0xe0] sm:$0xff] %vm411, %v2640
      %2673 = vst.msk [vmem:[#allocation3 + $0xe8] sm:$0xff] %vm411, %v2641
      %2674 = vst.msk [vmem:[#allocation3 + $0xf0] sm:$0xff] %vm411, %v2642
      %2675 = vst.msk [vmem:[#allocation3 + $0xf8] sm:$0xff] %vm411, %v2643
      %v2676 = vld [vmem:[%s420 + $0x2] sm:$0xff]
      %v2677 = vld [vmem:[%s420 + $0xa] sm:$0xff]
      %v2678 = vld [vmem:[%s420 + $0x1a] sm:$0xff]
      %v2679 = vld [vmem:[%s420 + $0x22] sm:$0xff]
      %v2680 = vld [vmem:[%s420 + $0x32] sm:$0xff]
      %v2681 = vld [vmem:[%s420 + $0x3a] sm:$0xff]
      %v2682 = vld [vmem:[%s420 + $0x4a] sm:$0xff]
      %v2683 = vld [vmem:[%s420 + $0x52] sm:$0xff]
      %v2684 = vld [vmem:[%s420 + $0x62] sm:$0xff]
      %v2685 = vld [vmem:[%s420 + $0x6a] sm:$0xff]
      %v2686 = vld [vmem:[%s420 + $0x7a] sm:$0xff]
      %v2687 = vld [vmem:[%s420 + $0x82] sm:$0xff]
      %v2688 = vld [vmem:[%s420 + $0x92] sm:$0xff]
      %v2689 = vld [vmem:[%s420 + $0x9a] sm:$0xff]
      %v2690 = vld [vmem:[%s420 + $0xaa] sm:$0xff]
      %v2691 = vld [vmem:[%s420 + $0xb2] sm:$0xff]
      %v2692 = vld [vmem:[%s420 + $0xc2] sm:$0xff]
      %v2693 = vld [vmem:[%s420 + $0xca] sm:$0xff]
      %v2694 = vld [vmem:[%s420 + $0xda] sm:$0xff]
      %v2695 = vld [vmem:[%s420 + $0xe2] sm:$0xff]
      %v2696 = vld [vmem:[%s420 + $0xf2] sm:$0xff]
      %v2697 = vld [vmem:[%s420 + $0xfa] sm:$0xff]
      %v2698 = vld [vmem:[%s420 + $0x10a] sm:$0xff]
      %v2699 = vld [vmem:[%s420 + $0x112] sm:$0xff]
      %v2700 = vld [vmem:[%s420 + $0x122] sm:$0xff]
      %v2701 = vld [vmem:[%s420 + $0x12a] sm:$0xff]
      %v2702 = vld [vmem:[%s420 + $0x13a] sm:$0xff]
      %v2703 = vld [vmem:[%s420 + $0x142] sm:$0xff]
      %v2704 = vld [vmem:[%s420 + $0x152] sm:$0xff]
      %v2705 = vld [vmem:[%s420 + $0x15a] sm:$0xff]
      %v2706 = vld [vmem:[%s420 + $0x16a] sm:$0xff]
      %v2707 = vld [vmem:[%s420 + $0x172] sm:$0xff]
      %s2708 = scalar_lea.vmem %s3, 40
      %v2709 = vld [vmem:[%s2708] sm:$0xff]
      %v2711 = vsel %vm411, %v2676, 0
      %v2714 = vsel %vm411, %v2677, 0
      %v2717 = vsel %vm411, %v2678, 0
      %v2720 = vsel %vm411, %v2679, 0
      %v2723 = vsel %vm411, %v2680, 0
      %v2726 = vsel %vm411, %v2681, 0
      %v2729 = vsel %vm411, %v2682, 0
      %v2732 = vsel %vm411, %v2683, 0
      %v2735 = vsel %vm411, %v2684, 0
      %v2738 = vsel %vm411, %v2685, 0
      %v2741 = vsel %vm411, %v2686, 0
      %v2744 = vsel %vm411, %v2687, 0
      %v2747 = vsel %vm411, %v2688, 0
      %v2750 = vsel %vm411, %v2689, 0
      %v2753 = vsel %vm411, %v2690, 0
      %v2756 = vsel %vm411, %v2691, 0
      %v2759 = vsel %vm411, %v2692, 0
      %v2762 = vsel %vm411, %v2693, 0
      %v2765 = vsel %vm411, %v2694, 0
      %v2768 = vsel %vm411, %v2695, 0
      %v2771 = vsel %vm411, %v2696, 0
      %v2774 = vsel %vm411, %v2697, 0
      %v2777 = vsel %vm411, %v2698, 0
      %v2780 = vsel %vm411, %v2699, 0
      %v2783 = vsel %vm411, %v2700, 0
      %v2786 = vsel %vm411, %v2701, 0
      %v2789 = vsel %vm411, %v2702, 0
      %v2792 = vsel %vm411, %v2703, 0
      %v2795 = vsel %vm411, %v2704, 0
      %v2798 = vsel %vm411, %v2705, 0
      %v2801 = vsel %vm411, %v2706, 0
      %v2804 = vsel %vm411, %v2707, 0
      %2806 = vmatprep.subr.mxu0 0.0
      %2807 = vmatpush1.msra.mxu0 0.0
      %2808 = vmatprep.subr.mxu0 0.0
      %2809 = vmatpush1.msra.mxu0 0.0
      %2810 = vmatprep.subr.mxu0 0.0
      %2811 = vmatpush1.msra.mxu0 0.0
      %2812 = vmatprep.subr.mxu0 0.0
      %2813 = vmatpush1.msra.mxu0 0.0
      %2814 = vmatprep.subr.mxu0 0.0
      %2815 = vmatpush1.msra.mxu0 0.0
      %2816 = vmatprep.subr.mxu0 0.0
      %2817 = vmatpush1.msra.mxu0 0.0
      %2818 = vmatprep.subr.mxu0 0.0
      %2819 = vmatpush1.msra.mxu0 0.0
      %2820 = vmatprep.subr.mxu0 0.0
      %2821 = vmatpush1.msra.mxu0 0.0
      %2822 = vmatprep.subr.mxu0 0.0
      %2823 = vmatpush1.msra.mxu0 0.0
      %2824 = vmatprep.subr.mxu0 0.0
      %2825 = vmatpush1.msra.mxu0 0.0
      %2826 = vmatprep.subr.mxu0 0.0
      %2827 = vmatpush1.msra.mxu0 0.0
      %2828 = vmatprep.subr.mxu0 0.0
      %2829 = vmatpush1.msra.mxu0 0.0
      %2830 = vmatprep.subr.mxu0 0.0
      %2831 = vmatpush1.msra.mxu0 0.0
      %2832 = vmatprep.subr.mxu0 0.0
      %2833 = vmatpush1.msra.mxu0 0.0
      %2834 = vmatprep.subr.mxu0 0.0
      %2835 = vmatpush1.msra.mxu0 0.0
      %2836 = vmatprep.subr.mxu0 0.0
      %2837 = vmatpush1.msra.mxu0 %v2709
      %2838 = vmatprep.subr.mxu0 0.0
      %2839 = vmatpush2.msra.mxu0 0.0
      %2840 = vmatprep.subr.mxu0 0.0
      %2841 = vmatpush2.msra.mxu0 0.0
      %2842 = vmatprep.subr.mxu0 0.0
      %2843 = vmatpush2.msra.mxu0 0.0
      %2844 = vmatprep.subr.mxu0 0.0
      %2845 = vmatpush2.msra.mxu0 0.0
      %2846 = vmatprep.subr.mxu0 0.0
      %2847 = vmatpush2.msra.mxu0 0.0
      %2848 = vmatprep.subr.mxu0 0.0
      %2849 = vmatpush2.msra.mxu0 0.0
      %2850 = vmatprep.subr.mxu0 0.0
      %2851 = vmatpush2.msra.mxu0 0.0
      %2852 = vmatprep.subr.mxu0 0.0
      %2853 = vmatpush2.msra.mxu0 0.0
      %2854 = vmatprep.subr.mxu0 0.0
      %2855 = vmatpush2.msra.mxu0 0.0
      %2856 = vmatprep.subr.mxu0 0.0
      %2857 = vmatpush2.msra.mxu0 0.0
      %2858 = vmatprep.subr.mxu0 0.0
      %2859 = vmatpush2.msra.mxu0 0.0
      %2860 = vmatprep.subr.mxu0 0.0
      %2861 = vmatpush2.msra.mxu0 0.0
      %2862 = vmatprep.subr.mxu0 0.0
      %2863 = vmatpush2.msra.mxu0 0.0
      %2864 = vmatprep.subr.mxu0 0.0
      %2865 = vmatpush2.msra.mxu0 0.0
      %2866 = vmatprep.subr.mxu0 0.0
      %2867 = vmatpush2.msra.mxu0 0.0
      %2868 = vmatprep.subr.mxu0 0.0
      %2869 = vmatpush2.msra.mxu0 0.0
      %2870 = vmatprep.mubr.f32.mxu0 0.0
      %2871 = vmatmul.mubr.f32.gmra.mxu0 %v2711
      %v2872 = vpop.f32.mrf.mxu0
      %v2873 = vadd.f32 0.0, %v2872
      %v2874 = vpop.f32.mrf.mxu0
      %2875 = vmatprep.mubr.f32.mxu0 0.0
      %2876 = vmatmul.mubr.f32.gmra.mxu0 %v2714
      %v2877 = vpop.f32.mrf.mxu0
      %v2878 = vadd.f32 0.0, %v2877
      %v2879 = vpop.f32.mrf.mxu0
      %2880 = vmatprep.mubr.f32.mxu0 0.0
      %2881 = vmatmul.mubr.f32.gmra.mxu0 %v2717
      %v2882 = vpop.f32.mrf.mxu0
      %v2883 = vadd.f32 0.0, %v2882
      %v2884 = vpop.f32.mrf.mxu0
      %2885 = vmatprep.mubr.f32.mxu0 0.0
      %2886 = vmatmul.mubr.f32.gmra.mxu0 %v2720
      %v2887 = vpop.f32.mrf.mxu0
      %v2888 = vadd.f32 0.0, %v2887
      %v2889 = vpop.f32.mrf.mxu0
      %2890 = vmatprep.mubr.f32.mxu0 0.0
      %2891 = vmatmul.mubr.f32.gmra.mxu0 %v2723
      %v2892 = vpop.f32.mrf.mxu0
      %v2893 = vadd.f32 0.0, %v2892
      %v2894 = vpop.f32.mrf.mxu0
      %2895 = vmatprep.mubr.f32.mxu0 0.0
      %2896 = vmatmul.mubr.f32.gmra.mxu0 %v2726
      %v2897 = vpop.f32.mrf.mxu0
      %v2898 = vadd.f32 0.0, %v2897
      %v2899 = vpop.f32.mrf.mxu0
      %2900 = vmatprep.mubr.f32.mxu0 0.0
      %2901 = vmatmul.mubr.f32.gmra.mxu0 %v2729
      %v2902 = vpop.f32.mrf.mxu0
      %v2903 = vadd.f32 0.0, %v2902
      %v2904 = vpop.f32.mrf.mxu0
      %2905 = vmatprep.mubr.f32.mxu0 0.0
      %2906 = vmatmul.mubr.f32.gmra.mxu0 %v2732
      %v2907 = vpop.f32.mrf.mxu0
      %v2908 = vadd.f32 0.0, %v2907
      %v2909 = vpop.f32.mrf.mxu0
      %2910 = vmatprep.mubr.f32.mxu0 0.0
      %2911 = vmatmul.mubr.f32.gmra.mxu0 %v2735
      %v2912 = vpop.f32.mrf.mxu0
      %v2913 = vadd.f32 0.0, %v2912
      %v2914 = vpop.f32.mrf.mxu0
      %2915 = vmatprep.mubr.f32.mxu0 0.0
      %2916 = vmatmul.mubr.f32.gmra.mxu0 %v2738
      %v2917 = vpop.f32.mrf.mxu0
      %v2918 = vadd.f32 0.0, %v2917
      %v2919 = vpop.f32.mrf.mxu0
      %2920 = vmatprep.mubr.f32.mxu0 0.0
      %2921 = vmatmul.mubr.f32.gmra.mxu0 %v2741
      %v2922 = vpop.f32.mrf.mxu0
      %v2923 = vadd.f32 0.0, %v2922
      %v2924 = vpop.f32.mrf.mxu0
      %2925 = vmatprep.mubr.f32.mxu0 0.0
      %2926 = vmatmul.mubr.f32.gmra.mxu0 %v2744
      %v2927 = vpop.f32.mrf.mxu0
      %v2928 = vadd.f32 0.0, %v2927
      %v2929 = vpop.f32.mrf.mxu0
      %2930 = vmatprep.mubr.f32.mxu0 0.0
      %2931 = vmatmul.mubr.f32.gmra.mxu0 %v2747
      %v2932 = vpop.f32.mrf.mxu0
      %v2933 = vadd.f32 0.0, %v2932
      %v2934 = vpop.f32.mrf.mxu0
      %2935 = vmatprep.mubr.f32.mxu0 0.0
      %2936 = vmatmul.mubr.f32.gmra.mxu0 %v2750
      %v2937 = vpop.f32.mrf.mxu0
      %v2938 = vadd.f32 0.0, %v2937
      %v2939 = vpop.f32.mrf.mxu0
      %2940 = vmatprep.mubr.f32.mxu0 0.0
      %2941 = vmatmul.mubr.f32.gmra.mxu0 %v2753
      %v2942 = vpop.f32.mrf.mxu0
      %v2943 = vadd.f32 0.0, %v2942
      %v2944 = vpop.f32.mrf.mxu0
      %2945 = vmatprep.mubr.f32.mxu0 0.0
      %2946 = vmatmul.mubr.f32.gmra.mxu0 %v2756
      %v2947 = vpop.f32.mrf.mxu0
      %v2948 = vadd.f32 0.0, %v2947
      %v2949 = vpop.f32.mrf.mxu0
      %2950 = vmatprep.mubr.f32.mxu0 0.0
      %2951 = vmatmul.mubr.f32.gmra.mxu0 %v2759
      %v2952 = vpop.f32.mrf.mxu0
      %v2953 = vadd.f32 0.0, %v2952
      %v2954 = vpop.f32.mrf.mxu0
      %2955 = vmatprep.mubr.f32.mxu0 0.0
      %2956 = vmatmul.mubr.f32.gmra.mxu0 %v2762
      %v2957 = vpop.f32.mrf.mxu0
      %v2958 = vadd.f32 0.0, %v2957
      %v2959 = vpop.f32.mrf.mxu0
      %2960 = vmatprep.mubr.f32.mxu0 0.0
      %2961 = vmatmul.mubr.f32.gmra.mxu0 %v2765
      %v2962 = vpop.f32.mrf.mxu0
      %v2963 = vadd.f32 0.0, %v2962
      %v2964 = vpop.f32.mrf.mxu0
      %2965 = vmatprep.mubr.f32.mxu0 0.0
      %2966 = vmatmul.mubr.f32.gmra.mxu0 %v2768
      %v2967 = vpop.f32.mrf.mxu0
      %v2968 = vadd.f32 0.0, %v2967
      %v2969 = vpop.f32.mrf.mxu0
      %2970 = vmatprep.mubr.f32.mxu0 0.0
      %2971 = vmatmul.mubr.f32.gmra.mxu0 %v2771
      %v2972 = vpop.f32.mrf.mxu0
      %v2973 = vadd.f32 0.0, %v2972
      %v2974 = vpop.f32.mrf.mxu0
      %2975 = vmatprep.mubr.f32.mxu0 0.0
      %2976 = vmatmul.mubr.f32.gmra.mxu0 %v2774
      %v2977 = vpop.f32.mrf.mxu0
      %v2978 = vadd.f32 0.0, %v2977
      %v2979 = vpop.f32.mrf.mxu0
      %2980 = vmatprep.mubr.f32.mxu0 0.0
      %2981 = vmatmul.mubr.f32.gmra.mxu0 %v2777
      %v2982 = vpop.f32.mrf.mxu0
      %v2983 = vadd.f32 0.0, %v2982
      %v2984 = vpop.f32.mrf.mxu0
      %2985 = vmatprep.mubr.f32.mxu0 0.0
      %2986 = vmatmul.mubr.f32.gmra.mxu0 %v2780
      %v2987 = vpop.f32.mrf.mxu0
      %v2988 = vadd.f32 0.0, %v2987
      %v2989 = vpop.f32.mrf.mxu0
      %2990 = vmatprep.mubr.f32.mxu0 0.0
      %2991 = vmatmul.mubr.f32.gmra.mxu0 %v2783
      %v2992 = vpop.f32.mrf.mxu0
      %v2993 = vadd.f32 0.0, %v2992
      %v2994 = vpop.f32.mrf.mxu0
      %2995 = vmatprep.mubr.f32.mxu0 0.0
      %2996 = vmatmul.mubr.f32.gmra.mxu0 %v2786
      %v2997 = vpop.f32.mrf.mxu0
      %v2998 = vadd.f32 0.0, %v2997
      %v2999 = vpop.f32.mrf.mxu0
      %3000 = vmatprep.mubr.f32.mxu0 0.0
      %3001 = vmatmul.mubr.f32.gmra.mxu0 %v2789
      %v3002 = vpop.f32.mrf.mxu0
      %v3003 = vadd.f32 0.0, %v3002
      %v3004 = vpop.f32.mrf.mxu0
      %3005 = vmatprep.mubr.f32.mxu0 0.0
      %3006 = vmatmul.mubr.f32.gmra.mxu0 %v2792
      %v3007 = vpop.f32.mrf.mxu0
      %v3008 = vadd.f32 0.0, %v3007
      %v3009 = vpop.f32.mrf.mxu0
      %3010 = vmatprep.mubr.f32.mxu0 0.0
      %3011 = vmatmul.mubr.f32.gmra.mxu0 %v2795
      %v3012 = vpop.f32.mrf.mxu0
      %v3013 = vadd.f32 0.0, %v3012
      %v3014 = vpop.f32.mrf.mxu0
      %3015 = vmatprep.mubr.f32.mxu0 0.0
      %3016 = vmatmul.mubr.f32.gmra.mxu0 %v2798
      %v3017 = vpop.f32.mrf.mxu0
      %v3018 = vadd.f32 0.0, %v3017
      %v3019 = vpop.f32.mrf.mxu0
      %3020 = vmatprep.mubr.f32.mxu0 0.0
      %3021 = vmatmul.mubr.f32.gmra.mxu0 %v2801
      %v3022 = vpop.f32.mrf.mxu0
      %v3023 = vadd.f32 0.0, %v3022
      %v3024 = vpop.f32.mrf.mxu0
      %3025 = vmatprep.mubr.f32.mxu0 0.0
      %3026 = vmatmul.mubr.f32.gmra.mxu0 %v2804
      %v3027 = vpop.f32.mrf.mxu0
      %v3028 = vadd.f32 0.0, %v3027
      %v3029 = vpop.f32.mrf.mxu0
      %3030 = vdwg.mxu0
      %v3031 = vld [vmem:[#allocation3] sm:$0xff]
      %v3032 = vld [vmem:[#allocation3 + $0x8] sm:$0xff]
      %v3033 = vld [vmem:[#allocation3 + $0x10] sm:$0xff]
      %v3034 = vld [vmem:[#allocation3 + $0x18] sm:$0xff]
      %v3035 = vld [vmem:[#allocation3 + $0x20] sm:$0xff]
      %v3036 = vld [vmem:[#allocation3 + $0x28] sm:$0xff]
      %v3037 = vld [vmem:[#allocation3 + $0x30] sm:$0xff]
      %v3038 = vld [vmem:[#allocation3 + $0x38] sm:$0xff]
      %v3039 = vld [vmem:[#allocation3 + $0x40] sm:$0xff]
      %v3040 = vld [vmem:[#allocation3 + $0x48] sm:$0xff]
      %v3041 = vld [vmem:[#allocation3 + $0x50] sm:$0xff]
      %v3042 = vld [vmem:[#allocation3 + $0x58] sm:$0xff]
      %v3043 = vld [vmem:[#allocation3 + $0x60] sm:$0xff]
      %v3044 = vld [vmem:[#allocation3 + $0x68] sm:$0xff]
      %v3045 = vld [vmem:[#allocation3 + $0x70] sm:$0xff]
      %v3046 = vld [vmem:[#allocation3 + $0x78] sm:$0xff]
      %v3047 = vld [vmem:[#allocation3 + $0x80] sm:$0xff]
      %v3048 = vld [vmem:[#allocation3 + $0x88] sm:$0xff]
      %v3049 = vld [vmem:[#allocation3 + $0x90] sm:$0xff]
      %v3050 = vld [vmem:[#allocation3 + $0x98] sm:$0xff]
      %v3051 = vld [vmem:[#allocation3 + $0xa0] sm:$0xff]
      %v3052 = vld [vmem:[#allocation3 + $0xa8] sm:$0xff]
      %v3053 = vld [vmem:[#allocation3 + $0xb0] sm:$0xff]
      %v3054 = vld [vmem:[#allocation3 + $0xb8] sm:$0xff]
      %v3055 = vld [vmem:[#allocation3 + $0xc0] sm:$0xff]
      %v3056 = vld [vmem:[#allocation3 + $0xc8] sm:$0xff]
      %v3057 = vld [vmem:[#allocation3 + $0xd0] sm:$0xff]
      %v3058 = vld [vmem:[#allocation3 + $0xd8] sm:$0xff]
      %v3059 = vld [vmem:[#allocation3 + $0xe0] sm:$0xff]
      %v3060 = vld [vmem:[#allocation3 + $0xe8] sm:$0xff]
      %v3061 = vld [vmem:[#allocation3 + $0xf0] sm:$0xff]
      %v3062 = vld [vmem:[#allocation3 + $0xf8] sm:$0xff]
      %v3063 = vadd.f32 %v3031, %v2873
      %v3064 = vadd.f32 %v3032, %v2878
      %v3065 = vadd.f32 %v3033, %v2883
      %v3066 = vadd.f32 %v3034, %v2888
      %v3067 = vadd.f32 %v3035, %v2893
      %v3068 = vadd.f32 %v3036, %v2898
      %v3069 = vadd.f32 %v3037, %v2903
      %v3070 = vadd.f32 %v3038, %v2908
      %v3071 = vadd.f32 %v3039, %v2913
      %v3072 = vadd.f32 %v3040, %v2918
      %v3073 = vadd.f32 %v3041, %v2923
      %v3074 = vadd.f32 %v3042, %v2928
      %v3075 = vadd.f32 %v3043, %v2933
      %v3076 = vadd.f32 %v3044, %v2938
      %v3077 = vadd.f32 %v3045, %v2943
      %v3078 = vadd.f32 %v3046, %v2948
      %v3079 = vadd.f32 %v3047, %v2953
      %v3080 = vadd.f32 %v3048, %v2958
      %v3081 = vadd.f32 %v3049, %v2963
      %v3082 = vadd.f32 %v3050, %v2968
      %v3083 = vadd.f32 %v3051, %v2973
      %v3084 = vadd.f32 %v3052, %v2978
      %v3085 = vadd.f32 %v3053, %v2983
      %v3086 = vadd.f32 %v3054, %v2988
      %v3087 = vadd.f32 %v3055, %v2993
      %v3088 = vadd.f32 %v3056, %v2998
      %v3089 = vadd.f32 %v3057, %v3003
      %v3090 = vadd.f32 %v3058, %v3008
      %v3091 = vadd.f32 %v3059, %v3013
      %v3092 = vadd.f32 %v3060, %v3018
      %v3093 = vadd.f32 %v3061, %v3023
      %v3094 = vadd.f32 %v3062, %v3028
      %3095 = vst.msk [vmem:[#allocation3] sm:$0xff] %vm411, %v3063
      %3096 = vst.msk [vmem:[#allocation3 + $0x8] sm:$0xff] %vm411, %v3064
      %3097 = vst.msk [vmem:[#allocation3 + $0x10] sm:$0xff] %vm411, %v3065
      %3098 = vst.msk [vmem:[#allocation3 + $0x18] sm:$0xff] %vm411, %v3066
      %3099 = vst.msk [vmem:[#allocation3 + $0x20] sm:$0xff] %vm411, %v3067
      %3100 = vst.msk [vmem:[#allocation3 + $0x28] sm:$0xff] %vm411, %v3068
      %3101 = vst.msk [vmem:[#allocation3 + $0x30] sm:$0xff] %vm411, %v3069
      %3102 = vst.msk [vmem:[#allocation3 + $0x38] sm:$0xff] %vm411, %v3070
      %3103 = vst.msk [vmem:[#allocation3 + $0x40] sm:$0xff] %vm411, %v3071
      %3104 = vst.msk [vmem:[#allocation3 + $0x48] sm:$0xff] %vm411, %v3072
      %3105 = vst.msk [vmem:[#allocation3 + $0x50] sm:$0xff] %vm411, %v3073
      %3106 = vst.msk [vmem:[#allocation3 + $0x58] sm:$0xff] %vm411, %v3074
      %3107 = vst.msk [vmem:[#allocation3 + $0x60] sm:$0xff] %vm411, %v3075
      %3108 = vst.msk [vmem:[#allocation3 + $0x68] sm:$0xff] %vm411, %v3076
      %3109 = vst.msk [vmem:[#allocation3 + $0x70] sm:$0xff] %vm411, %v3077
      %3110 = vst.msk [vmem:[#allocation3 + $0x78] sm:$0xff] %vm411, %v3078
      %3111 = vst.msk [vmem:[#allocation3 + $0x80] sm:$0xff] %vm411, %v3079
      %3112 = vst.msk [vmem:[#allocation3 + $0x88] sm:$0xff] %vm411, %v3080
      %3113 = vst.msk [vmem:[#allocation3 + $0x90] sm:$0xff] %vm411, %v3081
      %3114 = vst.msk [vmem:[#allocation3 + $0x98] sm:$0xff] %vm411, %v3082
      %3115 = vst.msk [vmem:[#allocation3 + $0xa0] sm:$0xff] %vm411, %v3083
      %3116 = vst.msk [vmem:[#allocation3 + $0xa8] sm:$0xff] %vm411, %v3084
      %3117 = vst.msk [vmem:[#allocation3 + $0xb0] sm:$0xff] %vm411, %v3085
      %3118 = vst.msk [vmem:[#allocation3 + $0xb8] sm:$0xff] %vm411, %v3086
      %3119 = vst.msk [vmem:[#allocation3 + $0xc0] sm:$0xff] %vm411, %v3087
      %3120 = vst.msk [vmem:[#allocation3 + $0xc8] sm:$0xff] %vm411, %v3088
      %3121 = vst.msk [vmem:[#allocation3 + $0xd0] sm:$0xff] %vm411, %v3089
      %3122 = vst.msk [vmem:[#allocation3 + $0xd8] sm:$0xff] %vm411, %v3090
      %3123 = vst.msk [vmem:[#allocation3 + $0xe0] sm:$0xff] %vm411, %v3091
      %3124 = vst.msk [vmem:[#allocation3 + $0xe8] sm:$0xff] %vm411, %v3092
      %3125 = vst.msk [vmem:[#allocation3 + $0xf0] sm:$0xff] %vm411, %v3093
      %3126 = vst.msk [vmem:[#allocation3 + $0xf8] sm:$0xff] %vm411, %v3094
      %s3127 = scalar_lea.vmem [#allocation2], 48
      %v3128 = vld [vmem:[%s3127] sm:$0xff]
      %v3129 = vld [vmem:[%s3127 + $0x8] sm:$0xff]
      %v3130 = vld [vmem:[%s3127 + $0x18] sm:$0xff]
      %v3131 = vld [vmem:[%s3127 + $0x20] sm:$0xff]
      %v3132 = vld [vmem:[%s3127 + $0x30] sm:$0xff]
      %v3133 = vld [vmem:[%s3127 + $0x38] sm:$0xff]
      %v3134 = vld [vmem:[%s3127 + $0x48] sm:$0xff]
      %v3135 = vld [vmem:[%s3127 + $0x50] sm:$0xff]
      %v3136 = vld [vmem:[%s3127 + $0x60] sm:$0xff]
      %v3137 = vld [vmem:[%s3127 + $0x68] sm:$0xff]
      %v3138 = vld [vmem:[%s3127 + $0x78] sm:$0xff]
      %v3139 = vld [vmem:[%s3127 + $0x80] sm:$0xff]
      %v3140 = vld [vmem:[%s3127 + $0x90] sm:$0xff]
      %v3141 = vld [vmem:[%s3127 + $0x98] sm:$0xff]
      %v3142 = vld [vmem:[%s3127 + $0xa8] sm:$0xff]
      %v3143 = vld [vmem:[%s3127 + $0xb0] sm:$0xff]
      %v3144 = vld [vmem:[%s3127 + $0xc0] sm:$0xff]
      %v3145 = vld [vmem:[%s3127 + $0xc8] sm:$0xff]
      %v3146 = vld [vmem:[%s3127 + $0xd8] sm:$0xff]
      %v3147 = vld [vmem:[%s3127 + $0xe0] sm:$0xff]
      %v3148 = vld [vmem:[%s3127 + $0xf0] sm:$0xff]
      %v3149 = vld [vmem:[%s3127 + $0xf8] sm:$0xff]
      %v3150 = vld [vmem:[%s3127 + $0x108] sm:$0xff]
      %v3151 = vld [vmem:[%s3127 + $0x110] sm:$0xff]
      %v3152 = vld [vmem:[%s3127 + $0x120] sm:$0xff]
      %v3153 = vld [vmem:[%s3127 + $0x128] sm:$0xff]
      %v3154 = vld [vmem:[%s3127 + $0x138] sm:$0xff]
      %v3155 = vld [vmem:[%s3127 + $0x140] sm:$0xff]
      %v3156 = vld [vmem:[%s3127 + $0x150] sm:$0xff]
      %v3157 = vld [vmem:[%s3127 + $0x158] sm:$0xff]
      %v3158 = vld [vmem:[%s3127 + $0x168] sm:$0xff]
      %v3159 = vld [vmem:[%s3127 + $0x170] sm:$0xff]
      %s3160 = scalar_lea.vmem %s3, 48
      %v3161 = vld [vmem:[%s3160] sm:$0xff]
      %v3163 = vsel %vm411, %v3128, 0
      %v3166 = vsel %vm411, %v3129, 0
      %v3169 = vsel %vm411, %v3130, 0
      %v3172 = vsel %vm411, %v3131, 0
      %v3175 = vsel %vm411, %v3132, 0
      %v3178 = vsel %vm411, %v3133, 0
      %v3181 = vsel %vm411, %v3134, 0
      %v3184 = vsel %vm411, %v3135, 0
      %v3187 = vsel %vm411, %v3136, 0
      %v3190 = vsel %vm411, %v3137, 0
      %v3193 = vsel %vm411, %v3138, 0
      %v3196 = vsel %vm411, %v3139, 0
      %v3199 = vsel %vm411, %v3140, 0
      %v3202 = vsel %vm411, %v3141, 0
      %v3205 = vsel %vm411, %v3142, 0
      %v3208 = vsel %vm411, %v3143, 0
      %v3211 = vsel %vm411, %v3144, 0
      %v3214 = vsel %vm411, %v3145, 0
      %v3217 = vsel %vm411, %v3146, 0
      %v3220 = vsel %vm411, %v3147, 0
      %v3223 = vsel %vm411, %v3148, 0
      %v3226 = vsel %vm411, %v3149, 0
      %v3229 = vsel %vm411, %v3150, 0
      %v3232 = vsel %vm411, %v3151, 0
      %v3235 = vsel %vm411, %v3152, 0
      %v3238 = vsel %vm411, %v3153, 0
      %v3241 = vsel %vm411, %v3154, 0
      %v3244 = vsel %vm411, %v3155, 0
      %v3247 = vsel %vm411, %v3156, 0
      %v3250 = vsel %vm411, %v3157, 0
      %v3253 = vsel %vm411, %v3158, 0
      %v3256 = vsel %vm411, %v3159, 0
      %3258 = vmatprep.subr.mxu0 0.0
      %3259 = vmatpush1.msra.mxu0 0.0
      %3260 = vmatprep.subr.mxu0 0.0
      %3261 = vmatpush1.msra.mxu0 0.0
      %3262 = vmatprep.subr.mxu0 0.0
      %3263 = vmatpush1.msra.mxu0 0.0
      %3264 = vmatprep.subr.mxu0 0.0
      %3265 = vmatpush1.msra.mxu0 0.0
      %3266 = vmatprep.subr.mxu0 0.0
      %3267 = vmatpush1.msra.mxu0 0.0
      %3268 = vmatprep.subr.mxu0 0.0
      %3269 = vmatpush1.msra.mxu0 0.0
      %3270 = vmatprep.subr.mxu0 0.0
      %3271 = vmatpush1.msra.mxu0 0.0
      %3272 = vmatprep.subr.mxu0 0.0
      %3273 = vmatpush1.msra.mxu0 0.0
      %3274 = vmatprep.subr.mxu0 0.0
      %3275 = vmatpush1.msra.mxu0 0.0
      %3276 = vmatprep.subr.mxu0 0.0
      %3277 = vmatpush1.msra.mxu0 0.0
      %3278 = vmatprep.subr.mxu0 0.0
      %3279 = vmatpush1.msra.mxu0 0.0
      %3280 = vmatprep.subr.mxu0 0.0
      %3281 = vmatpush1.msra.mxu0 0.0
      %3282 = vmatprep.subr.mxu0 0.0
      %3283 = vmatpush1.msra.mxu0 0.0
      %3284 = vmatprep.subr.mxu0 0.0
      %3285 = vmatpush1.msra.mxu0 0.0
      %3286 = vmatprep.subr.mxu0 0.0
      %3287 = vmatpush1.msra.mxu0 0.0
      %3288 = vmatprep.subr.mxu0 0.0
      %3289 = vmatpush1.msra.mxu0 %v3161
      %3290 = vmatprep.subr.mxu0 0.0
      %3291 = vmatpush2.msra.mxu0 0.0
      %3292 = vmatprep.subr.mxu0 0.0
      %3293 = vmatpush2.msra.mxu0 0.0
      %3294 = vmatprep.subr.mxu0 0.0
      %3295 = vmatpush2.msra.mxu0 0.0
      %3296 = vmatprep.subr.mxu0 0.0
      %3297 = vmatpush2.msra.mxu0 0.0
      %3298 = vmatprep.subr.mxu0 0.0
      %3299 = vmatpush2.msra.mxu0 0.0
      %3300 = vmatprep.subr.mxu0 0.0
      %3301 = vmatpush2.msra.mxu0 0.0
      %3302 = vmatprep.subr.mxu0 0.0
      %3303 = vmatpush2.msra.mxu0 0.0
      %3304 = vmatprep.subr.mxu0 0.0
      %3305 = vmatpush2.msra.mxu0 0.0
      %3306 = vmatprep.subr.mxu0 0.0
      %3307 = vmatpush2.msra.mxu0 0.0
      %3308 = vmatprep.subr.mxu0 0.0
      %3309 = vmatpush2.msra.mxu0 0.0
      %3310 = vmatprep.subr.mxu0 0.0
      %3311 = vmatpush2.msra.mxu0 0.0
      %3312 = vmatprep.subr.mxu0 0.0
      %3313 = vmatpush2.msra.mxu0 0.0
      %3314 = vmatprep.subr.mxu0 0.0
      %3315 = vmatpush2.msra.mxu0 0.0
      %3316 = vmatprep.subr.mxu0 0.0
      %3317 = vmatpush2.msra.mxu0 0.0
      %3318 = vmatprep.subr.mxu0 0.0
      %3319 = vmatpush2.msra.mxu0 0.0
      %3320 = vmatprep.subr.mxu0 0.0
      %3321 = vmatpush2.msra.mxu0 0.0
      %3322 = vmatprep.mubr.f32.mxu0 0.0
      %3323 = vmatmul.mubr.f32.gmra.mxu0 %v3163
      %v3324 = vpop.f32.mrf.mxu0
      %v3325 = vadd.f32 0.0, %v3324
      %v3326 = vpop.f32.mrf.mxu0
      %3327 = vmatprep.mubr.f32.mxu0 0.0
      %3328 = vmatmul.mubr.f32.gmra.mxu0 %v3166
      %v3329 = vpop.f32.mrf.mxu0
      %v3330 = vadd.f32 0.0, %v3329
      %v3331 = vpop.f32.mrf.mxu0
      %3332 = vmatprep.mubr.f32.mxu0 0.0
      %3333 = vmatmul.mubr.f32.gmra.mxu0 %v3169
      %v3334 = vpop.f32.mrf.mxu0
      %v3335 = vadd.f32 0.0, %v3334
      %v3336 = vpop.f32.mrf.mxu0
      %3337 = vmatprep.mubr.f32.mxu0 0.0
      %3338 = vmatmul.mubr.f32.gmra.mxu0 %v3172
      %v3339 = vpop.f32.mrf.mxu0
      %v3340 = vadd.f32 0.0, %v3339
      %v3341 = vpop.f32.mrf.mxu0
      %3342 = vmatprep.mubr.f32.mxu0 0.0
      %3343 = vmatmul.mubr.f32.gmra.mxu0 %v3175
      %v3344 = vpop.f32.mrf.mxu0
      %v3345 = vadd.f32 0.0, %v3344
      %v3346 = vpop.f32.mrf.mxu0
      %3347 = vmatprep.mubr.f32.mxu0 0.0
      %3348 = vmatmul.mubr.f32.gmra.mxu0 %v3178
      %v3349 = vpop.f32.mrf.mxu0
      %v3350 = vadd.f32 0.0, %v3349
      %v3351 = vpop.f32.mrf.mxu0
      %3352 = vmatprep.mubr.f32.mxu0 0.0
      %3353 = vmatmul.mubr.f32.gmra.mxu0 %v3181
      %v3354 = vpop.f32.mrf.mxu0
      %v3355 = vadd.f32 0.0, %v3354
      %v3356 = vpop.f32.mrf.mxu0
      %3357 = vmatprep.mubr.f32.mxu0 0.0
      %3358 = vmatmul.mubr.f32.gmra.mxu0 %v3184
      %v3359 = vpop.f32.mrf.mxu0
      %v3360 = vadd.f32 0.0, %v3359
      %v3361 = vpop.f32.mrf.mxu0
      %3362 = vmatprep.mubr.f32.mxu0 0.0
      %3363 = vmatmul.mubr.f32.gmra.mxu0 %v3187
      %v3364 = vpop.f32.mrf.mxu0
      %v3365 = vadd.f32 0.0, %v3364
      %v3366 = vpop.f32.mrf.mxu0
      %3367 = vmatprep.mubr.f32.mxu0 0.0
      %3368 = vmatmul.mubr.f32.gmra.mxu0 %v3190
      %v3369 = vpop.f32.mrf.mxu0
      %v3370 = vadd.f32 0.0, %v3369
      %v3371 = vpop.f32.mrf.mxu0
      %3372 = vmatprep.mubr.f32.mxu0 0.0
      %3373 = vmatmul.mubr.f32.gmra.mxu0 %v3193
      %v3374 = vpop.f32.mrf.mxu0
      %v3375 = vadd.f32 0.0, %v3374
      %v3376 = vpop.f32.mrf.mxu0
      %3377 = vmatprep.mubr.f32.mxu0 0.0
      %3378 = vmatmul.mubr.f32.gmra.mxu0 %v3196
      %v3379 = vpop.f32.mrf.mxu0
      %v3380 = vadd.f32 0.0, %v3379
      %v3381 = vpop.f32.mrf.mxu0
      %3382 = vmatprep.mubr.f32.mxu0 0.0
      %3383 = vmatmul.mubr.f32.gmra.mxu0 %v3199
      %v3384 = vpop.f32.mrf.mxu0
      %v3385 = vadd.f32 0.0, %v3384
      %v3386 = vpop.f32.mrf.mxu0
      %3387 = vmatprep.mubr.f32.mxu0 0.0
      %3388 = vmatmul.mubr.f32.gmra.mxu0 %v3202
      %v3389 = vpop.f32.mrf.mxu0
      %v3390 = vadd.f32 0.0, %v3389
      %v3391 = vpop.f32.mrf.mxu0
      %3392 = vmatprep.mubr.f32.mxu0 0.0
      %3393 = vmatmul.mubr.f32.gmra.mxu0 %v3205
      %v3394 = vpop.f32.mrf.mxu0
      %v3395 = vadd.f32 0.0, %v3394
      %v3396 = vpop.f32.mrf.mxu0
      %3397 = vmatprep.mubr.f32.mxu0 0.0
      %3398 = vmatmul.mubr.f32.gmra.mxu0 %v3208
      %v3399 = vpop.f32.mrf.mxu0
      %v3400 = vadd.f32 0.0, %v3399
      %v3401 = vpop.f32.mrf.mxu0
      %3402 = vmatprep.mubr.f32.mxu0 0.0
      %3403 = vmatmul.mubr.f32.gmra.mxu0 %v3211
      %v3404 = vpop.f32.mrf.mxu0
      %v3405 = vadd.f32 0.0, %v3404
      %v3406 = vpop.f32.mrf.mxu0
      %3407 = vmatprep.mubr.f32.mxu0 0.0
      %3408 = vmatmul.mubr.f32.gmra.mxu0 %v3214
      %v3409 = vpop.f32.mrf.mxu0
      %v3410 = vadd.f32 0.0, %v3409
      %v3411 = vpop.f32.mrf.mxu0
      %3412 = vmatprep.mubr.f32.mxu0 0.0
      %3413 = vmatmul.mubr.f32.gmra.mxu0 %v3217
      %v3414 = vpop.f32.mrf.mxu0
      %v3415 = vadd.f32 0.0, %v3414
      %v3416 = vpop.f32.mrf.mxu0
      %3417 = vmatprep.mubr.f32.mxu0 0.0
      %3418 = vmatmul.mubr.f32.gmra.mxu0 %v3220
      %v3419 = vpop.f32.mrf.mxu0
      %v3420 = vadd.f32 0.0, %v3419
      %v3421 = vpop.f32.mrf.mxu0
      %3422 = vmatprep.mubr.f32.mxu0 0.0
      %3423 = vmatmul.mubr.f32.gmra.mxu0 %v3223
      %v3424 = vpop.f32.mrf.mxu0
      %v3425 = vadd.f32 0.0, %v3424
      %v3426 = vpop.f32.mrf.mxu0
      %3427 = vmatprep.mubr.f32.mxu0 0.0
      %3428 = vmatmul.mubr.f32.gmra.mxu0 %v3226
      %v3429 = vpop.f32.mrf.mxu0
      %v3430 = vadd.f32 0.0, %v3429
      %v3431 = vpop.f32.mrf.mxu0
      %3432 = vmatprep.mubr.f32.mxu0 0.0
      %3433 = vmatmul.mubr.f32.gmra.mxu0 %v3229
      %v3434 = vpop.f32.mrf.mxu0
      %v3435 = vadd.f32 0.0, %v3434
      %v3436 = vpop.f32.mrf.mxu0
      %3437 = vmatprep.mubr.f32.mxu0 0.0
      %3438 = vmatmul.mubr.f32.gmra.mxu0 %v3232
      %v3439 = vpop.f32.mrf.mxu0
      %v3440 = vadd.f32 0.0, %v3439
      %v3441 = vpop.f32.mrf.mxu0
      %3442 = vmatprep.mubr.f32.mxu0 0.0
      %3443 = vmatmul.mubr.f32.gmra.mxu0 %v3235
      %v3444 = vpop.f32.mrf.mxu0
      %v3445 = vadd.f32 0.0, %v3444
      %v3446 = vpop.f32.mrf.mxu0
      %3447 = vmatprep.mubr.f32.mxu0 0.0
      %3448 = vmatmul.mubr.f32.gmra.mxu0 %v3238
      %v3449 = vpop.f32.mrf.mxu0
      %v3450 = vadd.f32 0.0, %v3449
      %v3451 = vpop.f32.mrf.mxu0
      %3452 = vmatprep.mubr.f32.mxu0 0.0
      %3453 = vmatmul.mubr.f32.gmra.mxu0 %v3241
      %v3454 = vpop.f32.mrf.mxu0
      %v3455 = vadd.f32 0.0, %v3454
      %v3456 = vpop.f32.mrf.mxu0
      %3457 = vmatprep.mubr.f32.mxu0 0.0
      %3458 = vmatmul.mubr.f32.gmra.mxu0 %v3244
      %v3459 = vpop.f32.mrf.mxu0
      %v3460 = vadd.f32 0.0, %v3459
      %v3461 = vpop.f32.mrf.mxu0
      %3462 = vmatprep.mubr.f32.mxu0 0.0
      %3463 = vmatmul.mubr.f32.gmra.mxu0 %v3247
      %v3464 = vpop.f32.mrf.mxu0
      %v3465 = vadd.f32 0.0, %v3464
      %v3466 = vpop.f32.mrf.mxu0
      %3467 = vmatprep.mubr.f32.mxu0 0.0
      %3468 = vmatmul.mubr.f32.gmra.mxu0 %v3250
      %v3469 = vpop.f32.mrf.mxu0
      %v3470 = vadd.f32 0.0, %v3469
      %v3471 = vpop.f32.mrf.mxu0
      %3472 = vmatprep.mubr.f32.mxu0 0.0
      %3473 = vmatmul.mubr.f32.gmra.mxu0 %v3253
      %v3474 = vpop.f32.mrf.mxu0
      %v3475 = vadd.f32 0.0, %v3474
      %v3476 = vpop.f32.mrf.mxu0
      %3477 = vmatprep.mubr.f32.mxu0 0.0
      %3478 = vmatmul.mubr.f32.gmra.mxu0 %v3256
      %v3479 = vpop.f32.mrf.mxu0
      %v3480 = vadd.f32 0.0, %v3479
      %v3481 = vpop.f32.mrf.mxu0
      %3482 = vdwg.mxu0
      %v3483 = vld [vmem:[#allocation3] sm:$0xff]
      %v3484 = vld [vmem:[#allocation3 + $0x8] sm:$0xff]
      %v3485 = vld [vmem:[#allocation3 + $0x10] sm:$0xff]
      %v3486 = vld [vmem:[#allocation3 + $0x18] sm:$0xff]
      %v3487 = vld [vmem:[#allocation3 + $0x20] sm:$0xff]
      %v3488 = vld [vmem:[#allocation3 + $0x28] sm:$0xff]
      %v3489 = vld [vmem:[#allocation3 + $0x30] sm:$0xff]
      %v3490 = vld [vmem:[#allocation3 + $0x38] sm:$0xff]
      %v3491 = vld [vmem:[#allocation3 + $0x40] sm:$0xff]
      %v3492 = vld [vmem:[#allocation3 + $0x48] sm:$0xff]
      %v3493 = vld [vmem:[#allocation3 + $0x50] sm:$0xff]
      %v3494 = vld [vmem:[#allocation3 + $0x58] sm:$0xff]
      %v3495 = vld [vmem:[#allocation3 + $0x60] sm:$0xff]
      %v3496 = vld [vmem:[#allocation3 + $0x68] sm:$0xff]
      %v3497 = vld [vmem:[#allocation3 + $0x70] sm:$0xff]
      %v3498 = vld [vmem:[#allocation3 + $0x78] sm:$0xff]
      %v3499 = vld [vmem:[#allocation3 + $0x80] sm:$0xff]
      %v3500 = vld [vmem:[#allocation3 + $0x88] sm:$0xff]
      %v3501 = vld [vmem:[#allocation3 + $0x90] sm:$0xff]
      %v3502 = vld [vmem:[#allocation3 + $0x98] sm:$0xff]
      %v3503 = vld [vmem:[#allocation3 + $0xa0] sm:$0xff]
      %v3504 = vld [vmem:[#allocation3 + $0xa8] sm:$0xff]
      %v3505 = vld [vmem:[#allocation3 + $0xb0] sm:$0xff]
      %v3506 = vld [vmem:[#allocation3 + $0xb8] sm:$0xff]
      %v3507 = vld [vmem:[#allocation3 + $0xc0] sm:$0xff]
      %v3508 = vld [vmem:[#allocation3 + $0xc8] sm:$0xff]
      %v3509 = vld [vmem:[#allocation3 + $0xd0] sm:$0xff]
      %v3510 = vld [vmem:[#allocation3 + $0xd8] sm:$0xff]
      %v3511 = vld [vmem:[#allocation3 + $0xe0] sm:$0xff]
      %v3512 = vld [vmem:[#allocation3 + $0xe8] sm:$0xff]
      %v3513 = vld [vmem:[#allocation3 + $0xf0] sm:$0xff]
      %v3514 = vld [vmem:[#allocation3 + $0xf8] sm:$0xff]
      %v3515 = vadd.f32 %v3483, %v3325
      %v3516 = vadd.f32 %v3484, %v3330
      %v3517 = vadd.f32 %v3485, %v3335
      %v3518 = vadd.f32 %v3486, %v3340
      %v3519 = vadd.f32 %v3487, %v3345
      %v3520 = vadd.f32 %v3488, %v3350
      %v3521 = vadd.f32 %v3489, %v3355
      %v3522 = vadd.f32 %v3490, %v3360
      %v3523 = vadd.f32 %v3491, %v3365
      %v3524 = vadd.f32 %v3492, %v3370
      %v3525 = vadd.f32 %v3493, %v3375
      %v3526 = vadd.f32 %v3494, %v3380
      %v3527 = vadd.f32 %v3495, %v3385
      %v3528 = vadd.f32 %v3496, %v3390
      %v3529 = vadd.f32 %v3497, %v3395
      %v3530 = vadd.f32 %v3498, %v3400
      %v3531 = vadd.f32 %v3499, %v3405
      %v3532 = vadd.f32 %v3500, %v3410
      %v3533 = vadd.f32 %v3501, %v3415
      %v3534 = vadd.f32 %v3502, %v3420
      %v3535 = vadd.f32 %v3503, %v3425
      %v3536 = vadd.f32 %v3504, %v3430
      %v3537 = vadd.f32 %v3505, %v3435
      %v3538 = vadd.f32 %v3506, %v3440
      %v3539 = vadd.f32 %v3507, %v3445
      %v3540 = vadd.f32 %v3508, %v3450
      %v3541 = vadd.f32 %v3509, %v3455
      %v3542 = vadd.f32 %v3510, %v3460
      %v3543 = vadd.f32 %v3511, %v3465
      %v3544 = vadd.f32 %v3512, %v3470
      %v3545 = vadd.f32 %v3513, %v3475
      %v3546 = vadd.f32 %v3514, %v3480
      %3547 = vst.msk [vmem:[#allocation3] sm:$0xff] %vm411, %v3515
      %3548 = vst.msk [vmem:[#allocation3 + $0x8] sm:$0xff] %vm411, %v3516
      %3549 = vst.msk [vmem:[#allocation3 + $0x10] sm:$0xff] %vm411, %v3517
      %3550 = vst.msk [vmem:[#allocation3 + $0x18] sm:$0xff] %vm411, %v3518
      %3551 = vst.msk [vmem:[#allocation3 + $0x20] sm:$0xff] %vm411, %v3519
      %3552 = vst.msk [vmem:[#allocation3 + $0x28] sm:$0xff] %vm411, %v3520
      %3553 = vst.msk [vmem:[#allocation3 + $0x30] sm:$0xff] %vm411, %v3521
      %3554 = vst.msk [vmem:[#allocation3 + $0x38] sm:$0xff] %vm411, %v3522
      %3555 = vst.msk [vmem:[#allocation3 + $0x40] sm:$0xff] %vm411, %v3523
      %3556 = vst.msk [vmem:[#allocation3 + $0x48] sm:$0xff] %vm411, %v3524
      %3557 = vst.msk [vmem:[#allocation3 + $0x50] sm:$0xff] %vm411, %v3525
      %3558 = vst.msk [vmem:[#allocation3 + $0x58] sm:$0xff] %vm411, %v3526
      %3559 = vst.msk [vmem:[#allocation3 + $0x60] sm:$0xff] %vm411, %v3527
      %3560 = vst.msk [vmem:[#allocation3 + $0x68] sm:$0xff] %vm411, %v3528
      %3561 = vst.msk [vmem:[#allocation3 + $0x70] sm:$0xff] %vm411, %v3529
      %3562 = vst.msk [vmem:[#allocation3 + $0x78] sm:$0xff] %vm411, %v3530
      %3563 = vst.msk [vmem:[#allocation3 + $0x80] sm:$0xff] %vm411, %v3531
      %3564 = vst.msk [vmem:[#allocation3 + $0x88] sm:$0xff] %vm411, %v3532
      %3565 = vst.msk [vmem:[#allocation3 + $0x90] sm:$0xff] %vm411, %v3533
      %3566 = vst.msk [vmem:[#allocation3 + $0x98] sm:$0xff] %vm411, %v3534
      %3567 = vst.msk [vmem:[#allocation3 + $0xa0] sm:$0xff] %vm411, %v3535
      %3568 = vst.msk [vmem:[#allocation3 + $0xa8] sm:$0xff] %vm411, %v3536
      %3569 = vst.msk [vmem:[#allocation3 + $0xb0] sm:$0xff] %vm411, %v3537
      %3570 = vst.msk [vmem:[#allocation3 + $0xb8] sm:$0xff] %vm411, %v3538
      %3571 = vst.msk [vmem:[#allocation3 + $0xc0] sm:$0xff] %vm411, %v3539
      %3572 = vst.msk [vmem:[#allocation3 + $0xc8] sm:$0xff] %vm411, %v3540
      %3573 = vst.msk [vmem:[#allocation3 + $0xd0] sm:$0xff] %vm411, %v3541
      %3574 = vst.msk [vmem:[#allocation3 + $0xd8] sm:$0xff] %vm411, %v3542
      %3575 = vst.msk [vmem:[#allocation3 + $0xe0] sm:$0xff] %vm411, %v3543
      %3576 = vst.msk [vmem:[#allocation3 + $0xe8] sm:$0xff] %vm411, %v3544
      %3577 = vst.msk [vmem:[#allocation3 + $0xf0] sm:$0xff] %vm411, %v3545
      %3578 = vst.msk [vmem:[#allocation3 + $0xf8] sm:$0xff] %vm411, %v3546
      %v3579 = vld [vmem:[%s3127 + $0x1] sm:$0xff]
      %v3580 = vld [vmem:[%s3127 + $0x9] sm:$0xff]
      %v3581 = vld [vmem:[%s3127 + $0x19] sm:$0xff]
      %v3582 = vld [vmem:[%s3127 + $0x21] sm:$0xff]
      %v3583 = vld [vmem:[%s3127 + $0x31] sm:$0xff]
      %v3584 = vld [vmem:[%s3127 + $0x39] sm:$0xff]
      %v3585 = vld [vmem:[%s3127 + $0x49] sm:$0xff]
      %v3586 = vld [vmem:[%s3127 + $0x51] sm:$0xff]
      %v3587 = vld [vmem:[%s3127 + $0x61] sm:$0xff]
      %v3588 = vld [vmem:[%s3127 + $0x69] sm:$0xff]
      %v3589 = vld [vmem:[%s3127 + $0x79] sm:$0xff]
      %v3590 = vld [vmem:[%s3127 + $0x81] sm:$0xff]
      %v3591 = vld [vmem:[%s3127 + $0x91] sm:$0xff]
      %v3592 = vld [vmem:[%s3127 + $0x99] sm:$0xff]
      %v3593 = vld [vmem:[%s3127 + $0xa9] sm:$0xff]
      %v3594 = vld [vmem:[%s3127 + $0xb1] sm:$0xff]
      %v3595 = vld [vmem:[%s3127 + $0xc1] sm:$0xff]
      %v3596 = vld [vmem:[%s3127 + $0xc9] sm:$0xff]
      %v3597 = vld [vmem:[%s3127 + $0xd9] sm:$0xff]
      %v3598 = vld [vmem:[%s3127 + $0xe1] sm:$0xff]
      %v3599 = vld [vmem:[%s3127 + $0xf1] sm:$0xff]
      %v3600 = vld [vmem:[%s3127 + $0xf9] sm:$0xff]
      %v3601 = vld [vmem:[%s3127 + $0x109] sm:$0xff]
      %v3602 = vld [vmem:[%s3127 + $0x111] sm:$0xff]
      %v3603 = vld [vmem:[%s3127 + $0x121] sm:$0xff]
      %v3604 = vld [vmem:[%s3127 + $0x129] sm:$0xff]
      %v3605 = vld [vmem:[%s3127 + $0x139] sm:$0xff]
      %v3606 = vld [vmem:[%s3127 + $0x141] sm:$0xff]
      %v3607 = vld [vmem:[%s3127 + $0x151] sm:$0xff]
      %v3608 = vld [vmem:[%s3127 + $0x159] sm:$0xff]
      %v3609 = vld [vmem:[%s3127 + $0x169] sm:$0xff]
      %v3610 = vld [vmem:[%s3127 + $0x171] sm:$0xff]
      %s3611 = scalar_lea.vmem %s3, 56
      %v3612 = vld [vmem:[%s3611] sm:$0xff]
      %v3614 = vsel %vm411, %v3579, 0
      %v3617 = vsel %vm411, %v3580, 0
      %v3620 = vsel %vm411, %v3581, 0
      %v3623 = vsel %vm411, %v3582, 0
      %v3626 = vsel %vm411, %v3583, 0
      %v3629 = vsel %vm411, %v3584, 0
      %v3632 = vsel %vm411, %v3585, 0
      %v3635 = vsel %vm411, %v3586, 0
      %v3638 = vsel %vm411, %v3587, 0
      %v3641 = vsel %vm411, %v3588, 0
      %v3644 = vsel %vm411, %v3589, 0
      %v3647 = vsel %vm411, %v3590, 0
      %v3650 = vsel %vm411, %v3591, 0
      %v3653 = vsel %vm411, %v3592, 0
      %v3656 = vsel %vm411, %v3593, 0
      %v3659 = vsel %vm411, %v3594, 0
      %v3662 = vsel %vm411, %v3595, 0
      %v3665 = vsel %vm411, %v3596, 0
      %v3668 = vsel %vm411, %v3597, 0
      %v3671 = vsel %vm411, %v3598, 0
      %v3674 = vsel %vm411, %v3599, 0
      %v3677 = vsel %vm411, %v3600, 0
      %v3680 = vsel %vm411, %v3601, 0
      %v3683 = vsel %vm411, %v3602, 0
      %v3686 = vsel %vm411, %v3603, 0
      %v3689 = vsel %vm411, %v3604, 0
      %v3692 = vsel %vm411, %v3605, 0
      %v3695 = vsel %vm411, %v3606, 0
      %v3698 = vsel %vm411, %v3607, 0
      %v3701 = vsel %vm411, %v3608, 0
      %v3704 = vsel %vm411, %v3609, 0
      %v3707 = vsel %vm411, %v3610, 0
      %3709 = vmatprep.subr.mxu0 0.0
      %3710 = vmatpush1.msra.mxu0 0.0
      %3711 = vmatprep.subr.mxu0 0.0
      %3712 = vmatpush1.msra.mxu0 0.0
      %3713 = vmatprep.subr.mxu0 0.0
      %3714 = vmatpush1.msra.mxu0 0.0
      %3715 = vmatprep.subr.mxu0 0.0
      %3716 = vmatpush1.msra.mxu0 0.0
      %3717 = vmatprep.subr.mxu0 0.0
      %3718 = vmatpush1.msra.mxu0 0.0
      %3719 = vmatprep.subr.mxu0 0.0
      %3720 = vmatpush1.msra.mxu0 0.0
      %3721 = vmatprep.subr.mxu0 0.0
      %3722 = vmatpush1.msra.mxu0 0.0
      %3723 = vmatprep.subr.mxu0 0.0
      %3724 = vmatpush1.msra.mxu0 0.0
      %3725 = vmatprep.subr.mxu0 0.0
      %3726 = vmatpush1.msra.mxu0 0.0
      %3727 = vmatprep.subr.mxu0 0.0
      %3728 = vmatpush1.msra.mxu0 0.0
      %3729 = vmatprep.subr.mxu0 0.0
      %3730 = vmatpush1.msra.mxu0 0.0
      %3731 = vmatprep.subr.mxu0 0.0
      %3732 = vmatpush1.msra.mxu0 0.0
      %3733 = vmatprep.subr.mxu0 0.0
      %3734 = vmatpush1.msra.mxu0 0.0
      %3735 = vmatprep.subr.mxu0 0.0
      %3736 = vmatpush1.msra.mxu0 0.0
      %3737 = vmatprep.subr.mxu0 0.0
      %3738 = vmatpush1.msra.mxu0 0.0
      %3739 = vmatprep.subr.mxu0 0.0
      %3740 = vmatpush1.msra.mxu0 %v3612
      %3741 = vmatprep.subr.mxu0 0.0
      %3742 = vmatpush2.msra.mxu0 0.0
      %3743 = vmatprep.subr.mxu0 0.0
      %3744 = vmatpush2.msra.mxu0 0.0
      %3745 = vmatprep.subr.mxu0 0.0
      %3746 = vmatpush2.msra.mxu0 0.0
      %3747 = vmatprep.subr.mxu0 0.0
      %3748 = vmatpush2.msra.mxu0 0.0
      %3749 = vmatprep.subr.mxu0 0.0
      %3750 = vmatpush2.msra.mxu0 0.0
      %3751 = vmatprep.subr.mxu0 0.0
      %3752 = vmatpush2.msra.mxu0 0.0
      %3753 = vmatprep.subr.mxu0 0.0
      %3754 = vmatpush2.msra.mxu0 0.0
      %3755 = vmatprep.subr.mxu0 0.0
      %3756 = vmatpush2.msra.mxu0 0.0
      %3757 = vmatprep.subr.mxu0 0.0
      %3758 = vmatpush2.msra.mxu0 0.0
      %3759 = vmatprep.subr.mxu0 0.0
      %3760 = vmatpush2.msra.mxu0 0.0
      %3761 = vmatprep.subr.mxu0 0.0
      %3762 = vmatpush2.msra.mxu0 0.0
      %3763 = vmatprep.subr.mxu0 0.0
      %3764 = vmatpush2.msra.mxu0 0.0
      %3765 = vmatprep.subr.mxu0 0.0
      %3766 = vmatpush2.msra.mxu0 0.0
      %3767 = vmatprep.subr.mxu0 0.0
      %3768 = vmatpush2.msra.mxu0 0.0
      %3769 = vmatprep.subr.mxu0 0.0
      %3770 = vmatpush2.msra.mxu0 0.0
      %3771 = vmatprep.subr.mxu0 0.0
      %3772 = vmatpush2.msra.mxu0 0.0
      %3773 = vmatprep.mubr.f32.mxu0 0.0
      %3774 = vmatmul.mubr.f32.gmra.mxu0 %v3614
      %v3775 = vpop.f32.mrf.mxu0
      %v3776 = vadd.f32 0.0, %v3775
      %v3777 = vpop.f32.mrf.mxu0
      %3778 = vmatprep.mubr.f32.mxu0 0.0
      %3779 = vmatmul.mubr.f32.gmra.mxu0 %v3617
      %v3780 = vpop.f32.mrf.mxu0
      %v3781 = vadd.f32 0.0, %v3780
      %v3782 = vpop.f32.mrf.mxu0
      %3783 = vmatprep.mubr.f32.mxu0 0.0
      %3784 = vmatmul.mubr.f32.gmra.mxu0 %v3620
      %v3785 = vpop.f32.mrf.mxu0
      %v3786 = vadd.f32 0.0, %v3785
      %v3787 = vpop.f32.mrf.mxu0
      %3788 = vmatprep.mubr.f32.mxu0 0.0
      %3789 = vmatmul.mubr.f32.gmra.mxu0 %v3623
      %v3790 = vpop.f32.mrf.mxu0
      %v3791 = vadd.f32 0.0, %v3790
      %v3792 = vpop.f32.mrf.mxu0
      %3793 = vmatprep.mubr.f32.mxu0 0.0
      %3794 = vmatmul.mubr.f32.gmra.mxu0 %v3626
      %v3795 = vpop.f32.mrf.mxu0
      %v3796 = vadd.f32 0.0, %v3795
      %v3797 = vpop.f32.mrf.mxu0
      %3798 = vmatprep.mubr.f32.mxu0 0.0
      %3799 = vmatmul.mubr.f32.gmra.mxu0 %v3629
      %v3800 = vpop.f32.mrf.mxu0
      %v3801 = vadd.f32 0.0, %v3800
      %v3802 = vpop.f32.mrf.mxu0
      %3803 = vmatprep.mubr.f32.mxu0 0.0
      %3804 = vmatmul.mubr.f32.gmra.mxu0 %v3632
      %v3805 = vpop.f32.mrf.mxu0
      %v3806 = vadd.f32 0.0, %v3805
      %v3807 = vpop.f32.mrf.mxu0
      %3808 = vmatprep.mubr.f32.mxu0 0.0
      %3809 = vmatmul.mubr.f32.gmra.mxu0 %v3635
      %v3810 = vpop.f32.mrf.mxu0
      %v3811 = vadd.f32 0.0, %v3810
      %v3812 = vpop.f32.mrf.mxu0
      %3813 = vmatprep.mubr.f32.mxu0 0.0
      %3814 = vmatmul.mubr.f32.gmra.mxu0 %v3638
      %v3815 = vpop.f32.mrf.mxu0
      %v3816 = vadd.f32 0.0, %v3815
      %v3817 = vpop.f32.mrf.mxu0
      %3818 = vmatprep.mubr.f32.mxu0 0.0
      %3819 = vmatmul.mubr.f32.gmra.mxu0 %v3641
      %v3820 = vpop.f32.mrf.mxu0
      %v3821 = vadd.f32 0.0, %v3820
      %v3822 = vpop.f32.mrf.mxu0
      %3823 = vmatprep.mubr.f32.mxu0 0.0
      %3824 = vmatmul.mubr.f32.gmra.mxu0 %v3644
      %v3825 = vpop.f32.mrf.mxu0
      %v3826 = vadd.f32 0.0, %v3825
      %v3827 = vpop.f32.mrf.mxu0
      %3828 = vmatprep.mubr.f32.mxu0 0.0
      %3829 = vmatmul.mubr.f32.gmra.mxu0 %v3647
      %v3830 = vpop.f32.mrf.mxu0
      %v3831 = vadd.f32 0.0, %v3830
      %v3832 = vpop.f32.mrf.mxu0
      %3833 = vmatprep.mubr.f32.mxu0 0.0
      %3834 = vmatmul.mubr.f32.gmra.mxu0 %v3650
      %v3835 = vpop.f32.mrf.mxu0
      %v3836 = vadd.f32 0.0, %v3835
      %v3837 = vpop.f32.mrf.mxu0
      %3838 = vmatprep.mubr.f32.mxu0 0.0
      %3839 = vmatmul.mubr.f32.gmra.mxu0 %v3653
      %v3840 = vpop.f32.mrf.mxu0
      %v3841 = vadd.f32 0.0, %v3840
      %v3842 = vpop.f32.mrf.mxu0
      %3843 = vmatprep.mubr.f32.mxu0 0.0
      %3844 = vmatmul.mubr.f32.gmra.mxu0 %v3656
      %v3845 = vpop.f32.mrf.mxu0
      %v3846 = vadd.f32 0.0, %v3845
      %v3847 = vpop.f32.mrf.mxu0
      %3848 = vmatprep.mubr.f32.mxu0 0.0
      %3849 = vmatmul.mubr.f32.gmra.mxu0 %v3659
      %v3850 = vpop.f32.mrf.mxu0
      %v3851 = vadd.f32 0.0, %v3850
      %v3852 = vpop.f32.mrf.mxu0
      %3853 = vmatprep.mubr.f32.mxu0 0.0
      %3854 = vmatmul.mubr.f32.gmra.mxu0 %v3662
      %v3855 = vpop.f32.mrf.mxu0
      %v3856 = vadd.f32 0.0, %v3855
      %v3857 = vpop.f32.mrf.mxu0
      %3858 = vmatprep.mubr.f32.mxu0 0.0
      %3859 = vmatmul.mubr.f32.gmra.mxu0 %v3665
      %v3860 = vpop.f32.mrf.mxu0
      %v3861 = vadd.f32 0.0, %v3860
      %v3862 = vpop.f32.mrf.mxu0
      %3863 = vmatprep.mubr.f32.mxu0 0.0
      %3864 = vmatmul.mubr.f32.gmra.mxu0 %v3668
      %v3865 = vpop.f32.mrf.mxu0
      %v3866 = vadd.f32 0.0, %v3865
      %v3867 = vpop.f32.mrf.mxu0
      %3868 = vmatprep.mubr.f32.mxu0 0.0
      %3869 = vmatmul.mubr.f32.gmra.mxu0 %v3671
      %v3870 = vpop.f32.mrf.mxu0
      %v3871 = vadd.f32 0.0, %v3870
      %v3872 = vpop.f32.mrf.mxu0
      %3873 = vmatprep.mubr.f32.mxu0 0.0
      %3874 = vmatmul.mubr.f32.gmra.mxu0 %v3674
      %v3875 = vpop.f32.mrf.mxu0
      %v3876 = vadd.f32 0.0, %v3875
      %v3877 = vpop.f32.mrf.mxu0
      %3878 = vmatprep.mubr.f32.mxu0 0.0
      %3879 = vmatmul.mubr.f32.gmra.mxu0 %v3677
      %v3880 = vpop.f32.mrf.mxu0
      %v3881 = vadd.f32 0.0, %v3880
      %v3882 = vpop.f32.mrf.mxu0
      %3883 = vmatprep.mubr.f32.mxu0 0.0
      %3884 = vmatmul.mubr.f32.gmra.mxu0 %v3680
      %v3885 = vpop.f32.mrf.mxu0
      %v3886 = vadd.f32 0.0, %v3885
      %v3887 = vpop.f32.mrf.mxu0
      %3888 = vmatprep.mubr.f32.mxu0 0.0
      %3889 = vmatmul.mubr.f32.gmra.mxu0 %v3683
      %v3890 = vpop.f32.mrf.mxu0
      %v3891 = vadd.f32 0.0, %v3890
      %v3892 = vpop.f32.mrf.mxu0
      %3893 = vmatprep.mubr.f32.mxu0 0.0
      %3894 = vmatmul.mubr.f32.gmra.mxu0 %v3686
      %v3895 = vpop.f32.mrf.mxu0
      %v3896 = vadd.f32 0.0, %v3895
      %v3897 = vpop.f32.mrf.mxu0
      %3898 = vmatprep.mubr.f32.mxu0 0.0
      %3899 = vmatmul.mubr.f32.gmra.mxu0 %v3689
      %v3900 = vpop.f32.mrf.mxu0
      %v3901 = vadd.f32 0.0, %v3900
      %v3902 = vpop.f32.mrf.mxu0
      %3903 = vmatprep.mubr.f32.mxu0 0.0
      %3904 = vmatmul.mubr.f32.gmra.mxu0 %v3692
      %v3905 = vpop.f32.mrf.mxu0
      %v3906 = vadd.f32 0.0, %v3905
      %v3907 = vpop.f32.mrf.mxu0
      %3908 = vmatprep.mubr.f32.mxu0 0.0
      %3909 = vmatmul.mubr.f32.gmra.mxu0 %v3695
      %v3910 = vpop.f32.mrf.mxu0
      %v3911 = vadd.f32 0.0, %v3910
      %v3912 = vpop.f32.mrf.mxu0
      %3913 = vmatprep.mubr.f32.mxu0 0.0
      %3914 = vmatmul.mubr.f32.gmra.mxu0 %v3698
      %v3915 = vpop.f32.mrf.mxu0
      %v3916 = vadd.f32 0.0, %v3915
      %v3917 = vpop.f32.mrf.mxu0
      %3918 = vmatprep.mubr.f32.mxu0 0.0
      %3919 = vmatmul.mubr.f32.gmra.mxu0 %v3701
      %v3920 = vpop.f32.mrf.mxu0
      %v3921 = vadd.f32 0.0, %v3920
      %v3922 = vpop.f32.mrf.mxu0
      %3923 = vmatprep.mubr.f32.mxu0 0.0
      %3924 = vmatmul.mubr.f32.gmra.mxu0 %v3704
      %v3925 = vpop.f32.mrf.mxu0
      %v3926 = vadd.f32 0.0, %v3925
      %v3927 = vpop.f32.mrf.mxu0
      %3928 = vmatprep.mubr.f32.mxu0 0.0
      %3929 = vmatmul.mubr.f32.gmra.mxu0 %v3707
      %v3930 = vpop.f32.mrf.mxu0
      %v3931 = vadd.f32 0.0, %v3930
      %v3932 = vpop.f32.mrf.mxu0
      %3933 = vdwg.mxu0
      %v3934 = vld [vmem:[#allocation3] sm:$0xff]
      %v3935 = vld [vmem:[#allocation3 + $0x8] sm:$0xff]
      %v3936 = vld [vmem:[#allocation3 + $0x10] sm:$0xff]
      %v3937 = vld [vmem:[#allocation3 + $0x18] sm:$0xff]
      %v3938 = vld [vmem:[#allocation3 + $0x20] sm:$0xff]
      %v3939 = vld [vmem:[#allocation3 + $0x28] sm:$0xff]
      %v3940 = vld [vmem:[#allocation3 + $0x30] sm:$0xff]
      %v3941 = vld [vmem:[#allocation3 + $0x38] sm:$0xff]
      %v3942 = vld [vmem:[#allocation3 + $0x40] sm:$0xff]
      %v3943 = vld [vmem:[#allocation3 + $0x48] sm:$0xff]
      %v3944 = vld [vmem:[#allocation3 + $0x50] sm:$0xff]
      %v3945 = vld [vmem:[#allocation3 + $0x58] sm:$0xff]
      %v3946 = vld [vmem:[#allocation3 + $0x60] sm:$0xff]
      %v3947 = vld [vmem:[#allocation3 + $0x68] sm:$0xff]
      %v3948 = vld [vmem:[#allocation3 + $0x70] sm:$0xff]
      %v3949 = vld [vmem:[#allocation3 + $0x78] sm:$0xff]
      %v3950 = vld [vmem:[#allocation3 + $0x80] sm:$0xff]
      %v3951 = vld [vmem:[#allocation3 + $0x88] sm:$0xff]
      %v3952 = vld [vmem:[#allocation3 + $0x90] sm:$0xff]
      %v3953 = vld [vmem:[#allocation3 + $0x98] sm:$0xff]
      %v3954 = vld [vmem:[#allocation3 + $0xa0] sm:$0xff]
      %v3955 = vld [vmem:[#allocation3 + $0xa8] sm:$0xff]
      %v3956 = vld [vmem:[#allocation3 + $0xb0] sm:$0xff]
      %v3957 = vld [vmem:[#allocation3 + $0xb8] sm:$0xff]
      %v3958 = vld [vmem:[#allocation3 + $0xc0] sm:$0xff]
      %v3959 = vld [vmem:[#allocation3 + $0xc8] sm:$0xff]
      %v3960 = vld [vmem:[#allocation3 + $0xd0] sm:$0xff]
      %v3961 = vld [vmem:[#allocation3 + $0xd8] sm:$0xff]
      %v3962 = vld [vmem:[#allocation3 + $0xe0] sm:$0xff]
      %v3963 = vld [vmem:[#allocation3 + $0xe8] sm:$0xff]
      %v3964 = vld [vmem:[#allocation3 + $0xf0] sm:$0xff]
      %v3965 = vld [vmem:[#allocation3 + $0xf8] sm:$0xff]
      %v3966 = vadd.f32 %v3934, %v3776
      %v3967 = vadd.f32 %v3935, %v3781
      %v3968 = vadd.f32 %v3936, %v3786
      %v3969 = vadd.f32 %v3937, %v3791
      %v3970 = vadd.f32 %v3938, %v3796
      %v3971 = vadd.f32 %v3939, %v3801
      %v3972 = vadd.f32 %v3940, %v3806
      %v3973 = vadd.f32 %v3941, %v3811
      %v3974 = vadd.f32 %v3942, %v3816
      %v3975 = vadd.f32 %v3943, %v3821
      %v3976 = vadd.f32 %v3944, %v3826
      %v3977 = vadd.f32 %v3945, %v3831
      %v3978 = vadd.f32 %v3946, %v3836
      %v3979 = vadd.f32 %v3947, %v3841
      %v3980 = vadd.f32 %v3948, %v3846
      %v3981 = vadd.f32 %v3949, %v3851
      %v3982 = vadd.f32 %v3950, %v3856
      %v3983 = vadd.f32 %v3951, %v3861
      %v3984 = vadd.f32 %v3952, %v3866
      %v3985 = vadd.f32 %v3953, %v3871
      %v3986 = vadd.f32 %v3954, %v3876
      %v3987 = vadd.f32 %v3955, %v3881
      %v3988 = vadd.f32 %v3956, %v3886
      %v3989 = vadd.f32 %v3957, %v3891
      %v3990 = vadd.f32 %v3958, %v3896
      %v3991 = vadd.f32 %v3959, %v3901
      %v3992 = vadd.f32 %v3960, %v3906
      %v3993 = vadd.f32 %v3961, %v3911
      %v3994 = vadd.f32 %v3962, %v3916
      %v3995 = vadd.f32 %v3963, %v3921
      %v3996 = vadd.f32 %v3964, %v3926
      %v3997 = vadd.f32 %v3965, %v3931
      %3998 = vst.msk [vmem:[#allocation3] sm:$0xff] %vm411, %v3966
      %3999 = vst.msk [vmem:[#allocation3 + $0x8] sm:$0xff] %vm411, %v3967
      %4000 = vst.msk [vmem:[#allocation3 + $0x10] sm:$0xff] %vm411, %v3968
      %4001 = vst.msk [vmem:[#allocation3 + $0x18] sm:$0xff] %vm411, %v3969
      %4002 = vst.msk [vmem:[#allocation3 + $0x20] sm:$0xff] %vm411, %v3970
      %4003 = vst.msk [vmem:[#allocation3 + $0x28] sm:$0xff] %vm411, %v3971
      %4004 = vst.msk [vmem:[#allocation3 + $0x30] sm:$0xff] %vm411, %v3972
      %4005 = vst.msk [vmem:[#allocation3 + $0x38] sm:$0xff] %vm411, %v3973
      %4006 = vst.msk [vmem:[#allocation3 + $0x40] sm:$0xff] %vm411, %v3974
      %4007 = vst.msk [vmem:[#allocation3 + $0x48] sm:$0xff] %vm411, %v3975
      %4008 = vst.msk [vmem:[#allocation3 + $0x50] sm:$0xff] %vm411, %v3976
      %4009 = vst.msk [vmem:[#allocation3 + $0x58] sm:$0xff] %vm411, %v3977
      %4010 = vst.msk [vmem:[#allocation3 + $0x60] sm:$0xff] %vm411, %v3978
      %4011 = vst.msk [vmem:[#allocation3 + $0x68] sm:$0xff] %vm411, %v3979
      %4012 = vst.msk [vmem:[#allocation3 + $0x70] sm:$0xff] %vm411, %v3980
      %4013 = vst.msk [vmem:[#allocation3 + $0x78] sm:$0xff] %vm411, %v3981
      %4014 = vst.msk [vmem:[#allocation3 + $0x80] sm:$0xff] %vm411, %v3982
      %4015 = vst.msk [vmem:[#allocation3 + $0x88] sm:$0xff] %vm411, %v3983
      %4016 = vst.msk [vmem:[#allocation3 + $0x90] sm:$0xff] %vm411, %v3984
      %4017 = vst.msk [vmem:[#allocation3 + $0x98] sm:$0xff] %vm411, %v3985
      %4018 = vst.msk [vmem:[#allocation3 + $0xa0] sm:$0xff] %vm411, %v3986
      %4019 = vst.msk [vmem:[#allocation3 + $0xa8] sm:$0xff] %vm411, %v3987
      %4020 = vst.msk [vmem:[#allocation3 + $0xb0] sm:$0xff] %vm411, %v3988
      %4021 = vst.msk [vmem:[#allocation3 + $0xb8] sm:$0xff] %vm411, %v3989
      %4022 = vst.msk [vmem:[#allocation3 + $0xc0] sm:$0xff] %vm411, %v3990
      %4023 = vst.msk [vmem:[#allocation3 + $0xc8] sm:$0xff] %vm411, %v3991
      %4024 = vst.msk [vmem:[#allocation3 + $0xd0] sm:$0xff] %vm411, %v3992
      %4025 = vst.msk [vmem:[#allocation3 + $0xd8] sm:$0xff] %vm411, %v3993
      %4026 = vst.msk [vmem:[#allocation3 + $0xe0] sm:$0xff] %vm411, %v3994
      %4027 = vst.msk [vmem:[#allocation3 + $0xe8] sm:$0xff] %vm411, %v3995
      %4028 = vst.msk [vmem:[#allocation3 + $0xf0] sm:$0xff] %vm411, %v3996
      %4029 = vst.msk [vmem:[#allocation3 + $0xf8] sm:$0xff] %vm411, %v3997
      %v4030 = vld [vmem:[%s3127 + $0x2] sm:$0xff]
      %v4031 = vld [vmem:[%s3127 + $0xa] sm:$0xff]
      %v4032 = vld [vmem:[%s3127 + $0x1a] sm:$0xff]
      %v4033 = vld [vmem:[%s3127 + $0x22] sm:$0xff]
      %v4034 = vld [vmem:[%s3127 + $0x32] sm:$0xff]
      %v4035 = vld [vmem:[%s3127 + $0x3a] sm:$0xff]
      %v4036 = vld [vmem:[%s3127 + $0x4a] sm:$0xff]
      %v4037 = vld [vmem:[%s3127 + $0x52] sm:$0xff]
      %v4038 = vld [vmem:[%s3127 + $0x62] sm:$0xff]
      %v4039 = vld [vmem:[%s3127 + $0x6a] sm:$0xff]
      %v4040 = vld [vmem:[%s3127 + $0x7a] sm:$0xff]
      %v4041 = vld [vmem:[%s3127 + $0x82] sm:$0xff]
      %v4042 = vld [vmem:[%s3127 + $0x92] sm:$0xff]
      %v4043 = vld [vmem:[%s3127 + $0x9a] sm:$0xff]
      %v4044 = vld [vmem:[%s3127 + $0xaa] sm:$0xff]
      %v4045 = vld [vmem:[%s3127 + $0xb2] sm:$0xff]
      %v4046 = vld [vmem:[%s3127 + $0xc2] sm:$0xff]
      %v4047 = vld [vmem:[%s3127 + $0xca] sm:$0xff]
      %v4048 = vld [vmem:[%s3127 + $0xda] sm:$0xff]
      %v4049 = vld [vmem:[%s3127 + $0xe2] sm:$0xff]
      %v4050 = vld [vmem:[%s3127 + $0xf2] sm:$0xff]
      %v4051 = vld [vmem:[%s3127 + $0xfa] sm:$0xff]
      %v4052 = vld [vmem:[%s3127 + $0x10a] sm:$0xff]
      %v4053 = vld [vmem:[%s3127 + $0x112] sm:$0xff]
      %v4054 = vld [vmem:[%s3127 + $0x122] sm:$0xff]
      %v4055 = vld [vmem:[%s3127 + $0x12a] sm:$0xff]
      %v4056 = vld [vmem:[%s3127 + $0x13a] sm:$0xff]
      %v4057 = vld [vmem:[%s3127 + $0x142] sm:$0xff]
      %v4058 = vld [vmem:[%s3127 + $0x152] sm:$0xff]
      %v4059 = vld [vmem:[%s3127 + $0x15a] sm:$0xff]
      %v4060 = vld [vmem:[%s3127 + $0x16a] sm:$0xff]
      %v4061 = vld [vmem:[%s3127 + $0x172] sm:$0xff]
      %s4062 = scalar_lea.vmem %s3, 64
      %v4063 = vld [vmem:[%s4062] sm:$0xff]
      %v4065 = vsel %vm411, %v4030, 0
      %v4068 = vsel %vm411, %v4031, 0
      %v4071 = vsel %vm411, %v4032, 0
      %v4074 = vsel %vm411, %v4033, 0
      %v4077 = vsel %vm411, %v4034, 0
      %v4080 = vsel %vm411, %v4035, 0
      %v4083 = vsel %vm411, %v4036, 0
      %v4086 = vsel %vm411, %v4037, 0
      %v4089 = vsel %vm411, %v4038, 0
      %v4092 = vsel %vm411, %v4039, 0
      %v4095 = vsel %vm411, %v4040, 0
      %v4098 = vsel %vm411, %v4041, 0
      %v4101 = vsel %vm411, %v4042, 0
      %v4104 = vsel %vm411, %v4043, 0
      %v4107 = vsel %vm411, %v4044, 0
      %v4110 = vsel %vm411, %v4045, 0
      %v4113 = vsel %vm411, %v4046, 0
      %v4116 = vsel %vm411, %v4047, 0
      %v4119 = vsel %vm411, %v4048, 0
      %v4122 = vsel %vm411, %v4049, 0
      %v4125 = vsel %vm411, %v4050, 0
      %v4128 = vsel %vm411, %v4051, 0
      %v4131 = vsel %vm411, %v4052, 0
      %v4134 = vsel %vm411, %v4053, 0
      %v4137 = vsel %vm411, %v4054, 0
      %v4140 = vsel %vm411, %v4055, 0
      %v4143 = vsel %vm411, %v4056, 0
      %v4146 = vsel %vm411, %v4057, 0
      %v4149 = vsel %vm411, %v4058, 0
      %v4152 = vsel %vm411, %v4059, 0
      %v4155 = vsel %vm411, %v4060, 0
      %v4158 = vsel %vm411, %v4061, 0
      %4160 = vmatprep.subr.mxu0 0.0
      %4161 = vmatpush1.msra.mxu0 0.0
      %4162 = vmatprep.subr.mxu0 0.0
      %4163 = vmatpush1.msra.mxu0 0.0
      %4164 = vmatprep.subr.mxu0 0.0
      %4165 = vmatpush1.msra.mxu0 0.0
      %4166 = vmatprep.subr.mxu0 0.0
      %4167 = vmatpush1.msra.mxu0 0.0
      %4168 = vmatprep.subr.mxu0 0.0
      %4169 = vmatpush1.msra.mxu0 0.0
      %4170 = vmatprep.subr.mxu0 0.0
      %4171 = vmatpush1.msra.mxu0 0.0
      %4172 = vmatprep.subr.mxu0 0.0
      %4173 = vmatpush1.msra.mxu0 0.0
      %4174 = vmatprep.subr.mxu0 0.0
      %4175 = vmatpush1.msra.mxu0 0.0
      %4176 = vmatprep.subr.mxu0 0.0
      %4177 = vmatpush1.msra.mxu0 0.0
      %4178 = vmatprep.subr.mxu0 0.0
      %4179 = vmatpush1.msra.mxu0 0.0
      %4180 = vmatprep.subr.mxu0 0.0
      %4181 = vmatpush1.msra.mxu0 0.0
      %4182 = vmatprep.subr.mxu0 0.0
      %4183 = vmatpush1.msra.mxu0 0.0
      %4184 = vmatprep.subr.mxu0 0.0
      %4185 = vmatpush1.msra.mxu0 0.0
      %4186 = vmatprep.subr.mxu0 0.0
      %4187 = vmatpush1.msra.mxu0 0.0
      %4188 = vmatprep.subr.mxu0 0.0
      %4189 = vmatpush1.msra.mxu0 0.0
      %4190 = vmatprep.subr.mxu0 0.0
      %4191 = vmatpush1.msra.mxu0 %v4063
      %4192 = vmatprep.subr.mxu0 0.0
      %4193 = vmatpush2.msra.mxu0 0.0
      %4194 = vmatprep.subr.mxu0 0.0
      %4195 = vmatpush2.msra.mxu0 0.0
      %4196 = vmatprep.subr.mxu0 0.0
      %4197 = vmatpush2.msra.mxu0 0.0
      %4198 = vmatprep.subr.mxu0 0.0
      %4199 = vmatpush2.msra.mxu0 0.0
      %4200 = vmatprep.subr.mxu0 0.0
      %4201 = vmatpush2.msra.mxu0 0.0
      %4202 = vmatprep.subr.mxu0 0.0
      %4203 = vmatpush2.msra.mxu0 0.0
      %4204 = vmatprep.subr.mxu0 0.0
      %4205 = vmatpush2.msra.mxu0 0.0
      %4206 = vmatprep.subr.mxu0 0.0
      %4207 = vmatpush2.msra.mxu0 0.0
      %4208 = vmatprep.subr.mxu0 0.0
      %4209 = vmatpush2.msra.mxu0 0.0
      %4210 = vmatprep.subr.mxu0 0.0
      %4211 = vmatpush2.msra.mxu0 0.0
      %4212 = vmatprep.subr.mxu0 0.0
      %4213 = vmatpush2.msra.mxu0 0.0
      %4214 = vmatprep.subr.mxu0 0.0
      %4215 = vmatpush2.msra.mxu0 0.0
      %4216 = vmatprep.subr.mxu0 0.0
      %4217 = vmatpush2.msra.mxu0 0.0
      %4218 = vmatprep.subr.mxu0 0.0
      %4219 = vmatpush2.msra.mxu0 0.0
      %4220 = vmatprep.subr.mxu0 0.0
      %4221 = vmatpush2.msra.mxu0 0.0
      %4222 = vmatprep.subr.mxu0 0.0
      %4223 = vmatpush2.msra.mxu0 0.0
      %4224 = vmatprep.mubr.f32.mxu0 0.0
      %4225 = vmatmul.mubr.f32.gmra.mxu0 %v4065
      %v4226 = vpop.f32.mrf.mxu0
      %v4227 = vadd.f32 0.0, %v4226
      %v4228 = vpop.f32.mrf.mxu0
      %4229 = vmatprep.mubr.f32.mxu0 0.0
      %4230 = vmatmul.mubr.f32.gmra.mxu0 %v4068
      %v4231 = vpop.f32.mrf.mxu0
      %v4232 = vadd.f32 0.0, %v4231
      %v4233 = vpop.f32.mrf.mxu0
      %4234 = vmatprep.mubr.f32.mxu0 0.0
      %4235 = vmatmul.mubr.f32.gmra.mxu0 %v4071
      %v4236 = vpop.f32.mrf.mxu0
      %v4237 = vadd.f32 0.0, %v4236
      %v4238 = vpop.f32.mrf.mxu0
      %4239 = vmatprep.mubr.f32.mxu0 0.0
      %4240 = vmatmul.mubr.f32.gmra.mxu0 %v4074
      %v4241 = vpop.f32.mrf.mxu0
      %v4242 = vadd.f32 0.0, %v4241
      %v4243 = vpop.f32.mrf.mxu0
      %4244 = vmatprep.mubr.f32.mxu0 0.0
      %4245 = vmatmul.mubr.f32.gmra.mxu0 %v4077
      %v4246 = vpop.f32.mrf.mxu0
      %v4247 = vadd.f32 0.0, %v4246
      %v4248 = vpop.f32.mrf.mxu0
      %4249 = vmatprep.mubr.f32.mxu0 0.0
      %4250 = vmatmul.mubr.f32.gmra.mxu0 %v4080
      %v4251 = vpop.f32.mrf.mxu0
      %v4252 = vadd.f32 0.0, %v4251
      %v4253 = vpop.f32.mrf.mxu0
      %4254 = vmatprep.mubr.f32.mxu0 0.0
      %4255 = vmatmul.mubr.f32.gmra.mxu0 %v4083
      %v4256 = vpop.f32.mrf.mxu0
      %v4257 = vadd.f32 0.0, %v4256
      %v4258 = vpop.f32.mrf.mxu0
      %4259 = vmatprep.mubr.f32.mxu0 0.0
      %4260 = vmatmul.mubr.f32.gmra.mxu0 %v4086
      %v4261 = vpop.f32.mrf.mxu0
      %v4262 = vadd.f32 0.0, %v4261
      %v4263 = vpop.f32.mrf.mxu0
      %4264 = vmatprep.mubr.f32.mxu0 0.0
      %4265 = vmatmul.mubr.f32.gmra.mxu0 %v4089
      %v4266 = vpop.f32.mrf.mxu0
      %v4267 = vadd.f32 0.0, %v4266
      %v4268 = vpop.f32.mrf.mxu0
      %4269 = vmatprep.mubr.f32.mxu0 0.0
      %4270 = vmatmul.mubr.f32.gmra.mxu0 %v4092
      %v4271 = vpop.f32.mrf.mxu0
      %v4272 = vadd.f32 0.0, %v4271
      %v4273 = vpop.f32.mrf.mxu0
      %4274 = vmatprep.mubr.f32.mxu0 0.0
      %4275 = vmatmul.mubr.f32.gmra.mxu0 %v4095
      %v4276 = vpop.f32.mrf.mxu0
      %v4277 = vadd.f32 0.0, %v4276
      %v4278 = vpop.f32.mrf.mxu0
      %4279 = vmatprep.mubr.f32.mxu0 0.0
      %4280 = vmatmul.mubr.f32.gmra.mxu0 %v4098
      %v4281 = vpop.f32.mrf.mxu0
      %v4282 = vadd.f32 0.0, %v4281
      %v4283 = vpop.f32.mrf.mxu0
      %4284 = vmatprep.mubr.f32.mxu0 0.0
      %4285 = vmatmul.mubr.f32.gmra.mxu0 %v4101
      %v4286 = vpop.f32.mrf.mxu0
      %v4287 = vadd.f32 0.0, %v4286
      %v4288 = vpop.f32.mrf.mxu0
      %4289 = vmatprep.mubr.f32.mxu0 0.0
      %4290 = vmatmul.mubr.f32.gmra.mxu0 %v4104
      %v4291 = vpop.f32.mrf.mxu0
      %v4292 = vadd.f32 0.0, %v4291
      %v4293 = vpop.f32.mrf.mxu0
      %4294 = vmatprep.mubr.f32.mxu0 0.0
      %4295 = vmatmul.mubr.f32.gmra.mxu0 %v4107
      %v4296 = vpop.f32.mrf.mxu0
      %v4297 = vadd.f32 0.0, %v4296
      %v4298 = vpop.f32.mrf.mxu0
      %4299 = vmatprep.mubr.f32.mxu0 0.0
      %4300 = vmatmul.mubr.f32.gmra.mxu0 %v4110
      %v4301 = vpop.f32.mrf.mxu0
      %v4302 = vadd.f32 0.0, %v4301
      %v4303 = vpop.f32.mrf.mxu0
      %4304 = vmatprep.mubr.f32.mxu0 0.0
      %4305 = vmatmul.mubr.f32.gmra.mxu0 %v4113
      %v4306 = vpop.f32.mrf.mxu0
      %v4307 = vadd.f32 0.0, %v4306
      %v4308 = vpop.f32.mrf.mxu0
      %4309 = vmatprep.mubr.f32.mxu0 0.0
      %4310 = vmatmul.mubr.f32.gmra.mxu0 %v4116
      %v4311 = vpop.f32.mrf.mxu0
      %v4312 = vadd.f32 0.0, %v4311
      %v4313 = vpop.f32.mrf.mxu0
      %4314 = vmatprep.mubr.f32.mxu0 0.0
      %4315 = vmatmul.mubr.f32.gmra.mxu0 %v4119
      %v4316 = vpop.f32.mrf.mxu0
      %v4317 = vadd.f32 0.0, %v4316
      %v4318 = vpop.f32.mrf.mxu0
      %4319 = vmatprep.mubr.f32.mxu0 0.0
      %4320 = vmatmul.mubr.f32.gmra.mxu0 %v4122
      %v4321 = vpop.f32.mrf.mxu0
      %v4322 = vadd.f32 0.0, %v4321
      %v4323 = vpop.f32.mrf.mxu0
      %4324 = vmatprep.mubr.f32.mxu0 0.0
      %4325 = vmatmul.mubr.f32.gmra.mxu0 %v4125
      %v4326 = vpop.f32.mrf.mxu0
      %v4327 = vadd.f32 0.0, %v4326
      %v4328 = vpop.f32.mrf.mxu0
      %4329 = vmatprep.mubr.f32.mxu0 0.0
      %4330 = vmatmul.mubr.f32.gmra.mxu0 %v4128
      %v4331 = vpop.f32.mrf.mxu0
      %v4332 = vadd.f32 0.0, %v4331
      %v4333 = vpop.f32.mrf.mxu0
      %4334 = vmatprep.mubr.f32.mxu0 0.0
      %4335 = vmatmul.mubr.f32.gmra.mxu0 %v4131
      %v4336 = vpop.f32.mrf.mxu0
      %v4337 = vadd.f32 0.0, %v4336
      %v4338 = vpop.f32.mrf.mxu0
      %4339 = vmatprep.mubr.f32.mxu0 0.0
      %4340 = vmatmul.mubr.f32.gmra.mxu0 %v4134
      %v4341 = vpop.f32.mrf.mxu0
      %v4342 = vadd.f32 0.0, %v4341
      %v4343 = vpop.f32.mrf.mxu0
      %4344 = vmatprep.mubr.f32.mxu0 0.0
      %4345 = vmatmul.mubr.f32.gmra.mxu0 %v4137
      %v4346 = vpop.f32.mrf.mxu0
      %v4347 = vadd.f32 0.0, %v4346
      %v4348 = vpop.f32.mrf.mxu0
      %4349 = vmatprep.mubr.f32.mxu0 0.0
      %4350 = vmatmul.mubr.f32.gmra.mxu0 %v4140
      %v4351 = vpop.f32.mrf.mxu0
      %v4352 = vadd.f32 0.0, %v4351
      %v4353 = vpop.f32.mrf.mxu0
      %4354 = vmatprep.mubr.f32.mxu0 0.0
      %4355 = vmatmul.mubr.f32.gmra.mxu0 %v4143
      %v4356 = vpop.f32.mrf.mxu0
      %v4357 = vadd.f32 0.0, %v4356
      %v4358 = vpop.f32.mrf.mxu0
      %4359 = vmatprep.mubr.f32.mxu0 0.0
      %4360 = vmatmul.mubr.f32.gmra.mxu0 %v4146
      %v4361 = vpop.f32.mrf.mxu0
      %v4362 = vadd.f32 0.0, %v4361
      %v4363 = vpop.f32.mrf.mxu0
      %4364 = vmatprep.mubr.f32.mxu0 0.0
      %4365 = vmatmul.mubr.f32.gmra.mxu0 %v4149
      %v4366 = vpop.f32.mrf.mxu0
      %v4367 = vadd.f32 0.0, %v4366
      %v4368 = vpop.f32.mrf.mxu0
      %4369 = vmatprep.mubr.f32.mxu0 0.0
      %4370 = vmatmul.mubr.f32.gmra.mxu0 %v4152
      %v4371 = vpop.f32.mrf.mxu0
      %v4372 = vadd.f32 0.0, %v4371
      %v4373 = vpop.f32.mrf.mxu0
      %4374 = vmatprep.mubr.f32.mxu0 0.0
      %4375 = vmatmul.mubr.f32.gmra.mxu0 %v4155
      %v4376 = vpop.f32.mrf.mxu0
      %v4377 = vadd.f32 0.0, %v4376
      %v4378 = vpop.f32.mrf.mxu0
      %4379 = vmatprep.mubr.f32.mxu0 0.0
      %4380 = vmatmul.mubr.f32.gmra.mxu0 %v4158
      %v4381 = vpop.f32.mrf.mxu0
      %v4382 = vadd.f32 0.0, %v4381
      %v4383 = vpop.f32.mrf.mxu0
      %4384 = vdwg.mxu0
      %v4385 = vld [vmem:[#allocation3] sm:$0xff]
      %v4386 = vld [vmem:[#allocation3 + $0x8] sm:$0xff]
      %v4387 = vld [vmem:[#allocation3 + $0x10] sm:$0xff]
      %v4388 = vld [vmem:[#allocation3 + $0x18] sm:$0xff]
      %v4389 = vld [vmem:[#allocation3 + $0x20] sm:$0xff]
      %v4390 = vld [vmem:[#allocation3 + $0x28] sm:$0xff]
      %v4391 = vld [vmem:[#allocation3 + $0x30] sm:$0xff]
      %v4392 = vld [vmem:[#allocation3 + $0x38] sm:$0xff]
      %v4393 = vld [vmem:[#allocation3 + $0x40] sm:$0xff]
      %v4394 = vld [vmem:[#allocation3 + $0x48] sm:$0xff]
      %v4395 = vld [vmem:[#allocation3 + $0x50] sm:$0xff]
      %v4396 = vld [vmem:[#allocation3 + $0x58] sm:$0xff]
      %v4397 = vld [vmem:[#allocation3 + $0x60] sm:$0xff]
      %v4398 = vld [vmem:[#allocation3 + $0x68] sm:$0xff]
      %v4399 = vld [vmem:[#allocation3 + $0x70] sm:$0xff]
      %v4400 = vld [vmem:[#allocation3 + $0x78] sm:$0xff]
      %v4401 = vld [vmem:[#allocation3 + $0x80] sm:$0xff]
      %v4402 = vld [vmem:[#allocation3 + $0x88] sm:$0xff]
      %v4403 = vld [vmem:[#allocation3 + $0x90] sm:$0xff]
      %v4404 = vld [vmem:[#allocation3 + $0x98] sm:$0xff]
      %v4405 = vld [vmem:[#allocation3 + $0xa0] sm:$0xff]
      %v4406 = vld [vmem:[#allocation3 + $0xa8] sm:$0xff]
      %v4407 = vld [vmem:[#allocation3 + $0xb0] sm:$0xff]
      %v4408 = vld [vmem:[#allocation3 + $0xb8] sm:$0xff]
      %v4409 = vld [vmem:[#allocation3 + $0xc0] sm:$0xff]
      %v4410 = vld [vmem:[#allocation3 + $0xc8] sm:$0xff]
      %v4411 = vld [vmem:[#allocation3 + $0xd0] sm:$0xff]
      %v4412 = vld [vmem:[#allocation3 + $0xd8] sm:$0xff]
      %v4413 = vld [vmem:[#allocation3 + $0xe0] sm:$0xff]
      %v4414 = vld [vmem:[#allocation3 + $0xe8] sm:$0xff]
      %v4415 = vld [vmem:[#allocation3 + $0xf0] sm:$0xff]
      %v4416 = vld [vmem:[#allocation3 + $0xf8] sm:$0xff]
      %v4417 = vadd.f32 %v4385, %v4227
      %v4418 = vadd.f32 %v4386, %v4232
      %v4419 = vadd.f32 %v4387, %v4237
      %v4420 = vadd.f32 %v4388, %v4242
      %v4421 = vadd.f32 %v4389, %v4247
      %v4422 = vadd.f32 %v4390, %v4252
      %v4423 = vadd.f32 %v4391, %v4257
      %v4424 = vadd.f32 %v4392, %v4262
      %v4425 = vadd.f32 %v4393, %v4267
      %v4426 = vadd.f32 %v4394, %v4272
      %v4427 = vadd.f32 %v4395, %v4277
      %v4428 = vadd.f32 %v4396, %v4282
      %v4429 = vadd.f32 %v4397, %v4287
      %v4430 = vadd.f32 %v4398, %v4292
      %v4431 = vadd.f32 %v4399, %v4297
      %v4432 = vadd.f32 %v4400, %v4302
      %v4433 = vadd.f32 %v4401, %v4307
      %v4434 = vadd.f32 %v4402, %v4312
      %v4435 = vadd.f32 %v4403, %v4317
      %v4436 = vadd.f32 %v4404, %v4322
      %v4437 = vadd.f32 %v4405, %v4327
      %v4438 = vadd.f32 %v4406, %v4332
      %v4439 = vadd.f32 %v4407, %v4337
      %v4440 = vadd.f32 %v4408, %v4342
      %v4441 = vadd.f32 %v4409, %v4347
      %v4442 = vadd.f32 %v4410, %v4352
      %v4443 = vadd.f32 %v4411, %v4357
      %v4444 = vadd.f32 %v4412, %v4362
      %v4445 = vadd.f32 %v4413, %v4367
      %v4446 = vadd.f32 %v4414, %v4372
      %v4447 = vadd.f32 %v4415, %v4377
      %v4448 = vadd.f32 %v4416, %v4382
      %4449 = vst.msk [vmem:[#allocation3] sm:$0xff] %vm411, %v4417
      %4450 = vst.msk [vmem:[#allocation3 + $0x8] sm:$0xff] %vm411, %v4418
      %4451 = vst.msk [vmem:[#allocation3 + $0x10] sm:$0xff] %vm411, %v4419
      %4452 = vst.msk [vmem:[#allocation3 + $0x18] sm:$0xff] %vm411, %v4420
      %4453 = vst.msk [vmem:[#allocation3 + $0x20] sm:$0xff] %vm411, %v4421
      %4454 = vst.msk [vmem:[#allocation3 + $0x28] sm:$0xff] %vm411, %v4422
      %4455 = vst.msk [vmem:[#allocation3 + $0x30] sm:$0xff] %vm411, %v4423
      %4456 = vst.msk [vmem:[#allocation3 + $0x38] sm:$0xff] %vm411, %v4424
      %4457 = vst.msk [vmem:[#allocation3 + $0x40] sm:$0xff] %vm411, %v4425
      %4458 = vst.msk [vmem:[#allocation3 + $0x48] sm:$0xff] %vm411, %v4426
      %4459 = vst.msk [vmem:[#allocation3 + $0x50] sm:$0xff] %vm411, %v4427
      %4460 = vst.msk [vmem:[#allocation3 + $0x58] sm:$0xff] %vm411, %v4428
      %4461 = vst.msk [vmem:[#allocation3 + $0x60] sm:$0xff] %vm411, %v4429
      %4462 = vst.msk [vmem:[#allocation3 + $0x68] sm:$0xff] %vm411, %v4430
      %4463 = vst.msk [vmem:[#allocation3 + $0x70] sm:$0xff] %vm411, %v4431
      %4464 = vst.msk [vmem:[#allocation3 + $0x78] sm:$0xff] %vm411, %v4432
      %4465 = vst.msk [vmem:[#allocation3 + $0x80] sm:$0xff] %vm411, %v4433
      %4466 = vst.msk [vmem:[#allocation3 + $0x88] sm:$0xff] %vm411, %v4434
      %4467 = vst.msk [vmem:[#allocation3 + $0x90] sm:$0xff] %vm411, %v4435
      %4468 = vst.msk [vmem:[#allocation3 + $0x98] sm:$0xff] %vm411, %v4436
      %4469 = vst.msk [vmem:[#allocation3 + $0xa0] sm:$0xff] %vm411, %v4437
      %4470 = vst.msk [vmem:[#allocation3 + $0xa8] sm:$0xff] %vm411, %v4438
      %4471 = vst.msk [vmem:[#allocation3 + $0xb0] sm:$0xff] %vm411, %v4439
      %4472 = vst.msk [vmem:[#allocation3 + $0xb8] sm:$0xff] %vm411, %v4440
      %4473 = vst.msk [vmem:[#allocation3 + $0xc0] sm:$0xff] %vm411, %v4441
      %4474 = vst.msk [vmem:[#allocation3 + $0xc8] sm:$0xff] %vm411, %v4442
      %4475 = vst.msk [vmem:[#allocation3 + $0xd0] sm:$0xff] %vm411, %v4443
      %4476 = vst.msk [vmem:[#allocation3 + $0xd8] sm:$0xff] %vm411, %v4444
      %4477 = vst.msk [vmem:[#allocation3 + $0xe0] sm:$0xff] %vm411, %v4445
      %4478 = vst.msk [vmem:[#allocation3 + $0xe8] sm:$0xff] %vm411, %v4446
      %4479 = vst.msk [vmem:[#allocation3 + $0xf0] sm:$0xff] %vm411, %v4447
      %4480 = vst.msk [vmem:[#allocation3 + $0xf8] sm:$0xff] %vm411, %v4448
      %v4481 = vld [vmem:[#allocation3] sm:$0xff]
      %v4482 = vld [vmem:[#allocation3 + $0x8] sm:$0xff]
      %v4483 = vld [vmem:[#allocation3 + $0x10] sm:$0xff]
      %v4484 = vld [vmem:[#allocation3 + $0x18] sm:$0xff]
      %v4485 = vld [vmem:[#allocation3 + $0x20] sm:$0xff]
      %v4486 = vld [vmem:[#allocation3 + $0x28] sm:$0xff]
      %v4487 = vld [vmem:[#allocation3 + $0x30] sm:$0xff]
      %v4488 = vld [vmem:[#allocation3 + $0x38] sm:$0xff]
      %v4489 = vld [vmem:[#allocation3 + $0x40] sm:$0xff]
      %v4490 = vld [vmem:[#allocation3 + $0x48] sm:$0xff]
      %v4491 = vld [vmem:[#allocation3 + $0x50] sm:$0xff]
      %v4492 = vld [vmem:[#allocation3 + $0x58] sm:$0xff]
      %v4493 = vld [vmem:[#allocation3 + $0x60] sm:$0xff]
      %v4494 = vld [vmem:[#allocation3 + $0x68] sm:$0xff]
      %v4495 = vld [vmem:[#allocation3 + $0x70] sm:$0xff]
      %v4496 = vld [vmem:[#allocation3 + $0x78] sm:$0xff]
      %v4497 = vld [vmem:[#allocation3 + $0x80] sm:$0xff]
      %v4498 = vld [vmem:[#allocation3 + $0x88] sm:$0xff]
      %v4499 = vld [vmem:[#allocation3 + $0x90] sm:$0xff]
      %v4500 = vld [vmem:[#allocation3 + $0x98] sm:$0xff]
      %v4501 = vld [vmem:[#allocation3 + $0xa0] sm:$0xff]
      %v4502 = vld [vmem:[#allocation3 + $0xa8] sm:$0xff]
      %v4503 = vld [vmem:[#allocation3 + $0xb0] sm:$0xff]
      %v4504 = vld [vmem:[#allocation3 + $0xb8] sm:$0xff]
      %v4505 = vld [vmem:[#allocation3 + $0xc0] sm:$0xff]
      %v4506 = vld [vmem:[#allocation3 + $0xc8] sm:$0xff]
      %v4507 = vld [vmem:[#allocation3 + $0xd0] sm:$0xff]
      %v4508 = vld [vmem:[#allocation3 + $0xd8] sm:$0xff]
      %v4509 = vld [vmem:[#allocation3 + $0xe0] sm:$0xff]
      %v4510 = vld [vmem:[#allocation3 + $0xe8] sm:$0xff]
      %v4511 = vld [vmem:[#allocation3 + $0xf0] sm:$0xff]
      %v4512 = vld [vmem:[#allocation3 + $0xf8] sm:$0xff]
      %4513 = vst.msk [vmem:[%s262] sm:$0xff] %vm411, %v4481
      %4514 = vst.msk [vmem:[%s262 + $0x8] sm:$0xff] %vm411, %v4482
      %4515 = vst.msk [vmem:[%s262 + $0x10] sm:$0xff] %vm411, %v4483
      %4516 = vst.msk [vmem:[%s262 + $0x18] sm:$0xff] %vm411, %v4484
      %4517 = vst.msk [vmem:[%s262 + $0x20] sm:$0xff] %vm411, %v4485
      %4518 = vst.msk [vmem:[%s262 + $0x28] sm:$0xff] %vm411, %v4486
      %4519 = vst.msk [vmem:[%s262 + $0x30] sm:$0xff] %vm411, %v4487
      %4520 = vst.msk [vmem:[%s262 + $0x38] sm:$0xff] %vm411, %v4488
      %4521 = vst.msk [vmem:[%s262 + $0x40] sm:$0xff] %vm411, %v4489
      %4522 = vst.msk [vmem:[%s262 + $0x48] sm:$0xff] %vm411, %v4490
      %4523 = vst.msk [vmem:[%s262 + $0x50] sm:$0xff] %vm411, %v4491
      %4524 = vst.msk [vmem:[%s262 + $0x58] sm:$0xff] %vm411, %v4492
      %4525 = vst.msk [vmem:[%s262 + $0x60] sm:$0xff] %vm411, %v4493
      %4526 = vst.msk [vmem:[%s262 + $0x68] sm:$0xff] %vm411, %v4494
      %4527 = vst.msk [vmem:[%s262 + $0x70] sm:$0xff] %vm411, %v4495
      %4528 = vst.msk [vmem:[%s262 + $0x78] sm:$0xff] %vm411, %v4496
      %4529 = vst.msk [vmem:[%s262 + $0x80] sm:$0xff] %vm411, %v4497
      %4530 = vst.msk [vmem:[%s262 + $0x88] sm:$0xff] %vm411, %v4498
      %4531 = vst.msk [vmem:[%s262 + $0x90] sm:$0xff] %vm411, %v4499
      %4532 = vst.msk [vmem:[%s262 + $0x98] sm:$0xff] %vm411, %v4500
      %4533 = vst.msk [vmem:[%s262 + $0xa0] sm:$0xff] %vm411, %v4501
      %4534 = vst.msk [vmem:[%s262 + $0xa8] sm:$0xff] %vm411, %v4502
      %4535 = vst.msk [vmem:[%s262 + $0xb0] sm:$0xff] %vm411, %v4503
      %4536 = vst.msk [vmem:[%s262 + $0xb8] sm:$0xff] %vm411, %v4504
      %4537 = vst.msk [vmem:[%s262 + $0xc0] sm:$0xff] %vm411, %v4505
      %4538 = vst.msk [vmem:[%s262 + $0xc8] sm:$0xff] %vm411, %v4506
      %4539 = vst.msk [vmem:[%s262 + $0xd0] sm:$0xff] %vm411, %v4507
      %4540 = vst.msk [vmem:[%s262 + $0xd8] sm:$0xff] %vm411, %v4508
      %4541 = vst.msk [vmem:[%s262 + $0xe0] sm:$0xff] %vm411, %v4509
      %4542 = vst.msk [vmem:[%s262 + $0xe8] sm:$0xff] %vm411, %v4510
      %4543 = vst.msk [vmem:[%s262 + $0xf0] sm:$0xff] %vm411, %v4511
      %4544 = vst.msk [vmem:[%s262 + $0xf8] sm:$0xff] %vm411, %v4512
      %v4545 = vsel %vm411, %v4481, 0.0
      %v4546 = vsel %vm411, %v4482, 0.0
      %v4547 = vadd.f32 %v4545, %v4546
      %v4548 = vsel %vm411, %v4483, 0.0
      %v4549 = vadd.f32 %v4547, %v4548
      %v4550 = vsel %vm411, %v4484, 0.0
      %v4551 = vadd.f32 %v4549, %v4550
      %v4552 = vsel %vm411, %v4485, 0.0
      %v4553 = vadd.f32 %v4551, %v4552
      %v4554 = vsel %vm411, %v4486, 0.0
      %v4555 = vadd.f32 %v4553, %v4554
      %v4556 = vsel %vm411, %v4487, 0.0
      %v4557 = vadd.f32 %v4555, %v4556
      %v4558 = vsel %vm411, %v4488, 0.0
      %v4559 = vadd.f32 %v4557, %v4558
      %v4560 = vsel %vm411, %v4489, 0.0
      %v4561 = vadd.f32 %v4559, %v4560
      %v4562 = vsel %vm411, %v4490, 0.0
      %v4563 = vadd.f32 %v4561, %v4562
      %v4564 = vsel %vm411, %v4491, 0.0
      %v4565 = vadd.f32 %v4563, %v4564
      %v4566 = vsel %vm411, %v4492, 0.0
      %v4567 = vadd.f32 %v4565, %v4566
      %v4568 = vsel %vm411, %v4493, 0.0
      %v4569 = vadd.f32 %v4567, %v4568
      %v4570 = vsel %vm411, %v4494, 0.0
      %v4571 = vadd.f32 %v4569, %v4570
      %v4572 = vsel %vm411, %v4495, 0.0
      %v4573 = vadd.f32 %v4571, %v4572
      %v4574 = vsel %vm411, %v4496, 0.0
      %v4575 = vadd.f32 %v4573, %v4574
      %v4576 = vsel %vm411, %v4497, 0.0
      %v4577 = vadd.f32 %v4575, %v4576
      %v4578 = vsel %vm411, %v4498, 0.0
      %v4579 = vadd.f32 %v4577, %v4578
      %v4580 = vsel %vm411, %v4499, 0.0
      %v4581 = vadd.f32 %v4579, %v4580
      %v4582 = vsel %vm411, %v4500, 0.0
      %v4583 = vadd.f32 %v4581, %v4582
      %v4584 = vsel %vm411, %v4501, 0.0
      %v4585 = vadd.f32 %v4583, %v4584
      %v4586 = vsel %vm411, %v4502, 0.0
      %v4587 = vadd.f32 %v4585, %v4586
      %v4588 = vsel %vm411, %v4503, 0.0
      %v4589 = vadd.f32 %v4587, %v4588
      %v4590 = vsel %vm411, %v4504, 0.0
      %v4591 = vadd.f32 %v4589, %v4590
      %v4592 = vsel %vm411, %v4505, 0.0
      %v4593 = vadd.f32 %v4591, %v4592
      %v4594 = vsel %vm411, %v4506, 0.0
      %v4595 = vadd.f32 %v4593, %v4594
      %v4596 = vsel %vm411, %v4507, 0.0
      %v4597 = vadd.f32 %v4595, %v4596
      %v4598 = vsel %vm411, %v4508, 0.0
      %v4599 = vadd.f32 %v4597, %v4598
      %v4600 = vsel %vm411, %v4509, 0.0
      %v4601 = vadd.f32 %v4599, %v4600
      %v4602 = vsel %vm411, %v4510, 0.0
      %v4603 = vadd.f32 %v4601, %v4602
      %v4604 = vsel %vm411, %v4511, 0.0
      %v4605 = vadd.f32 %v4603, %v4604
      %v4606 = vsel %vm411, %v4512, 0.0
      %v4607 = vadd.f32 %v4605, %v4606
      %v4608 = vrot.slane %v4607, 4
      %v4609 = vadd.f32 %v4607, %v4608
      %v4610 = vrot.slane %v4609, 2
      %v4611 = vadd.f32 %v4609, %v4610
      %v4612 = vrot.slane %v4611, 1
      %v4613 = vadd.f32 %v4611, %v4612
      %4614 = vst.msk [vmem:[%s265] sm:$0x1] %vm421, %v4613
      %v4615 = vmul.f32 %v4481, %v4481
      %v4616 = vmul.f32 %v4482, %v4482
      %v4617 = vmul.f32 %v4483, %v4483
      %v4618 = vmul.f32 %v4484, %v4484
      %v4619 = vmul.f32 %v4485, %v4485
      %v4620 = vmul.f32 %v4486, %v4486
      %v4621 = vmul.f32 %v4487, %v4487
      %v4622 = vmul.f32 %v4488, %v4488
      %v4623 = vmul.f32 %v4489, %v4489
      %v4624 = vmul.f32 %v4490, %v4490
      %v4625 = vmul.f32 %v4491, %v4491
      %v4626 = vmul.f32 %v4492, %v4492
      %v4627 = vmul.f32 %v4493, %v4493
      %v4628 = vmul.f32 %v4494, %v4494
      %v4629 = vmul.f32 %v4495, %v4495
      %v4630 = vmul.f32 %v4496, %v4496
      %v4631 = vmul.f32 %v4497, %v4497
      %v4632 = vmul.f32 %v4498, %v4498
      %v4633 = vmul.f32 %v4499, %v4499
      %v4634 = vmul.f32 %v4500, %v4500
      %v4635 = vmul.f32 %v4501, %v4501
      %v4636 = vmul.f32 %v4502, %v4502
      %v4637 = vmul.f32 %v4503, %v4503
      %v4638 = vmul.f32 %v4504, %v4504
      %v4639 = vmul.f32 %v4505, %v4505
      %v4640 = vmul.f32 %v4506, %v4506
      %v4641 = vmul.f32 %v4507, %v4507
      %v4642 = vmul.f32 %v4508, %v4508
      %v4643 = vmul.f32 %v4509, %v4509
      %v4644 = vmul.f32 %v4510, %v4510
      %v4645 = vmul.f32 %v4511, %v4511
      %v4646 = vmul.f32 %v4512, %v4512
      %v4647 = vsel %vm411, %v4615, 0.0
      %v4648 = vsel %vm411, %v4616, 0.0
      %v4649 = vadd.f32 %v4647, %v4648
      %v4650 = vsel %vm411, %v4617, 0.0
      %v4651 = vadd.f32 %v4649, %v4650
      %v4652 = vsel %vm411, %v4618, 0.0
      %v4653 = vadd.f32 %v4651, %v4652
      %v4654 = vsel %vm411, %v4619, 0.0
      %v4655 = vadd.f32 %v4653, %v4654
      %v4656 = vsel %vm411, %v4620, 0.0
      %v4657 = vadd.f32 %v4655, %v4656
      %v4658 = vsel %vm411, %v4621, 0.0
      %v4659 = vadd.f32 %v4657, %v4658
      %v4660 = vsel %vm411, %v4622, 0.0
      %v4661 = vadd.f32 %v4659, %v4660
      %v4662 = vsel %vm411, %v4623, 0.0
      %v4663 = vadd.f32 %v4661, %v4662
      %v4664 = vsel %vm411, %v4624, 0.0
      %v4665 = vadd.f32 %v4663, %v4664
      %v4666 = vsel %vm411, %v4625, 0.0
      %v4667 = vadd.f32 %v4665, %v4666
      %v4668 = vsel %vm411, %v4626, 0.0
      %v4669 = vadd.f32 %v4667, %v4668
      %v4670 = vsel %vm411, %v4627, 0.0
      %v4671 = vadd.f32 %v4669, %v4670
      %v4672 = vsel %vm411, %v4628, 0.0
      %v4673 = vadd.f32 %v4671, %v4672
      %v4674 = vsel %vm411, %v4629, 0.0
      %v4675 = vadd.f32 %v4673, %v4674
      %v4676 = vsel %vm411, %v4630, 0.0
      %v4677 = vadd.f32 %v4675, %v4676
      %v4678 = vsel %vm411, %v4631, 0.0
      %v4679 = vadd.f32 %v4677, %v4678
      %v4680 = vsel %vm411, %v4632, 0.0
      %v4681 = vadd.f32 %v4679, %v4680
      %v4682 = vsel %vm411, %v4633, 0.0
      %v4683 = vadd.f32 %v4681, %v4682
      %v4684 = vsel %vm411, %v4634, 0.0
      %v4685 = vadd.f32 %v4683, %v4684
      %v4686 = vsel %vm411, %v4635, 0.0
      %v4687 = vadd.f32 %v4685, %v4686
      %v4688 = vsel %vm411, %v4636, 0.0
      %v4689 = vadd.f32 %v4687, %v4688
      %v4690 = vsel %vm411, %v4637, 0.0
      %v4691 = vadd.f32 %v4689, %v4690
      %v4692 = vsel %vm411, %v4638, 0.0
      %v4693 = vadd.f32 %v4691, %v4692
      %v4694 = vsel %vm411, %v4639, 0.0
      %v4695 = vadd.f32 %v4693, %v4694
      %v4696 = vsel %vm411, %v4640, 0.0
      %v4697 = vadd.f32 %v4695, %v4696
      %v4698 = vsel %vm411, %v4641, 0.0
      %v4699 = vadd.f32 %v4697, %v4698
      %v4700 = vsel %vm411, %v4642, 0.0
      %v4701 = vadd.f32 %v4699, %v4700
      %v4702 = vsel %vm411, %v4643, 0.0
      %v4703 = vadd.f32 %v4701, %v4702
      %v4704 = vsel %vm411, %v4644, 0.0
      %v4705 = vadd.f32 %v4703, %v4704
      %v4706 = vsel %vm411, %v4645, 0.0
      %v4707 = vadd.f32 %v4705, %v4706
      %v4708 = vsel %vm411, %v4646, 0.0
      %v4709 = vadd.f32 %v4707, %v4708
      %v4710 = vrot.slane %v4709, 4
      %v4711 = vadd.f32 %v4709, %v4710
      %v4712 = vrot.slane %v4711, 2
      %v4713 = vadd.f32 %v4711, %v4712
      %v4714 = vrot.slane %v4713, 1
      %v4715 = vadd.f32 %v4713, %v4714
      %4716 = vst.msk [vmem:[%s268] sm:$0x1] %vm421, %v4715
      %p4717 = scmp.lt.s32.totalorder %s18, 1
      %s4718 = scalar_select %p4717, %s18, 1
      %s4719 = smul.addr %s4718, 32
      %s4720 = smul.addr %s4719, 8
      %s4721 = scalar_lea.vmem %s4, %s4720
      %p4722 = scmp.lt.s32.totalorder %s18, 1
      %s4723 = scalar_select %p4722, %s18, 1
      %s4724 = scalar_lea.vmem %s5, %s4723
      %p4725 = scmp.lt.s32.totalorder %s18, 1
      %s4726 = scalar_select %p4725, %s18, 1
      %s4727 = scalar_lea.vmem %s6, %s4726
      // Predicated region
      $region37: #{double_conv.4} parent=35 // pred_check
        %p4728 = pneg %p125
      $region38: #{double_conv.4} parent=35 // pred_check_branch
        %4730 = sbr.rel (%p4728) target = $region40
      $region39: #{double_conv.4} parent=35 // pred_region
        _
      $region40: #{double_conv.4} parent=35 // pred_fallthru
        _
      // Predicated region
      $region41: #{double_conv.4} parent=35 // pred_check
        %p4731 = pneg %p151
      $region42: #{double_conv.4} parent=35 // pred_check_branch
        %4733 = sbr.rel (%p4731) target = $region44
      $region43: #{double_conv.4} parent=35 // pred_region
        _
      $region44: #{double_conv.4} parent=35 // pred_fallthru
        _
      // Predicated region
      $region45: #{double_conv.4} parent=35 // pred_check
        %p4734 = pneg %p177
      $region46: #{double_conv.4} parent=35 // pred_check_branch
        %4736 = sbr.rel (%p4734) target = $region48
      $region47: #{double_conv.4} parent=35 // pred_region
        _
      $region48: #{double_conv.4} parent=35 // pred_fallthru
        _
    $region36: #{double_conv.4} parent=5 // pred_fallthru
      _
    %p4737 = scmp.le.s32.totalorder 2, %s13
    // Predicated region
    $region49: #{double_conv.4} parent=5 // pred_check
      %p4738 = pneg %p4737
    $region50: #{double_conv.4} parent=5 // pred_check_branch
      %4740 = sbr.rel (%p4738) target = $region52
    $region51: #{double_conv.4} parent=5 // pred_region
      %s4741 = ssub.s32 %s13, 2
      // Predicated region
      $region53: #{double_conv.4} parent=51 // pred_check
        %p4742 = pneg %p131
      $region54: #{double_conv.4} parent=51 // pred_check_branch
        %4744 = sbr.rel (%p4742) target = $region56
      $region55: #{double_conv.4} parent=51 // pred_region
        %p4745 = scmp.lt.s32.totalorder %s19, 1
        %s4746 = scalar_select %p4745, %s19, 1
        %s4747 = smul.addr %s4746, 32
        %s4748 = smul.addr %s4747, 8
        %s4749 = scalar_lea.vmem %s4, %s4748
      $region56: #{double_conv.4} parent=51 // pred_fallthru
        _
      // Predicated region
      $region57: #{double_conv.4} parent=51 // pred_check
        %p4750 = pneg %p157
      $region58: #{double_conv.4} parent=51 // pred_check_branch
        %4752 = sbr.rel (%p4750) target = $region60
      $region59: #{double_conv.4} parent=51 // pred_region
        %p4753 = scmp.lt.s32.totalorder %s19, 1
        %s4754 = scalar_select %p4753, %s19, 1
        %s4755 = scalar_lea.vmem %s5, %s4754
      $region60: #{double_conv.4} parent=51 // pred_fallthru
        _
      // Predicated region
      $region61: #{double_conv.4} parent=51 // pred_check
        %p4756 = pneg %p183
      $region62: #{double_conv.4} parent=51 // pred_check_branch
        %4758 = sbr.rel (%p4756) target = $region64
      $region63: #{double_conv.4} parent=51 // pred_region
        %p4759 = scmp.lt.s32.totalorder %s19, 1
        %s4760 = scalar_select %p4759, %s19, 1
        %s4761 = scalar_lea.vmem %s6, %s4760
      $region64: #{double_conv.4} parent=51 // pred_fallthru
        _
    $region52: #{double_conv.4} parent=5 // pred_fallthru
      _
  $region6: #{double_conv.4} parent=0 // loop_footer
    %s17 = sadd.s32 1, %s13
  $region7: #{double_conv.4} parent=0 // loop_footer_branch
    %12 = sbr.rel target = $region3
  $region8: #{double_conv.4} parent=0 // loop_exit
    _

</llo_original>
